<compile_context>
chip_gen: v5e
topology: v5e:2x2
jax: 0.10.0
libtpu: 0.0.40
codegen_flags: <defaults>
</compile_context>

<pallas_src>
import functools

import jax
import jax.numpy as jnp
from jax.experimental import pallas as pl
from jax.experimental.pallas import tpu as pltpu


# ---------------------------------------------------------------------------
# Kernel 1: fused QKV projection + per-head RMSNorm(q,k) + RoPE(q,k)
# ---------------------------------------------------------------------------
def _qkv_norm_rope_kernel(x_ref, w_ref, b_ref, caq_ref, cbq_ref, cak_ref, cbk_ref,
                          q_ref, k_ref, v_ref, qkv_sc, *, num_heads, head_dim):
    # x_ref : (tm, dim) bf16        w_ref : (dim, 3*dim) bf16    b_ref : (1, 3*dim) f32
    # ca*/cb* : (tm, D) f32 RoPE coeffs (de-interleaved layout, norm-scale & sm_scale folded in)
    # q/k/v_ref : (H, tm, D) bf16   qkv_sc : (tm, 3*dim) f32 scratch
    d = head_dim
    hd = num_heads * d

    # One big MXU matmul for the whole row tile; result parked in VMEM scratch so the
    # per-head loop only keeps one head's temporaries live.
    qkv_sc[...] = jnp.dot(x_ref[...], w_ref[...],
                          preferred_element_type=jnp.float32) + b_ref[...]

    caq = caq_ref[...]
    cbq = cbq_ref[...]
    cak = cak_ref[...]
    cbk = cbk_ref[...]

    def head_body(h, carry):
        qo = pl.multiple_of(h * d, d)
        ko = pl.multiple_of(hd + h * d, d)
        vo = pl.multiple_of(2 * hd + h * d, d)
        q_h = qkv_sc[:, pl.ds(qo, d)]
        k_h = qkv_sc[:, pl.ds(ko, d)]
        v_h = qkv_sc[:, pl.ds(vo, d)]
        # RMSNorm (f32): x * rsqrt(mean(x^2) + 1e-6)   (the learned scale lives in ca*/cb*)
        q_h = q_h * jax.lax.rsqrt(
            jnp.mean(q_h * q_h, axis=-1, keepdims=True) + 1e-6)
        k_h = k_h * jax.lax.rsqrt(
            jnp.mean(k_h * k_h, axis=-1, keepdims=True) + 1e-6)
        # RoPE in de-interleaved layout: out = cA * x + cB * partner(x),
        # partner(x) = half-length lane rotation (XLU slot, cheap).
        q_h = caq * q_h + cbq * pltpu.roll(q_h, shift=d // 2, axis=1)
        k_h = cak * k_h + cbk * pltpu.roll(k_h, shift=d // 2, axis=1)
        q_ref[h] = q_h.astype(q_ref.dtype)
        k_ref[h] = k_h.astype(k_ref.dtype)
        v_ref[h] = v_h.astype(v_ref.dtype)
        return carry

    jax.lax.fori_loop(0, num_heads, head_body, 0)


# ---------------------------------------------------------------------------
# Kernel 2: flash attention (online softmax), output written as (B, L, H*D)
# sm_scale is pre-folded into q, so the inner loop has no extra scaling multiply.
# ---------------------------------------------------------------------------
def _flash_attention_kernel(q_ref, k_ref, v_ref, o_ref, m_sc, l_sc, acc_sc):
    ki = pl.program_id(3)

    @pl.when(ki == 0)
    def _init():
        m_sc[...] = jnp.full(m_sc.shape, -jnp.inf, dtype=m_sc.dtype)
        l_sc[...] = jnp.zeros(l_sc.shape, dtype=l_sc.dtype)
        acc_sc[...] = jnp.zeros(acc_sc.shape, dtype=acc_sc.dtype)

    q = q_ref[...]                                   # (tq, D) bf16 (already * D**-0.5)
    k = k_ref[...]                                   # (tk, D) bf16
    s = jax.lax.dot_general(q, k, (((1,), (1,)), ((), ())),
                            preferred_element_type=jnp.float32)
    m_prev = m_sc[...]
    m_new = jnp.maximum(m_prev, jnp.max(s, axis=-1, keepdims=True))
    alpha = jnp.exp(m_prev - m_new)
    p = jnp.exp(s - m_new)
    l_sc[...] = alpha * l_sc[...] + jnp.sum(p, axis=-1, keepdims=True)
    acc_sc[...] = alpha * acc_sc[...] + jnp.dot(
        p.astype(v_ref.dtype), v_ref[...], preferred_element_type=jnp.float32)
    m_sc[...] = m_new

    @pl.when(ki == pl.num_programs(3) - 1)
    def _finalize():
        o_ref[...] = (acc_sc[...] *
                      pl.reciprocal(l_sc[...], approx=True)).astype(o_ref.dtype)


# ---------------------------------------------------------------------------
# Kernel 3: output projection
# ---------------------------------------------------------------------------
def _proj_kernel(x_ref, w_ref, b_ref, o_ref):
    o = jnp.dot(x_ref[...], w_ref[...],
                preferred_element_type=jnp.float32) + b_ref[...]
    o_ref[...] = o.astype(o_ref.dtype)


# ---------------------------------------------------------------------------
# Wrapper
# ---------------------------------------------------------------------------
def self_attention(x, pe, w_qkv, b_qkv, q_scale, k_scale, w_proj, b_proj, *,
                   num_heads, tm=256, tq=256, tk=256):
    """x: (B, L, dim), pe: (1 or B, 1, L, D//2, 2, 2) -> (B, L, dim)."""
    B, L, dim = x.shape
    H = num_heads
    D = dim // H
    assert dim == H * D and D % 2 == 0
    tm, tq, tk = min(tm, L), min(tq, L), min(tk, L)
    assert L % tm == 0 and L % tq == 0 and L % tk == 0, "pad L to tile multiples"
    assert pe.shape[1] == 1 and pe.shape[-3:] == (D // 2, 2, 2)

    sm_scale = float(D) ** -0.5

    # ---- wrapper-side layout plumbing (cheap plain-JAX, outside the kernels) ----
    # De-interleave permutation: new i <- old 2i,  new D/2+i <- old 2i+1.
    # (q and k are permuted identically -> QK^T unchanged; v and W_proj untouched.)
    perm = jnp.concatenate([jnp.arange(0, D, 2), jnp.arange(1, D, 2)])
    w3 = w_qkv.reshape(dim, 3, H, D)
    w_perm = jnp.stack([w3[:, 0][:, :, perm], w3[:, 1][:, :, perm], w3[:, 2]],
                       axis=1).reshape(dim, 3 * dim).astype(jnp.bfloat16)
    b3 = b_qkv.reshape(3, H, D)
    b_perm = jnp.stack([b3[0][:, perm], b3[1][:, perm], b3[2]],
                       axis=0).reshape(1, 3 * dim).astype(jnp.float32)

    # Norm scales in the permuted basis; softmax scale folded into the q side.
    qs = q_scale[perm].astype(jnp.float32) * sm_scale            # (D,)
    ks = k_scale[perm].astype(jnp.float32)                       # (D,)

    # RoPE 2x2 matrices -> per-position coefficient planes in de-interleaved layout,
    # with the (linear) RMSNorm scales folded in:  out = cA*(s*x) + cB*roll(s*x)
    #                                                 = (cA*s)*x + (cB*roll(s))*roll(x)
    f = pe[:, 0].astype(jnp.float32)                             # (1 or B, L, D//2, 2, 2)
    ca = jnp.concatenate([f[..., 0, 0], f[..., 1, 1]], axis=-1)  # (1 or B, L, D)
    cb = jnp.concatenate([f[..., 0, 1], f[..., 1, 0]], axis=-1)
    ca_q = jnp.broadcast_to(ca * qs, (B, L, D))
    cb_q = jnp.broadcast_to(cb * jnp.roll(qs, D // 2), (B, L, D))
    ca_k = jnp.broadcast_to(ca * ks, (B, L, D))
    cb_k = jnp.broadcast_to(cb * jnp.roll(ks, D // 2), (B, L, D))

    x_bf16 = x.astype(jnp.bfloat16)
    w_proj_bf16 = w_proj.astype(jnp.bfloat16)
    b_proj_2d = b_proj.reshape(1, dim).astype(jnp.float32)

    # ---- Kernel 1: QKV + QKNorm + RoPE ----
    qkv_struct = jax.ShapeDtypeStruct((B, H, L, D), jnp.bfloat16)
    q, k, v = pl.pallas_call(
        functools.partial(_qkv_norm_rope_kernel, num_heads=H, head_dim=D),
        out_shape=(qkv_struct, qkv_struct, qkv_struct),
        grid=(B, L // tm),
        in_specs=[
            pl.BlockSpec((None, tm, dim), lambda b, j: (b, j, 0)),     # x rows (bf16)
            pl.BlockSpec((dim, 3 * dim), lambda b, j: (0, 0),          # W_qkv resident
                         pipeline_mode=pl.Buffered(1)),
            pl.BlockSpec((1, 3 * dim), lambda b, j: (0, 0),            # b_qkv resident
                         pipeline_mode=pl.Buffered(1)),
            pl.BlockSpec((None, tm, D), lambda b, j: (b, j, 0)),       # rope coeff A (q)
            pl.BlockSpec((None, tm, D), lambda b, j: (b, j, 0)),       # rope coeff B (q)
            pl.BlockSpec((None, tm, D), lambda b, j: (b, j, 0)),       # rope coeff A (k)
            pl.BlockSpec((None, tm, D), lambda b, j: (b, j, 0)),       # rope coeff B (k)
        ],
        out_specs=(
            pl.BlockSpec((None, H, tm, D), lambda b, j: (b, 0, j, 0)),
            pl.BlockSpec((None, H, tm, D), lambda b, j: (b, 0, j, 0)),
            pl.BlockSpec((None, H, tm, D), lambda b, j: (b, 0, j, 0)),
        ),
        scratch_shapes=[pltpu.VMEM((tm, 3 * dim), jnp.float32)],
        compiler_params=pltpu.CompilerParams(
            dimension_semantics=("parallel", "parallel")),
        cost_estimate=pl.CostEstimate(
            flops=2 * B * L * dim * 3 * dim,
            transcendentals=2 * B * L * H,
            bytes_accessed=(B * L * dim * 2 + dim * 3 * dim * 2 + 3 * dim * 4
                            + 4 * B * L * D * 4 + 3 * B * H * L * D * 2)),
    )(x_bf16, w_perm, b_perm, ca_q, cb_q, ca_k, cb_k)

    # ---- Kernel 2: flash attention ----
    attn = pl.pallas_call(
        _flash_attention_kernel,
        out_shape=jax.ShapeDtypeStruct((B, L, dim), jnp.bfloat16),
        grid=(B, H, L // tq, L // tk),
        in_specs=[
            pl.BlockSpec((None, None, tq, D), lambda b, h, qi, ki: (b, h, qi, 0)),
            pl.BlockSpec((None, None, tk, D), lambda b, h, qi, ki: (b, h, ki, 0)),
            pl.BlockSpec((None, None, tk, D), lambda b, h, qi, ki: (b, h, ki, 0)),
        ],
        out_specs=pl.BlockSpec((None, tq, D), lambda b, h, qi, ki: (b, qi, h)),
        scratch_shapes=[
            pltpu.VMEM((tq, 1), jnp.float32),     # running max
            pltpu.VMEM((tq, 1), jnp.float32),     # running denom
            pltpu.VMEM((tq, D), jnp.float32),     # accumulator
        ],
        compiler_params=pltpu.CompilerParams(
            dimension_semantics=("parallel", "parallel", "parallel", "arbitrary")),
        cost_estimate=pl.CostEstimate(
            flops=4 * B * H * L * L * D,
            transcendentals=B * H * L * L,
            bytes_accessed=(B * H * L * D * 2                      # Q read once
                            + 2 * (L // tq) * B * H * L * D * 2    # K,V re-read L/tq times
                            + B * L * dim * 2)),                   # output
    )(q, k, v)

    # ---- Kernel 3: output projection ----
    M = B * L
    assert M % tm == 0
    out = pl.pallas_call(
        _proj_kernel,
        out_shape=jax.ShapeDtypeStruct((M, dim), x.dtype),
        grid=(M // tm,),
        in_specs=[
            pl.BlockSpec((tm, dim), lambda i: (i, 0)),
            pl.BlockSpec((dim, dim), lambda i: (0, 0),                 # W_proj resident
                         pipeline_mode=pl.Buffered(1)),
            pl.BlockSpec((1, dim), lambda i: (0, 0),
                         pipeline_mode=pl.Buffered(1)),
        ],
        out_specs=pl.BlockSpec((tm, dim), lambda i: (i, 0)),
        compiler_params=pltpu.CompilerParams(dimension_semantics=("parallel",)),
        cost_estimate=pl.CostEstimate(
            flops=2 * M * dim * dim,
            transcendentals=0,
            bytes_accessed=M * dim * 2 + dim * dim * 2 + dim * 4 + M * dim * 4),
    )(attn.reshape(M, dim), w_proj_bf16, b_proj_2d)

    return out.reshape(B, L, dim)


# ---------------------------------------------------------------------------
# Pure-JAX reference matching the PyTorch module exactly (f32)
# ---------------------------------------------------------------------------
def self_attention_ref(x, pe, w_qkv, b_qkv, q_scale, k_scale, w_proj, b_proj, *,
                       num_heads):
    B, L, dim = x.shape
    D = dim // num_heads
    qkv = x @ w_qkv + b_qkv
    qkv = qkv.reshape(B, L, 3, num_heads, D)
    q = jnp.transpose(qkv[:, :, 0], (0, 2, 1, 3))
    k = jnp.transpose(qkv[:, :, 1], (0, 2, 1, 3))
    v = jnp.transpose(qkv[:, :, 2], (0, 2, 1, 3))

    def rms_norm(t, scale):
        rrms = jax.lax.rsqrt(
            jnp.mean(t.astype(jnp.float32) ** 2, axis=-1, keepdims=True) + 1e-6)
        return t * rrms * scale

    q = rms_norm(q, q_scale)
    k = rms_norm(k, k_scale)

    def rope(t):
        t_ = t.reshape(*t.shape[:-1], -1, 1, 2)
        out = pe[..., 0] * t_[..., 0] + pe[..., 1] * t_[..., 1]
        return out.reshape(t.shape)

    q, k = rope(q), rope(k)
    s = jnp.einsum("bhqd,bhkd->bhqk", q, k) * (D ** -0.5)
    p = jax.nn.softmax(s, axis=-1)
    o = jnp.einsum("bhqk,bhkd->bhqd", p, v)
    o = jnp.transpose(o, (0, 2, 1, 3)).reshape(B, L, dim)
    return o @ w_proj + b_proj


if __name__ == "__main__":
    # Small shapes consistent with the module, but lane-dense: head_dim=128, dim=256.
    B, L, num_heads, head_dim = 2, 256, 2, 128
    dim = num_heads * head_dim

    key = jax.random.PRNGKey(0)
    kx, kw1, kb1, kqs, kks, kw2, kb2 = jax.random.split(key, 7)

    x = jax.random.normal(kx, (B, L, dim), dtype=jnp.float32)
    w_qkv = jax.random.normal(kw1, (dim, 3 * dim), dtype=jnp.float32) * dim ** -0.5
    b_qkv = jax.random.normal(kb1, (3 * dim,), dtype=jnp.float32) * 0.02
    q_scale = 1.0 + 0.1 * jax.random.normal(kqs, (head_dim,), dtype=jnp.float32)
    k_scale = 1.0 + 0.1 * jax.random.normal(kks, (head_dim,), dtype=jnp.float32)
    w_proj = jax.random.normal(kw2, (dim, dim), dtype=jnp.float32) * dim ** -0.5
    b_proj = jax.random.normal(kb2, (dim,), dtype=jnp.float32) * 0.02

    # RoPE rotation matrices: pe[..., i] = [[cos, -sin], [sin, cos]]
    pos = jnp.arange(L, dtype=jnp.float32)
    omega = 1.0 / (10000.0 ** (jnp.arange(head_dim // 2, dtype=jnp.float32)
                               / (head_dim // 2)))
    ang = pos[:, None] * omega[None, :]                       # (L, D//2)
    row0 = jnp.stack([jnp.cos(ang), -jnp.sin(ang)], axis=-1)
    row1 = jnp.stack([jnp.sin(ang), jnp.cos(ang)], axis=-1)
    pe = jnp.stack([row0, row1], axis=-2)[None, None]         # (1, 1, L, D//2, 2, 2)

    attn_fn = jax.jit(functools.partial(self_attention, num_heads=num_heads))
    out = attn_fn(x, pe, w_qkv, b_qkv, q_scale, k_scale, w_proj, b_proj)
    out = jax.block_until_ready(out)

    ref = self_attention_ref(x, pe, w_qkv, b_qkv, q_scale, k_scale, w_proj, b_proj,
                             num_heads=num_heads)
    assert out.shape == (B, L, dim), out.shape
    # bf16 MXU matmuls with f32 accumulation -> loosened tolerance vs the f32 reference.
    assert jnp.allclose(out, ref, atol=5e-2, rtol=5e-2), float(
        jnp.max(jnp.abs(out - ref)))
    print("KERNEL_OK")
</pallas_src>

<mosaic_0001>
module attributes {stable_mosaic.version = 11 : i64} {
  func.func @_qkv_norm_rope_kernel(%arg0: i32, %arg1: i32, %arg2: memref<1x256x256xbf16, #tpu.memory_space<vmem>>, %arg3: memref<256x768xbf16, #tpu.memory_space<vmem>>, %arg4: memref<1x768xf32, #tpu.memory_space<vmem>>, %arg5: memref<1x256x128xf32, #tpu.memory_space<vmem>>, %arg6: memref<1x256x128xf32, #tpu.memory_space<vmem>>, %arg7: memref<1x256x128xf32, #tpu.memory_space<vmem>>, %arg8: memref<1x256x128xf32, #tpu.memory_space<vmem>>, %arg9: memref<1x2x256x128xbf16, #tpu.memory_space<vmem>>, %arg10: memref<1x2x256x128xbf16, #tpu.memory_space<vmem>>, %arg11: memref<1x2x256x128xbf16, #tpu.memory_space<vmem>>, %arg12: memref<256x768xf32, #tpu.memory_space<vmem>>) attributes {dimension_semantics = [#tpu.dimension_semantics<parallel>, #tpu.dimension_semantics<parallel>], iteration_bounds = array<i64: 2, 1>, scalar_prefetch = 0 : i64, scratch_operands = 1 : i64, tpu.core_type = #tpu.core_type<tc>, window_params = [{transform_indices = @transform_0, window_bounds = array<i64: 1, 256, 256>}, {pipeline_mode = #tpu.pipeline_mode<synchronous>, transform_indices = @transform_1, window_bounds = array<i64: 256, 768>}, {pipeline_mode = #tpu.pipeline_mode<synchronous>, transform_indices = @transform_2, window_bounds = array<i64: 1, 768>}, {transform_indices = @transform_3, window_bounds = array<i64: 1, 256, 128>}, {transform_indices = @transform_4, window_bounds = array<i64: 1, 256, 128>}, {transform_indices = @transform_5, window_bounds = array<i64: 1, 256, 128>}, {transform_indices = @transform_6, window_bounds = array<i64: 1, 256, 128>}, {transform_indices = @transform_7, window_bounds = array<i64: 1, 2, 256, 128>}, {transform_indices = @transform_8, window_bounds = array<i64: 1, 2, 256, 128>}, {transform_indices = @transform_9, window_bounds = array<i64: 1, 2, 256, 128>}]} {
    %c0 = arith.constant 0 : index
    %c0_0 = arith.constant 0 : index
    %c0_1 = arith.constant 0 : index
    %0 = vector.load %arg2[%c0, %c0_0, %c0_1] : memref<1x256x256xbf16, #tpu.memory_space<vmem>>, vector<1x256x256xbf16>
    %1 = vector.shape_cast %0 : vector<1x256x256xbf16> to vector<256x256xbf16>
    %c0_2 = arith.constant 0 : index
    %c0_3 = arith.constant 0 : index
    %2 = vector.load %arg3[%c0_2, %c0_3] : memref<256x768xbf16, #tpu.memory_space<vmem>>, vector<256x768xbf16>
    %cst = arith.constant dense<0.000000e+00> : vector<256x768xf32>
    %3 = tpu.matmul %1, %2, %cst {dimension_numbers = #tpu.dot_dimension_numbers<[1], [0], [0], [1], [0, 0, 1, 1], [], []>} : vector<256x256xbf16>, vector<256x768xbf16>, vector<256x768xf32> -> vector<256x768xf32>
    %c0_4 = arith.constant 0 : index
    %c0_5 = arith.constant 0 : index
    %4 = vector.load %arg4[%c0_4, %c0_5] : memref<1x768xf32, #tpu.memory_space<vmem>>, vector<1x768xf32>
    %5 = vector.broadcast %4 : vector<1x768xf32> to vector<256x768xf32>
    %6 = arith.addf %3, %5 : vector<256x768xf32>
    %c0_6 = arith.constant 0 : index
    %c0_7 = arith.constant 0 : index
    %7 = vector.load %arg12[%c0_6, %c0_7] : memref<256x768xf32, #tpu.memory_space<vmem>>, vector<256x768xf32>
    tpu.vector_store %arg12[%c0_6, %c0_7], %6 {strides = array<i32>} : memref<256x768xf32, #tpu.memory_space<vmem>>, vector<256x768xf32>,
    %c0_8 = arith.constant 0 : index
    %c0_9 = arith.constant 0 : index
    %c0_10 = arith.constant 0 : index
    %8 = vector.load %arg5[%c0_8, %c0_9, %c0_10] : memref<1x256x128xf32, #tpu.memory_space<vmem>>, vector<1x256x128xf32>
    %9 = vector.shape_cast %8 : vector<1x256x128xf32> to vector<256x128xf32>
    %c0_11 = arith.constant 0 : index
    %c0_12 = arith.constant 0 : index
    %c0_13 = arith.constant 0 : index
    %10 = vector.load %arg6[%c0_11, %c0_12, %c0_13] : memref<1x256x128xf32, #tpu.memory_space<vmem>>, vector<1x256x128xf32>
    %11 = vector.shape_cast %10 : vector<1x256x128xf32> to vector<256x128xf32>
    %c0_14 = arith.constant 0 : index
    %c0_15 = arith.constant 0 : index
    %c0_16 = arith.constant 0 : index
    %12 = vector.load %arg7[%c0_14, %c0_15, %c0_16] : memref<1x256x128xf32, #tpu.memory_space<vmem>>, vector<1x256x128xf32>
    %13 = vector.shape_cast %12 : vector<1x256x128xf32> to vector<256x128xf32>
    %c0_17 = arith.constant 0 : index
    %c0_18 = arith.constant 0 : index
    %c0_19 = arith.constant 0 : index
    %14 = vector.load %arg8[%c0_17, %c0_18, %c0_19] : memref<1x256x128xf32, #tpu.memory_space<vmem>>, vector<1x256x128xf32>
    %15 = vector.shape_cast %14 : vector<1x256x128xf32> to vector<256x128xf32>
    %c0_i32 = arith.constant 0 : i32
    %c2_i32 = arith.constant 2 : i32
    %16 = arith.addi %c0_i32, %c2_i32 : i32
    %c1_i32 = arith.constant 1 : i32
    scf.for %arg13 = %c0_i32 to %16 step %c1_i32  : i32 {
      %c128_i32 = arith.constant 128 : i32
      %17 = arith.muli %arg13, %c128_i32 : i32
      %18 = tpu.assume_multiple %17, 128 : i32
      %c128_i32_21 = arith.constant 128 : i32
      %19 = arith.muli %arg13, %c128_i32_21 : i32
      %c256_i32 = arith.constant 256 : i32
      %20 = arith.addi %c256_i32, %19 : i32
      %21 = tpu.assume_multiple %20, 128 : i32
      %c128_i32_22 = arith.constant 128 : i32
      %22 = arith.muli %arg13, %c128_i32_22 : i32
      %c512_i32 = arith.constant 512 : i32
      %23 = arith.addi %c512_i32, %22 : i32
      %24 = tpu.assume_multiple %23, 128 : i32
      %c0_23 = arith.constant 0 : index
      %25 = arith.index_cast %18 : i32 to index
      %26 = vector.load %arg12[%c0_23, %25] : memref<256x768xf32, #tpu.memory_space<vmem>>, vector<256x128xf32>
      %c0_24 = arith.constant 0 : index
      %27 = arith.index_cast %21 : i32 to index
      %28 = vector.load %arg12[%c0_24, %27] : memref<256x768xf32, #tpu.memory_space<vmem>>, vector<256x128xf32>
      %c0_25 = arith.constant 0 : index
      %29 = arith.index_cast %24 : i32 to index
      %30 = vector.load %arg12[%c0_25, %29] : memref<256x768xf32, #tpu.memory_space<vmem>>, vector<256x128xf32>
      %31 = arith.mulf %26, %26 : vector<256x128xf32>
      %cst_26 = arith.constant dense<0.000000e+00> : vector<256xf32>
      %32 = vector.multi_reduction <add>, %31, %cst_26 [1] : vector<256x128xf32> to vector<256xf32>
      %33 = vector.shape_cast %32 : vector<256xf32> to vector<256x1xf32>
      %cst_27 = arith.constant 1.280000e+02 : f32
      %34 = vector.broadcast %cst_27 : f32 to vector<256x1xf32>
      %35 = arith.divf %33, %34 : vector<256x1xf32>
      %cst_28 = arith.constant 9.99999997E-7 : f32
      %36 = vector.broadcast %cst_28 : f32 to vector<256x1xf32>
      %37 = arith.addf %35, %36 : vector<256x1xf32>
      %38 = math.rsqrt %37 : vector<256x1xf32>
      %39 = vector.broadcast %38 : vector<256x1xf32> to vector<256x128xf32>
      %40 = arith.mulf %26, %39 : vector<256x128xf32>
      %41 = arith.mulf %28, %28 : vector<256x128xf32>
      %cst_29 = arith.constant dense<0.000000e+00> : vector<256xf32>
      %42 = vector.multi_reduction <add>, %41, %cst_29 [1] : vector<256x128xf32> to vector<256xf32>
      %43 = vector.shape_cast %42 : vector<256xf32> to vector<256x1xf32>
      %cst_30 = arith.constant 1.280000e+02 : f32
      %44 = vector.broadcast %cst_30 : f32 to vector<256x1xf32>
      %45 = arith.divf %43, %44 : vector<256x1xf32>
      %cst_31 = arith.constant 9.99999997E-7 : f32
      %46 = vector.broadcast %cst_31 : f32 to vector<256x1xf32>
      %47 = arith.addf %45, %46 : vector<256x1xf32>
      %48 = math.rsqrt %47 : vector<256x1xf32>
      %49 = vector.broadcast %48 : vector<256x1xf32> to vector<256x128xf32>
      %50 = arith.mulf %28, %49 : vector<256x128xf32>
      %51 = arith.mulf %9, %40 : vector<256x128xf32>
      %c64_i32 = arith.constant 64 : i32
      %52 = tpu.dynamic_rotate %40 by %c64_i32 dim 1 : vector<256x128xf32>, i32 -> vector<256x128xf32>
      %53 = arith.mulf %11, %52 : vector<256x128xf32>
      %54 = arith.addf %51, %53 : vector<256x128xf32>
      %55 = arith.mulf %13, %50 : vector<256x128xf32>
      %c64_i32_32 = arith.constant 64 : i32
      %56 = tpu.dynamic_rotate %50 by %c64_i32_32 dim 1 : vector<256x128xf32>, i32 -> vector<256x128xf32>
      %57 = arith.mulf %15, %56 : vector<256x128xf32>
      %58 = arith.addf %55, %57 : vector<256x128xf32>
      %59 = arith.truncf %54 : vector<256x128xf32> to vector<256x128xbf16>
      %c0_33 = arith.constant 0 : index
      %60 = arith.index_cast %arg13 : i32 to index
      %c0_34 = arith.constant 0 : index
      %c0_35 = arith.constant 0 : index
      %61 = vector.load %arg9[%c0_33, %60, %c0_34, %c0_35] : memref<1x2x256x128xbf16, #tpu.memory_space<vmem>>, vector<1x1x256x128xbf16>
      %62 = vector.shape_cast %61 : vector<1x1x256x128xbf16> to vector<256x128xbf16>
      %63 = vector.shape_cast %59 : vector<256x128xbf16> to vector<1x1x256x128xbf16>
      tpu.vector_store %arg9[%c0_33, %60, %c0_34, %c0_35], %63 {strides = array<i32>} : memref<1x2x256x128xbf16, #tpu.memory_space<vmem>>, vector<1x1x256x128xbf16>,
      %64 = arith.truncf %58 : vector<256x128xf32> to vector<256x128xbf16>
      %c0_36 = arith.constant 0 : index
      %65 = arith.index_cast %arg13 : i32 to index
      %c0_37 = arith.constant 0 : index
      %c0_38 = arith.constant 0 : index
      %66 = vector.load %arg10[%c0_36, %65, %c0_37, %c0_38] : memref<1x2x256x128xbf16, #tpu.memory_space<vmem>>, vector<1x1x256x128xbf16>
      %67 = vector.shape_cast %66 : vector<1x1x256x128xbf16> to vector<256x128xbf16>
      %68 = vector.shape_cast %64 : vector<256x128xbf16> to vector<1x1x256x128xbf16>
      tpu.vector_store %arg10[%c0_36, %65, %c0_37, %c0_38], %68 {strides = array<i32>} : memref<1x2x256x128xbf16, #tpu.memory_space<vmem>>, vector<1x1x256x128xbf16>,
      %69 = arith.truncf %30 : vector<256x128xf32> to vector<256x128xbf16>
      %c0_39 = arith.constant 0 : index
      %70 = arith.index_cast %arg13 : i32 to index
      %c0_40 = arith.constant 0 : index
      %c0_41 = arith.constant 0 : index
      %71 = vector.load %arg11[%c0_39, %70, %c0_40, %c0_41] : memref<1x2x256x128xbf16, #tpu.memory_space<vmem>>, vector<1x1x256x128xbf16>
      %72 = vector.shape_cast %71 : vector<1x1x256x128xbf16> to vector<256x128xbf16>
      %73 = vector.shape_cast %69 : vector<256x128xbf16> to vector<1x1x256x128xbf16>
      tpu.vector_store %arg11[%c0_39, %70, %c0_40, %c0_41], %73 {strides = array<i32>} : memref<1x2x256x128xbf16, #tpu.memory_space<vmem>>, vector<1x1x256x128xbf16>,
    }
    %c2_i32_20 = arith.constant 2 : i32
    return
  }
  func.func @transform_0(%arg0: i32, %arg1: i32) -> (i32, i32, i32) {
    %c0_i32 = arith.constant 0 : i32
    %c0_i32_0 = arith.constant 0 : i32
    return %arg0, %arg1, %c0_i32 : i32, i32, i32
  }
  func.func @transform_1(%arg0: i32, %arg1: i32) -> (i32, i32) {
    %c0_i32 = arith.constant 0 : i32
    %c0_i32_0 = arith.constant 0 : i32
    %c0_i32_1 = arith.constant 0 : i32
    return %c0_i32, %c0_i32_0 : i32, i32
  }
  func.func @transform_2(%arg0: i32, %arg1: i32) -> (i32, i32) {
    %c0_i32 = arith.constant 0 : i32
    %c0_i32_0 = arith.constant 0 : i32
    %c0_i32_1 = arith.constant 0 : i32
    return %c0_i32, %c0_i32_0 : i32, i32
  }
  func.func @transform_3(%arg0: i32, %arg1: i32) -> (i32, i32, i32) {
    %c0_i32 = arith.constant 0 : i32
    %c0_i32_0 = arith.constant 0 : i32
    return %arg0, %arg1, %c0_i32 : i32, i32, i32
  }
  func.func @transform_4(%arg0: i32, %arg1: i32) -> (i32, i32, i32) {
    %c0_i32 = arith.constant 0 : i32
    %c0_i32_0 = arith.constant 0 : i32
    return %arg0, %arg1, %c0_i32 : i32, i32, i32
  }
  func.func @transform_5(%arg0: i32, %arg1: i32) -> (i32, i32, i32) {
    %c0_i32 = arith.constant 0 : i32
    %c0_i32_0 = arith.constant 0 : i32
    return %arg0, %arg1, %c0_i32 : i32, i32, i32
  }
  func.func @transform_6(%arg0: i32, %arg1: i32) -> (i32, i32, i32) {
    %c0_i32 = arith.constant 0 : i32
    %c0_i32_0 = arith.constant 0 : i32
    return %arg0, %arg1, %c0_i32 : i32, i32, i32
  }
  func.func @transform_7(%arg0: i32, %arg1: i32) -> (i32, i32, i32, i32) {
    %c0_i32 = arith.constant 0 : i32
    %c0_i32_0 = arith.constant 0 : i32
    %c0_i32_1 = arith.constant 0 : i32
    return %arg0, %c0_i32, %arg1, %c0_i32_0 : i32, i32, i32, i32
  }
  func.func @transform_8(%arg0: i32, %arg1: i32) -> (i32, i32, i32, i32) {
    %c0_i32 = arith.constant 0 : i32
    %c0_i32_0 = arith.constant 0 : i32
    %c0_i32_1 = arith.constant 0 : i32
    return %arg0, %c0_i32, %arg1, %c0_i32_0 : i32, i32, i32, i32
  }
  func.func @transform_9(%arg0: i32, %arg1: i32) -> (i32, i32, i32, i32) {
    %c0_i32 = arith.constant 0 : i32
    %c0_i32_0 = arith.constant 0 : i32
    %c0_i32_1 = arith.constant 0 : i32
    return %arg0, %c0_i32, %arg1, %c0_i32_0 : i32, i32, i32, i32
  }
}

module attributes {stable_mosaic.version = 11 : i64} {
  func.func @_flash_attention_kernel(%arg0: i32, %arg1: i32, %arg2: i32, %arg3: i32, %arg4: memref<1x1x256x128xbf16, #tpu.memory_space<vmem>>, %arg5: memref<1x1x256x128xbf16, #tpu.memory_space<vmem>>, %arg6: memref<1x1x256x128xbf16, #tpu.memory_space<vmem>>, %arg7: memref<1x256x128xbf16, #tpu.memory_space<vmem>>, %arg8: memref<256x1xf32, #tpu.memory_space<vmem>>, %arg9: memref<256x1xf32, #tpu.memory_space<vmem>>, %arg10: memref<256x128xf32, #tpu.memory_space<vmem>>) attributes {dimension_semantics = [#tpu.dimension_semantics<parallel>, #tpu.dimension_semantics<parallel>, #tpu.dimension_semantics<parallel>, #tpu.dimension_semantics<arbitrary>], iteration_bounds = array<i64: 2, 2, 1, 1>, scalar_prefetch = 0 : i64, scratch_operands = 3 : i64, tpu.core_type = #tpu.core_type<tc>, window_params = [{transform_indices = @transform_0, window_bounds = array<i64: 1, 1, 256, 128>}, {transform_indices = @transform_1, window_bounds = array<i64: 1, 1, 256, 128>}, {transform_indices = @transform_2, window_bounds = array<i64: 1, 1, 256, 128>}, {transform_indices = @transform_3, window_bounds = array<i64: 1, 256, 128>}]} {
    %c0_i32 = arith.constant 0 : i32
    %0 = arith.cmpi eq, %arg3, %c0_i32 : i32
    %1 = arith.extui %0 : i1 to i32
    %c0_i32_0 = arith.constant 0 : i32
    %2 = arith.cmpi ne, %1, %c0_i32_0 : i32
    scf.if %2 {
      %cst_29 = arith.constant 0xFF800000 : f32
      %36 = vector.broadcast %cst_29 : f32 to vector<256x1xf32>
      %c0_30 = arith.constant 0 : index
      %c0_31 = arith.constant 0 : index
      %37 = vector.load %arg8[%c0_30, %c0_31] : memref<256x1xf32, #tpu.memory_space<vmem>>, vector<256x1xf32>
      tpu.vector_store %arg8[%c0_30, %c0_31], %36 {strides = array<i32>} : memref<256x1xf32, #tpu.memory_space<vmem>>, vector<256x1xf32>,
      %cst_32 = arith.constant 0.000000e+00 : f32
      %38 = vector.broadcast %cst_32 : f32 to vector<256x1xf32>
      %c0_33 = arith.constant 0 : index
      %c0_34 = arith.constant 0 : index
      %39 = vector.load %arg9[%c0_33, %c0_34] : memref<256x1xf32, #tpu.memory_space<vmem>>, vector<256x1xf32>
      tpu.vector_store %arg9[%c0_33, %c0_34], %38 {strides = array<i32>} : memref<256x1xf32, #tpu.memory_space<vmem>>, vector<256x1xf32>,
      %cst_35 = arith.constant 0.000000e+00 : f32
      %40 = vector.broadcast %cst_35 : f32 to vector<256x128xf32>
      %c0_36 = arith.constant 0 : index
      %c0_37 = arith.constant 0 : index
      %41 = vector.load %arg10[%c0_36, %c0_37] : memref<256x128xf32, #tpu.memory_space<vmem>>, vector<256x128xf32>
      tpu.vector_store %arg10[%c0_36, %c0_37], %40 {strides = array<i32>} : memref<256x128xf32, #tpu.memory_space<vmem>>, vector<256x128xf32>,
    } else {
    }
    %c0 = arith.constant 0 : index
    %c0_1 = arith.constant 0 : index
    %c0_2 = arith.constant 0 : index
    %c0_3 = arith.constant 0 : index
    %3 = vector.load %arg4[%c0, %c0_1, %c0_2, %c0_3] : memref<1x1x256x128xbf16, #tpu.memory_space<vmem>>, vector<1x1x256x128xbf16>
    %4 = vector.shape_cast %3 : vector<1x1x256x128xbf16> to vector<256x128xbf16>
    %c0_4 = arith.constant 0 : index
    %c0_5 = arith.constant 0 : index
    %c0_6 = arith.constant 0 : index
    %c0_7 = arith.constant 0 : index
    %5 = vector.load %arg5[%c0_4, %c0_5, %c0_6, %c0_7] : memref<1x1x256x128xbf16, #tpu.memory_space<vmem>>, vector<1x1x256x128xbf16>
    %6 = vector.shape_cast %5 : vector<1x1x256x128xbf16> to vector<256x128xbf16>
    %cst = arith.constant dense<0.000000e+00> : vector<256x256xf32>
    %7 = tpu.matmul %4, %6, %cst {dimension_numbers = #tpu.dot_dimension_numbers<[1], [1], [0], [0], [0, 0, 1, 0], [], []>} : vector<256x128xbf16>, vector<256x128xbf16>, vector<256x256xf32> -> vector<256x256xf32>
    %c0_8 = arith.constant 0 : index
    %c0_9 = arith.constant 0 : index
    %8 = vector.load %arg8[%c0_8, %c0_9] : memref<256x1xf32, #tpu.memory_space<vmem>>, vector<256x1xf32>
    %cst_10 = arith.constant dense<0xFF800000> : vector<256xf32>
    %9 = vector.multi_reduction <maximumf>, %7, %cst_10 [1] : vector<256x256xf32> to vector<256xf32>
    %10 = vector.shape_cast %9 : vector<256xf32> to vector<256x1xf32>
    %11 = arith.maximumf %8, %10 : vector<256x1xf32>
    %12 = arith.subf %8, %11 : vector<256x1xf32>
    %13 = math.exp %12 : vector<256x1xf32>
    %14 = vector.broadcast %11 : vector<256x1xf32> to vector<256x256xf32>
    %15 = arith.subf %7, %14 : vector<256x256xf32>
    %16 = math.exp %15 : vector<256x256xf32>
    %c0_11 = arith.constant 0 : index
    %c0_12 = arith.constant 0 : index
    %17 = vector.load %arg9[%c0_11, %c0_12] : memref<256x1xf32, #tpu.memory_space<vmem>>, vector<256x1xf32>
    %18 = arith.mulf %13, %17 : vector<256x1xf32>
    %cst_13 = arith.constant dense<0.000000e+00> : vector<256xf32>
    %19 = vector.multi_reduction <add>, %16, %cst_13 [1] : vector<256x256xf32> to vector<256xf32>
    %20 = vector.shape_cast %19 : vector<256xf32> to vector<256x1xf32>
    %21 = arith.addf %18, %20 : vector<256x1xf32>
    %c0_14 = arith.constant 0 : index
    %c0_15 = arith.constant 0 : index
    %22 = vector.load %arg9[%c0_14, %c0_15] : memref<256x1xf32, #tpu.memory_space<vmem>>, vector<256x1xf32>
    tpu.vector_store %arg9[%c0_14, %c0_15], %21 {strides = array<i32>} : memref<256x1xf32, #tpu.memory_space<vmem>>, vector<256x1xf32>,
    %c0_16 = arith.constant 0 : index
    %c0_17 = arith.constant 0 : index
    %23 = vector.load %arg10[%c0_16, %c0_17] : memref<256x128xf32, #tpu.memory_space<vmem>>, vector<256x128xf32>
    %24 = vector.broadcast %13 : vector<256x1xf32> to vector<256x128xf32>
    %25 = arith.mulf %24, %23 : vector<256x128xf32>
    %26 = arith.truncf %16 : vector<256x256xf32> to vector<256x256xbf16>
    %c0_18 = arith.constant 0 : index
    %c0_19 = arith.constant 0 : index
    %c0_20 = arith.constant 0 : index
    %c0_21 = arith.constant 0 : index
    %27 = vector.load %arg6[%c0_18, %c0_19, %c0_20, %c0_21] : memref<1x1x256x128xbf16, #tpu.memory_space<vmem>>, vector<1x1x256x128xbf16>
    %28 = vector.shape_cast %27 : vector<1x1x256x128xbf16> to vector<256x128xbf16>
    %cst_22 = arith.constant dense<0.000000e+00> : vector<256x128xf32>
    %29 = tpu.matmul %26, %28, %cst_22 {dimension_numbers = #tpu.dot_dimension_numbers<[1], [0], [0], [1], [0, 0, 1, 1], [], []>} : vector<256x256xbf16>, vector<256x128xbf16>, vector<256x128xf32> -> vector<256x128xf32>
    %30 = arith.addf %25, %29 : vector<256x128xf32>
    %c0_23 = arith.constant 0 : index
    %c0_24 = arith.constant 0 : index
    %31 = vector.load %arg10[%c0_23, %c0_24] : memref<256x128xf32, #tpu.memory_space<vmem>>, vector<256x128xf32>
    tpu.vector_store %arg10[%c0_23, %c0_24], %30 {strides = array<i32>} : memref<256x128xf32, #tpu.memory_space<vmem>>, vector<256x128xf32>,
    %c0_25 = arith.constant 0 : index
    %c0_26 = arith.constant 0 : index
    %32 = vector.load %arg8[%c0_25, %c0_26] : memref<256x1xf32, #tpu.memory_space<vmem>>, vector<256x1xf32>
    tpu.vector_store %arg8[%c0_25, %c0_26], %11 {strides = array<i32>} : memref<256x1xf32, #tpu.memory_space<vmem>>, vector<256x1xf32>,
    %c0_i32_27 = arith.constant 0 : i32
    %33 = arith.cmpi eq, %arg3, %c0_i32_27 : i32
    %34 = arith.extui %33 : i1 to i32
    %c0_i32_28 = arith.constant 0 : i32
    %35 = arith.cmpi ne, %34, %c0_i32_28 : i32
    scf.if %35 {
      %c0_29 = arith.constant 0 : index
      %c0_30 = arith.constant 0 : index
      %36 = vector.load %arg10[%c0_29, %c0_30] : memref<256x128xf32, #tpu.memory_space<vmem>>, vector<256x128xf32>
      %c0_31 = arith.constant 0 : index
      %c0_32 = arith.constant 0 : index
      %37 = vector.load %arg9[%c0_31, %c0_32] : memref<256x1xf32, #tpu.memory_space<vmem>>, vector<256x1xf32>
      %38 = tpu.reciprocal %37 {approx = true} : vector<256x1xf32> -> vector<256x1xf32>
      %39 = vector.broadcast %38 : vector<256x1xf32> to vector<256x128xf32>
      %40 = arith.mulf %36, %39 : vector<256x128xf32>
      %41 = arith.truncf %40 : vector<256x128xf32> to vector<256x128xbf16>
      %c0_33 = arith.constant 0 : index
      %c0_34 = arith.constant 0 : index
      %c0_35 = arith.constant 0 : index
      %42 = vector.load %arg7[%c0_33, %c0_34, %c0_35] : memref<1x256x128xbf16, #tpu.memory_space<vmem>>, vector<1x256x128xbf16>
      %43 = vector.shape_cast %42 : vector<1x256x128xbf16> to vector<256x128xbf16>
      %44 = vector.shape_cast %41 : vector<256x128xbf16> to vector<1x256x128xbf16>
      tpu.vector_store %arg7[%c0_33, %c0_34, %c0_35], %44 {strides = array<i32>} : memref<1x256x128xbf16, #tpu.memory_space<vmem>>, vector<1x256x128xbf16>,
    } else {
    }
    return
  }
  func.func @transform_0(%arg0: i32, %arg1: i32, %arg2: i32, %arg3: i32) -> (i32, i32, i32, i32) {
    %c0_i32 = arith.constant 0 : i32
    %c0_i32_0 = arith.constant 0 : i32
    return %arg0, %arg1, %arg2, %c0_i32 : i32, i32, i32, i32
  }
  func.func @transform_1(%arg0: i32, %arg1: i32, %arg2: i32, %arg3: i32) -> (i32, i32, i32, i32) {
    %c0_i32 = arith.constant 0 : i32
    %c0_i32_0 = arith.constant 0 : i32
    return %arg0, %arg1, %arg3, %c0_i32 : i32, i32, i32, i32
  }
  func.func @transform_2(%arg0: i32, %arg1: i32, %arg2: i32, %arg3: i32) -> (i32, i32, i32, i32) {
    %c0_i32 = arith.constant 0 : i32
    %c0_i32_0 = arith.constant 0 : i32
    return %arg0, %arg1, %arg3, %c0_i32 : i32, i32, i32, i32
  }
  func.func @transform_3(%arg0: i32, %arg1: i32, %arg2: i32, %arg3: i32) -> (i32, i32, i32) {
    %c0_i32 = arith.constant 0 : i32
    return %arg0, %arg2, %arg1 : i32, i32, i32
  }
}

module attributes {stable_mosaic.version = 11 : i64} {
  func.func @_proj_kernel(%arg0: i32, %arg1: memref<256x256xbf16, #tpu.memory_space<vmem>>, %arg2: memref<256x256xbf16, #tpu.memory_space<vmem>>, %arg3: memref<1x256xf32, #tpu.memory_space<vmem>>, %arg4: memref<256x256xf32, #tpu.memory_space<vmem>>) attributes {dimension_semantics = [#tpu.dimension_semantics<parallel>], iteration_bounds = array<i64: 2>, scalar_prefetch = 0 : i64, scratch_operands = 0 : i64, tpu.core_type = #tpu.core_type<tc>, window_params = [{transform_indices = @transform_0, window_bounds = array<i64: 256, 256>}, {pipeline_mode = #tpu.pipeline_mode<synchronous>, transform_indices = @transform_1, window_bounds = array<i64: 256, 256>}, {pipeline_mode = #tpu.pipeline_mode<synchronous>, transform_indices = @transform_2, window_bounds = array<i64: 1, 256>}, {transform_indices = @transform_3, window_bounds = array<i64: 256, 256>}]} {
    %c0 = arith.constant 0 : index
    %c0_0 = arith.constant 0 : index
    %0 = vector.load %arg1[%c0, %c0_0] : memref<256x256xbf16, #tpu.memory_space<vmem>>, vector<256x256xbf16>
    %c0_1 = arith.constant 0 : index
    %c0_2 = arith.constant 0 : index
    %1 = vector.load %arg2[%c0_1, %c0_2] : memref<256x256xbf16, #tpu.memory_space<vmem>>, vector<256x256xbf16>
    %cst = arith.constant dense<0.000000e+00> : vector<256x256xf32>
    %2 = tpu.matmul %0, %1, %cst {dimension_numbers = #tpu.dot_dimension_numbers<[1], [0], [0], [1], [0, 0, 1, 1], [], []>} : vector<256x256xbf16>, vector<256x256xbf16>, vector<256x256xf32> -> vector<256x256xf32>
    %c0_3 = arith.constant 0 : index
    %c0_4 = arith.constant 0 : index
    %3 = vector.load %arg3[%c0_3, %c0_4] : memref<1x256xf32, #tpu.memory_space<vmem>>, vector<1x256xf32>
    %4 = vector.broadcast %3 : vector<1x256xf32> to vector<256x256xf32>
    %5 = arith.addf %2, %4 : vector<256x256xf32>
    %c0_5 = arith.constant 0 : index
    %c0_6 = arith.constant 0 : index
    %6 = vector.load %arg4[%c0_5, %c0_6] : memref<256x256xf32, #tpu.memory_space<vmem>>, vector<256x256xf32>
    tpu.vector_store %arg4[%c0_5, %c0_6], %5 {strides = array<i32>} : memref<256x256xf32, #tpu.memory_space<vmem>>, vector<256x256xf32>,
    return
  }
  func.func @transform_0(%arg0: i32) -> (i32, i32) {
    %c0_i32 = arith.constant 0 : i32
    %c0_i32_0 = arith.constant 0 : i32
    return %arg0, %c0_i32 : i32, i32
  }
  func.func @transform_1(%arg0: i32) -> (i32, i32) {
    %c0_i32 = arith.constant 0 : i32
    %c0_i32_0 = arith.constant 0 : i32
    %c0_i32_1 = arith.constant 0 : i32
    return %c0_i32, %c0_i32_0 : i32, i32
  }
  func.func @transform_2(%arg0: i32) -> (i32, i32) {
    %c0_i32 = arith.constant 0 : i32
    %c0_i32_0 = arith.constant 0 : i32
    %c0_i32_1 = arith.constant 0 : i32
    return %c0_i32, %c0_i32_0 : i32, i32
  }
  func.func @transform_3(%arg0: i32) -> (i32, i32) {
    %c0_i32 = arith.constant 0 : i32
    %c0_i32_0 = arith.constant 0 : i32
    return %arg0, %c0_i32 : i32, i32
  }
}

</mosaic_0001>

<llo_original>
// kernel: self_attention.5
$region0: #{self_attention.5}
  #allocation0 [shape = 'u32[]', space=smem, size = 0x4, offset = 0x4, fixed_abs, tag = 'smem constant byte address 0x4 - core index']
  #allocation1 [shape = 'u32[72,128]{1,0:T(1,128)}', space=vmem, size = 0x9000, scoped, tag = 'internal scratch']
  %s0 = inlined_call_operand.vmem [shape: bf16[512,256], index: 0, kind: input, shape index: {}]
  %s1 = inlined_call_operand.vmem [shape: bf16[256,256], index: 1, kind: input, shape index: {}]
  %s2 = inlined_call_operand.vmem [shape: f32[1,256], index: 2, kind: input, shape index: {}]
  %s3 = inlined_call_operand.hbm [shape: f32[512,256], index: 3, kind: output, shape index: {}]
  %s4 = sld [smem:[#allocation0]]
  $region45: #{self_attention.5} parent=0
    _
  %s6 = ssub.s32 1, %s4
  %s7 = scalar_select 0, %s6, %s4
  $region1: #{self_attention.5} parent=0
    #allocation2 [shape = 'u8[524288]{0}', space=vmem, size = 0x80000, scoped, tag = 'output window, operand 0']
    #allocation3 [shape = 's32[2]{0}', space=sflag, size = 0x8, scoped, tag = 'scoped memory for self_attention.5']
    %8 = vsyncpa [#allocation3], 0
    %s9 = scalar_lea.sflag [#allocation3], 1
    %10 = vsyncpa %s9, 0
    loop: start=0, step=1, limit=4
    $region2: #{self_attention.5} parent=1 // loop_pre_header
      _
    $region3: #{self_attention.5} parent=1 // loop_header
      %s12 = sphi 0, %s16
      %p13 = scmp.ge.s32.totalorder %s12, 4
      %s22 = sphi 0, %s24
      %s25 = sphi 0, %s22
      %s26 = sphi 0, %s25
      %s42 = sphi 0, %s26
      %s46 = sphi 0, %s46
      %s48 = sphi 0, %s46
      %s49 = sphi 0, %s48
      %s63 = sphi 0, %s49
      %s67 = sphi 0, %s67
      %s69 = sphi 0, %s67
      %s70 = sphi 0, %s69
      %s84 = sphi 0, %s70
      %s90 = sphi 0, %s92
      %s93 = sphi 0, %s90
      %s94 = sphi 0, %s93
      %s110 = sphi 0, %s94
    $region4: #{self_attention.5} parent=1 // loop_header_branch
      %15 = sbr.rel (%p13) target = $region8
    $region5: #{self_attention.5} parent=1 // loop_body
      %s17 = ssub.s32 %s12, 1
      %s18 = ssub.s32 %s12, 2
      %s19 = sadd.s32 %s12, 1
      %s20 = ssub.s32 %s12, %s19
      %p21 = scmp.eq.s32.totalorder %s20, 0
      %s23 = sadd.s32 %s22, 1
      %s24 = scalar_select %p21, %s22, %s23
      %p27 = pneg %p21
      %p28 = scmp.eq.s32.totalorder %s12, 1
      %p29 = por %p27, %p28
      %p30 = scmp.ne.s32.totalorder %s22, %s25
      %p31 = scmp.eq.s32.totalorder %s12, 0
      %p32 = por %p30, %p31
      %p33 = scmp.ne.s32.totalorder %s22, %s25
      %p34 = scmp.eq.s32.totalorder %s17, 1
      %p35 = por %p33, %p34
      %p36 = scmp.ne.s32.totalorder %s25, %s26
      %p37 = scmp.eq.s32.totalorder %s17, 0
      %p38 = por %p36, %p37
      %p39 = scmp.ne.s32.totalorder %s25, %s26
      %p40 = scmp.eq.s32.totalorder %s18, 1
      %p41 = por %p39, %p40
      %p43 = scmp.ne.s32.totalorder %s26, %s42
      %p44 = scmp.eq.s32.totalorder %s18, 0
      %p45 = por %p43, %p44
      %s47 = sadd.s32 %s46, 1
      %p50 = scmp.eq.s32.totalorder %s12, 1
      %p51 = scmp.ne.s32.totalorder %s46, %s48
      %p52 = scmp.eq.s32.totalorder %s12, 0
      %p53 = por %p51, %p52
      %p54 = scmp.ne.s32.totalorder %s46, %s48
      %p55 = scmp.eq.s32.totalorder %s17, 1
      %p56 = por %p54, %p55
      %p57 = scmp.ne.s32.totalorder %s48, %s49
      %p58 = scmp.eq.s32.totalorder %s17, 0
      %p59 = por %p57, %p58
      %p60 = scmp.ne.s32.totalorder %s48, %s49
      %p61 = scmp.eq.s32.totalorder %s18, 1
      %p62 = por %p60, %p61
      %p64 = scmp.ne.s32.totalorder %s49, %s63
      %p65 = scmp.eq.s32.totalorder %s18, 0
      %p66 = por %p64, %p65
      %s68 = sadd.s32 %s67, 1
      %p71 = scmp.eq.s32.totalorder %s12, 1
      %p72 = scmp.ne.s32.totalorder %s67, %s69
      %p73 = scmp.eq.s32.totalorder %s12, 0
      %p74 = por %p72, %p73
      %p75 = scmp.ne.s32.totalorder %s67, %s69
      %p76 = scmp.eq.s32.totalorder %s17, 1
      %p77 = por %p75, %p76
      %p78 = scmp.ne.s32.totalorder %s69, %s70
      %p79 = scmp.eq.s32.totalorder %s17, 0
      %p80 = por %p78, %p79
      %p81 = scmp.ne.s32.totalorder %s69, %s70
      %p82 = scmp.eq.s32.totalorder %s18, 1
      %p83 = por %p81, %p82
      %p85 = scmp.ne.s32.totalorder %s70, %s84
      %p86 = scmp.eq.s32.totalorder %s18, 0
      %p87 = por %p85, %p86
      %s88 = ssub.s32 %s12, %s19
      %p89 = scmp.eq.s32.totalorder %s88, 0
      %s91 = sadd.s32 %s90, 1
      %s92 = scalar_select %p89, %s90, %s91
      %p95 = pneg %p89
      %p96 = scmp.eq.s32.totalorder %s12, 1
      %p97 = por %p95, %p96
      %p98 = scmp.ne.s32.totalorder %s90, %s93
      %p99 = scmp.eq.s32.totalorder %s12, 0
      %p100 = por %p98, %p99
      %p101 = scmp.ne.s32.totalorder %s90, %s93
      %p102 = scmp.eq.s32.totalorder %s17, 1
      %p103 = por %p101, %p102
      %p104 = scmp.ne.s32.totalorder %s93, %s94
      %p105 = scmp.eq.s32.totalorder %s17, 0
      %p106 = por %p104, %p105
      %p107 = scmp.ne.s32.totalorder %s93, %s94
      %p108 = scmp.eq.s32.totalorder %s18, 1
      %p109 = por %p107, %p108
      %p111 = scmp.ne.s32.totalorder %s94, %s110
      %p112 = scmp.eq.s32.totalorder %s18, 0
      %p113 = por %p111, %p112
      %p114 = scmp.le.s32.totalorder 1, %s12
      %p115 = scmp.lt.s32.totalorder %s12, 3
      %p116 = pnand %p114, %p115
      %p117 = pneg %p116
      // Predicated region
      $region9: #{self_attention.5} parent=5 // pred_check
        _
      $region10: #{self_attention.5} parent=5 // pred_check_branch
        %119 = sbr.rel (%p116) target = $region12
      $region11: #{self_attention.5} parent=5 // pred_region
        %s120 = ssub.s32 %s12, 1
        // Predicated region
        $region13: #{self_attention.5} parent=11 // pred_check
          %p121 = pneg %p59
        $region14: #{self_attention.5} parent=11 // pred_check_branch
          %123 = sbr.rel (%p121) target = $region16
        $region15: #{self_attention.5} parent=11 // pred_region
          _
        $region16: #{self_attention.5} parent=11 // pred_fallthru
          _
        // Predicated region
        $region17: #{self_attention.5} parent=11 // pred_check
          %p124 = pneg %p80
        $region18: #{self_attention.5} parent=11 // pred_check_branch
          %126 = sbr.rel (%p124) target = $region20
        $region19: #{self_attention.5} parent=11 // pred_region
          _
        $region20: #{self_attention.5} parent=11 // pred_fallthru
          _
      $region12: #{self_attention.5} parent=5 // pred_fallthru
        _
      %p127 = scmp.lt.s32.totalorder %s12, 2
      // Predicated region
      $region21: #{self_attention.5} parent=5 // pred_check
        %p128 = pneg %p127
      $region22: #{self_attention.5} parent=5 // pred_check_branch
        %130 = sbr.rel (%p128) target = $region24
      $region23: #{self_attention.5} parent=5 // pred_region
        // Predicated region
        $region25: #{self_attention.5} parent=23 // pred_check
          %p131 = pneg %p32
        $region26: #{self_attention.5} parent=23 // pred_check_branch
          %133 = sbr.rel (%p131) target = $region28
        $region27: #{self_attention.5} parent=23 // pred_region
          %s134 = smul.u32 32, %s12
          %p135 = scmp.lt.s32.totalorder %s134, 63
          %s136 = scalar_select %p135, %s134, 63
          %s137 = smul.addr %s136, 2
          %s138 = smul.addr %s137, 4
          %s139 = scalar_lea.vmem %s0, %s138
          %s140 = smul.u32 32, %s12
        $region28: #{self_attention.5} parent=23 // pred_fallthru
          _
      $region24: #{self_attention.5} parent=5 // pred_fallthru
        _
      %p141 = scmp.le.s32.totalorder 1, %s12
      %p142 = scmp.lt.s32.totalorder %s12, 3
      %p143 = pnand %p141, %p142
      %p144 = pneg %p143
      // Predicated region
      $region29: #{self_attention.5} parent=5 // pred_check
        _
      $region30: #{self_attention.5} parent=5 // pred_check_branch
        %146 = sbr.rel (%p143) target = $region32
      $region31: #{self_attention.5} parent=5 // pred_region
        %s147 = ssub.s32 %s12, 1
        %s148 = smul.u32 32, %s17
        %p149 = scmp.lt.s32.totalorder %s148, 63
        %s150 = scalar_select %p149, %s148, 63
        %s151 = smul.addr %s150, 2
        %s152 = smul.addr %s151, 4
        %s153 = scalar_lea.vmem %s0, %s152
        %p154 = pneg %p38
        %p155 = pneg %p35
        %p156 = pneg %p59
        %p157 = pneg %p56
        %p158 = pneg %p80
        %p159 = pneg %p77
        %p160 = pneg %p106
        %p161 = pneg %p103
        %s162 = sand.u32 %s93, 1
        %s163 = scalar_lea.sflag [#allocation3], %s162
        %s164 = sand.u32 %s93, 1
        %s165 = smul.addr %s164, 512
        %s166 = scalar_lea.vmem [#allocation2], %s165
        %s167 = smul.u32 32, %s17
        %p168 = scmp.lt.s32.totalorder %s167, 63
        %s169 = scalar_select %p168, %s167, 63
        %s170 = smul.addr %s169, 2
        %s171 = smul.addr %s170, 4
        %s172 = scalar_lea.vmem %s0, %s171
        %s173 = smul.u32 32, %s17
        %s174 = smul.u32 32, %s17
        %v175 = vld [vmem:[%s172] sm:$0xff]
        %v176 = vld [vmem:[%s172 + $0x8] sm:$0xff]
        %v177 = vld [vmem:[%s172 + $0x10] sm:$0xff]
        %v178 = vld [vmem:[%s172 + $0x18] sm:$0xff]
        %v179 = vld [vmem:[%s172 + $0x20] sm:$0xff]
        %v180 = vld [vmem:[%s172 + $0x28] sm:$0xff]
        %v181 = vld [vmem:[%s172 + $0x30] sm:$0xff]
        %v182 = vld [vmem:[%s172 + $0x38] sm:$0xff]
        %v183 = vld [vmem:[%s172 + $0x40] sm:$0xff]
        %v184 = vld [vmem:[%s172 + $0x48] sm:$0xff]
        %v185 = vld [vmem:[%s172 + $0x50] sm:$0xff]
        %v186 = vld [vmem:[%s172 + $0x58] sm:$0xff]
        %v187 = vld [vmem:[%s172 + $0x60] sm:$0xff]
        %v188 = vld [vmem:[%s172 + $0x68] sm:$0xff]
        %v189 = vld [vmem:[%s172 + $0x70] sm:$0xff]
        %v190 = vld [vmem:[%s172 + $0x78] sm:$0xff]
        %v191 = vld [vmem:[%s172 + $0x80] sm:$0xff]
        %v192 = vld [vmem:[%s172 + $0x88] sm:$0xff]
        %v193 = vld [vmem:[%s172 + $0x90] sm:$0xff]
        %v194 = vld [vmem:[%s172 + $0x98] sm:$0xff]
        %v195 = vld [vmem:[%s172 + $0xa0] sm:$0xff]
        %v196 = vld [vmem:[%s172 + $0xa8] sm:$0xff]
        %v197 = vld [vmem:[%s172 + $0xb0] sm:$0xff]
        %v198 = vld [vmem:[%s172 + $0xb8] sm:$0xff]
        %v199 = vld [vmem:[%s172 + $0xc0] sm:$0xff]
        %v200 = vld [vmem:[%s172 + $0xc8] sm:$0xff]
        %v201 = vld [vmem:[%s172 + $0xd0] sm:$0xff]
        %v202 = vld [vmem:[%s172 + $0xd8] sm:$0xff]
        %v203 = vld [vmem:[%s172 + $0xe0] sm:$0xff]
        %v204 = vld [vmem:[%s172 + $0xe8] sm:$0xff]
        %v205 = vld [vmem:[%s172 + $0xf0] sm:$0xff]
        %v206 = vld [vmem:[%s172 + $0xf8] sm:$0xff]
        %v207 = vld [vmem:[%s1] sm:$0xff]
        %v208 = vld [vmem:[%s1 + $0x8] sm:$0xff]
        %v209 = vld [vmem:[%s1 + $0x10] sm:$0xff]
        %v210 = vld [vmem:[%s1 + $0x18] sm:$0xff]
        %v211 = vld [vmem:[%s1 + $0x20] sm:$0xff]
        %v212 = vld [vmem:[%s1 + $0x28] sm:$0xff]
        %v213 = vld [vmem:[%s1 + $0x30] sm:$0xff]
        %v214 = vld [vmem:[%s1 + $0x38] sm:$0xff]
        %v215 = vld [vmem:[%s1 + $0x40] sm:$0xff]
        %v216 = vld [vmem:[%s1 + $0x48] sm:$0xff]
        %v217 = vld [vmem:[%s1 + $0x50] sm:$0xff]
        %v218 = vld [vmem:[%s1 + $0x58] sm:$0xff]
        %v219 = vld [vmem:[%s1 + $0x60] sm:$0xff]
        %v220 = vld [vmem:[%s1 + $0x68] sm:$0xff]
        %v221 = vld [vmem:[%s1 + $0x70] sm:$0xff]
        %v222 = vld [vmem:[%s1 + $0x78] sm:$0xff]
        %v223 = vld [vmem:[%s1 + $0x80] sm:$0xff]
        %v224 = vld [vmem:[%s1 + $0x88] sm:$0xff]
        %v225 = vld [vmem:[%s1 + $0x90] sm:$0xff]
        %v226 = vld [vmem:[%s1 + $0x98] sm:$0xff]
        %v227 = vld [vmem:[%s1 + $0xa0] sm:$0xff]
        %v228 = vld [vmem:[%s1 + $0xa8] sm:$0xff]
        %v229 = vld [vmem:[%s1 + $0xb0] sm:$0xff]
        %v230 = vld [vmem:[%s1 + $0xb8] sm:$0xff]
        %v231 = vld [vmem:[%s1 + $0xc0] sm:$0xff]
        %v232 = vld [vmem:[%s1 + $0xc8] sm:$0xff]
        %v233 = vld [vmem:[%s1 + $0xd0] sm:$0xff]
        %v234 = vld [vmem:[%s1 + $0xd8] sm:$0xff]
        %v235 = vld [vmem:[%s1 + $0xe0] sm:$0xff]
        %v236 = vld [vmem:[%s1 + $0xe8] sm:$0xff]
        %v237 = vld [vmem:[%s1 + $0xf0] sm:$0xff]
        %v238 = vld [vmem:[%s1 + $0xf8] sm:$0xff]
        %v239 = vld [vmem:[%s2] sm:$0x3]
        %v241 = vperm.slane %v239, 0
        %v242 = vperm.slane %v239, 1
        %v277 = vunpack.c.l.b16 %v175
        %v278 = vunpack.c.h.b16 %v175
        %v279 = vunpack.c.l.b16 %v176
        %v280 = vunpack.c.h.b16 %v176
        %v281 = vunpack.c.l.b16 %v177
        %v282 = vunpack.c.h.b16 %v177
        %v283 = vunpack.c.l.b16 %v178
        %v284 = vunpack.c.h.b16 %v178
        %v285 = vunpack.c.l.b16 %v179
        %v286 = vunpack.c.h.b16 %v179
        %v287 = vunpack.c.l.b16 %v180
        %v288 = vunpack.c.h.b16 %v180
        %v289 = vunpack.c.l.b16 %v181
        %v290 = vunpack.c.h.b16 %v181
        %v291 = vunpack.c.l.b16 %v182
        %v292 = vunpack.c.h.b16 %v182
        %v293 = vunpack.c.l.b16 %v183
        %v294 = vunpack.c.h.b16 %v183
        %v295 = vunpack.c.l.b16 %v184
        %v296 = vunpack.c.h.b16 %v184
        %v297 = vunpack.c.l.b16 %v185
        %v298 = vunpack.c.h.b16 %v185
        %v299 = vunpack.c.l.b16 %v186
        %v300 = vunpack.c.h.b16 %v186
        %v301 = vunpack.c.l.b16 %v187
        %v302 = vunpack.c.h.b16 %v187
        %v303 = vunpack.c.l.b16 %v188
        %v304 = vunpack.c.h.b16 %v188
        %v305 = vunpack.c.l.b16 %v189
        %v306 = vunpack.c.h.b16 %v189
        %v307 = vunpack.c.l.b16 %v190
        %v308 = vunpack.c.h.b16 %v190
        %v309 = vunpack.c.l.b16 %v191
        %v310 = vunpack.c.h.b16 %v191
        %v311 = vunpack.c.l.b16 %v192
        %v312 = vunpack.c.h.b16 %v192
        %v313 = vunpack.c.l.b16 %v193
        %v314 = vunpack.c.h.b16 %v193
        %v315 = vunpack.c.l.b16 %v194
        %v316 = vunpack.c.h.b16 %v194
        %v317 = vunpack.c.l.b16 %v195
        %v318 = vunpack.c.h.b16 %v195
        %v319 = vunpack.c.l.b16 %v196
        %v320 = vunpack.c.h.b16 %v196
        %v321 = vunpack.c.l.b16 %v197
        %v322 = vunpack.c.h.b16 %v197
        %v323 = vunpack.c.l.b16 %v198
        %v324 = vunpack.c.h.b16 %v198
        %v325 = vunpack.c.l.b16 %v199
        %v326 = vunpack.c.h.b16 %v199
        %v327 = vunpack.c.l.b16 %v200
        %v328 = vunpack.c.h.b16 %v200
        %v329 = vunpack.c.l.b16 %v201
        %v330 = vunpack.c.h.b16 %v201
        %v331 = vunpack.c.l.b16 %v202
        %v332 = vunpack.c.h.b16 %v202
        %v333 = vunpack.c.l.b16 %v203
        %v334 = vunpack.c.h.b16 %v203
        %v335 = vunpack.c.l.b16 %v204
        %v336 = vunpack.c.h.b16 %v204
        %v337 = vunpack.c.l.b16 %v205
        %v338 = vunpack.c.h.b16 %v205
        %v339 = vunpack.c.l.b16 %v206
        %v340 = vunpack.c.h.b16 %v206
        %v341 = vpack.c.b16 %v279, %v277
        %v342 = vpack.c.b16 %v280, %v278
        %v343 = vpack.c.b16 %v283, %v281
        %v344 = vpack.c.b16 %v284, %v282
        %v345 = vpack.c.b16 %v287, %v285
        %v346 = vpack.c.b16 %v288, %v286
        %v347 = vpack.c.b16 %v291, %v289
        %v348 = vpack.c.b16 %v292, %v290
        %v349 = vpack.c.b16 %v295, %v293
        %v350 = vpack.c.b16 %v296, %v294
        %v351 = vpack.c.b16 %v299, %v297
        %v352 = vpack.c.b16 %v300, %v298
        %v353 = vpack.c.b16 %v303, %v301
        %v354 = vpack.c.b16 %v304, %v302
        %v355 = vpack.c.b16 %v307, %v305
        %v356 = vpack.c.b16 %v308, %v306
        %v357 = vpack.c.b16 %v311, %v309
        %v358 = vpack.c.b16 %v312, %v310
        %v359 = vpack.c.b16 %v315, %v313
        %v360 = vpack.c.b16 %v316, %v314
        %v361 = vpack.c.b16 %v319, %v317
        %v362 = vpack.c.b16 %v320, %v318
        %v363 = vpack.c.b16 %v323, %v321
        %v364 = vpack.c.b16 %v324, %v322
        %v365 = vpack.c.b16 %v327, %v325
        %v366 = vpack.c.b16 %v328, %v326
        %v367 = vpack.c.b16 %v331, %v329
        %v368 = vpack.c.b16 %v332, %v330
        %v369 = vpack.c.b16 %v335, %v333
        %v370 = vpack.c.b16 %v336, %v334
        %v371 = vpack.c.b16 %v339, %v337
        %v372 = vpack.c.b16 %v340, %v338
        %v437 = vunpack.c.l.b16 %v207
        %v438 = vunpack.c.h.b16 %v207
        %v439 = vunpack.c.l.b16 %v208
        %v440 = vunpack.c.h.b16 %v208
        %v441 = vunpack.c.l.b16 %v209
        %v442 = vunpack.c.h.b16 %v209
        %v443 = vunpack.c.l.b16 %v210
        %v444 = vunpack.c.h.b16 %v210
        %v445 = vunpack.c.l.b16 %v211
        %v446 = vunpack.c.h.b16 %v211
        %v447 = vunpack.c.l.b16 %v212
        %v448 = vunpack.c.h.b16 %v212
        %v449 = vunpack.c.l.b16 %v213
        %v450 = vunpack.c.h.b16 %v213
        %v451 = vunpack.c.l.b16 %v214
        %v452 = vunpack.c.h.b16 %v214
        %v453 = vunpack.c.l.b16 %v215
        %v454 = vunpack.c.h.b16 %v215
        %v455 = vunpack.c.l.b16 %v216
        %v456 = vunpack.c.h.b16 %v216
        %v457 = vunpack.c.l.b16 %v217
        %v458 = vunpack.c.h.b16 %v217
        %v459 = vunpack.c.l.b16 %v218
        %v460 = vunpack.c.h.b16 %v218
        %v461 = vunpack.c.l.b16 %v219
        %v462 = vunpack.c.h.b16 %v219
        %v463 = vunpack.c.l.b16 %v220
        %v464 = vunpack.c.h.b16 %v220
        %v465 = vunpack.c.l.b16 %v221
        %v466 = vunpack.c.h.b16 %v221
        %v467 = vunpack.c.l.b16 %v222
        %v468 = vunpack.c.h.b16 %v222
        %v469 = vunpack.c.l.b16 %v223
        %v470 = vunpack.c.h.b16 %v223
        %v471 = vunpack.c.l.b16 %v224
        %v472 = vunpack.c.h.b16 %v224
        %v473 = vunpack.c.l.b16 %v225
        %v474 = vunpack.c.h.b16 %v225
        %v475 = vunpack.c.l.b16 %v226
        %v476 = vunpack.c.h.b16 %v226
        %v477 = vunpack.c.l.b16 %v227
        %v478 = vunpack.c.h.b16 %v227
        %v479 = vunpack.c.l.b16 %v228
        %v480 = vunpack.c.h.b16 %v228
        %v481 = vunpack.c.l.b16 %v229
        %v482 = vunpack.c.h.b16 %v229
        %v483 = vunpack.c.l.b16 %v230
        %v484 = vunpack.c.h.b16 %v230
        %v485 = vunpack.c.l.b16 %v231
        %v486 = vunpack.c.h.b16 %v231
        %v487 = vunpack.c.l.b16 %v232
        %v488 = vunpack.c.h.b16 %v232
        %v489 = vunpack.c.l.b16 %v233
        %v490 = vunpack.c.h.b16 %v233
        %v491 = vunpack.c.l.b16 %v234
        %v492 = vunpack.c.h.b16 %v234
        %v493 = vunpack.c.l.b16 %v235
        %v494 = vunpack.c.h.b16 %v235
        %v495 = vunpack.c.l.b16 %v236
        %v496 = vunpack.c.h.b16 %v236
        %v497 = vunpack.c.l.b16 %v237
        %v498 = vunpack.c.h.b16 %v237
        %v499 = vunpack.c.l.b16 %v238
        %v500 = vunpack.c.h.b16 %v238
        %v501 = vpack.c.b16 %v439, %v437
        %v502 = vpack.c.b16 %v440, %v438
        %v503 = vpack.c.b16 %v443, %v441
        %v504 = vpack.c.b16 %v444, %v442
        %v505 = vpack.c.b16 %v447, %v445
        %v506 = vpack.c.b16 %v448, %v446
        %v507 = vpack.c.b16 %v451, %v449
        %v508 = vpack.c.b16 %v452, %v450
        %v509 = vpack.c.b16 %v455, %v453
        %v510 = vpack.c.b16 %v456, %v454
        %v511 = vpack.c.b16 %v459, %v457
        %v512 = vpack.c.b16 %v460, %v458
        %v513 = vpack.c.b16 %v463, %v461
        %v514 = vpack.c.b16 %v464, %v462
        %v515 = vpack.c.b16 %v467, %v465
        %v516 = vpack.c.b16 %v468, %v466
        %v517 = vpack.c.b16 %v471, %v469
        %v518 = vpack.c.b16 %v472, %v470
        %v519 = vpack.c.b16 %v475, %v473
        %v520 = vpack.c.b16 %v476, %v474
        %v521 = vpack.c.b16 %v479, %v477
        %v522 = vpack.c.b16 %v480, %v478
        %v523 = vpack.c.b16 %v483, %v481
        %v524 = vpack.c.b16 %v484, %v482
        %v525 = vpack.c.b16 %v487, %v485
        %v526 = vpack.c.b16 %v488, %v486
        %v527 = vpack.c.b16 %v491, %v489
        %v528 = vpack.c.b16 %v492, %v490
        %v529 = vpack.c.b16 %v495, %v493
        %v530 = vpack.c.b16 %v496, %v494
        %v531 = vpack.c.b16 %v499, %v497
        %v532 = vpack.c.b16 %v500, %v498
        %565 = vmatpush.bf16.msra.mxu0 %v515
        %566 = vmatpush.bf16.msra.mxu0 %v513
        %567 = vmatpush.bf16.msra.mxu0 %v511
        %568 = vmatpush.bf16.msra.mxu0 %v509
        %569 = vmatpush.bf16.msra.mxu0 %v507
        %570 = vmatpush.bf16.msra.mxu0 %v505
        %571 = vmatpush.bf16.msra.mxu0 %v503
        %572 = vmatpush.bf16.msra.mxu0 %v501
        %573 = vmatmul.bf16.gmra.mxu0 %v341
        %v574 = vpop.f32.mrf.mxu0
        %v575 = vadd.f32 %v241, %v574
        %v576 = vpop.f32.mrf.mxu0
        %v577 = vadd.f32 %v241, %v576
        %578 = vmatmul.bf16.gmra.mxu0 %v343
        %v579 = vpop.f32.mrf.mxu0
        %v580 = vadd.f32 %v241, %v579
        %v581 = vpop.f32.mrf.mxu0
        %v582 = vadd.f32 %v241, %v581
        %583 = vmatmul.bf16.gmra.mxu0 %v345
        %v584 = vpop.f32.mrf.mxu0
        %v585 = vadd.f32 %v241, %v584
        %v586 = vpop.f32.mrf.mxu0
        %v587 = vadd.f32 %v241, %v586
        %588 = vmatmul.bf16.gmra.mxu0 %v347
        %v589 = vpop.f32.mrf.mxu0
        %v590 = vadd.f32 %v241, %v589
        %v591 = vpop.f32.mrf.mxu0
        %v592 = vadd.f32 %v241, %v591
        %593 = vmatmul.bf16.gmra.mxu0 %v349
        %v594 = vpop.f32.mrf.mxu0
        %v595 = vadd.f32 %v241, %v594
        %v596 = vpop.f32.mrf.mxu0
        %v597 = vadd.f32 %v241, %v596
        %598 = vmatmul.bf16.gmra.mxu0 %v351
        %v599 = vpop.f32.mrf.mxu0
        %v600 = vadd.f32 %v241, %v599
        %v601 = vpop.f32.mrf.mxu0
        %v602 = vadd.f32 %v241, %v601
        %603 = vmatmul.bf16.gmra.mxu0 %v353
        %v604 = vpop.f32.mrf.mxu0
        %v605 = vadd.f32 %v241, %v604
        %v606 = vpop.f32.mrf.mxu0
        %v607 = vadd.f32 %v241, %v606
        %608 = vmatmul.bf16.gmra.mxu0 %v355
        %v609 = vpop.f32.mrf.mxu0
        %v610 = vadd.f32 %v241, %v609
        %v611 = vpop.f32.mrf.mxu0
        %v612 = vadd.f32 %v241, %v611
        %613 = vmatmul.bf16.gmra.mxu0 %v357
        %v614 = vpop.f32.mrf.mxu0
        %v615 = vadd.f32 %v241, %v614
        %v616 = vpop.f32.mrf.mxu0
        %v617 = vadd.f32 %v241, %v616
        %618 = vmatmul.bf16.gmra.mxu0 %v359
        %v619 = vpop.f32.mrf.mxu0
        %v620 = vadd.f32 %v241, %v619
        %v621 = vpop.f32.mrf.mxu0
        %v622 = vadd.f32 %v241, %v621
        %623 = vmatmul.bf16.gmra.mxu0 %v361
        %v624 = vpop.f32.mrf.mxu0
        %v625 = vadd.f32 %v241, %v624
        %v626 = vpop.f32.mrf.mxu0
        %v627 = vadd.f32 %v241, %v626
        %628 = vmatmul.bf16.gmra.mxu0 %v363
        %v629 = vpop.f32.mrf.mxu0
        %v630 = vadd.f32 %v241, %v629
        %v631 = vpop.f32.mrf.mxu0
        %v632 = vadd.f32 %v241, %v631
        %633 = vmatmul.bf16.gmra.mxu0 %v365
        %v634 = vpop.f32.mrf.mxu0
        %v635 = vadd.f32 %v241, %v634
        %v636 = vpop.f32.mrf.mxu0
        %v637 = vadd.f32 %v241, %v636
        %638 = vmatmul.bf16.gmra.mxu0 %v367
        %v639 = vpop.f32.mrf.mxu0
        %v640 = vadd.f32 %v241, %v639
        %v641 = vpop.f32.mrf.mxu0
        %v642 = vadd.f32 %v241, %v641
        %643 = vmatmul.bf16.gmra.mxu0 %v369
        %v644 = vpop.f32.mrf.mxu0
        %v645 = vadd.f32 %v241, %v644
        %v646 = vpop.f32.mrf.mxu0
        %v647 = vadd.f32 %v241, %v646
        %648 = vmatmul.bf16.gmra.mxu0 %v371
        %v649 = vpop.f32.mrf.mxu0
        %v650 = vadd.f32 %v241, %v649
        %v651 = vpop.f32.mrf.mxu0
        %v652 = vadd.f32 %v241, %v651
        %653 = vdwg.mxu0
        %654 = vmatpush.bf16.msra.mxu0 %v531
        %655 = vmatpush.bf16.msra.mxu0 %v529
        %656 = vmatpush.bf16.msra.mxu0 %v527
        %657 = vmatpush.bf16.msra.mxu0 %v525
        %658 = vmatpush.bf16.msra.mxu0 %v523
        %659 = vmatpush.bf16.msra.mxu0 %v521
        %660 = vmatpush.bf16.msra.mxu0 %v519
        %661 = vmatpush.bf16.msra.mxu0 %v517
        %662 = vmatmul.bf16.gmra.mxu0 %v342
        %v663 = vpop.f32.mrf.mxu0
        %v664 = vadd.f32 %v575, %v663
        %v665 = vpop.f32.mrf.mxu0
        %v666 = vadd.f32 %v577, %v665
        %667 = vmatmul.bf16.gmra.mxu0 %v344
        %v668 = vpop.f32.mrf.mxu0
        %v669 = vadd.f32 %v580, %v668
        %v670 = vpop.f32.mrf.mxu0
        %v671 = vadd.f32 %v582, %v670
        %672 = vmatmul.bf16.gmra.mxu0 %v346
        %v673 = vpop.f32.mrf.mxu0
        %v674 = vadd.f32 %v585, %v673
        %v675 = vpop.f32.mrf.mxu0
        %v676 = vadd.f32 %v587, %v675
        %677 = vmatmul.bf16.gmra.mxu0 %v348
        %v678 = vpop.f32.mrf.mxu0
        %v679 = vadd.f32 %v590, %v678
        %v680 = vpop.f32.mrf.mxu0
        %v681 = vadd.f32 %v592, %v680
        %682 = vmatmul.bf16.gmra.mxu0 %v350
        %v683 = vpop.f32.mrf.mxu0
        %v684 = vadd.f32 %v595, %v683
        %v685 = vpop.f32.mrf.mxu0
        %v686 = vadd.f32 %v597, %v685
        %687 = vmatmul.bf16.gmra.mxu0 %v352
        %v688 = vpop.f32.mrf.mxu0
        %v689 = vadd.f32 %v600, %v688
        %v690 = vpop.f32.mrf.mxu0
        %v691 = vadd.f32 %v602, %v690
        %692 = vmatmul.bf16.gmra.mxu0 %v354
        %v693 = vpop.f32.mrf.mxu0
        %v694 = vadd.f32 %v605, %v693
        %v695 = vpop.f32.mrf.mxu0
        %v696 = vadd.f32 %v607, %v695
        %697 = vmatmul.bf16.gmra.mxu0 %v356
        %v698 = vpop.f32.mrf.mxu0
        %v699 = vadd.f32 %v610, %v698
        %v700 = vpop.f32.mrf.mxu0
        %v701 = vadd.f32 %v612, %v700
        %702 = vmatmul.bf16.gmra.mxu0 %v358
        %v703 = vpop.f32.mrf.mxu0
        %v704 = vadd.f32 %v615, %v703
        %v705 = vpop.f32.mrf.mxu0
        %v706 = vadd.f32 %v617, %v705
        %707 = vmatmul.bf16.gmra.mxu0 %v360
        %v708 = vpop.f32.mrf.mxu0
        %v709 = vadd.f32 %v620, %v708
        %v710 = vpop.f32.mrf.mxu0
        %v711 = vadd.f32 %v622, %v710
        %712 = vmatmul.bf16.gmra.mxu0 %v362
        %v713 = vpop.f32.mrf.mxu0
        %v714 = vadd.f32 %v625, %v713
        %v715 = vpop.f32.mrf.mxu0
        %v716 = vadd.f32 %v627, %v715
        %717 = vmatmul.bf16.gmra.mxu0 %v364
        %v718 = vpop.f32.mrf.mxu0
        %v719 = vadd.f32 %v630, %v718
        %v720 = vpop.f32.mrf.mxu0
        %v721 = vadd.f32 %v632, %v720
        %722 = vmatmul.bf16.gmra.mxu0 %v366
        %v723 = vpop.f32.mrf.mxu0
        %v724 = vadd.f32 %v635, %v723
        %v725 = vpop.f32.mrf.mxu0
        %v726 = vadd.f32 %v637, %v725
        %727 = vmatmul.bf16.gmra.mxu0 %v368
        %v728 = vpop.f32.mrf.mxu0
        %v729 = vadd.f32 %v640, %v728
        %v730 = vpop.f32.mrf.mxu0
        %v731 = vadd.f32 %v642, %v730
        %732 = vmatmul.bf16.gmra.mxu0 %v370
        %v733 = vpop.f32.mrf.mxu0
        %v734 = vadd.f32 %v645, %v733
        %v735 = vpop.f32.mrf.mxu0
        %v736 = vadd.f32 %v647, %v735
        %737 = vmatmul.bf16.gmra.mxu0 %v372
        %v738 = vpop.f32.mrf.mxu0
        %v739 = vadd.f32 %v650, %v738
        %v740 = vpop.f32.mrf.mxu0
        %v741 = vadd.f32 %v652, %v740
        %742 = vdwg.mxu0
        %743 = vmatpush.bf16.msra.mxu0 %v516
        %744 = vmatpush.bf16.msra.mxu0 %v514
        %745 = vmatpush.bf16.msra.mxu0 %v512
        %746 = vmatpush.bf16.msra.mxu0 %v510
        %747 = vmatpush.bf16.msra.mxu0 %v508
        %748 = vmatpush.bf16.msra.mxu0 %v506
        %749 = vmatpush.bf16.msra.mxu0 %v504
        %750 = vmatpush.bf16.msra.mxu0 %v502
        %751 = vmatmul.bf16.gmra.mxu0 %v341
        %v752 = vpop.f32.mrf.mxu0
        %v753 = vadd.f32 %v242, %v752
        %v754 = vpop.f32.mrf.mxu0
        %v755 = vadd.f32 %v242, %v754
        %756 = vmatmul.bf16.gmra.mxu0 %v343
        %v757 = vpop.f32.mrf.mxu0
        %v758 = vadd.f32 %v242, %v757
        %v759 = vpop.f32.mrf.mxu0
        %v760 = vadd.f32 %v242, %v759
        %761 = vmatmul.bf16.gmra.mxu0 %v345
        %v762 = vpop.f32.mrf.mxu0
        %v763 = vadd.f32 %v242, %v762
        %v764 = vpop.f32.mrf.mxu0
        %v765 = vadd.f32 %v242, %v764
        %766 = vmatmul.bf16.gmra.mxu0 %v347
        %v767 = vpop.f32.mrf.mxu0
        %v768 = vadd.f32 %v242, %v767
        %v769 = vpop.f32.mrf.mxu0
        %v770 = vadd.f32 %v242, %v769
        %771 = vmatmul.bf16.gmra.mxu0 %v349
        %v772 = vpop.f32.mrf.mxu0
        %v773 = vadd.f32 %v242, %v772
        %v774 = vpop.f32.mrf.mxu0
        %v775 = vadd.f32 %v242, %v774
        %776 = vmatmul.bf16.gmra.mxu0 %v351
        %v777 = vpop.f32.mrf.mxu0
        %v778 = vadd.f32 %v242, %v777
        %v779 = vpop.f32.mrf.mxu0
        %v780 = vadd.f32 %v242, %v779
        %781 = vmatmul.bf16.gmra.mxu0 %v353
        %v782 = vpop.f32.mrf.mxu0
        %v783 = vadd.f32 %v242, %v782
        %v784 = vpop.f32.mrf.mxu0
        %v785 = vadd.f32 %v242, %v784
        %786 = vmatmul.bf16.gmra.mxu0 %v355
        %v787 = vpop.f32.mrf.mxu0
        %v788 = vadd.f32 %v242, %v787
        %v789 = vpop.f32.mrf.mxu0
        %v790 = vadd.f32 %v242, %v789
        %791 = vmatmul.bf16.gmra.mxu0 %v357
        %v792 = vpop.f32.mrf.mxu0
        %v793 = vadd.f32 %v242, %v792
        %v794 = vpop.f32.mrf.mxu0
        %v795 = vadd.f32 %v242, %v794
        %796 = vmatmul.bf16.gmra.mxu0 %v359
        %v797 = vpop.f32.mrf.mxu0
        %v798 = vadd.f32 %v242, %v797
        %v799 = vpop.f32.mrf.mxu0
        %v800 = vadd.f32 %v242, %v799
        %801 = vmatmul.bf16.gmra.mxu0 %v361
        %v802 = vpop.f32.mrf.mxu0
        %v803 = vadd.f32 %v242, %v802
        %v804 = vpop.f32.mrf.mxu0
        %v805 = vadd.f32 %v242, %v804
        %806 = vmatmul.bf16.gmra.mxu0 %v363
        %v807 = vpop.f32.mrf.mxu0
        %v808 = vadd.f32 %v242, %v807
        %v809 = vpop.f32.mrf.mxu0
        %v810 = vadd.f32 %v242, %v809
        %811 = vmatmul.bf16.gmra.mxu0 %v365
        %v812 = vpop.f32.mrf.mxu0
        %v813 = vadd.f32 %v242, %v812
        %v814 = vpop.f32.mrf.mxu0
        %v815 = vadd.f32 %v242, %v814
        %816 = vmatmul.bf16.gmra.mxu0 %v367
        %v817 = vpop.f32.mrf.mxu0
        %v818 = vadd.f32 %v242, %v817
        %v819 = vpop.f32.mrf.mxu0
        %v820 = vadd.f32 %v242, %v819
        %821 = vmatmul.bf16.gmra.mxu0 %v369
        %v822 = vpop.f32.mrf.mxu0
        %v823 = vadd.f32 %v242, %v822
        %v824 = vpop.f32.mrf.mxu0
        %v825 = vadd.f32 %v242, %v824
        %826 = vmatmul.bf16.gmra.mxu0 %v371
        %v827 = vpop.f32.mrf.mxu0
        %v828 = vadd.f32 %v242, %v827
        %v829 = vpop.f32.mrf.mxu0
        %v830 = vadd.f32 %v242, %v829
        %831 = vdwg.mxu0
        %832 = vmatpush.bf16.msra.mxu0 %v532
        %833 = vmatpush.bf16.msra.mxu0 %v530
        %834 = vmatpush.bf16.msra.mxu0 %v528
        %835 = vmatpush.bf16.msra.mxu0 %v526
        %836 = vmatpush.bf16.msra.mxu0 %v524
        %837 = vmatpush.bf16.msra.mxu0 %v522
        %838 = vmatpush.bf16.msra.mxu0 %v520
        %839 = vmatpush.bf16.msra.mxu0 %v518
        %840 = vmatmul.bf16.gmra.mxu0 %v342
        %v841 = vpop.f32.mrf.mxu0
        %v842 = vadd.f32 %v753, %v841
        %v843 = vpop.f32.mrf.mxu0
        %v844 = vadd.f32 %v755, %v843
        %845 = vmatmul.bf16.gmra.mxu0 %v344
        %v846 = vpop.f32.mrf.mxu0
        %v847 = vadd.f32 %v758, %v846
        %v848 = vpop.f32.mrf.mxu0
        %v849 = vadd.f32 %v760, %v848
        %850 = vmatmul.bf16.gmra.mxu0 %v346
        %v851 = vpop.f32.mrf.mxu0
        %v852 = vadd.f32 %v763, %v851
        %v853 = vpop.f32.mrf.mxu0
        %v854 = vadd.f32 %v765, %v853
        %855 = vmatmul.bf16.gmra.mxu0 %v348
        %v856 = vpop.f32.mrf.mxu0
        %v857 = vadd.f32 %v768, %v856
        %v858 = vpop.f32.mrf.mxu0
        %v859 = vadd.f32 %v770, %v858
        %860 = vmatmul.bf16.gmra.mxu0 %v350
        %v861 = vpop.f32.mrf.mxu0
        %v862 = vadd.f32 %v773, %v861
        %v863 = vpop.f32.mrf.mxu0
        %v864 = vadd.f32 %v775, %v863
        %865 = vmatmul.bf16.gmra.mxu0 %v352
        %v866 = vpop.f32.mrf.mxu0
        %v867 = vadd.f32 %v778, %v866
        %v868 = vpop.f32.mrf.mxu0
        %v869 = vadd.f32 %v780, %v868
        %870 = vmatmul.bf16.gmra.mxu0 %v354
        %v871 = vpop.f32.mrf.mxu0
        %v872 = vadd.f32 %v783, %v871
        %v873 = vpop.f32.mrf.mxu0
        %v874 = vadd.f32 %v785, %v873
        %875 = vmatmul.bf16.gmra.mxu0 %v356
        %v876 = vpop.f32.mrf.mxu0
        %v877 = vadd.f32 %v788, %v876
        %v878 = vpop.f32.mrf.mxu0
        %v879 = vadd.f32 %v790, %v878
        %880 = vmatmul.bf16.gmra.mxu0 %v358
        %v881 = vpop.f32.mrf.mxu0
        %v882 = vadd.f32 %v793, %v881
        %v883 = vpop.f32.mrf.mxu0
        %v884 = vadd.f32 %v795, %v883
        %885 = vmatmul.bf16.gmra.mxu0 %v360
        %v886 = vpop.f32.mrf.mxu0
        %v887 = vadd.f32 %v798, %v886
        %v888 = vpop.f32.mrf.mxu0
        %v889 = vadd.f32 %v800, %v888
        %890 = vmatmul.bf16.gmra.mxu0 %v362
        %v891 = vpop.f32.mrf.mxu0
        %v892 = vadd.f32 %v803, %v891
        %v893 = vpop.f32.mrf.mxu0
        %v894 = vadd.f32 %v805, %v893
        %895 = vmatmul.bf16.gmra.mxu0 %v364
        %v896 = vpop.f32.mrf.mxu0
        %v897 = vadd.f32 %v808, %v896
        %v898 = vpop.f32.mrf.mxu0
        %v899 = vadd.f32 %v810, %v898
        %900 = vmatmul.bf16.gmra.mxu0 %v366
        %v901 = vpop.f32.mrf.mxu0
        %v902 = vadd.f32 %v813, %v901
        %v903 = vpop.f32.mrf.mxu0
        %v904 = vadd.f32 %v815, %v903
        %905 = vmatmul.bf16.gmra.mxu0 %v368
        %v906 = vpop.f32.mrf.mxu0
        %v907 = vadd.f32 %v818, %v906
        %v908 = vpop.f32.mrf.mxu0
        %v909 = vadd.f32 %v820, %v908
        %910 = vmatmul.bf16.gmra.mxu0 %v370
        %v911 = vpop.f32.mrf.mxu0
        %v912 = vadd.f32 %v823, %v911
        %v913 = vpop.f32.mrf.mxu0
        %v914 = vadd.f32 %v825, %v913
        %915 = vmatmul.bf16.gmra.mxu0 %v372
        %v916 = vpop.f32.mrf.mxu0
        %v917 = vadd.f32 %v828, %v916
        %v918 = vpop.f32.mrf.mxu0
        %v919 = vadd.f32 %v830, %v918
        %920 = vdwg.mxu0
        %921 = vst [vmem:[%s166] sm:$0xff] %v664
        %922 = vst [vmem:[%s166 + $0x8] sm:$0xff] %v842
        %923 = vst [vmem:[%s166 + $0x10] sm:$0xff] %v666
        %924 = vst [vmem:[%s166 + $0x18] sm:$0xff] %v844
        %925 = vst [vmem:[%s166 + $0x20] sm:$0xff] %v669
        %926 = vst [vmem:[%s166 + $0x28] sm:$0xff] %v847
        %927 = vst [vmem:[%s166 + $0x30] sm:$0xff] %v671
        %928 = vst [vmem:[%s166 + $0x38] sm:$0xff] %v849
        %929 = vst [vmem:[%s166 + $0x40] sm:$0xff] %v674
        %930 = vst [vmem:[%s166 + $0x48] sm:$0xff] %v852
        %931 = vst [vmem:[%s166 + $0x50] sm:$0xff] %v676
        %932 = vst [vmem:[%s166 + $0x58] sm:$0xff] %v854
        %933 = vst [vmem:[%s166 + $0x60] sm:$0xff] %v679
        %934 = vst [vmem:[%s166 + $0x68] sm:$0xff] %v857
        %935 = vst [vmem:[%s166 + $0x70] sm:$0xff] %v681
        %936 = vst [vmem:[%s166 + $0x78] sm:$0xff] %v859
        %937 = vst [vmem:[%s166 + $0x80] sm:$0xff] %v684
        %938 = vst [vmem:[%s166 + $0x88] sm:$0xff] %v862
        %939 = vst [vmem:[%s166 + $0x90] sm:$0xff] %v686
        %940 = vst [vmem:[%s166 + $0x98] sm:$0xff] %v864
        %941 = vst [vmem:[%s166 + $0xa0] sm:$0xff] %v689
        %942 = vst [vmem:[%s166 + $0xa8] sm:$0xff] %v867
        %943 = vst [vmem:[%s166 + $0xb0] sm:$0xff] %v691
        %944 = vst [vmem:[%s166 + $0xb8] sm:$0xff] %v869
        %945 = vst [vmem:[%s166 + $0xc0] sm:$0xff] %v694
        %946 = vst [vmem:[%s166 + $0xc8] sm:$0xff] %v872
        %947 = vst [vmem:[%s166 + $0xd0] sm:$0xff] %v696
        %948 = vst [vmem:[%s166 + $0xd8] sm:$0xff] %v874
        %949 = vst [vmem:[%s166 + $0xe0] sm:$0xff] %v699
        %950 = vst [vmem:[%s166 + $0xe8] sm:$0xff] %v877
        %951 = vst [vmem:[%s166 + $0xf0] sm:$0xff] %v701
        %952 = vst [vmem:[%s166 + $0xf8] sm:$0xff] %v879
        %953 = vst [vmem:[%s166 + $0x100] sm:$0xff] %v704
        %954 = vst [vmem:[%s166 + $0x108] sm:$0xff] %v882
        %955 = vst [vmem:[%s166 + $0x110] sm:$0xff] %v706
        %956 = vst [vmem:[%s166 + $0x118] sm:$0xff] %v884
        %957 = vst [vmem:[%s166 + $0x120] sm:$0xff] %v709
        %958 = vst [vmem:[%s166 + $0x128] sm:$0xff] %v887
        %959 = vst [vmem:[%s166 + $0x130] sm:$0xff] %v711
        %960 = vst [vmem:[%s166 + $0x138] sm:$0xff] %v889
        %961 = vst [vmem:[%s166 + $0x140] sm:$0xff] %v714
        %962 = vst [vmem:[%s166 + $0x148] sm:$0xff] %v892
        %963 = vst [vmem:[%s166 + $0x150] sm:$0xff] %v716
        %964 = vst [vmem:[%s166 + $0x158] sm:$0xff] %v894
        %965 = vst [vmem:[%s166 + $0x160] sm:$0xff] %v719
        %966 = vst [vmem:[%s166 + $0x168] sm:$0xff] %v897
        %967 = vst [vmem:[%s166 + $0x170] sm:$0xff] %v721
        %968 = vst [vmem:[%s166 + $0x178] sm:$0xff] %v899
        %969 = vst [vmem:[%s166 + $0x180] sm:$0xff] %v724
        %970 = vst [vmem:[%s166 + $0x188] sm:$0xff] %v902
        %971 = vst [vmem:[%s166 + $0x190] sm:$0xff] %v726
        %972 = vst [vmem:[%s166 + $0x198] sm:$0xff] %v904
        %973 = vst [vmem:[%s166 + $0x1a0] sm:$0xff] %v729
        %974 = vst [vmem:[%s166 + $0x1a8] sm:$0xff] %v907
        %975 = vst [vmem:[%s166 + $0x1b0] sm:$0xff] %v731
        %976 = vst [vmem:[%s166 + $0x1b8] sm:$0xff] %v909
        %977 = vst [vmem:[%s166 + $0x1c0] sm:$0xff] %v734
        %978 = vst [vmem:[%s166 + $0x1c8] sm:$0xff] %v912
        %979 = vst [vmem:[%s166 + $0x1d0] sm:$0xff] %v736
        %980 = vst [vmem:[%s166 + $0x1d8] sm:$0xff] %v914
        %981 = vst [vmem:[%s166 + $0x1e0] sm:$0xff] %v739
        %982 = vst [vmem:[%s166 + $0x1e8] sm:$0xff] %v917
        %983 = vst [vmem:[%s166 + $0x1f0] sm:$0xff] %v741
        %984 = vst [vmem:[%s166 + $0x1f8] sm:$0xff] %v919
        %s985 = sand.u32 %s93, 1
        %s986 = scalar_lea.sflag [#allocation3], %s985
        %s987 = sand.u32 %s93, 1
        %s988 = smul.addr %s987, 512
        %s989 = scalar_lea.vmem [#allocation2], %s988
        // Predicated region
        $region33: #{self_attention.5} parent=31 // pred_check
          %p990 = pneg %p103
        $region34: #{self_attention.5} parent=31 // pred_check_branch
          %992 = sbr.rel (%p990) target = $region36
        $region35: #{self_attention.5} parent=31 // pred_region
          %s993 = smul.u32 32, %s17
          %995 = vsyncadd %s986, 0
          %s996 = smul.addr %s993, 2
          %s997 = smul.addr %s996, 8
          %s998 = scalar_lea.hbm %s3, %s997
          %s999 = sshll.u32 %s989, 4
          %s1000 = int_to_ptr.vmem [resolvable:$true] %s999
          %s1001 = sshll.u32 %s998, 4
          %s1002 = int_to_ptr.hbm [resolvable:$true] %s1001
          %1007 = dma.vmem_to_hbm [thread:$0]  %s1000, 8192, %s1002, %s986, 256, 256, 16
        $region36: #{self_attention.5} parent=31 // pred_fallthru
          _
      $region32: #{self_attention.5} parent=5 // pred_fallthru
        _
      %p1008 = scmp.le.s32.totalorder 2, %s12
      // Predicated region
      $region37: #{self_attention.5} parent=5 // pred_check
        %p1009 = pneg %p1008
      $region38: #{self_attention.5} parent=5 // pred_check_branch
        %1011 = sbr.rel (%p1009) target = $region40
      $region39: #{self_attention.5} parent=5 // pred_region
        %s1012 = ssub.s32 %s12, 2
        // Predicated region
        $region41: #{self_attention.5} parent=39 // pred_check
          %p1013 = pneg %p109
        $region42: #{self_attention.5} parent=39 // pred_check_branch
          %1015 = sbr.rel (%p1013) target = $region44
        $region43: #{self_attention.5} parent=39 // pred_region
          %s1016 = sand.u32 %s94, 1
          %s1017 = scalar_lea.sflag [#allocation3], %s1016
          %s1018 = sand.u32 %s94, 1
          %s1019 = smul.addr %s1018, 512
          %s1020 = scalar_lea.vmem [#allocation2], %s1019
          %1022 = dma.done %s1017, 8192
        $region44: #{self_attention.5} parent=39 // pred_fallthru
          _
      $region40: #{self_attention.5} parent=5 // pred_fallthru
        _
    $region6: #{self_attention.5} parent=1 // loop_footer
      %s16 = sadd.s32 1, %s12
    $region7: #{self_attention.5} parent=1 // loop_footer_branch
      %11 = sbr.rel target = $region3
    $region8: #{self_attention.5} parent=1 // loop_exit
      _
    %1023 = vsyncpa [#allocation3], 1
    %s1024 = scalar_lea.sflag [#allocation3], 1
    %1025 = vsyncpa %s1024, 1

// kernel: self_attention.4
$region0: #{self_attention.4}
  #allocation0 [shape = 'u32[]', space=smem, size = 0x4, offset = 0x4, fixed_abs, tag = 'smem constant byte address 0x4 - core index']
  #allocation1 [shape = 'u32[72,128]{1,0:T(1,128)}', space=vmem, size = 0x9000, scoped, tag = 'internal scratch']
  #allocation2 [shape = 'f32[256,1]{1,0:T(8,128)}', space=vmem, size = 0x20000, scoped, tag = 'scratch operand']
  #allocation3 [shape = 'f32[256,1]{1,0:T(8,128)}', space=vmem, size = 0x20000, scoped, tag = 'scratch operand']
  #allocation4 [shape = 'f32[256,128]{1,0:T(8,128)}', space=vmem, size = 0x20000, scoped, tag = 'scratch operand']
  %s0 = inlined_call_operand.vmem [shape: bf16[2,2,256,128], index: 0, kind: input, shape index: {}]
  %s1 = inlined_call_operand.vmem [shape: bf16[2,2,256,128], index: 1, kind: input, shape index: {}]
  %s2 = inlined_call_operand.vmem [shape: bf16[2,2,256,128], index: 2, kind: input, shape index: {}]
  %s3 = inlined_call_operand.vmem [shape: bf16[2,256,256], index: 3, kind: output, shape index: {}]
  %s4 = sld [smem:[#allocation0]]
  $region90: #{self_attention.4} parent=0
    _
  %s6 = ssub.s32 1, %s4
  %s7 = scalar_select 0, %s6, %s4
  $region1: #{self_attention.4} parent=0
    #allocation5 [shape = 'u8[131072]{0}', space=vmem, size = 0x20000, scoped, tag = 'output window, operand 0']
    loop: start=0, step=1, limit=6
    $region2: #{self_attention.4} parent=1 // loop_pre_header
      _
    $region3: #{self_attention.4} parent=1 // loop_header
      %s9 = sphi 0, %s13
      %p10 = scmp.ge.s32.totalorder %s9, 6
      %s16 = sphi 0, %s42
      %s17 = sphi 0, %s38
      %s18 = sphi 0, %s34
      %s19 = sphi 0, %s30
      %s20 = sphi 0, %s16
      %s21 = sphi 0, %s17
      %s22 = sphi 0, %s18
      %s23 = sphi 0, %s19
      %s24 = sphi 0, %s20
      %s25 = sphi 0, %s21
      %s26 = sphi 0, %s22
      %s27 = sphi 0, %s23
      %s49 = sphi 0, %s51
      %s52 = sphi 0, %s49
      %s53 = sphi 0, %s52
      %s69 = sphi 0, %s53
      %s79 = sphi 0, %s81
      %s82 = sphi 0, %s79
      %s83 = sphi 0, %s82
      %s99 = sphi 0, %s83
      %s109 = sphi 0, %s111
      %s112 = sphi 0, %s109
      %s113 = sphi 0, %s112
      %s129 = sphi 0, %s113
      %s139 = sphi 0, %s141
      %s142 = sphi 0, %s139
      %s143 = sphi 0, %s142
      %s159 = sphi 0, %s143
    $region4: #{self_attention.4} parent=1 // loop_header_branch
      %12 = sbr.rel (%p10) target = $region8
    $region5: #{self_attention.4} parent=1 // loop_body
      %s14 = ssub.s32 %s9, 1
      %s15 = ssub.s32 %s9, 2
      %s28 = sadd.s32 1, %s19
      %p29 = scmp.ge.s32.totalorder %s28, 1
      %s30 = scalar_select %p29, 0, %s28
      %s31 = sadd.s32 1, %s18
      %s32 = scalar_select %p29, %s31, %s18
      %p33 = scmp.ge.s32.totalorder %s32, 1
      %s34 = scalar_select %p33, 0, %s32
      %s35 = sadd.s32 1, %s17
      %s36 = scalar_select %p33, %s35, %s17
      %p37 = scmp.ge.s32.totalorder %s36, 2
      %s38 = scalar_select %p37, 0, %s36
      %s39 = sadd.s32 1, %s16
      %s40 = scalar_select %p37, %s39, %s16
      %p41 = scmp.ge.s32.totalorder %s40, 2
      %s42 = scalar_select %p41, 0, %s40
      %s43 = ssub.s32 %s16, %s42
      %s44 = ssub.s32 %s17, %s38
      %s45 = sor.u32 %s43, %s44
      %s46 = ssub.s32 %s18, %s34
      %s47 = sor.u32 %s45, %s46
      %p48 = scmp.eq.s32.totalorder %s47, 0
      %s50 = sadd.s32 %s49, 1
      %s51 = scalar_select %p48, %s49, %s50
      %p54 = pneg %p48
      %p55 = scmp.eq.s32.totalorder %s9, 3
      %p56 = por %p54, %p55
      %p57 = scmp.ne.s32.totalorder %s49, %s52
      %p58 = scmp.eq.s32.totalorder %s9, 0
      %p59 = por %p57, %p58
      %p60 = scmp.ne.s32.totalorder %s49, %s52
      %p61 = scmp.eq.s32.totalorder %s14, 3
      %p62 = por %p60, %p61
      %p63 = scmp.ne.s32.totalorder %s52, %s53
      %p64 = scmp.eq.s32.totalorder %s14, 0
      %p65 = por %p63, %p64
      %p66 = scmp.ne.s32.totalorder %s52, %s53
      %p67 = scmp.eq.s32.totalorder %s15, 3
      %p68 = por %p66, %p67
      %p70 = scmp.ne.s32.totalorder %s53, %s69
      %p71 = scmp.eq.s32.totalorder %s15, 0
      %p72 = por %p70, %p71
      %s73 = ssub.s32 %s16, %s42
      %s74 = ssub.s32 %s17, %s38
      %s75 = sor.u32 %s73, %s74
      %s76 = ssub.s32 %s19, %s30
      %s77 = sor.u32 %s75, %s76
      %p78 = scmp.eq.s32.totalorder %s77, 0
      %s80 = sadd.s32 %s79, 1
      %s81 = scalar_select %p78, %s79, %s80
      %p84 = pneg %p78
      %p85 = scmp.eq.s32.totalorder %s9, 3
      %p86 = por %p84, %p85
      %p87 = scmp.ne.s32.totalorder %s79, %s82
      %p88 = scmp.eq.s32.totalorder %s9, 0
      %p89 = por %p87, %p88
      %p90 = scmp.ne.s32.totalorder %s79, %s82
      %p91 = scmp.eq.s32.totalorder %s14, 3
      %p92 = por %p90, %p91
      %p93 = scmp.ne.s32.totalorder %s82, %s83
      %p94 = scmp.eq.s32.totalorder %s14, 0
      %p95 = por %p93, %p94
      %p96 = scmp.ne.s32.totalorder %s82, %s83
      %p97 = scmp.eq.s32.totalorder %s15, 3
      %p98 = por %p96, %p97
      %p100 = scmp.ne.s32.totalorder %s83, %s99
      %p101 = scmp.eq.s32.totalorder %s15, 0
      %p102 = por %p100, %p101
      %s103 = ssub.s32 %s16, %s42
      %s104 = ssub.s32 %s17, %s38
      %s105 = sor.u32 %s103, %s104
      %s106 = ssub.s32 %s19, %s30
      %s107 = sor.u32 %s105, %s106
      %p108 = scmp.eq.s32.totalorder %s107, 0
      %s110 = sadd.s32 %s109, 1
      %s111 = scalar_select %p108, %s109, %s110
      %p114 = pneg %p108
      %p115 = scmp.eq.s32.totalorder %s9, 3
      %p116 = por %p114, %p115
      %p117 = scmp.ne.s32.totalorder %s109, %s112
      %p118 = scmp.eq.s32.totalorder %s9, 0
      %p119 = por %p117, %p118
      %p120 = scmp.ne.s32.totalorder %s109, %s112
      %p121 = scmp.eq.s32.totalorder %s14, 3
      %p122 = por %p120, %p121
      %p123 = scmp.ne.s32.totalorder %s112, %s113
      %p124 = scmp.eq.s32.totalorder %s14, 0
      %p125 = por %p123, %p124
      %p126 = scmp.ne.s32.totalorder %s112, %s113
      %p127 = scmp.eq.s32.totalorder %s15, 3
      %p128 = por %p126, %p127
      %p130 = scmp.ne.s32.totalorder %s113, %s129
      %p131 = scmp.eq.s32.totalorder %s15, 0
      %p132 = por %p130, %p131
      %s133 = ssub.s32 %s16, %s42
      %s134 = ssub.s32 %s18, %s34
      %s135 = sor.u32 %s133, %s134
      %s136 = ssub.s32 %s17, %s38
      %s137 = sor.u32 %s135, %s136
      %p138 = scmp.eq.s32.totalorder %s137, 0
      %s140 = sadd.s32 %s139, 1
      %s141 = scalar_select %p138, %s139, %s140
      %p144 = pneg %p138
      %p145 = scmp.eq.s32.totalorder %s9, 3
      %p146 = por %p144, %p145
      %p147 = scmp.ne.s32.totalorder %s139, %s142
      %p148 = scmp.eq.s32.totalorder %s9, 0
      %p149 = por %p147, %p148
      %p150 = scmp.ne.s32.totalorder %s139, %s142
      %p151 = scmp.eq.s32.totalorder %s14, 3
      %p152 = por %p150, %p151
      %p153 = scmp.ne.s32.totalorder %s142, %s143
      %p154 = scmp.eq.s32.totalorder %s14, 0
      %p155 = por %p153, %p154
      %p156 = scmp.ne.s32.totalorder %s142, %s143
      %p157 = scmp.eq.s32.totalorder %s15, 3
      %p158 = por %p156, %p157
      %p160 = scmp.ne.s32.totalorder %s143, %s159
      %p161 = scmp.eq.s32.totalorder %s15, 0
      %p162 = por %p160, %p161
      %p163 = scmp.le.s32.totalorder 1, %s9
      %p164 = scmp.lt.s32.totalorder %s9, 5
      %p165 = pnand %p163, %p164
      %p166 = pneg %p165
      // Predicated region
      $region9: #{self_attention.4} parent=5 // pred_check
        _
      $region10: #{self_attention.4} parent=5 // pred_check_branch
        %168 = sbr.rel (%p165) target = $region12
      $region11: #{self_attention.4} parent=5 // pred_region
        %s169 = ssub.s32 %s9, 1
      $region12: #{self_attention.4} parent=5 // pred_fallthru
        _
      %p170 = scmp.lt.s32.totalorder %s9, 4
      // Predicated region
      $region13: #{self_attention.4} parent=5 // pred_check
        %p171 = pneg %p170
      $region14: #{self_attention.4} parent=5 // pred_check_branch
        %173 = sbr.rel (%p171) target = $region16
      $region15: #{self_attention.4} parent=5 // pred_region
        // Predicated region
        $region17: #{self_attention.4} parent=15 // pred_check
          %p174 = pneg %p59
        $region18: #{self_attention.4} parent=15 // pred_check_branch
          %176 = sbr.rel (%p174) target = $region20
        $region19: #{self_attention.4} parent=15 // pred_region
          %s177 = smul.u32 32, %s18
          %p178 = scmp.lt.s32.totalorder %s16, 1
          %s179 = scalar_select %p178, %s16, 1
          %p180 = scmp.lt.s32.totalorder %s17, 1
          %s181 = scalar_select %p180, %s17, 1
          %p182 = scmp.lt.s32.totalorder %s177, 31
          %s183 = scalar_select %p182, %s177, 31
          %s184 = smul.addr %s181, 32
          %s185 = sadd.s32 %s183, %s184
          %s186 = smul.addr %s179, 64
          %s187 = sadd.s32 %s185, %s186
          %s188 = smul.addr %s187, 4
          %s189 = scalar_lea.vmem %s0, %s188
          %s190 = smul.u32 32, %s18
        $region20: #{self_attention.4} parent=15 // pred_fallthru
          _
        // Predicated region
        $region21: #{self_attention.4} parent=15 // pred_check
          %p191 = pneg %p89
        $region22: #{self_attention.4} parent=15 // pred_check_branch
          %193 = sbr.rel (%p191) target = $region24
        $region23: #{self_attention.4} parent=15 // pred_region
          %s194 = smul.u32 32, %s19
          %p195 = scmp.lt.s32.totalorder %s16, 1
          %s196 = scalar_select %p195, %s16, 1
          %p197 = scmp.lt.s32.totalorder %s17, 1
          %s198 = scalar_select %p197, %s17, 1
          %p199 = scmp.lt.s32.totalorder %s194, 31
          %s200 = scalar_select %p199, %s194, 31
          %s201 = smul.addr %s198, 32
          %s202 = sadd.s32 %s200, %s201
          %s203 = smul.addr %s196, 64
          %s204 = sadd.s32 %s202, %s203
          %s205 = smul.addr %s204, 4
          %s206 = scalar_lea.vmem %s1, %s205
          %s207 = smul.u32 32, %s19
        $region24: #{self_attention.4} parent=15 // pred_fallthru
          _
        // Predicated region
        $region25: #{self_attention.4} parent=15 // pred_check
          %p208 = pneg %p119
        $region26: #{self_attention.4} parent=15 // pred_check_branch
          %210 = sbr.rel (%p208) target = $region28
        $region27: #{self_attention.4} parent=15 // pred_region
          %s211 = smul.u32 32, %s19
          %p212 = scmp.lt.s32.totalorder %s16, 1
          %s213 = scalar_select %p212, %s16, 1
          %p214 = scmp.lt.s32.totalorder %s17, 1
          %s215 = scalar_select %p214, %s17, 1
          %p216 = scmp.lt.s32.totalorder %s211, 31
          %s217 = scalar_select %p216, %s211, 31
          %s218 = smul.addr %s215, 32
          %s219 = sadd.s32 %s217, %s218
          %s220 = smul.addr %s213, 64
          %s221 = sadd.s32 %s219, %s220
          %s222 = smul.addr %s221, 4
          %s223 = scalar_lea.vmem %s2, %s222
          %s224 = smul.u32 32, %s19
        $region28: #{self_attention.4} parent=15 // pred_fallthru
          _
      $region16: #{self_attention.4} parent=5 // pred_fallthru
        _
      %p225 = scmp.le.s32.totalorder 1, %s9
      %p226 = scmp.lt.s32.totalorder %s9, 5
      %p227 = pnand %p225, %p226
      %p228 = pneg %p227
      // Predicated region
      $region29: #{self_attention.4} parent=5 // pred_check
        _
      $region30: #{self_attention.4} parent=5 // pred_check_branch
        %230 = sbr.rel (%p227) target = $region32
      $region31: #{self_attention.4} parent=5 // pred_region
        %s231 = ssub.s32 %s9, 1
        %s232 = smul.u32 32, %s22
        %p233 = scmp.lt.s32.totalorder %s20, 1
        %s234 = scalar_select %p233, %s20, 1
        %p235 = scmp.lt.s32.totalorder %s21, 1
        %s236 = scalar_select %p235, %s21, 1
        %p237 = scmp.lt.s32.totalorder %s232, 31
        %s238 = scalar_select %p237, %s232, 31
        %s239 = smul.addr %s236, 32
        %s240 = sadd.s32 %s238, %s239
        %s241 = smul.addr %s234, 64
        %s242 = sadd.s32 %s240, %s241
        %s243 = smul.addr %s242, 4
        %s244 = scalar_lea.vmem %s0, %s243
        %p245 = pneg %p65
        %p246 = pneg %p62
        %s247 = smul.u32 32, %s23
        %p248 = scmp.lt.s32.totalorder %s20, 1
        %s249 = scalar_select %p248, %s20, 1
        %p250 = scmp.lt.s32.totalorder %s21, 1
        %s251 = scalar_select %p250, %s21, 1
        %p252 = scmp.lt.s32.totalorder %s247, 31
        %s253 = scalar_select %p252, %s247, 31
        %s254 = smul.addr %s251, 32
        %s255 = sadd.s32 %s253, %s254
        %s256 = smul.addr %s249, 64
        %s257 = sadd.s32 %s255, %s256
        %s258 = smul.addr %s257, 4
        %s259 = scalar_lea.vmem %s1, %s258
        %p260 = pneg %p95
        %p261 = pneg %p92
        %s262 = smul.u32 32, %s23
        %p263 = scmp.lt.s32.totalorder %s20, 1
        %s264 = scalar_select %p263, %s20, 1
        %p265 = scmp.lt.s32.totalorder %s21, 1
        %s266 = scalar_select %p265, %s21, 1
        %p267 = scmp.lt.s32.totalorder %s262, 31
        %s268 = scalar_select %p267, %s262, 31
        %s269 = smul.addr %s266, 32
        %s270 = sadd.s32 %s268, %s269
        %s271 = smul.addr %s264, 64
        %s272 = sadd.s32 %s270, %s271
        %s273 = smul.addr %s272, 4
        %s274 = scalar_lea.vmem %s2, %s273
        %p275 = pneg %p125
        %p276 = pneg %p122
        %p277 = pneg %p155
        %p278 = pneg %p152
        %s279 = sand.u32 %s142, 1
        %s280 = sand.u32 %s142, 1
        %s281 = smul.addr %s280, 128
        %s282 = scalar_lea.vmem [#allocation5], %s281
        %s283 = smul.u32 32, %s22
        %p284 = scmp.lt.s32.totalorder %s20, 1
        %s285 = scalar_select %p284, %s20, 1
        %p286 = scmp.lt.s32.totalorder %s21, 1
        %s287 = scalar_select %p286, %s21, 1
        %p288 = scmp.lt.s32.totalorder %s283, 31
        %s289 = scalar_select %p288, %s283, 31
        %s290 = smul.addr %s287, 32
        %s291 = sadd.s32 %s289, %s290
        %s292 = smul.addr %s285, 64
        %s293 = sadd.s32 %s291, %s292
        %s294 = smul.addr %s293, 4
        %s295 = scalar_lea.vmem %s0, %s294
        %s296 = smul.u32 32, %s22
        %s297 = smul.u32 32, %s23
        %p298 = scmp.lt.s32.totalorder %s20, 1
        %s299 = scalar_select %p298, %s20, 1
        %p300 = scmp.lt.s32.totalorder %s21, 1
        %s301 = scalar_select %p300, %s21, 1
        %p302 = scmp.lt.s32.totalorder %s297, 31
        %s303 = scalar_select %p302, %s297, 31
        %s304 = smul.addr %s301, 32
        %s305 = sadd.s32 %s303, %s304
        %s306 = smul.addr %s299, 64
        %s307 = sadd.s32 %s305, %s306
        %s308 = smul.addr %s307, 4
        %s309 = scalar_lea.vmem %s1, %s308
        %s310 = smul.u32 32, %s23
        %s311 = smul.u32 32, %s23
        %p312 = scmp.lt.s32.totalorder %s20, 1
        %s313 = scalar_select %p312, %s20, 1
        %p314 = scmp.lt.s32.totalorder %s21, 1
        %s315 = scalar_select %p314, %s21, 1
        %p316 = scmp.lt.s32.totalorder %s311, 31
        %s317 = scalar_select %p316, %s311, 31
        %s318 = smul.addr %s315, 32
        %s319 = sadd.s32 %s317, %s318
        %s320 = smul.addr %s313, 64
        %s321 = sadd.s32 %s319, %s320
        %s322 = smul.addr %s321, 4
        %s323 = scalar_lea.vmem %s2, %s322
        %s324 = smul.u32 32, %s23
        %s325 = smul.u32 32, %s22
        %p326 = scmp.eq.s32.totalorder %s23, 0
        // Predicated region
        $region33: #{self_attention.4} parent=31 // pred_check
          %p327 = pneg %p326
        $region34: #{self_attention.4} parent=31 // pred_check_branch
          %329 = sbr.rel (%p327) target = $region36
        $region35: #{self_attention.4} parent=31 // pred_region
          %vm330 = vcmask 7168
          %331 = vst.msk [vmem:[#allocation2] sm:$0xff] %vm330, -inf
          %332 = vst.msk [vmem:[#allocation2 + $0x8] sm:$0xff] %vm330, -inf
          %333 = vst.msk [vmem:[#allocation2 + $0x10] sm:$0xff] %vm330, -inf
          %334 = vst.msk [vmem:[#allocation2 + $0x18] sm:$0xff] %vm330, -inf
          %335 = vst.msk [vmem:[#allocation2 + $0x20] sm:$0xff] %vm330, -inf
          %336 = vst.msk [vmem:[#allocation2 + $0x28] sm:$0xff] %vm330, -inf
          %337 = vst.msk [vmem:[#allocation2 + $0x30] sm:$0xff] %vm330, -inf
          %338 = vst.msk [vmem:[#allocation2 + $0x38] sm:$0xff] %vm330, -inf
          %339 = vst.msk [vmem:[#allocation2 + $0x40] sm:$0xff] %vm330, -inf
          %340 = vst.msk [vmem:[#allocation2 + $0x48] sm:$0xff] %vm330, -inf
          %341 = vst.msk [vmem:[#allocation2 + $0x50] sm:$0xff] %vm330, -inf
          %342 = vst.msk [vmem:[#allocation2 + $0x58] sm:$0xff] %vm330, -inf
          %343 = vst.msk [vmem:[#allocation2 + $0x60] sm:$0xff] %vm330, -inf
          %344 = vst.msk [vmem:[#allocation2 + $0x68] sm:$0xff] %vm330, -inf
          %345 = vst.msk [vmem:[#allocation2 + $0x70] sm:$0xff] %vm330, -inf
          %346 = vst.msk [vmem:[#allocation2 + $0x78] sm:$0xff] %vm330, -inf
          %347 = vst.msk [vmem:[#allocation2 + $0x80] sm:$0xff] %vm330, -inf
          %348 = vst.msk [vmem:[#allocation2 + $0x88] sm:$0xff] %vm330, -inf
          %349 = vst.msk [vmem:[#allocation2 + $0x90] sm:$0xff] %vm330, -inf
          %350 = vst.msk [vmem:[#allocation2 + $0x98] sm:$0xff] %vm330, -inf
          %351 = vst.msk [vmem:[#allocation2 + $0xa0] sm:$0xff] %vm330, -inf
          %352 = vst.msk [vmem:[#allocation2 + $0xa8] sm:$0xff] %vm330, -inf
          %353 = vst.msk [vmem:[#allocation2 + $0xb0] sm:$0xff] %vm330, -inf
          %354 = vst.msk [vmem:[#allocation2 + $0xb8] sm:$0xff] %vm330, -inf
          %355 = vst.msk [vmem:[#allocation2 + $0xc0] sm:$0xff] %vm330, -inf
          %356 = vst.msk [vmem:[#allocation2 + $0xc8] sm:$0xff] %vm330, -inf
          %357 = vst.msk [vmem:[#allocation2 + $0xd0] sm:$0xff] %vm330, -inf
          %358 = vst.msk [vmem:[#allocation2 + $0xd8] sm:$0xff] %vm330, -inf
          %359 = vst.msk [vmem:[#allocation2 + $0xe0] sm:$0xff] %vm330, -inf
          %360 = vst.msk [vmem:[#allocation2 + $0xe8] sm:$0xff] %vm330, -inf
          %361 = vst.msk [vmem:[#allocation2 + $0xf0] sm:$0xff] %vm330, -inf
          %362 = vst.msk [vmem:[#allocation2 + $0xf8] sm:$0xff] %vm330, -inf
          %363 = vst.msk [vmem:[#allocation3] sm:$0xff] %vm330, 0.0
          %364 = vst.msk [vmem:[#allocation3 + $0x8] sm:$0xff] %vm330, 0.0
          %365 = vst.msk [vmem:[#allocation3 + $0x10] sm:$0xff] %vm330, 0.0
          %366 = vst.msk [vmem:[#allocation3 + $0x18] sm:$0xff] %vm330, 0.0
          %367 = vst.msk [vmem:[#allocation3 + $0x20] sm:$0xff] %vm330, 0.0
          %368 = vst.msk [vmem:[#allocation3 + $0x28] sm:$0xff] %vm330, 0.0
          %369 = vst.msk [vmem:[#allocation3 + $0x30] sm:$0xff] %vm330, 0.0
          %370 = vst.msk [vmem:[#allocation3 + $0x38] sm:$0xff] %vm330, 0.0
          %371 = vst.msk [vmem:[#allocation3 + $0x40] sm:$0xff] %vm330, 0.0
          %372 = vst.msk [vmem:[#allocation3 + $0x48] sm:$0xff] %vm330, 0.0
          %373 = vst.msk [vmem:[#allocation3 + $0x50] sm:$0xff] %vm330, 0.0
          %374 = vst.msk [vmem:[#allocation3 + $0x58] sm:$0xff] %vm330, 0.0
          %375 = vst.msk [vmem:[#allocation3 + $0x60] sm:$0xff] %vm330, 0.0
          %376 = vst.msk [vmem:[#allocation3 + $0x68] sm:$0xff] %vm330, 0.0
          %377 = vst.msk [vmem:[#allocation3 + $0x70] sm:$0xff] %vm330, 0.0
          %378 = vst.msk [vmem:[#allocation3 + $0x78] sm:$0xff] %vm330, 0.0
          %379 = vst.msk [vmem:[#allocation3 + $0x80] sm:$0xff] %vm330, 0.0
          %380 = vst.msk [vmem:[#allocation3 + $0x88] sm:$0xff] %vm330, 0.0
          %381 = vst.msk [vmem:[#allocation3 + $0x90] sm:$0xff] %vm330, 0.0
          %382 = vst.msk [vmem:[#allocation3 + $0x98] sm:$0xff] %vm330, 0.0
          %383 = vst.msk [vmem:[#allocation3 + $0xa0] sm:$0xff] %vm330, 0.0
          %384 = vst.msk [vmem:[#allocation3 + $0xa8] sm:$0xff] %vm330, 0.0
          %385 = vst.msk [vmem:[#allocation3 + $0xb0] sm:$0xff] %vm330, 0.0
          %386 = vst.msk [vmem:[#allocation3 + $0xb8] sm:$0xff] %vm330, 0.0
          %387 = vst.msk [vmem:[#allocation3 + $0xc0] sm:$0xff] %vm330, 0.0
          %388 = vst.msk [vmem:[#allocation3 + $0xc8] sm:$0xff] %vm330, 0.0
          %389 = vst.msk [vmem:[#allocation3 + $0xd0] sm:$0xff] %vm330, 0.0
          %390 = vst.msk [vmem:[#allocation3 + $0xd8] sm:$0xff] %vm330, 0.0
          %391 = vst.msk [vmem:[#allocation3 + $0xe0] sm:$0xff] %vm330, 0.0
          %392 = vst.msk [vmem:[#allocation3 + $0xe8] sm:$0xff] %vm330, 0.0
          %393 = vst.msk [vmem:[#allocation3 + $0xf0] sm:$0xff] %vm330, 0.0
          %394 = vst.msk [vmem:[#allocation3 + $0xf8] sm:$0xff] %vm330, 0.0
          %395 = vst [vmem:[#allocation4] sm:$0xff] 0.0
          %396 = vst [vmem:[#allocation4 + $0x8] sm:$0xff] 0.0
          %397 = vst [vmem:[#allocation4 + $0x10] sm:$0xff] 0.0
          %398 = vst [vmem:[#allocation4 + $0x18] sm:$0xff] 0.0
          %399 = vst [vmem:[#allocation4 + $0x20] sm:$0xff] 0.0
          %400 = vst [vmem:[#allocation4 + $0x28] sm:$0xff] 0.0
          %401 = vst [vmem:[#allocation4 + $0x30] sm:$0xff] 0.0
          %402 = vst [vmem:[#allocation4 + $0x38] sm:$0xff] 0.0
          %403 = vst [vmem:[#allocation4 + $0x40] sm:$0xff] 0.0
          %404 = vst [vmem:[#allocation4 + $0x48] sm:$0xff] 0.0
          %405 = vst [vmem:[#allocation4 + $0x50] sm:$0xff] 0.0
          %406 = vst [vmem:[#allocation4 + $0x58] sm:$0xff] 0.0
          %407 = vst [vmem:[#allocation4 + $0x60] sm:$0xff] 0.0
          %408 = vst [vmem:[#allocation4 + $0x68] sm:$0xff] 0.0
          %409 = vst [vmem:[#allocation4 + $0x70] sm:$0xff] 0.0
          %410 = vst [vmem:[#allocation4 + $0x78] sm:$0xff] 0.0
          %411 = vst [vmem:[#allocation4 + $0x80] sm:$0xff] 0.0
          %412 = vst [vmem:[#allocation4 + $0x88] sm:$0xff] 0.0
          %413 = vst [vmem:[#allocation4 + $0x90] sm:$0xff] 0.0
          %414 = vst [vmem:[#allocation4 + $0x98] sm:$0xff] 0.0
          %415 = vst [vmem:[#allocation4 + $0xa0] sm:$0xff] 0.0
          %416 = vst [vmem:[#allocation4 + $0xa8] sm:$0xff] 0.0
          %417 = vst [vmem:[#allocation4 + $0xb0] sm:$0xff] 0.0
          %418 = vst [vmem:[#allocation4 + $0xb8] sm:$0xff] 0.0
          %419 = vst [vmem:[#allocation4 + $0xc0] sm:$0xff] 0.0
          %420 = vst [vmem:[#allocation4 + $0xc8] sm:$0xff] 0.0
          %421 = vst [vmem:[#allocation4 + $0xd0] sm:$0xff] 0.0
          %422 = vst [vmem:[#allocation4 + $0xd8] sm:$0xff] 0.0
          %423 = vst [vmem:[#allocation4 + $0xe0] sm:$0xff] 0.0
          %424 = vst [vmem:[#allocation4 + $0xe8] sm:$0xff] 0.0
          %425 = vst [vmem:[#allocation4 + $0xf0] sm:$0xff] 0.0
          %426 = vst [vmem:[#allocation4 + $0xf8] sm:$0xff] 0.0
        $region36: #{self_attention.4} parent=31 // pred_fallthru
          _
        %v427 = vld [vmem:[%s295] sm:$0xf]
        %v428 = vld [vmem:[%s295 + $0x4] sm:$0xf]
        %v429 = vld [vmem:[%s295 + $0x8] sm:$0xf]
        %v430 = vld [vmem:[%s295 + $0xc] sm:$0xf]
        %v431 = vld [vmem:[%s295 + $0x10] sm:$0xf]
        %v432 = vld [vmem:[%s295 + $0x14] sm:$0xf]
        %v433 = vld [vmem:[%s295 + $0x18] sm:$0xf]
        %v434 = vld [vmem:[%s295 + $0x1c] sm:$0xf]
        %v435 = vld [vmem:[%s295 + $0x20] sm:$0xf]
        %v436 = vld [vmem:[%s295 + $0x24] sm:$0xf]
        %v437 = vld [vmem:[%s295 + $0x28] sm:$0xf]
        %v438 = vld [vmem:[%s295 + $0x2c] sm:$0xf]
        %v439 = vld [vmem:[%s295 + $0x30] sm:$0xf]
        %v440 = vld [vmem:[%s295 + $0x34] sm:$0xf]
        %v441 = vld [vmem:[%s295 + $0x38] sm:$0xf]
        %v442 = vld [vmem:[%s295 + $0x3c] sm:$0xf]
        %v443 = vld [vmem:[%s295 + $0x40] sm:$0xf]
        %v444 = vld [vmem:[%s295 + $0x44] sm:$0xf]
        %v445 = vld [vmem:[%s295 + $0x48] sm:$0xf]
        %v446 = vld [vmem:[%s295 + $0x4c] sm:$0xf]
        %v447 = vld [vmem:[%s295 + $0x50] sm:$0xf]
        %v448 = vld [vmem:[%s295 + $0x54] sm:$0xf]
        %v449 = vld [vmem:[%s295 + $0x58] sm:$0xf]
        %v450 = vld [vmem:[%s295 + $0x5c] sm:$0xf]
        %v451 = vld [vmem:[%s295 + $0x60] sm:$0xf]
        %v452 = vld [vmem:[%s295 + $0x64] sm:$0xf]
        %v453 = vld [vmem:[%s295 + $0x68] sm:$0xf]
        %v454 = vld [vmem:[%s295 + $0x6c] sm:$0xf]
        %v455 = vld [vmem:[%s295 + $0x70] sm:$0xf]
        %v456 = vld [vmem:[%s295 + $0x74] sm:$0xf]
        %v457 = vld [vmem:[%s295 + $0x78] sm:$0xf]
        %v458 = vld [vmem:[%s295 + $0x7c] sm:$0xf]
        %v459 = vld [vmem:[%s309] sm:$0xf]
        %v460 = vld [vmem:[%s309 + $0x4] sm:$0xf]
        %v461 = vld [vmem:[%s309 + $0x8] sm:$0xf]
        %v462 = vld [vmem:[%s309 + $0xc] sm:$0xf]
        %v463 = vld [vmem:[%s309 + $0x10] sm:$0xf]
        %v464 = vld [vmem:[%s309 + $0x14] sm:$0xf]
        %v465 = vld [vmem:[%s309 + $0x18] sm:$0xf]
        %v466 = vld [vmem:[%s309 + $0x1c] sm:$0xf]
        %v467 = vld [vmem:[%s309 + $0x20] sm:$0xf]
        %v468 = vld [vmem:[%s309 + $0x24] sm:$0xf]
        %v469 = vld [vmem:[%s309 + $0x28] sm:$0xf]
        %v470 = vld [vmem:[%s309 + $0x2c] sm:$0xf]
        %v471 = vld [vmem:[%s309 + $0x30] sm:$0xf]
        %v472 = vld [vmem:[%s309 + $0x34] sm:$0xf]
        %v473 = vld [vmem:[%s309 + $0x38] sm:$0xf]
        %v474 = vld [vmem:[%s309 + $0x3c] sm:$0xf]
        %v475 = vld [vmem:[%s309 + $0x40] sm:$0xf]
        %v476 = vld [vmem:[%s309 + $0x44] sm:$0xf]
        %v477 = vld [vmem:[%s309 + $0x48] sm:$0xf]
        %v478 = vld [vmem:[%s309 + $0x4c] sm:$0xf]
        %v479 = vld [vmem:[%s309 + $0x50] sm:$0xf]
        %v480 = vld [vmem:[%s309 + $0x54] sm:$0xf]
        %v481 = vld [vmem:[%s309 + $0x58] sm:$0xf]
        %v482 = vld [vmem:[%s309 + $0x5c] sm:$0xf]
        %v483 = vld [vmem:[%s309 + $0x60] sm:$0xf]
        %v484 = vld [vmem:[%s309 + $0x64] sm:$0xf]
        %v485 = vld [vmem:[%s309 + $0x68] sm:$0xf]
        %v486 = vld [vmem:[%s309 + $0x6c] sm:$0xf]
        %v487 = vld [vmem:[%s309 + $0x70] sm:$0xf]
        %v488 = vld [vmem:[%s309 + $0x74] sm:$0xf]
        %v489 = vld [vmem:[%s309 + $0x78] sm:$0xf]
        %v490 = vld [vmem:[%s309 + $0x7c] sm:$0xf]
        %v523 = vunpack.c.l.b16 %v427
        %v524 = vunpack.c.l.b16 %v428
        %v525 = vunpack.c.l.b16 %v429
        %v526 = vunpack.c.l.b16 %v430
        %v527 = vunpack.c.l.b16 %v431
        %v528 = vunpack.c.l.b16 %v432
        %v529 = vunpack.c.l.b16 %v433
        %v530 = vunpack.c.l.b16 %v434
        %v531 = vunpack.c.l.b16 %v435
        %v532 = vunpack.c.l.b16 %v436
        %v533 = vunpack.c.l.b16 %v437
        %v534 = vunpack.c.l.b16 %v438
        %v535 = vunpack.c.l.b16 %v439
        %v536 = vunpack.c.l.b16 %v440
        %v537 = vunpack.c.l.b16 %v441
        %v538 = vunpack.c.l.b16 %v442
        %v539 = vunpack.c.l.b16 %v443
        %v540 = vunpack.c.l.b16 %v444
        %v541 = vunpack.c.l.b16 %v445
        %v542 = vunpack.c.l.b16 %v446
        %v543 = vunpack.c.l.b16 %v447
        %v544 = vunpack.c.l.b16 %v448
        %v545 = vunpack.c.l.b16 %v449
        %v546 = vunpack.c.l.b16 %v450
        %v547 = vunpack.c.l.b16 %v451
        %v548 = vunpack.c.l.b16 %v452
        %v549 = vunpack.c.l.b16 %v453
        %v550 = vunpack.c.l.b16 %v454
        %v551 = vunpack.c.l.b16 %v455
        %v552 = vunpack.c.l.b16 %v456
        %v553 = vunpack.c.l.b16 %v457
        %v554 = vunpack.c.l.b16 %v458
        %v555 = vpack.c.b16 %v524, %v523
        %v556 = vpack.c.b16 %v526, %v525
        %v557 = vpack.c.b16 %v528, %v527
        %v558 = vpack.c.b16 %v530, %v529
        %v559 = vpack.c.b16 %v532, %v531
        %v560 = vpack.c.b16 %v534, %v533
        %v561 = vpack.c.b16 %v536, %v535
        %v562 = vpack.c.b16 %v538, %v537
        %v563 = vpack.c.b16 %v540, %v539
        %v564 = vpack.c.b16 %v542, %v541
        %v565 = vpack.c.b16 %v544, %v543
        %v566 = vpack.c.b16 %v546, %v545
        %v567 = vpack.c.b16 %v548, %v547
        %v568 = vpack.c.b16 %v550, %v549
        %v569 = vpack.c.b16 %v552, %v551
        %v570 = vpack.c.b16 %v554, %v553
        %v619 = vunpack.c.l.b16 %v459
        %v620 = vunpack.c.l.b16 %v460
        %v621 = vunpack.c.l.b16 %v461
        %v622 = vunpack.c.l.b16 %v462
        %v623 = vunpack.c.l.b16 %v463
        %v624 = vunpack.c.l.b16 %v464
        %v625 = vunpack.c.l.b16 %v465
        %v626 = vunpack.c.l.b16 %v466
        %v627 = vunpack.c.l.b16 %v467
        %v628 = vunpack.c.l.b16 %v468
        %v629 = vunpack.c.l.b16 %v469
        %v630 = vunpack.c.l.b16 %v470
        %v631 = vunpack.c.l.b16 %v471
        %v632 = vunpack.c.l.b16 %v472
        %v633 = vunpack.c.l.b16 %v473
        %v634 = vunpack.c.l.b16 %v474
        %v635 = vunpack.c.l.b16 %v475
        %v636 = vunpack.c.l.b16 %v476
        %v637 = vunpack.c.l.b16 %v477
        %v638 = vunpack.c.l.b16 %v478
        %v639 = vunpack.c.l.b16 %v479
        %v640 = vunpack.c.l.b16 %v480
        %v641 = vunpack.c.l.b16 %v481
        %v642 = vunpack.c.l.b16 %v482
        %v643 = vunpack.c.l.b16 %v483
        %v644 = vunpack.c.l.b16 %v484
        %v645 = vunpack.c.l.b16 %v485
        %v646 = vunpack.c.l.b16 %v486
        %v647 = vunpack.c.l.b16 %v487
        %v648 = vunpack.c.l.b16 %v488
        %v649 = vunpack.c.l.b16 %v489
        %v650 = vunpack.c.l.b16 %v490
        %v651 = vpack.c.b16 %v620, %v619
        %v652 = vpack.c.b16 %v622, %v621
        %v653 = vpack.c.b16 %v624, %v623
        %v654 = vpack.c.b16 %v626, %v625
        %v655 = vpack.c.b16 %v628, %v627
        %v656 = vpack.c.b16 %v630, %v629
        %v657 = vpack.c.b16 %v632, %v631
        %v658 = vpack.c.b16 %v634, %v633
        %v659 = vpack.c.b16 %v636, %v635
        %v660 = vpack.c.b16 %v638, %v637
        %v661 = vpack.c.b16 %v640, %v639
        %v662 = vpack.c.b16 %v642, %v641
        %v663 = vpack.c.b16 %v644, %v643
        %v664 = vpack.c.b16 %v646, %v645
        %v665 = vpack.c.b16 %v648, %v647
        %v666 = vpack.c.b16 %v650, %v649
        %683 = vmatpush.bf16.xpose.msra.mxu0 %v658
        %684 = vmatpush.bf16.xpose.msra.mxu0 %v657
        %685 = vmatpush.bf16.xpose.msra.mxu0 %v656
        %686 = vmatpush.bf16.xpose.msra.mxu0 %v655
        %687 = vmatpush.bf16.xpose.msra.mxu0 %v654
        %688 = vmatpush.bf16.xpose.msra.mxu0 %v653
        %689 = vmatpush.bf16.xpose.msra.mxu0 %v652
        %690 = vmatpush.bf16.xpose.msra.mxu0 %v651
        %691 = vmatmul.bf16.gmra.mxu0 %v555
        %v692 = vpop.f32.mrf.mxu0
        %v693 = vadd.f32 0.0, %v692
        %v694 = vpop.f32.mrf.mxu0
        %v695 = vadd.f32 0.0, %v694
        %696 = vmatmul.bf16.gmra.mxu0 %v556
        %v697 = vpop.f32.mrf.mxu0
        %v698 = vadd.f32 0.0, %v697
        %v699 = vpop.f32.mrf.mxu0
        %v700 = vadd.f32 0.0, %v699
        %701 = vmatmul.bf16.gmra.mxu0 %v557
        %v702 = vpop.f32.mrf.mxu0
        %v703 = vadd.f32 0.0, %v702
        %v704 = vpop.f32.mrf.mxu0
        %v705 = vadd.f32 0.0, %v704
        %706 = vmatmul.bf16.gmra.mxu0 %v558
        %v707 = vpop.f32.mrf.mxu0
        %v708 = vadd.f32 0.0, %v707
        %v709 = vpop.f32.mrf.mxu0
        %v710 = vadd.f32 0.0, %v709
        %711 = vmatmul.bf16.gmra.mxu0 %v559
        %v712 = vpop.f32.mrf.mxu0
        %v713 = vadd.f32 0.0, %v712
        %v714 = vpop.f32.mrf.mxu0
        %v715 = vadd.f32 0.0, %v714
        %716 = vmatmul.bf16.gmra.mxu0 %v560
        %v717 = vpop.f32.mrf.mxu0
        %v718 = vadd.f32 0.0, %v717
        %v719 = vpop.f32.mrf.mxu0
        %v720 = vadd.f32 0.0, %v719
        %721 = vmatmul.bf16.gmra.mxu0 %v561
        %v722 = vpop.f32.mrf.mxu0
        %v723 = vadd.f32 0.0, %v722
        %v724 = vpop.f32.mrf.mxu0
        %v725 = vadd.f32 0.0, %v724
        %726 = vmatmul.bf16.gmra.mxu0 %v562
        %v727 = vpop.f32.mrf.mxu0
        %v728 = vadd.f32 0.0, %v727
        %v729 = vpop.f32.mrf.mxu0
        %v730 = vadd.f32 0.0, %v729
        %731 = vmatmul.bf16.gmra.mxu0 %v563
        %v732 = vpop.f32.mrf.mxu0
        %v733 = vadd.f32 0.0, %v732
        %v734 = vpop.f32.mrf.mxu0
        %v735 = vadd.f32 0.0, %v734
        %736 = vmatmul.bf16.gmra.mxu0 %v564
        %v737 = vpop.f32.mrf.mxu0
        %v738 = vadd.f32 0.0, %v737
        %v739 = vpop.f32.mrf.mxu0
        %v740 = vadd.f32 0.0, %v739
        %741 = vmatmul.bf16.gmra.mxu0 %v565
        %v742 = vpop.f32.mrf.mxu0
        %v743 = vadd.f32 0.0, %v742
        %v744 = vpop.f32.mrf.mxu0
        %v745 = vadd.f32 0.0, %v744
        %746 = vmatmul.bf16.gmra.mxu0 %v566
        %v747 = vpop.f32.mrf.mxu0
        %v748 = vadd.f32 0.0, %v747
        %v749 = vpop.f32.mrf.mxu0
        %v750 = vadd.f32 0.0, %v749
        %751 = vmatmul.bf16.gmra.mxu0 %v567
        %v752 = vpop.f32.mrf.mxu0
        %v753 = vadd.f32 0.0, %v752
        %v754 = vpop.f32.mrf.mxu0
        %v755 = vadd.f32 0.0, %v754
        %756 = vmatmul.bf16.gmra.mxu0 %v568
        %v757 = vpop.f32.mrf.mxu0
        %v758 = vadd.f32 0.0, %v757
        %v759 = vpop.f32.mrf.mxu0
        %v760 = vadd.f32 0.0, %v759
        %761 = vmatmul.bf16.gmra.mxu0 %v569
        %v762 = vpop.f32.mrf.mxu0
        %v763 = vadd.f32 0.0, %v762
        %v764 = vpop.f32.mrf.mxu0
        %v765 = vadd.f32 0.0, %v764
        %766 = vmatmul.bf16.gmra.mxu0 %v570
        %v767 = vpop.f32.mrf.mxu0
        %v768 = vadd.f32 0.0, %v767
        %v769 = vpop.f32.mrf.mxu0
        %v770 = vadd.f32 0.0, %v769
        %771 = vdwg.mxu0
        %772 = vmatpush.bf16.xpose.msra.mxu0 %v666
        %773 = vmatpush.bf16.xpose.msra.mxu0 %v665
        %774 = vmatpush.bf16.xpose.msra.mxu0 %v664
        %775 = vmatpush.bf16.xpose.msra.mxu0 %v663
        %776 = vmatpush.bf16.xpose.msra.mxu0 %v662
        %777 = vmatpush.bf16.xpose.msra.mxu0 %v661
        %778 = vmatpush.bf16.xpose.msra.mxu0 %v660
        %779 = vmatpush.bf16.xpose.msra.mxu0 %v659
        %780 = vmatmul.bf16.gmra.mxu0 %v555
        %v781 = vpop.f32.mrf.mxu0
        %v782 = vadd.f32 0.0, %v781
        %v783 = vpop.f32.mrf.mxu0
        %v784 = vadd.f32 0.0, %v783
        %785 = vmatmul.bf16.gmra.mxu0 %v556
        %v786 = vpop.f32.mrf.mxu0
        %v787 = vadd.f32 0.0, %v786
        %v788 = vpop.f32.mrf.mxu0
        %v789 = vadd.f32 0.0, %v788
        %790 = vmatmul.bf16.gmra.mxu0 %v557
        %v791 = vpop.f32.mrf.mxu0
        %v792 = vadd.f32 0.0, %v791
        %v793 = vpop.f32.mrf.mxu0
        %v794 = vadd.f32 0.0, %v793
        %795 = vmatmul.bf16.gmra.mxu0 %v558
        %v796 = vpop.f32.mrf.mxu0
        %v797 = vadd.f32 0.0, %v796
        %v798 = vpop.f32.mrf.mxu0
        %v799 = vadd.f32 0.0, %v798
        %800 = vmatmul.bf16.gmra.mxu0 %v559
        %v801 = vpop.f32.mrf.mxu0
        %v802 = vadd.f32 0.0, %v801
        %v803 = vpop.f32.mrf.mxu0
        %v804 = vadd.f32 0.0, %v803
        %805 = vmatmul.bf16.gmra.mxu0 %v560
        %v806 = vpop.f32.mrf.mxu0
        %v807 = vadd.f32 0.0, %v806
        %v808 = vpop.f32.mrf.mxu0
        %v809 = vadd.f32 0.0, %v808
        %810 = vmatmul.bf16.gmra.mxu0 %v561
        %v811 = vpop.f32.mrf.mxu0
        %v812 = vadd.f32 0.0, %v811
        %v813 = vpop.f32.mrf.mxu0
        %v814 = vadd.f32 0.0, %v813
        %815 = vmatmul.bf16.gmra.mxu0 %v562
        %v816 = vpop.f32.mrf.mxu0
        %v817 = vadd.f32 0.0, %v816
        %v818 = vpop.f32.mrf.mxu0
        %v819 = vadd.f32 0.0, %v818
        %820 = vmatmul.bf16.gmra.mxu0 %v563
        %v821 = vpop.f32.mrf.mxu0
        %v822 = vadd.f32 0.0, %v821
        %v823 = vpop.f32.mrf.mxu0
        %v824 = vadd.f32 0.0, %v823
        %825 = vmatmul.bf16.gmra.mxu0 %v564
        %v826 = vpop.f32.mrf.mxu0
        %v827 = vadd.f32 0.0, %v826
        %v828 = vpop.f32.mrf.mxu0
        %v829 = vadd.f32 0.0, %v828
        %830 = vmatmul.bf16.gmra.mxu0 %v565
        %v831 = vpop.f32.mrf.mxu0
        %v832 = vadd.f32 0.0, %v831
        %v833 = vpop.f32.mrf.mxu0
        %v834 = vadd.f32 0.0, %v833
        %835 = vmatmul.bf16.gmra.mxu0 %v566
        %v836 = vpop.f32.mrf.mxu0
        %v837 = vadd.f32 0.0, %v836
        %v838 = vpop.f32.mrf.mxu0
        %v839 = vadd.f32 0.0, %v838
        %840 = vmatmul.bf16.gmra.mxu0 %v567
        %v841 = vpop.f32.mrf.mxu0
        %v842 = vadd.f32 0.0, %v841
        %v843 = vpop.f32.mrf.mxu0
        %v844 = vadd.f32 0.0, %v843
        %845 = vmatmul.bf16.gmra.mxu0 %v568
        %v846 = vpop.f32.mrf.mxu0
        %v847 = vadd.f32 0.0, %v846
        %v848 = vpop.f32.mrf.mxu0
        %v849 = vadd.f32 0.0, %v848
        %850 = vmatmul.bf16.gmra.mxu0 %v569
        %v851 = vpop.f32.mrf.mxu0
        %v852 = vadd.f32 0.0, %v851
        %v853 = vpop.f32.mrf.mxu0
        %v854 = vadd.f32 0.0, %v853
        %855 = vmatmul.bf16.gmra.mxu0 %v570
        %v856 = vpop.f32.mrf.mxu0
        %v857 = vadd.f32 0.0, %v856
        %v858 = vpop.f32.mrf.mxu0
        %v859 = vadd.f32 0.0, %v858
        %860 = vdwg.mxu0
        %v861 = vld [vmem:[#allocation2] sm:$0xff]
        %v862 = vld [vmem:[#allocation2 + $0x8] sm:$0xff]
        %v863 = vld [vmem:[#allocation2 + $0x10] sm:$0xff]
        %v864 = vld [vmem:[#allocation2 + $0x18] sm:$0xff]
        %v865 = vld [vmem:[#allocation2 + $0x20] sm:$0xff]
        %v866 = vld [vmem:[#allocation2 + $0x28] sm:$0xff]
        %v867 = vld [vmem:[#allocation2 + $0x30] sm:$0xff]
        %v868 = vld [vmem:[#allocation2 + $0x38] sm:$0xff]
        %v869 = vld [vmem:[#allocation2 + $0x40] sm:$0xff]
        %v870 = vld [vmem:[#allocation2 + $0x48] sm:$0xff]
        %v871 = vld [vmem:[#allocation2 + $0x50] sm:$0xff]
        %v872 = vld [vmem:[#allocation2 + $0x58] sm:$0xff]
        %v873 = vld [vmem:[#allocation2 + $0x60] sm:$0xff]
        %v874 = vld [vmem:[#allocation2 + $0x68] sm:$0xff]
        %v875 = vld [vmem:[#allocation2 + $0x70] sm:$0xff]
        %v876 = vld [vmem:[#allocation2 + $0x78] sm:$0xff]
        %v877 = vld [vmem:[#allocation2 + $0x80] sm:$0xff]
        %v878 = vld [vmem:[#allocation2 + $0x88] sm:$0xff]
        %v879 = vld [vmem:[#allocation2 + $0x90] sm:$0xff]
        %v880 = vld [vmem:[#allocation2 + $0x98] sm:$0xff]
        %v881 = vld [vmem:[#allocation2 + $0xa0] sm:$0xff]
        %v882 = vld [vmem:[#allocation2 + $0xa8] sm:$0xff]
        %v883 = vld [vmem:[#allocation2 + $0xb0] sm:$0xff]
        %v884 = vld [vmem:[#allocation2 + $0xb8] sm:$0xff]
        %v885 = vld [vmem:[#allocation2 + $0xc0] sm:$0xff]
        %v886 = vld [vmem:[#allocation2 + $0xc8] sm:$0xff]
        %v887 = vld [vmem:[#allocation2 + $0xd0] sm:$0xff]
        %v888 = vld [vmem:[#allocation2 + $0xd8] sm:$0xff]
        %v889 = vld [vmem:[#allocation2 + $0xe0] sm:$0xff]
        %v890 = vld [vmem:[#allocation2 + $0xe8] sm:$0xff]
        %v891 = vld [vmem:[#allocation2 + $0xf0] sm:$0xff]
        %v892 = vld [vmem:[#allocation2 + $0xf8] sm:$0xff]
        %v893 = vmax.f32 %v693, %v782
        %894 = vmax.xlane.f32.xlu0 %v893
        %v895 = vpop.xlane.xlu0 %894
        %v896 = vmax.f32 %v695, %v784
        %897 = vmax.xlane.f32.xlu0 %v896
        %v898 = vpop.xlane.xlu0 %897
        %v899 = vmax.f32 %v698, %v787
        %900 = vmax.xlane.f32.xlu0 %v899
        %v901 = vpop.xlane.xlu0 %900
        %v902 = vmax.f32 %v700, %v789
        %903 = vmax.xlane.f32.xlu0 %v902
        %v904 = vpop.xlane.xlu0 %903
        %v905 = vmax.f32 %v703, %v792
        %906 = vmax.xlane.f32.xlu0 %v905
        %v907 = vpop.xlane.xlu0 %906
        %v908 = vmax.f32 %v705, %v794
        %909 = vmax.xlane.f32.xlu0 %v908
        %v910 = vpop.xlane.xlu0 %909
        %v911 = vmax.f32 %v708, %v797
        %912 = vmax.xlane.f32.xlu0 %v911
        %v913 = vpop.xlane.xlu0 %912
        %v914 = vmax.f32 %v710, %v799
        %915 = vmax.xlane.f32.xlu0 %v914
        %v916 = vpop.xlane.xlu0 %915
        %v917 = vmax.f32 %v713, %v802
        %918 = vmax.xlane.f32.xlu0 %v917
        %v919 = vpop.xlane.xlu0 %918
        %v920 = vmax.f32 %v715, %v804
        %921 = vmax.xlane.f32.xlu0 %v920
        %v922 = vpop.xlane.xlu0 %921
        %v923 = vmax.f32 %v718, %v807
        %924 = vmax.xlane.f32.xlu0 %v923
        %v925 = vpop.xlane.xlu0 %924
        %v926 = vmax.f32 %v720, %v809
        %927 = vmax.xlane.f32.xlu0 %v926
        %v928 = vpop.xlane.xlu0 %927
        %v929 = vmax.f32 %v723, %v812
        %930 = vmax.xlane.f32.xlu0 %v929
        %v931 = vpop.xlane.xlu0 %930
        %v932 = vmax.f32 %v725, %v814
        %933 = vmax.xlane.f32.xlu0 %v932
        %v934 = vpop.xlane.xlu0 %933
        %v935 = vmax.f32 %v728, %v817
        %936 = vmax.xlane.f32.xlu0 %v935
        %v937 = vpop.xlane.xlu0 %936
        %v938 = vmax.f32 %v730, %v819
        %939 = vmax.xlane.f32.xlu0 %v938
        %v940 = vpop.xlane.xlu0 %939
        %v941 = vmax.f32 %v733, %v822
        %942 = vmax.xlane.f32.xlu0 %v941
        %v943 = vpop.xlane.xlu0 %942
        %v944 = vmax.f32 %v735, %v824
        %945 = vmax.xlane.f32.xlu0 %v944
        %v946 = vpop.xlane.xlu0 %945
        %v947 = vmax.f32 %v738, %v827
        %948 = vmax.xlane.f32.xlu0 %v947
        %v949 = vpop.xlane.xlu0 %948
        %v950 = vmax.f32 %v740, %v829
        %951 = vmax.xlane.f32.xlu0 %v950
        %v952 = vpop.xlane.xlu0 %951
        %v953 = vmax.f32 %v743, %v832
        %954 = vmax.xlane.f32.xlu0 %v953
        %v955 = vpop.xlane.xlu0 %954
        %v956 = vmax.f32 %v745, %v834
        %957 = vmax.xlane.f32.xlu0 %v956
        %v958 = vpop.xlane.xlu0 %957
        %v959 = vmax.f32 %v748, %v837
        %960 = vmax.xlane.f32.xlu0 %v959
        %v961 = vpop.xlane.xlu0 %960
        %v962 = vmax.f32 %v750, %v839
        %963 = vmax.xlane.f32.xlu0 %v962
        %v964 = vpop.xlane.xlu0 %963
        %v965 = vmax.f32 %v753, %v842
        %966 = vmax.xlane.f32.xlu0 %v965
        %v967 = vpop.xlane.xlu0 %966
        %v968 = vmax.f32 %v755, %v844
        %969 = vmax.xlane.f32.xlu0 %v968
        %v970 = vpop.xlane.xlu0 %969
        %v971 = vmax.f32 %v758, %v847
        %972 = vmax.xlane.f32.xlu0 %v971
        %v973 = vpop.xlane.xlu0 %972
        %v974 = vmax.f32 %v760, %v849
        %975 = vmax.xlane.f32.xlu0 %v974
        %v976 = vpop.xlane.xlu0 %975
        %v977 = vmax.f32 %v763, %v852
        %978 = vmax.xlane.f32.xlu0 %v977
        %v979 = vpop.xlane.xlu0 %978
        %v980 = vmax.f32 %v765, %v854
        %981 = vmax.xlane.f32.xlu0 %v980
        %v982 = vpop.xlane.xlu0 %981
        %v983 = vmax.f32 %v768, %v857
        %984 = vmax.xlane.f32.xlu0 %v983
        %v985 = vpop.xlane.xlu0 %984
        %v986 = vmax.f32 %v770, %v859
        %987 = vmax.xlane.f32.xlu0 %v986
        %v988 = vpop.xlane.xlu0 %987
        %v989 = vmax.f32 %v861, %v895
        %v990 = vmax.f32 %v862, %v898
        %v991 = vmax.f32 %v863, %v901
        %v992 = vmax.f32 %v864, %v904
        %v993 = vmax.f32 %v865, %v907
        %v994 = vmax.f32 %v866, %v910
        %v995 = vmax.f32 %v867, %v913
        %v996 = vmax.f32 %v868, %v916
        %v997 = vmax.f32 %v869, %v919
        %v998 = vmax.f32 %v870, %v922
        %v999 = vmax.f32 %v871, %v925
        %v1000 = vmax.f32 %v872, %v928
        %v1001 = vmax.f32 %v873, %v931
        %v1002 = vmax.f32 %v874, %v934
        %v1003 = vmax.f32 %v875, %v937
        %v1004 = vmax.f32 %v876, %v940
        %v1005 = vmax.f32 %v877, %v943
        %v1006 = vmax.f32 %v878, %v946
        %v1007 = vmax.f32 %v879, %v949
        %v1008 = vmax.f32 %v880, %v952
        %v1009 = vmax.f32 %v881, %v955
        %v1010 = vmax.f32 %v882, %v958
        %v1011 = vmax.f32 %v883, %v961
        %v1012 = vmax.f32 %v884, %v964
        %v1013 = vmax.f32 %v885, %v967
        %v1014 = vmax.f32 %v886, %v970
        %v1015 = vmax.f32 %v887, %v973
        %v1016 = vmax.f32 %v888, %v976
        %v1017 = vmax.f32 %v889, %v979
        %v1018 = vmax.f32 %v890, %v982
        %v1019 = vmax.f32 %v891, %v985
        %v1020 = vmax.f32 %v892, %v988
        %v1021 = vsub.f32 %v861, %v989
        %v1022 = vsub.f32 %v862, %v990
        %v1023 = vsub.f32 %v863, %v991
        %v1024 = vsub.f32 %v864, %v992
        %v1025 = vsub.f32 %v865, %v993
        %v1026 = vsub.f32 %v866, %v994
        %v1027 = vsub.f32 %v867, %v995
        %v1028 = vsub.f32 %v868, %v996
        %v1029 = vsub.f32 %v869, %v997
        %v1030 = vsub.f32 %v870, %v998
        %v1031 = vsub.f32 %v871, %v999
        %v1032 = vsub.f32 %v872, %v1000
        %v1033 = vsub.f32 %v873, %v1001
        %v1034 = vsub.f32 %v874, %v1002
        %v1035 = vsub.f32 %v875, %v1003
        %v1036 = vsub.f32 %v876, %v1004
        %v1037 = vsub.f32 %v877, %v1005
        %v1038 = vsub.f32 %v878, %v1006
        %v1039 = vsub.f32 %v879, %v1007
        %v1040 = vsub.f32 %v880, %v1008
        %v1041 = vsub.f32 %v881, %v1009
        %v1042 = vsub.f32 %v882, %v1010
        %v1043 = vsub.f32 %v883, %v1011
        %v1044 = vsub.f32 %v884, %v1012
        %v1045 = vsub.f32 %v885, %v1013
        %v1046 = vsub.f32 %v886, %v1014
        %v1047 = vsub.f32 %v887, %v1015
        %v1048 = vsub.f32 %v888, %v1016
        %v1049 = vsub.f32 %v889, %v1017
        %v1050 = vsub.f32 %v890, %v1018
        %v1051 = vsub.f32 %v891, %v1019
        %v1052 = vsub.f32 %v892, %v1020
        %v1053 = vmul.f32 %v1021, 1.442695
        %v1054 = vpow.pop %v1053
        %v1055 = vmul.f32 %v1022, 1.442695
        %v1056 = vpow.pop %v1055
        %v1057 = vmul.f32 %v1023, 1.442695
        %v1058 = vpow.pop %v1057
        %v1059 = vmul.f32 %v1024, 1.442695
        %v1060 = vpow.pop %v1059
        %v1061 = vmul.f32 %v1025, 1.442695
        %v1062 = vpow.pop %v1061
        %v1063 = vmul.f32 %v1026, 1.442695
        %v1064 = vpow.pop %v1063
        %v1065 = vmul.f32 %v1027, 1.442695
        %v1066 = vpow.pop %v1065
        %v1067 = vmul.f32 %v1028, 1.442695
        %v1068 = vpow.pop %v1067
        %v1069 = vmul.f32 %v1029, 1.442695
        %v1070 = vpow.pop %v1069
        %v1071 = vmul.f32 %v1030, 1.442695
        %v1072 = vpow.pop %v1071
        %v1073 = vmul.f32 %v1031, 1.442695
        %v1074 = vpow.pop %v1073
        %v1075 = vmul.f32 %v1032, 1.442695
        %v1076 = vpow.pop %v1075
        %v1077 = vmul.f32 %v1033, 1.442695
        %v1078 = vpow.pop %v1077
        %v1079 = vmul.f32 %v1034, 1.442695
        %v1080 = vpow.pop %v1079
        %v1081 = vmul.f32 %v1035, 1.442695
        %v1082 = vpow.pop %v1081
        %v1083 = vmul.f32 %v1036, 1.442695
        %v1084 = vpow.pop %v1083
        %v1085 = vmul.f32 %v1037, 1.442695
        %v1086 = vpow.pop %v1085
        %v1087 = vmul.f32 %v1038, 1.442695
        %v1088 = vpow.pop %v1087
        %v1089 = vmul.f32 %v1039, 1.442695
        %v1090 = vpow.pop %v1089
        %v1091 = vmul.f32 %v1040, 1.442695
        %v1092 = vpow.pop %v1091
        %v1093 = vmul.f32 %v1041, 1.442695
        %v1094 = vpow.pop %v1093
        %v1095 = vmul.f32 %v1042, 1.442695
        %v1096 = vpow.pop %v1095
        %v1097 = vmul.f32 %v1043, 1.442695
        %v1098 = vpow.pop %v1097
        %v1099 = vmul.f32 %v1044, 1.442695
        %v1100 = vpow.pop %v1099
        %v1101 = vmul.f32 %v1045, 1.442695
        %v1102 = vpow.pop %v1101
        %v1103 = vmul.f32 %v1046, 1.442695
        %v1104 = vpow.pop %v1103
        %v1105 = vmul.f32 %v1047, 1.442695
        %v1106 = vpow.pop %v1105
        %v1107 = vmul.f32 %v1048, 1.442695
        %v1108 = vpow.pop %v1107
        %v1109 = vmul.f32 %v1049, 1.442695
        %v1110 = vpow.pop %v1109
        %v1111 = vmul.f32 %v1050, 1.442695
        %v1112 = vpow.pop %v1111
        %v1113 = vmul.f32 %v1051, 1.442695
        %v1114 = vpow.pop %v1113
        %v1115 = vmul.f32 %v1052, 1.442695
        %v1116 = vpow.pop %v1115
        %1118 = vset.pattern.permute.xlu0 0
        %1119 = vperm.xlu0 %1118, %v989
        %v1120 = vpop.permute.xlu0 %1119
        %1123 = vset.pattern.permute.xlu0 0
        %1124 = vperm.xlu0 %1123, %v990
        %v1125 = vpop.permute.xlu0 %1124
        %1128 = vset.pattern.permute.xlu0 0
        %1129 = vperm.xlu0 %1128, %v991
        %v1130 = vpop.permute.xlu0 %1129
        %1133 = vset.pattern.permute.xlu0 0
        %1134 = vperm.xlu0 %1133, %v992
        %v1135 = vpop.permute.xlu0 %1134
        %1138 = vset.pattern.permute.xlu0 0
        %1139 = vperm.xlu0 %1138, %v993
        %v1140 = vpop.permute.xlu0 %1139
        %1143 = vset.pattern.permute.xlu0 0
        %1144 = vperm.xlu0 %1143, %v994
        %v1145 = vpop.permute.xlu0 %1144
        %1148 = vset.pattern.permute.xlu0 0
        %1149 = vperm.xlu0 %1148, %v995
        %v1150 = vpop.permute.xlu0 %1149
        %1153 = vset.pattern.permute.xlu0 0
        %1154 = vperm.xlu0 %1153, %v996
        %v1155 = vpop.permute.xlu0 %1154
        %1158 = vset.pattern.permute.xlu0 0
        %1159 = vperm.xlu0 %1158, %v997
        %v1160 = vpop.permute.xlu0 %1159
        %1163 = vset.pattern.permute.xlu0 0
        %1164 = vperm.xlu0 %1163, %v998
        %v1165 = vpop.permute.xlu0 %1164
        %1168 = vset.pattern.permute.xlu0 0
        %1169 = vperm.xlu0 %1168, %v999
        %v1170 = vpop.permute.xlu0 %1169
        %1173 = vset.pattern.permute.xlu0 0
        %1174 = vperm.xlu0 %1173, %v1000
        %v1175 = vpop.permute.xlu0 %1174
        %1178 = vset.pattern.permute.xlu0 0
        %1179 = vperm.xlu0 %1178, %v1001
        %v1180 = vpop.permute.xlu0 %1179
        %1183 = vset.pattern.permute.xlu0 0
        %1184 = vperm.xlu0 %1183, %v1002
        %v1185 = vpop.permute.xlu0 %1184
        %1188 = vset.pattern.permute.xlu0 0
        %1189 = vperm.xlu0 %1188, %v1003
        %v1190 = vpop.permute.xlu0 %1189
        %1193 = vset.pattern.permute.xlu0 0
        %1194 = vperm.xlu0 %1193, %v1004
        %v1195 = vpop.permute.xlu0 %1194
        %1198 = vset.pattern.permute.xlu0 0
        %1199 = vperm.xlu0 %1198, %v1005
        %v1200 = vpop.permute.xlu0 %1199
        %1203 = vset.pattern.permute.xlu0 0
        %1204 = vperm.xlu0 %1203, %v1006
        %v1205 = vpop.permute.xlu0 %1204
        %1208 = vset.pattern.permute.xlu0 0
        %1209 = vperm.xlu0 %1208, %v1007
        %v1210 = vpop.permute.xlu0 %1209
        %1213 = vset.pattern.permute.xlu0 0
        %1214 = vperm.xlu0 %1213, %v1008
        %v1215 = vpop.permute.xlu0 %1214
        %1218 = vset.pattern.permute.xlu0 0
        %1219 = vperm.xlu0 %1218, %v1009
        %v1220 = vpop.permute.xlu0 %1219
        %1223 = vset.pattern.permute.xlu0 0
        %1224 = vperm.xlu0 %1223, %v1010
        %v1225 = vpop.permute.xlu0 %1224
        %1228 = vset.pattern.permute.xlu0 0
        %1229 = vperm.xlu0 %1228, %v1011
        %v1230 = vpop.permute.xlu0 %1229
        %1233 = vset.pattern.permute.xlu0 0
        %1234 = vperm.xlu0 %1233, %v1012
        %v1235 = vpop.permute.xlu0 %1234
        %1238 = vset.pattern.permute.xlu0 0
        %1239 = vperm.xlu0 %1238, %v1013
        %v1240 = vpop.permute.xlu0 %1239
        %1243 = vset.pattern.permute.xlu0 0
        %1244 = vperm.xlu0 %1243, %v1014
        %v1245 = vpop.permute.xlu0 %1244
        %1248 = vset.pattern.permute.xlu0 0
        %1249 = vperm.xlu0 %1248, %v1015
        %v1250 = vpop.permute.xlu0 %1249
        %1253 = vset.pattern.permute.xlu0 0
        %1254 = vperm.xlu0 %1253, %v1016
        %v1255 = vpop.permute.xlu0 %1254
        %1258 = vset.pattern.permute.xlu0 0
        %1259 = vperm.xlu0 %1258, %v1017
        %v1260 = vpop.permute.xlu0 %1259
        %1263 = vset.pattern.permute.xlu0 0
        %1264 = vperm.xlu0 %1263, %v1018
        %v1265 = vpop.permute.xlu0 %1264
        %1268 = vset.pattern.permute.xlu0 0
        %1269 = vperm.xlu0 %1268, %v1019
        %v1270 = vpop.permute.xlu0 %1269
        %1273 = vset.pattern.permute.xlu0 0
        %1274 = vperm.xlu0 %1273, %v1020
        %v1275 = vpop.permute.xlu0 %1274
        %v1277 = vsub.f32 %v693, %v1120
        %v1278 = vsub.f32 %v782, %v1120
        %v1279 = vsub.f32 %v695, %v1125
        %v1280 = vsub.f32 %v784, %v1125
        %v1281 = vsub.f32 %v698, %v1130
        %v1282 = vsub.f32 %v787, %v1130
        %v1283 = vsub.f32 %v700, %v1135
        %v1284 = vsub.f32 %v789, %v1135
        %v1285 = vsub.f32 %v703, %v1140
        %v1286 = vsub.f32 %v792, %v1140
        %v1287 = vsub.f32 %v705, %v1145
        %v1288 = vsub.f32 %v794, %v1145
        %v1289 = vsub.f32 %v708, %v1150
        %v1290 = vsub.f32 %v797, %v1150
        %v1291 = vsub.f32 %v710, %v1155
        %v1292 = vsub.f32 %v799, %v1155
        %v1293 = vsub.f32 %v713, %v1160
        %v1294 = vsub.f32 %v802, %v1160
        %v1295 = vsub.f32 %v715, %v1165
        %v1296 = vsub.f32 %v804, %v1165
        %v1297 = vsub.f32 %v718, %v1170
        %v1298 = vsub.f32 %v807, %v1170
        %v1299 = vsub.f32 %v720, %v1175
        %v1300 = vsub.f32 %v809, %v1175
        %v1301 = vsub.f32 %v723, %v1180
        %v1302 = vsub.f32 %v812, %v1180
        %v1303 = vsub.f32 %v725, %v1185
        %v1304 = vsub.f32 %v814, %v1185
        %v1305 = vsub.f32 %v728, %v1190
        %v1306 = vsub.f32 %v817, %v1190
        %v1307 = vsub.f32 %v730, %v1195
        %v1308 = vsub.f32 %v819, %v1195
        %v1309 = vsub.f32 %v733, %v1200
        %v1310 = vsub.f32 %v822, %v1200
        %v1311 = vsub.f32 %v735, %v1205
        %v1312 = vsub.f32 %v824, %v1205
        %v1313 = vsub.f32 %v738, %v1210
        %v1314 = vsub.f32 %v827, %v1210
        %v1315 = vsub.f32 %v740, %v1215
        %v1316 = vsub.f32 %v829, %v1215
        %v1317 = vsub.f32 %v743, %v1220
        %v1318 = vsub.f32 %v832, %v1220
        %v1319 = vsub.f32 %v745, %v1225
        %v1320 = vsub.f32 %v834, %v1225
        %v1321 = vsub.f32 %v748, %v1230
        %v1322 = vsub.f32 %v837, %v1230
        %v1323 = vsub.f32 %v750, %v1235
        %v1324 = vsub.f32 %v839, %v1235
        %v1325 = vsub.f32 %v753, %v1240
        %v1326 = vsub.f32 %v842, %v1240
        %v1327 = vsub.f32 %v755, %v1245
        %v1328 = vsub.f32 %v844, %v1245
        %v1329 = vsub.f32 %v758, %v1250
        %v1330 = vsub.f32 %v847, %v1250
        %v1331 = vsub.f32 %v760, %v1255
        %v1332 = vsub.f32 %v849, %v1255
        %v1333 = vsub.f32 %v763, %v1260
        %v1334 = vsub.f32 %v852, %v1260
        %v1335 = vsub.f32 %v765, %v1265
        %v1336 = vsub.f32 %v854, %v1265
        %v1337 = vsub.f32 %v768, %v1270
        %v1338 = vsub.f32 %v857, %v1270
        %v1339 = vsub.f32 %v770, %v1275
        %v1340 = vsub.f32 %v859, %v1275
        %v1341 = vmul.f32 %v1277, 1.442695
        %v1342 = vpow.pop %v1341
        %v1343 = vmul.f32 %v1278, 1.442695
        %v1344 = vpow.pop %v1343
        %v1345 = vmul.f32 %v1279, 1.442695
        %v1346 = vpow.pop %v1345
        %v1347 = vmul.f32 %v1280, 1.442695
        %v1348 = vpow.pop %v1347
        %v1349 = vmul.f32 %v1281, 1.442695
        %v1350 = vpow.pop %v1349
        %v1351 = vmul.f32 %v1282, 1.442695
        %v1352 = vpow.pop %v1351
        %v1353 = vmul.f32 %v1283, 1.442695
        %v1354 = vpow.pop %v1353
        %v1355 = vmul.f32 %v1284, 1.442695
        %v1356 = vpow.pop %v1355
        %v1357 = vmul.f32 %v1285, 1.442695
        %v1358 = vpow.pop %v1357
        %v1359 = vmul.f32 %v1286, 1.442695
        %v1360 = vpow.pop %v1359
        %v1361 = vmul.f32 %v1287, 1.442695
        %v1362 = vpow.pop %v1361
        %v1363 = vmul.f32 %v1288, 1.442695
        %v1364 = vpow.pop %v1363
        %v1365 = vmul.f32 %v1289, 1.442695
        %v1366 = vpow.pop %v1365
        %v1367 = vmul.f32 %v1290, 1.442695
        %v1368 = vpow.pop %v1367
        %v1369 = vmul.f32 %v1291, 1.442695
        %v1370 = vpow.pop %v1369
        %v1371 = vmul.f32 %v1292, 1.442695
        %v1372 = vpow.pop %v1371
        %v1373 = vmul.f32 %v1293, 1.442695
        %v1374 = vpow.pop %v1373
        %v1375 = vmul.f32 %v1294, 1.442695
        %v1376 = vpow.pop %v1375
        %v1377 = vmul.f32 %v1295, 1.442695
        %v1378 = vpow.pop %v1377
        %v1379 = vmul.f32 %v1296, 1.442695
        %v1380 = vpow.pop %v1379
        %v1381 = vmul.f32 %v1297, 1.442695
        %v1382 = vpow.pop %v1381
        %v1383 = vmul.f32 %v1298, 1.442695
        %v1384 = vpow.pop %v1383
        %v1385 = vmul.f32 %v1299, 1.442695
        %v1386 = vpow.pop %v1385
        %v1387 = vmul.f32 %v1300, 1.442695
        %v1388 = vpow.pop %v1387
        %v1389 = vmul.f32 %v1301, 1.442695
        %v1390 = vpow.pop %v1389
        %v1391 = vmul.f32 %v1302, 1.442695
        %v1392 = vpow.pop %v1391
        %v1393 = vmul.f32 %v1303, 1.442695
        %v1394 = vpow.pop %v1393
        %v1395 = vmul.f32 %v1304, 1.442695
        %v1396 = vpow.pop %v1395
        %v1397 = vmul.f32 %v1305, 1.442695
        %v1398 = vpow.pop %v1397
        %v1399 = vmul.f32 %v1306, 1.442695
        %v1400 = vpow.pop %v1399
        %v1401 = vmul.f32 %v1307, 1.442695
        %v1402 = vpow.pop %v1401
        %v1403 = vmul.f32 %v1308, 1.442695
        %v1404 = vpow.pop %v1403
        %v1405 = vmul.f32 %v1309, 1.442695
        %v1406 = vpow.pop %v1405
        %v1407 = vmul.f32 %v1310, 1.442695
        %v1408 = vpow.pop %v1407
        %v1409 = vmul.f32 %v1311, 1.442695
        %v1410 = vpow.pop %v1409
        %v1411 = vmul.f32 %v1312, 1.442695
        %v1412 = vpow.pop %v1411
        %v1413 = vmul.f32 %v1313, 1.442695
        %v1414 = vpow.pop %v1413
        %v1415 = vmul.f32 %v1314, 1.442695
        %v1416 = vpow.pop %v1415
        %v1417 = vmul.f32 %v1315, 1.442695
        %v1418 = vpow.pop %v1417
        %v1419 = vmul.f32 %v1316, 1.442695
        %v1420 = vpow.pop %v1419
        %v1421 = vmul.f32 %v1317, 1.442695
        %v1422 = vpow.pop %v1421
        %v1423 = vmul.f32 %v1318, 1.442695
        %v1424 = vpow.pop %v1423
        %v1425 = vmul.f32 %v1319, 1.442695
        %v1426 = vpow.pop %v1425
        %v1427 = vmul.f32 %v1320, 1.442695
        %v1428 = vpow.pop %v1427
        %v1429 = vmul.f32 %v1321, 1.442695
        %v1430 = vpow.pop %v1429
        %v1431 = vmul.f32 %v1322, 1.442695
        %v1432 = vpow.pop %v1431
        %v1433 = vmul.f32 %v1323, 1.442695
        %v1434 = vpow.pop %v1433
        %v1435 = vmul.f32 %v1324, 1.442695
        %v1436 = vpow.pop %v1435
        %v1437 = vmul.f32 %v1325, 1.442695
        %v1438 = vpow.pop %v1437
        %v1439 = vmul.f32 %v1326, 1.442695
        %v1440 = vpow.pop %v1439
        %v1441 = vmul.f32 %v1327, 1.442695
        %v1442 = vpow.pop %v1441
        %v1443 = vmul.f32 %v1328, 1.442695
        %v1444 = vpow.pop %v1443
        %v1445 = vmul.f32 %v1329, 1.442695
        %v1446 = vpow.pop %v1445
        %v1447 = vmul.f32 %v1330, 1.442695
        %v1448 = vpow.pop %v1447
        %v1449 = vmul.f32 %v1331, 1.442695
        %v1450 = vpow.pop %v1449
        %v1451 = vmul.f32 %v1332, 1.442695
        %v1452 = vpow.pop %v1451
        %v1453 = vmul.f32 %v1333, 1.442695
        %v1454 = vpow.pop %v1453
        %v1455 = vmul.f32 %v1334, 1.442695
        %v1456 = vpow.pop %v1455
        %v1457 = vmul.f32 %v1335, 1.442695
        %v1458 = vpow.pop %v1457
        %v1459 = vmul.f32 %v1336, 1.442695
        %v1460 = vpow.pop %v1459
        %v1461 = vmul.f32 %v1337, 1.442695
        %v1462 = vpow.pop %v1461
        %v1463 = vmul.f32 %v1338, 1.442695
        %v1464 = vpow.pop %v1463
        %v1465 = vmul.f32 %v1339, 1.442695
        %v1466 = vpow.pop %v1465
        %v1467 = vmul.f32 %v1340, 1.442695
        %v1468 = vpow.pop %v1467
        %v1469 = vld [vmem:[#allocation3] sm:$0xff]
        %v1470 = vld [vmem:[#allocation3 + $0x8] sm:$0xff]
        %v1471 = vld [vmem:[#allocation3 + $0x10] sm:$0xff]
        %v1472 = vld [vmem:[#allocation3 + $0x18] sm:$0xff]
        %v1473 = vld [vmem:[#allocation3 + $0x20] sm:$0xff]
        %v1474 = vld [vmem:[#allocation3 + $0x28] sm:$0xff]
        %v1475 = vld [vmem:[#allocation3 + $0x30] sm:$0xff]
        %v1476 = vld [vmem:[#allocation3 + $0x38] sm:$0xff]
        %v1477 = vld [vmem:[#allocation3 + $0x40] sm:$0xff]
        %v1478 = vld [vmem:[#allocation3 + $0x48] sm:$0xff]
        %v1479 = vld [vmem:[#allocation3 + $0x50] sm:$0xff]
        %v1480 = vld [vmem:[#allocation3 + $0x58] sm:$0xff]
        %v1481 = vld [vmem:[#allocation3 + $0x60] sm:$0xff]
        %v1482 = vld [vmem:[#allocation3 + $0x68] sm:$0xff]
        %v1483 = vld [vmem:[#allocation3 + $0x70] sm:$0xff]
        %v1484 = vld [vmem:[#allocation3 + $0x78] sm:$0xff]
        %v1485 = vld [vmem:[#allocation3 + $0x80] sm:$0xff]
        %v1486 = vld [vmem:[#allocation3 + $0x88] sm:$0xff]
        %v1487 = vld [vmem:[#allocation3 + $0x90] sm:$0xff]
        %v1488 = vld [vmem:[#allocation3 + $0x98] sm:$0xff]
        %v1489 = vld [vmem:[#allocation3 + $0xa0] sm:$0xff]
        %v1490 = vld [vmem:[#allocation3 + $0xa8] sm:$0xff]
        %v1491 = vld [vmem:[#allocation3 + $0xb0] sm:$0xff]
        %v1492 = vld [vmem:[#allocation3 + $0xb8] sm:$0xff]
        %v1493 = vld [vmem:[#allocation3 + $0xc0] sm:$0xff]
        %v1494 = vld [vmem:[#allocation3 + $0xc8] sm:$0xff]
        %v1495 = vld [vmem:[#allocation3 + $0xd0] sm:$0xff]
        %v1496 = vld [vmem:[#allocation3 + $0xd8] sm:$0xff]
        %v1497 = vld [vmem:[#allocation3 + $0xe0] sm:$0xff]
        %v1498 = vld [vmem:[#allocation3 + $0xe8] sm:$0xff]
        %v1499 = vld [vmem:[#allocation3 + $0xf0] sm:$0xff]
        %v1500 = vld [vmem:[#allocation3 + $0xf8] sm:$0xff]
        %v1501 = vmul.f32 %v1054, %v1469
        %v1502 = vmul.f32 %v1056, %v1470
        %v1503 = vmul.f32 %v1058, %v1471
        %v1504 = vmul.f32 %v1060, %v1472
        %v1505 = vmul.f32 %v1062, %v1473
        %v1506 = vmul.f32 %v1064, %v1474
        %v1507 = vmul.f32 %v1066, %v1475
        %v1508 = vmul.f32 %v1068, %v1476
        %v1509 = vmul.f32 %v1070, %v1477
        %v1510 = vmul.f32 %v1072, %v1478
        %v1511 = vmul.f32 %v1074, %v1479
        %v1512 = vmul.f32 %v1076, %v1480
        %v1513 = vmul.f32 %v1078, %v1481
        %v1514 = vmul.f32 %v1080, %v1482
        %v1515 = vmul.f32 %v1082, %v1483
        %v1516 = vmul.f32 %v1084, %v1484
        %v1517 = vmul.f32 %v1086, %v1485
        %v1518 = vmul.f32 %v1088, %v1486
        %v1519 = vmul.f32 %v1090, %v1487
        %v1520 = vmul.f32 %v1092, %v1488
        %v1521 = vmul.f32 %v1094, %v1489
        %v1522 = vmul.f32 %v1096, %v1490
        %v1523 = vmul.f32 %v1098, %v1491
        %v1524 = vmul.f32 %v1100, %v1492
        %v1525 = vmul.f32 %v1102, %v1493
        %v1526 = vmul.f32 %v1104, %v1494
        %v1527 = vmul.f32 %v1106, %v1495
        %v1528 = vmul.f32 %v1108, %v1496
        %v1529 = vmul.f32 %v1110, %v1497
        %v1530 = vmul.f32 %v1112, %v1498
        %v1531 = vmul.f32 %v1114, %v1499
        %v1532 = vmul.f32 %v1116, %v1500
        %v1533 = vadd.f32 %v1342, %v1344
        %1534 = vadd.xlane.f32.xlu0 %v1533
        %v1535 = vpop.xlane.xlu0 %1534
        %v1536 = vadd.f32 %v1346, %v1348
        %1537 = vadd.xlane.f32.xlu0 %v1536
        %v1538 = vpop.xlane.xlu0 %1537
        %v1539 = vadd.f32 %v1350, %v1352
        %1540 = vadd.xlane.f32.xlu0 %v1539
        %v1541 = vpop.xlane.xlu0 %1540
        %v1542 = vadd.f32 %v1354, %v1356
        %1543 = vadd.xlane.f32.xlu0 %v1542
        %v1544 = vpop.xlane.xlu0 %1543
        %v1545 = vadd.f32 %v1358, %v1360
        %1546 = vadd.xlane.f32.xlu0 %v1545
        %v1547 = vpop.xlane.xlu0 %1546
        %v1548 = vadd.f32 %v1362, %v1364
        %1549 = vadd.xlane.f32.xlu0 %v1548
        %v1550 = vpop.xlane.xlu0 %1549
        %v1551 = vadd.f32 %v1366, %v1368
        %1552 = vadd.xlane.f32.xlu0 %v1551
        %v1553 = vpop.xlane.xlu0 %1552
        %v1554 = vadd.f32 %v1370, %v1372
        %1555 = vadd.xlane.f32.xlu0 %v1554
        %v1556 = vpop.xlane.xlu0 %1555
        %v1557 = vadd.f32 %v1374, %v1376
        %1558 = vadd.xlane.f32.xlu0 %v1557
        %v1559 = vpop.xlane.xlu0 %1558
        %v1560 = vadd.f32 %v1378, %v1380
        %1561 = vadd.xlane.f32.xlu0 %v1560
        %v1562 = vpop.xlane.xlu0 %1561
        %v1563 = vadd.f32 %v1382, %v1384
        %1564 = vadd.xlane.f32.xlu0 %v1563
        %v1565 = vpop.xlane.xlu0 %1564
        %v1566 = vadd.f32 %v1386, %v1388
        %1567 = vadd.xlane.f32.xlu0 %v1566
        %v1568 = vpop.xlane.xlu0 %1567
        %v1569 = vadd.f32 %v1390, %v1392
        %1570 = vadd.xlane.f32.xlu0 %v1569
        %v1571 = vpop.xlane.xlu0 %1570
        %v1572 = vadd.f32 %v1394, %v1396
        %1573 = vadd.xlane.f32.xlu0 %v1572
        %v1574 = vpop.xlane.xlu0 %1573
        %v1575 = vadd.f32 %v1398, %v1400
        %1576 = vadd.xlane.f32.xlu0 %v1575
        %v1577 = vpop.xlane.xlu0 %1576
        %v1578 = vadd.f32 %v1402, %v1404
        %1579 = vadd.xlane.f32.xlu0 %v1578
        %v1580 = vpop.xlane.xlu0 %1579
        %v1581 = vadd.f32 %v1406, %v1408
        %1582 = vadd.xlane.f32.xlu0 %v1581
        %v1583 = vpop.xlane.xlu0 %1582
        %v1584 = vadd.f32 %v1410, %v1412
        %1585 = vadd.xlane.f32.xlu0 %v1584
        %v1586 = vpop.xlane.xlu0 %1585
        %v1587 = vadd.f32 %v1414, %v1416
        %1588 = vadd.xlane.f32.xlu0 %v1587
        %v1589 = vpop.xlane.xlu0 %1588
        %v1590 = vadd.f32 %v1418, %v1420
        %1591 = vadd.xlane.f32.xlu0 %v1590
        %v1592 = vpop.xlane.xlu0 %1591
        %v1593 = vadd.f32 %v1422, %v1424
        %1594 = vadd.xlane.f32.xlu0 %v1593
        %v1595 = vpop.xlane.xlu0 %1594
        %v1596 = vadd.f32 %v1426, %v1428
        %1597 = vadd.xlane.f32.xlu0 %v1596
        %v1598 = vpop.xlane.xlu0 %1597
        %v1599 = vadd.f32 %v1430, %v1432
        %1600 = vadd.xlane.f32.xlu0 %v1599
        %v1601 = vpop.xlane.xlu0 %1600
        %v1602 = vadd.f32 %v1434, %v1436
        %1603 = vadd.xlane.f32.xlu0 %v1602
        %v1604 = vpop.xlane.xlu0 %1603
        %v1605 = vadd.f32 %v1438, %v1440
        %1606 = vadd.xlane.f32.xlu0 %v1605
        %v1607 = vpop.xlane.xlu0 %1606
        %v1608 = vadd.f32 %v1442, %v1444
        %1609 = vadd.xlane.f32.xlu0 %v1608
        %v1610 = vpop.xlane.xlu0 %1609
        %v1611 = vadd.f32 %v1446, %v1448
        %1612 = vadd.xlane.f32.xlu0 %v1611
        %v1613 = vpop.xlane.xlu0 %1612
        %v1614 = vadd.f32 %v1450, %v1452
        %1615 = vadd.xlane.f32.xlu0 %v1614
        %v1616 = vpop.xlane.xlu0 %1615
        %v1617 = vadd.f32 %v1454, %v1456
        %1618 = vadd.xlane.f32.xlu0 %v1617
        %v1619 = vpop.xlane.xlu0 %1618
        %v1620 = vadd.f32 %v1458, %v1460
        %1621 = vadd.xlane.f32.xlu0 %v1620
        %v1622 = vpop.xlane.xlu0 %1621
        %v1623 = vadd.f32 %v1462, %v1464
        %1624 = vadd.xlane.f32.xlu0 %v1623
        %v1625 = vpop.xlane.xlu0 %1624
        %v1626 = vadd.f32 %v1466, %v1468
        %1627 = vadd.xlane.f32.xlu0 %v1626
        %v1628 = vpop.xlane.xlu0 %1627
        %v1629 = vadd.f32 %v1501, %v1535
        %v1630 = vadd.f32 %v1502, %v1538
        %v1631 = vadd.f32 %v1503, %v1541
        %v1632 = vadd.f32 %v1504, %v1544
        %v1633 = vadd.f32 %v1505, %v1547
        %v1634 = vadd.f32 %v1506, %v1550
        %v1635 = vadd.f32 %v1507, %v1553
        %v1636 = vadd.f32 %v1508, %v1556
        %v1637 = vadd.f32 %v1509, %v1559
        %v1638 = vadd.f32 %v1510, %v1562
        %v1639 = vadd.f32 %v1511, %v1565
        %v1640 = vadd.f32 %v1512, %v1568
        %v1641 = vadd.f32 %v1513, %v1571
        %v1642 = vadd.f32 %v1514, %v1574
        %v1643 = vadd.f32 %v1515, %v1577
        %v1644 = vadd.f32 %v1516, %v1580
        %v1645 = vadd.f32 %v1517, %v1583
        %v1646 = vadd.f32 %v1518, %v1586
        %v1647 = vadd.f32 %v1519, %v1589
        %v1648 = vadd.f32 %v1520, %v1592
        %v1649 = vadd.f32 %v1521, %v1595
        %v1650 = vadd.f32 %v1522, %v1598
        %v1651 = vadd.f32 %v1523, %v1601
        %v1652 = vadd.f32 %v1524, %v1604
        %v1653 = vadd.f32 %v1525, %v1607
        %v1654 = vadd.f32 %v1526, %v1610
        %v1655 = vadd.f32 %v1527, %v1613
        %v1656 = vadd.f32 %v1528, %v1616
        %v1657 = vadd.f32 %v1529, %v1619
        %v1658 = vadd.f32 %v1530, %v1622
        %v1659 = vadd.f32 %v1531, %v1625
        %v1660 = vadd.f32 %v1532, %v1628
        %vm1661 = vcmask 7168
        %1662 = vst.msk [vmem:[#allocation3] sm:$0xff] %vm1661, %v1629
        %1663 = vst.msk [vmem:[#allocation3 + $0x8] sm:$0xff] %vm1661, %v1630
        %1664 = vst.msk [vmem:[#allocation3 + $0x10] sm:$0xff] %vm1661, %v1631
        %1665 = vst.msk [vmem:[#allocation3 + $0x18] sm:$0xff] %vm1661, %v1632
        %1666 = vst.msk [vmem:[#allocation3 + $0x20] sm:$0xff] %vm1661, %v1633
        %1667 = vst.msk [vmem:[#allocation3 + $0x28] sm:$0xff] %vm1661, %v1634
        %1668 = vst.msk [vmem:[#allocation3 + $0x30] sm:$0xff] %vm1661, %v1635
        %1669 = vst.msk [vmem:[#allocation3 + $0x38] sm:$0xff] %vm1661, %v1636
        %1670 = vst.msk [vmem:[#allocation3 + $0x40] sm:$0xff] %vm1661, %v1637
        %1671 = vst.msk [vmem:[#allocation3 + $0x48] sm:$0xff] %vm1661, %v1638
        %1672 = vst.msk [vmem:[#allocation3 + $0x50] sm:$0xff] %vm1661, %v1639
        %1673 = vst.msk [vmem:[#allocation3 + $0x58] sm:$0xff] %vm1661, %v1640
        %1674 = vst.msk [vmem:[#allocation3 + $0x60] sm:$0xff] %vm1661, %v1641
        %1675 = vst.msk [vmem:[#allocation3 + $0x68] sm:$0xff] %vm1661, %v1642
        %1676 = vst.msk [vmem:[#allocation3 + $0x70] sm:$0xff] %vm1661, %v1643
        %1677 = vst.msk [vmem:[#allocation3 + $0x78] sm:$0xff] %vm1661, %v1644
        %1678 = vst.msk [vmem:[#allocation3 + $0x80] sm:$0xff] %vm1661, %v1645
        %1679 = vst.msk [vmem:[#allocation3 + $0x88] sm:$0xff] %vm1661, %v1646
        %1680 = vst.msk [vmem:[#allocation3 + $0x90] sm:$0xff] %vm1661, %v1647
        %1681 = vst.msk [vmem:[#allocation3 + $0x98] sm:$0xff] %vm1661, %v1648
        %1682 = vst.msk [vmem:[#allocation3 + $0xa0] sm:$0xff] %vm1661, %v1649
        %1683 = vst.msk [vmem:[#allocation3 + $0xa8] sm:$0xff] %vm1661, %v1650
        %1684 = vst.msk [vmem:[#allocation3 + $0xb0] sm:$0xff] %vm1661, %v1651
        %1685 = vst.msk [vmem:[#allocation3 + $0xb8] sm:$0xff] %vm1661, %v1652
        %1686 = vst.msk [vmem:[#allocation3 + $0xc0] sm:$0xff] %vm1661, %v1653
        %1687 = vst.msk [vmem:[#allocation3 + $0xc8] sm:$0xff] %vm1661, %v1654
        %1688 = vst.msk [vmem:[#allocation3 + $0xd0] sm:$0xff] %vm1661, %v1655
        %1689 = vst.msk [vmem:[#allocation3 + $0xd8] sm:$0xff] %vm1661, %v1656
        %1690 = vst.msk [vmem:[#allocation3 + $0xe0] sm:$0xff] %vm1661, %v1657
        %1691 = vst.msk [vmem:[#allocation3 + $0xe8] sm:$0xff] %vm1661, %v1658
        %1692 = vst.msk [vmem:[#allocation3 + $0xf0] sm:$0xff] %vm1661, %v1659
        %1693 = vst.msk [vmem:[#allocation3 + $0xf8] sm:$0xff] %vm1661, %v1660
        %v1694 = vld [vmem:[#allocation4] sm:$0xff]
        %v1695 = vld [vmem:[#allocation4 + $0x8] sm:$0xff]
        %v1696 = vld [vmem:[#allocation4 + $0x10] sm:$0xff]
        %v1697 = vld [vmem:[#allocation4 + $0x18] sm:$0xff]
        %v1698 = vld [vmem:[#allocation4 + $0x20] sm:$0xff]
        %v1699 = vld [vmem:[#allocation4 + $0x28] sm:$0xff]
        %v1700 = vld [vmem:[#allocation4 + $0x30] sm:$0xff]
        %v1701 = vld [vmem:[#allocation4 + $0x38] sm:$0xff]
        %v1702 = vld [vmem:[#allocation4 + $0x40] sm:$0xff]
        %v1703 = vld [vmem:[#allocation4 + $0x48] sm:$0xff]
        %v1704 = vld [vmem:[#allocation4 + $0x50] sm:$0xff]
        %v1705 = vld [vmem:[#allocation4 + $0x58] sm:$0xff]
        %v1706 = vld [vmem:[#allocation4 + $0x60] sm:$0xff]
        %v1707 = vld [vmem:[#allocation4 + $0x68] sm:$0xff]
        %v1708 = vld [vmem:[#allocation4 + $0x70] sm:$0xff]
        %v1709 = vld [vmem:[#allocation4 + $0x78] sm:$0xff]
        %v1710 = vld [vmem:[#allocation4 + $0x80] sm:$0xff]
        %v1711 = vld [vmem:[#allocation4 + $0x88] sm:$0xff]
        %v1712 = vld [vmem:[#allocation4 + $0x90] sm:$0xff]
        %v1713 = vld [vmem:[#allocation4 + $0x98] sm:$0xff]
        %v1714 = vld [vmem:[#allocation4 + $0xa0] sm:$0xff]
        %v1715 = vld [vmem:[#allocation4 + $0xa8] sm:$0xff]
        %v1716 = vld [vmem:[#allocation4 + $0xb0] sm:$0xff]
        %v1717 = vld [vmem:[#allocation4 + $0xb8] sm:$0xff]
        %v1718 = vld [vmem:[#allocation4 + $0xc0] sm:$0xff]
        %v1719 = vld [vmem:[#allocation4 + $0xc8] sm:$0xff]
        %v1720 = vld [vmem:[#allocation4 + $0xd0] sm:$0xff]
        %v1721 = vld [vmem:[#allocation4 + $0xd8] sm:$0xff]
        %v1722 = vld [vmem:[#allocation4 + $0xe0] sm:$0xff]
        %v1723 = vld [vmem:[#allocation4 + $0xe8] sm:$0xff]
        %v1724 = vld [vmem:[#allocation4 + $0xf0] sm:$0xff]
        %v1725 = vld [vmem:[#allocation4 + $0xf8] sm:$0xff]
        %1727 = vset.pattern.permute.xlu0 0
        %1728 = vperm.xlu0 %1727, %v1054
        %v1729 = vpop.permute.xlu0 %1728
        %1732 = vset.pattern.permute.xlu0 0
        %1733 = vperm.xlu0 %1732, %v1056
        %v1734 = vpop.permute.xlu0 %1733
        %1737 = vset.pattern.permute.xlu0 0
        %1738 = vperm.xlu0 %1737, %v1058
        %v1739 = vpop.permute.xlu0 %1738
        %1742 = vset.pattern.permute.xlu0 0
        %1743 = vperm.xlu0 %1742, %v1060
        %v1744 = vpop.permute.xlu0 %1743
        %1747 = vset.pattern.permute.xlu0 0
        %1748 = vperm.xlu0 %1747, %v1062
        %v1749 = vpop.permute.xlu0 %1748
        %1752 = vset.pattern.permute.xlu0 0
        %1753 = vperm.xlu0 %1752, %v1064
        %v1754 = vpop.permute.xlu0 %1753
        %1757 = vset.pattern.permute.xlu0 0
        %1758 = vperm.xlu0 %1757, %v1066
        %v1759 = vpop.permute.xlu0 %1758
        %1762 = vset.pattern.permute.xlu0 0
        %1763 = vperm.xlu0 %1762, %v1068
        %v1764 = vpop.permute.xlu0 %1763
        %1767 = vset.pattern.permute.xlu0 0
        %1768 = vperm.xlu0 %1767, %v1070
        %v1769 = vpop.permute.xlu0 %1768
        %1772 = vset.pattern.permute.xlu0 0
        %1773 = vperm.xlu0 %1772, %v1072
        %v1774 = vpop.permute.xlu0 %1773
        %1777 = vset.pattern.permute.xlu0 0
        %1778 = vperm.xlu0 %1777, %v1074
        %v1779 = vpop.permute.xlu0 %1778
        %1782 = vset.pattern.permute.xlu0 0
        %1783 = vperm.xlu0 %1782, %v1076
        %v1784 = vpop.permute.xlu0 %1783
        %1787 = vset.pattern.permute.xlu0 0
        %1788 = vperm.xlu0 %1787, %v1078
        %v1789 = vpop.permute.xlu0 %1788
        %1792 = vset.pattern.permute.xlu0 0
        %1793 = vperm.xlu0 %1792, %v1080
        %v1794 = vpop.permute.xlu0 %1793
        %1797 = vset.pattern.permute.xlu0 0
        %1798 = vperm.xlu0 %1797, %v1082
        %v1799 = vpop.permute.xlu0 %1798
        %1802 = vset.pattern.permute.xlu0 0
        %1803 = vperm.xlu0 %1802, %v1084
        %v1804 = vpop.permute.xlu0 %1803
        %1807 = vset.pattern.permute.xlu0 0
        %1808 = vperm.xlu0 %1807, %v1086
        %v1809 = vpop.permute.xlu0 %1808
        %1812 = vset.pattern.permute.xlu0 0
        %1813 = vperm.xlu0 %1812, %v1088
        %v1814 = vpop.permute.xlu0 %1813
        %1817 = vset.pattern.permute.xlu0 0
        %1818 = vperm.xlu0 %1817, %v1090
        %v1819 = vpop.permute.xlu0 %1818
        %1822 = vset.pattern.permute.xlu0 0
        %1823 = vperm.xlu0 %1822, %v1092
        %v1824 = vpop.permute.xlu0 %1823
        %1827 = vset.pattern.permute.xlu0 0
        %1828 = vperm.xlu0 %1827, %v1094
        %v1829 = vpop.permute.xlu0 %1828
        %1832 = vset.pattern.permute.xlu0 0
        %1833 = vperm.xlu0 %1832, %v1096
        %v1834 = vpop.permute.xlu0 %1833
        %1837 = vset.pattern.permute.xlu0 0
        %1838 = vperm.xlu0 %1837, %v1098
        %v1839 = vpop.permute.xlu0 %1838
        %1842 = vset.pattern.permute.xlu0 0
        %1843 = vperm.xlu0 %1842, %v1100
        %v1844 = vpop.permute.xlu0 %1843
        %1847 = vset.pattern.permute.xlu0 0
        %1848 = vperm.xlu0 %1847, %v1102
        %v1849 = vpop.permute.xlu0 %1848
        %1852 = vset.pattern.permute.xlu0 0
        %1853 = vperm.xlu0 %1852, %v1104
        %v1854 = vpop.permute.xlu0 %1853
        %1857 = vset.pattern.permute.xlu0 0
        %1858 = vperm.xlu0 %1857, %v1106
        %v1859 = vpop.permute.xlu0 %1858
        %1862 = vset.pattern.permute.xlu0 0
        %1863 = vperm.xlu0 %1862, %v1108
        %v1864 = vpop.permute.xlu0 %1863
        %1867 = vset.pattern.permute.xlu0 0
        %1868 = vperm.xlu0 %1867, %v1110
        %v1869 = vpop.permute.xlu0 %1868
        %1872 = vset.pattern.permute.xlu0 0
        %1873 = vperm.xlu0 %1872, %v1112
        %v1874 = vpop.permute.xlu0 %1873
        %1877 = vset.pattern.permute.xlu0 0
        %1878 = vperm.xlu0 %1877, %v1114
        %v1879 = vpop.permute.xlu0 %1878
        %1882 = vset.pattern.permute.xlu0 0
        %1883 = vperm.xlu0 %1882, %v1116
        %v1884 = vpop.permute.xlu0 %1883
        %v1886 = vmul.f32 %v1729, %v1694
        %v1887 = vmul.f32 %v1734, %v1695
        %v1888 = vmul.f32 %v1739, %v1696
        %v1889 = vmul.f32 %v1744, %v1697
        %v1890 = vmul.f32 %v1749, %v1698
        %v1891 = vmul.f32 %v1754, %v1699
        %v1892 = vmul.f32 %v1759, %v1700
        %v1893 = vmul.f32 %v1764, %v1701
        %v1894 = vmul.f32 %v1769, %v1702
        %v1895 = vmul.f32 %v1774, %v1703
        %v1896 = vmul.f32 %v1779, %v1704
        %v1897 = vmul.f32 %v1784, %v1705
        %v1898 = vmul.f32 %v1789, %v1706
        %v1899 = vmul.f32 %v1794, %v1707
        %v1900 = vmul.f32 %v1799, %v1708
        %v1901 = vmul.f32 %v1804, %v1709
        %v1902 = vmul.f32 %v1809, %v1710
        %v1903 = vmul.f32 %v1814, %v1711
        %v1904 = vmul.f32 %v1819, %v1712
        %v1905 = vmul.f32 %v1824, %v1713
        %v1906 = vmul.f32 %v1829, %v1714
        %v1907 = vmul.f32 %v1834, %v1715
        %v1908 = vmul.f32 %v1839, %v1716
        %v1909 = vmul.f32 %v1844, %v1717
        %v1910 = vmul.f32 %v1849, %v1718
        %v1911 = vmul.f32 %v1854, %v1719
        %v1912 = vmul.f32 %v1859, %v1720
        %v1913 = vmul.f32 %v1864, %v1721
        %v1914 = vmul.f32 %v1869, %v1722
        %v1915 = vmul.f32 %v1874, %v1723
        %v1916 = vmul.f32 %v1879, %v1724
        %v1917 = vmul.f32 %v1884, %v1725
        %v1918 = vpack.c.bf16 %v1346, %v1342
        %v1919 = vpack.c.bf16 %v1348, %v1344
        %v1920 = vpack.c.bf16 %v1354, %v1350
        %v1921 = vpack.c.bf16 %v1356, %v1352
        %v1922 = vpack.c.bf16 %v1362, %v1358
        %v1923 = vpack.c.bf16 %v1364, %v1360
        %v1924 = vpack.c.bf16 %v1370, %v1366
        %v1925 = vpack.c.bf16 %v1372, %v1368
        %v1926 = vpack.c.bf16 %v1378, %v1374
        %v1927 = vpack.c.bf16 %v1380, %v1376
        %v1928 = vpack.c.bf16 %v1386, %v1382
        %v1929 = vpack.c.bf16 %v1388, %v1384
        %v1930 = vpack.c.bf16 %v1394, %v1390
        %v1931 = vpack.c.bf16 %v1396, %v1392
        %v1932 = vpack.c.bf16 %v1402, %v1398
        %v1933 = vpack.c.bf16 %v1404, %v1400
        %v1934 = vpack.c.bf16 %v1410, %v1406
        %v1935 = vpack.c.bf16 %v1412, %v1408
        %v1936 = vpack.c.bf16 %v1418, %v1414
        %v1937 = vpack.c.bf16 %v1420, %v1416
        %v1938 = vpack.c.bf16 %v1426, %v1422
        %v1939 = vpack.c.bf16 %v1428, %v1424
        %v1940 = vpack.c.bf16 %v1434, %v1430
        %v1941 = vpack.c.bf16 %v1436, %v1432
        %v1942 = vpack.c.bf16 %v1442, %v1438
        %v1943 = vpack.c.bf16 %v1444, %v1440
        %v1944 = vpack.c.bf16 %v1450, %v1446
        %v1945 = vpack.c.bf16 %v1452, %v1448
        %v1946 = vpack.c.bf16 %v1458, %v1454
        %v1947 = vpack.c.bf16 %v1460, %v1456
        %v1948 = vpack.c.bf16 %v1466, %v1462
        %v1949 = vpack.c.bf16 %v1468, %v1464
        %v1950 = vld [vmem:[%s323] sm:$0xf]
        %v1951 = vld [vmem:[%s323 + $0x4] sm:$0xf]
        %v1952 = vld [vmem:[%s323 + $0x8] sm:$0xf]
        %v1953 = vld [vmem:[%s323 + $0xc] sm:$0xf]
        %v1954 = vld [vmem:[%s323 + $0x10] sm:$0xf]
        %v1955 = vld [vmem:[%s323 + $0x14] sm:$0xf]
        %v1956 = vld [vmem:[%s323 + $0x18] sm:$0xf]
        %v1957 = vld [vmem:[%s323 + $0x1c] sm:$0xf]
        %v1958 = vld [vmem:[%s323 + $0x20] sm:$0xf]
        %v1959 = vld [vmem:[%s323 + $0x24] sm:$0xf]
        %v1960 = vld [vmem:[%s323 + $0x28] sm:$0xf]
        %v1961 = vld [vmem:[%s323 + $0x2c] sm:$0xf]
        %v1962 = vld [vmem:[%s323 + $0x30] sm:$0xf]
        %v1963 = vld [vmem:[%s323 + $0x34] sm:$0xf]
        %v1964 = vld [vmem:[%s323 + $0x38] sm:$0xf]
        %v1965 = vld [vmem:[%s323 + $0x3c] sm:$0xf]
        %v1966 = vld [vmem:[%s323 + $0x40] sm:$0xf]
        %v1967 = vld [vmem:[%s323 + $0x44] sm:$0xf]
        %v1968 = vld [vmem:[%s323 + $0x48] sm:$0xf]
        %v1969 = vld [vmem:[%s323 + $0x4c] sm:$0xf]
        %v1970 = vld [vmem:[%s323 + $0x50] sm:$0xf]
        %v1971 = vld [vmem:[%s323 + $0x54] sm:$0xf]
        %v1972 = vld [vmem:[%s323 + $0x58] sm:$0xf]
        %v1973 = vld [vmem:[%s323 + $0x5c] sm:$0xf]
        %v1974 = vld [vmem:[%s323 + $0x60] sm:$0xf]
        %v1975 = vld [vmem:[%s323 + $0x64] sm:$0xf]
        %v1976 = vld [vmem:[%s323 + $0x68] sm:$0xf]
        %v1977 = vld [vmem:[%s323 + $0x6c] sm:$0xf]
        %v1978 = vld [vmem:[%s323 + $0x70] sm:$0xf]
        %v1979 = vld [vmem:[%s323 + $0x74] sm:$0xf]
        %v1980 = vld [vmem:[%s323 + $0x78] sm:$0xf]
        %v1981 = vld [vmem:[%s323 + $0x7c] sm:$0xf]
        %v2014 = vunpack.c.l.b16 %v1950
        %v2015 = vunpack.c.l.b16 %v1951
        %v2016 = vunpack.c.l.b16 %v1952
        %v2017 = vunpack.c.l.b16 %v1953
        %v2018 = vunpack.c.l.b16 %v1954
        %v2019 = vunpack.c.l.b16 %v1955
        %v2020 = vunpack.c.l.b16 %v1956
        %v2021 = vunpack.c.l.b16 %v1957
        %v2022 = vunpack.c.l.b16 %v1958
        %v2023 = vunpack.c.l.b16 %v1959
        %v2024 = vunpack.c.l.b16 %v1960
        %v2025 = vunpack.c.l.b16 %v1961
        %v2026 = vunpack.c.l.b16 %v1962
        %v2027 = vunpack.c.l.b16 %v1963
        %v2028 = vunpack.c.l.b16 %v1964
        %v2029 = vunpack.c.l.b16 %v1965
        %v2030 = vunpack.c.l.b16 %v1966
        %v2031 = vunpack.c.l.b16 %v1967
        %v2032 = vunpack.c.l.b16 %v1968
        %v2033 = vunpack.c.l.b16 %v1969
        %v2034 = vunpack.c.l.b16 %v1970
        %v2035 = vunpack.c.l.b16 %v1971
        %v2036 = vunpack.c.l.b16 %v1972
        %v2037 = vunpack.c.l.b16 %v1973
        %v2038 = vunpack.c.l.b16 %v1974
        %v2039 = vunpack.c.l.b16 %v1975
        %v2040 = vunpack.c.l.b16 %v1976
        %v2041 = vunpack.c.l.b16 %v1977
        %v2042 = vunpack.c.l.b16 %v1978
        %v2043 = vunpack.c.l.b16 %v1979
        %v2044 = vunpack.c.l.b16 %v1980
        %v2045 = vunpack.c.l.b16 %v1981
        %v2046 = vpack.c.b16 %v2015, %v2014
        %v2047 = vpack.c.b16 %v2017, %v2016
        %v2048 = vpack.c.b16 %v2019, %v2018
        %v2049 = vpack.c.b16 %v2021, %v2020
        %v2050 = vpack.c.b16 %v2023, %v2022
        %v2051 = vpack.c.b16 %v2025, %v2024
        %v2052 = vpack.c.b16 %v2027, %v2026
        %v2053 = vpack.c.b16 %v2029, %v2028
        %v2054 = vpack.c.b16 %v2031, %v2030
        %v2055 = vpack.c.b16 %v2033, %v2032
        %v2056 = vpack.c.b16 %v2035, %v2034
        %v2057 = vpack.c.b16 %v2037, %v2036
        %v2058 = vpack.c.b16 %v2039, %v2038
        %v2059 = vpack.c.b16 %v2041, %v2040
        %v2060 = vpack.c.b16 %v2043, %v2042
        %v2061 = vpack.c.b16 %v2045, %v2044
        %2078 = vmatpush.bf16.msra.mxu0 %v2053
        %2079 = vmatpush.bf16.msra.mxu0 %v2052
        %2080 = vmatpush.bf16.msra.mxu0 %v2051
        %2081 = vmatpush.bf16.msra.mxu0 %v2050
        %2082 = vmatpush.bf16.msra.mxu0 %v2049
        %2083 = vmatpush.bf16.msra.mxu0 %v2048
        %2084 = vmatpush.bf16.msra.mxu0 %v2047
        %2085 = vmatpush.bf16.msra.mxu0 %v2046
        %2086 = vmatmul.bf16.gmra.mxu0 %v1918
        %v2087 = vpop.f32.mrf.mxu0
        %v2088 = vadd.f32 0.0, %v2087
        %v2089 = vpop.f32.mrf.mxu0
        %v2090 = vadd.f32 0.0, %v2089
        %2091 = vmatmul.bf16.gmra.mxu0 %v1920
        %v2092 = vpop.f32.mrf.mxu0
        %v2093 = vadd.f32 0.0, %v2092
        %v2094 = vpop.f32.mrf.mxu0
        %v2095 = vadd.f32 0.0, %v2094
        %2096 = vmatmul.bf16.gmra.mxu0 %v1922
        %v2097 = vpop.f32.mrf.mxu0
        %v2098 = vadd.f32 0.0, %v2097
        %v2099 = vpop.f32.mrf.mxu0
        %v2100 = vadd.f32 0.0, %v2099
        %2101 = vmatmul.bf16.gmra.mxu0 %v1924
        %v2102 = vpop.f32.mrf.mxu0
        %v2103 = vadd.f32 0.0, %v2102
        %v2104 = vpop.f32.mrf.mxu0
        %v2105 = vadd.f32 0.0, %v2104
        %2106 = vmatmul.bf16.gmra.mxu0 %v1926
        %v2107 = vpop.f32.mrf.mxu0
        %v2108 = vadd.f32 0.0, %v2107
        %v2109 = vpop.f32.mrf.mxu0
        %v2110 = vadd.f32 0.0, %v2109
        %2111 = vmatmul.bf16.gmra.mxu0 %v1928
        %v2112 = vpop.f32.mrf.mxu0
        %v2113 = vadd.f32 0.0, %v2112
        %v2114 = vpop.f32.mrf.mxu0
        %v2115 = vadd.f32 0.0, %v2114
        %2116 = vmatmul.bf16.gmra.mxu0 %v1930
        %v2117 = vpop.f32.mrf.mxu0
        %v2118 = vadd.f32 0.0, %v2117
        %v2119 = vpop.f32.mrf.mxu0
        %v2120 = vadd.f32 0.0, %v2119
        %2121 = vmatmul.bf16.gmra.mxu0 %v1932
        %v2122 = vpop.f32.mrf.mxu0
        %v2123 = vadd.f32 0.0, %v2122
        %v2124 = vpop.f32.mrf.mxu0
        %v2125 = vadd.f32 0.0, %v2124
        %2126 = vmatmul.bf16.gmra.mxu0 %v1934
        %v2127 = vpop.f32.mrf.mxu0
        %v2128 = vadd.f32 0.0, %v2127
        %v2129 = vpop.f32.mrf.mxu0
        %v2130 = vadd.f32 0.0, %v2129
        %2131 = vmatmul.bf16.gmra.mxu0 %v1936
        %v2132 = vpop.f32.mrf.mxu0
        %v2133 = vadd.f32 0.0, %v2132
        %v2134 = vpop.f32.mrf.mxu0
        %v2135 = vadd.f32 0.0, %v2134
        %2136 = vmatmul.bf16.gmra.mxu0 %v1938
        %v2137 = vpop.f32.mrf.mxu0
        %v2138 = vadd.f32 0.0, %v2137
        %v2139 = vpop.f32.mrf.mxu0
        %v2140 = vadd.f32 0.0, %v2139
        %2141 = vmatmul.bf16.gmra.mxu0 %v1940
        %v2142 = vpop.f32.mrf.mxu0
        %v2143 = vadd.f32 0.0, %v2142
        %v2144 = vpop.f32.mrf.mxu0
        %v2145 = vadd.f32 0.0, %v2144
        %2146 = vmatmul.bf16.gmra.mxu0 %v1942
        %v2147 = vpop.f32.mrf.mxu0
        %v2148 = vadd.f32 0.0, %v2147
        %v2149 = vpop.f32.mrf.mxu0
        %v2150 = vadd.f32 0.0, %v2149
        %2151 = vmatmul.bf16.gmra.mxu0 %v1944
        %v2152 = vpop.f32.mrf.mxu0
        %v2153 = vadd.f32 0.0, %v2152
        %v2154 = vpop.f32.mrf.mxu0
        %v2155 = vadd.f32 0.0, %v2154
        %2156 = vmatmul.bf16.gmra.mxu0 %v1946
        %v2157 = vpop.f32.mrf.mxu0
        %v2158 = vadd.f32 0.0, %v2157
        %v2159 = vpop.f32.mrf.mxu0
        %v2160 = vadd.f32 0.0, %v2159
        %2161 = vmatmul.bf16.gmra.mxu0 %v1948
        %v2162 = vpop.f32.mrf.mxu0
        %v2163 = vadd.f32 0.0, %v2162
        %v2164 = vpop.f32.mrf.mxu0
        %v2165 = vadd.f32 0.0, %v2164
        %2166 = vdwg.mxu0
        %2167 = vmatpush.bf16.msra.mxu0 %v2061
        %2168 = vmatpush.bf16.msra.mxu0 %v2060
        %2169 = vmatpush.bf16.msra.mxu0 %v2059
        %2170 = vmatpush.bf16.msra.mxu0 %v2058
        %2171 = vmatpush.bf16.msra.mxu0 %v2057
        %2172 = vmatpush.bf16.msra.mxu0 %v2056
        %2173 = vmatpush.bf16.msra.mxu0 %v2055
        %2174 = vmatpush.bf16.msra.mxu0 %v2054
        %2175 = vmatmul.bf16.gmra.mxu0 %v1919
        %v2176 = vpop.f32.mrf.mxu0
        %v2177 = vadd.f32 %v2088, %v2176
        %v2178 = vpop.f32.mrf.mxu0
        %v2179 = vadd.f32 %v2090, %v2178
        %2180 = vmatmul.bf16.gmra.mxu0 %v1921
        %v2181 = vpop.f32.mrf.mxu0
        %v2182 = vadd.f32 %v2093, %v2181
        %v2183 = vpop.f32.mrf.mxu0
        %v2184 = vadd.f32 %v2095, %v2183
        %2185 = vmatmul.bf16.gmra.mxu0 %v1923
        %v2186 = vpop.f32.mrf.mxu0
        %v2187 = vadd.f32 %v2098, %v2186
        %v2188 = vpop.f32.mrf.mxu0
        %v2189 = vadd.f32 %v2100, %v2188
        %2190 = vmatmul.bf16.gmra.mxu0 %v1925
        %v2191 = vpop.f32.mrf.mxu0
        %v2192 = vadd.f32 %v2103, %v2191
        %v2193 = vpop.f32.mrf.mxu0
        %v2194 = vadd.f32 %v2105, %v2193
        %2195 = vmatmul.bf16.gmra.mxu0 %v1927
        %v2196 = vpop.f32.mrf.mxu0
        %v2197 = vadd.f32 %v2108, %v2196
        %v2198 = vpop.f32.mrf.mxu0
        %v2199 = vadd.f32 %v2110, %v2198
        %2200 = vmatmul.bf16.gmra.mxu0 %v1929
        %v2201 = vpop.f32.mrf.mxu0
        %v2202 = vadd.f32 %v2113, %v2201
        %v2203 = vpop.f32.mrf.mxu0
        %v2204 = vadd.f32 %v2115, %v2203
        %2205 = vmatmul.bf16.gmra.mxu0 %v1931
        %v2206 = vpop.f32.mrf.mxu0
        %v2207 = vadd.f32 %v2118, %v2206
        %v2208 = vpop.f32.mrf.mxu0
        %v2209 = vadd.f32 %v2120, %v2208
        %2210 = vmatmul.bf16.gmra.mxu0 %v1933
        %v2211 = vpop.f32.mrf.mxu0
        %v2212 = vadd.f32 %v2123, %v2211
        %v2213 = vpop.f32.mrf.mxu0
        %v2214 = vadd.f32 %v2125, %v2213
        %2215 = vmatmul.bf16.gmra.mxu0 %v1935
        %v2216 = vpop.f32.mrf.mxu0
        %v2217 = vadd.f32 %v2128, %v2216
        %v2218 = vpop.f32.mrf.mxu0
        %v2219 = vadd.f32 %v2130, %v2218
        %2220 = vmatmul.bf16.gmra.mxu0 %v1937
        %v2221 = vpop.f32.mrf.mxu0
        %v2222 = vadd.f32 %v2133, %v2221
        %v2223 = vpop.f32.mrf.mxu0
        %v2224 = vadd.f32 %v2135, %v2223
        %2225 = vmatmul.bf16.gmra.mxu0 %v1939
        %v2226 = vpop.f32.mrf.mxu0
        %v2227 = vadd.f32 %v2138, %v2226
        %v2228 = vpop.f32.mrf.mxu0
        %v2229 = vadd.f32 %v2140, %v2228
        %2230 = vmatmul.bf16.gmra.mxu0 %v1941
        %v2231 = vpop.f32.mrf.mxu0
        %v2232 = vadd.f32 %v2143, %v2231
        %v2233 = vpop.f32.mrf.mxu0
        %v2234 = vadd.f32 %v2145, %v2233
        %2235 = vmatmul.bf16.gmra.mxu0 %v1943
        %v2236 = vpop.f32.mrf.mxu0
        %v2237 = vadd.f32 %v2148, %v2236
        %v2238 = vpop.f32.mrf.mxu0
        %v2239 = vadd.f32 %v2150, %v2238
        %2240 = vmatmul.bf16.gmra.mxu0 %v1945
        %v2241 = vpop.f32.mrf.mxu0
        %v2242 = vadd.f32 %v2153, %v2241
        %v2243 = vpop.f32.mrf.mxu0
        %v2244 = vadd.f32 %v2155, %v2243
        %2245 = vmatmul.bf16.gmra.mxu0 %v1947
        %v2246 = vpop.f32.mrf.mxu0
        %v2247 = vadd.f32 %v2158, %v2246
        %v2248 = vpop.f32.mrf.mxu0
        %v2249 = vadd.f32 %v2160, %v2248
        %2250 = vmatmul.bf16.gmra.mxu0 %v1949
        %v2251 = vpop.f32.mrf.mxu0
        %v2252 = vadd.f32 %v2163, %v2251
        %v2253 = vpop.f32.mrf.mxu0
        %v2254 = vadd.f32 %v2165, %v2253
        %2255 = vdwg.mxu0
        %v2256 = vadd.f32 %v1886, %v2177
        %v2257 = vadd.f32 %v1887, %v2179
        %v2258 = vadd.f32 %v1888, %v2182
        %v2259 = vadd.f32 %v1889, %v2184
        %v2260 = vadd.f32 %v1890, %v2187
        %v2261 = vadd.f32 %v1891, %v2189
        %v2262 = vadd.f32 %v1892, %v2192
        %v2263 = vadd.f32 %v1893, %v2194
        %v2264 = vadd.f32 %v1894, %v2197
        %v2265 = vadd.f32 %v1895, %v2199
        %v2266 = vadd.f32 %v1896, %v2202
        %v2267 = vadd.f32 %v1897, %v2204
        %v2268 = vadd.f32 %v1898, %v2207
        %v2269 = vadd.f32 %v1899, %v2209
        %v2270 = vadd.f32 %v1900, %v2212
        %v2271 = vadd.f32 %v1901, %v2214
        %v2272 = vadd.f32 %v1902, %v2217
        %v2273 = vadd.f32 %v1903, %v2219
        %v2274 = vadd.f32 %v1904, %v2222
        %v2275 = vadd.f32 %v1905, %v2224
        %v2276 = vadd.f32 %v1906, %v2227
        %v2277 = vadd.f32 %v1907, %v2229
        %v2278 = vadd.f32 %v1908, %v2232
        %v2279 = vadd.f32 %v1909, %v2234
        %v2280 = vadd.f32 %v1910, %v2237
        %v2281 = vadd.f32 %v1911, %v2239
        %v2282 = vadd.f32 %v1912, %v2242
        %v2283 = vadd.f32 %v1913, %v2244
        %v2284 = vadd.f32 %v1914, %v2247
        %v2285 = vadd.f32 %v1915, %v2249
        %v2286 = vadd.f32 %v1916, %v2252
        %v2287 = vadd.f32 %v1917, %v2254
        %2288 = vst [vmem:[#allocation4] sm:$0xff] %v2256
        %2289 = vst [vmem:[#allocation4 + $0x8] sm:$0xff] %v2257
        %2290 = vst [vmem:[#allocation4 + $0x10] sm:$0xff] %v2258
        %2291 = vst [vmem:[#allocation4 + $0x18] sm:$0xff] %v2259
        %2292 = vst [vmem:[#allocation4 + $0x20] sm:$0xff] %v2260
        %2293 = vst [vmem:[#allocation4 + $0x28] sm:$0xff] %v2261
        %2294 = vst [vmem:[#allocation4 + $0x30] sm:$0xff] %v2262
        %2295 = vst [vmem:[#allocation4 + $0x38] sm:$0xff] %v2263
        %2296 = vst [vmem:[#allocation4 + $0x40] sm:$0xff] %v2264
        %2297 = vst [vmem:[#allocation4 + $0x48] sm:$0xff] %v2265
        %2298 = vst [vmem:[#allocation4 + $0x50] sm:$0xff] %v2266
        %2299 = vst [vmem:[#allocation4 + $0x58] sm:$0xff] %v2267
        %2300 = vst [vmem:[#allocation4 + $0x60] sm:$0xff] %v2268
        %2301 = vst [vmem:[#allocation4 + $0x68] sm:$0xff] %v2269
        %2302 = vst [vmem:[#allocation4 + $0x70] sm:$0xff] %v2270
        %2303 = vst [vmem:[#allocation4 + $0x78] sm:$0xff] %v2271
        %2304 = vst [vmem:[#allocation4 + $0x80] sm:$0xff] %v2272
        %2305 = vst [vmem:[#allocation4 + $0x88] sm:$0xff] %v2273
        %2306 = vst [vmem:[#allocation4 + $0x90] sm:$0xff] %v2274
        %2307 = vst [vmem:[#allocation4 + $0x98] sm:$0xff] %v2275
        %2308 = vst [vmem:[#allocation4 + $0xa0] sm:$0xff] %v2276
        %2309 = vst [vmem:[#allocation4 + $0xa8] sm:$0xff] %v2277
        %2310 = vst [vmem:[#allocation4 + $0xb0] sm:$0xff] %v2278
        %2311 = vst [vmem:[#allocation4 + $0xb8] sm:$0xff] %v2279
        %2312 = vst [vmem:[#allocation4 + $0xc0] sm:$0xff] %v2280
        %2313 = vst [vmem:[#allocation4 + $0xc8] sm:$0xff] %v2281
        %2314 = vst [vmem:[#allocation4 + $0xd0] sm:$0xff] %v2282
        %2315 = vst [vmem:[#allocation4 + $0xd8] sm:$0xff] %v2283
        %2316 = vst [vmem:[#allocation4 + $0xe0] sm:$0xff] %v2284
        %2317 = vst [vmem:[#allocation4 + $0xe8] sm:$0xff] %v2285
        %2318 = vst [vmem:[#allocation4 + $0xf0] sm:$0xff] %v2286
        %2319 = vst [vmem:[#allocation4 + $0xf8] sm:$0xff] %v2287
        %2320 = vst.msk [vmem:[#allocation2] sm:$0xff] %vm1661, %v989
        %2321 = vst.msk [vmem:[#allocation2 + $0x8] sm:$0xff] %vm1661, %v990
        %2322 = vst.msk [vmem:[#allocation2 + $0x10] sm:$0xff] %vm1661, %v991
        %2323 = vst.msk [vmem:[#allocation2 + $0x18] sm:$0xff] %vm1661, %v992
        %2324 = vst.msk [vmem:[#allocation2 + $0x20] sm:$0xff] %vm1661, %v993
        %2325 = vst.msk [vmem:[#allocation2 + $0x28] sm:$0xff] %vm1661, %v994
        %2326 = vst.msk [vmem:[#allocation2 + $0x30] sm:$0xff] %vm1661, %v995
        %2327 = vst.msk [vmem:[#allocation2 + $0x38] sm:$0xff] %vm1661, %v996
        %2328 = vst.msk [vmem:[#allocation2 + $0x40] sm:$0xff] %vm1661, %v997
        %2329 = vst.msk [vmem:[#allocation2 + $0x48] sm:$0xff] %vm1661, %v998
        %2330 = vst.msk [vmem:[#allocation2 + $0x50] sm:$0xff] %vm1661, %v999
        %2331 = vst.msk [vmem:[#allocation2 + $0x58] sm:$0xff] %vm1661, %v1000
        %2332 = vst.msk [vmem:[#allocation2 + $0x60] sm:$0xff] %vm1661, %v1001
        %2333 = vst.msk [vmem:[#allocation2 + $0x68] sm:$0xff] %vm1661, %v1002
        %2334 = vst.msk [vmem:[#allocation2 + $0x70] sm:$0xff] %vm1661, %v1003
        %2335 = vst.msk [vmem:[#allocation2 + $0x78] sm:$0xff] %vm1661, %v1004
        %2336 = vst.msk [vmem:[#allocation2 + $0x80] sm:$0xff] %vm1661, %v1005
        %2337 = vst.msk [vmem:[#allocation2 + $0x88] sm:$0xff] %vm1661, %v1006
        %2338 = vst.msk [vmem:[#allocation2 + $0x90] sm:$0xff] %vm1661, %v1007
        %2339 = vst.msk [vmem:[#allocation2 + $0x98] sm:$0xff] %vm1661, %v1008
        %2340 = vst.msk [vmem:[#allocation2 + $0xa0] sm:$0xff] %vm1661, %v1009
        %2341 = vst.msk [vmem:[#allocation2 + $0xa8] sm:$0xff] %vm1661, %v1010
        %2342 = vst.msk [vmem:[#allocation2 + $0xb0] sm:$0xff] %vm1661, %v1011
        %2343 = vst.msk [vmem:[#allocation2 + $0xb8] sm:$0xff] %vm1661, %v1012
        %2344 = vst.msk [vmem:[#allocation2 + $0xc0] sm:$0xff] %vm1661, %v1013
        %2345 = vst.msk [vmem:[#allocation2 + $0xc8] sm:$0xff] %vm1661, %v1014
        %2346 = vst.msk [vmem:[#allocation2 + $0xd0] sm:$0xff] %vm1661, %v1015
        %2347 = vst.msk [vmem:[#allocation2 + $0xd8] sm:$0xff] %vm1661, %v1016
        %2348 = vst.msk [vmem:[#allocation2 + $0xe0] sm:$0xff] %vm1661, %v1017
        %2349 = vst.msk [vmem:[#allocation2 + $0xe8] sm:$0xff] %vm1661, %v1018
        %2350 = vst.msk [vmem:[#allocation2 + $0xf0] sm:$0xff] %vm1661, %v1019
        %2351 = vst.msk [vmem:[#allocation2 + $0xf8] sm:$0xff] %vm1661, %v1020
        // Predicated region
        $region37: #{self_attention.4} parent=31 // pred_check
          %p2352 = pneg %p326
        $region38: #{self_attention.4} parent=31 // pred_check_branch
          %2354 = sbr.rel (%p2352) target = $region40
        $region39: #{self_attention.4} parent=31 // pred_region
          %v2355 = vld [vmem:[#allocation4] sm:$0xff]
          %v2356 = vld [vmem:[#allocation4 + $0x8] sm:$0xff]
          %v2357 = vld [vmem:[#allocation4 + $0x10] sm:$0xff]
          %v2358 = vld [vmem:[#allocation4 + $0x18] sm:$0xff]
          %v2359 = vld [vmem:[#allocation4 + $0x20] sm:$0xff]
          %v2360 = vld [vmem:[#allocation4 + $0x28] sm:$0xff]
          %v2361 = vld [vmem:[#allocation4 + $0x30] sm:$0xff]
          %v2362 = vld [vmem:[#allocation4 + $0x38] sm:$0xff]
          %v2363 = vld [vmem:[#allocation4 + $0x40] sm:$0xff]
          %v2364 = vld [vmem:[#allocation4 + $0x48] sm:$0xff]
          %v2365 = vld [vmem:[#allocation4 + $0x50] sm:$0xff]
          %v2366 = vld [vmem:[#allocation4 + $0x58] sm:$0xff]
          %v2367 = vld [vmem:[#allocation4 + $0x60] sm:$0xff]
          %v2368 = vld [vmem:[#allocation4 + $0x68] sm:$0xff]
          %v2369 = vld [vmem:[#allocation4 + $0x70] sm:$0xff]
          %v2370 = vld [vmem:[#allocation4 + $0x78] sm:$0xff]
          %v2371 = vld [vmem:[#allocation4 + $0x80] sm:$0xff]
          %v2372 = vld [vmem:[#allocation4 + $0x88] sm:$0xff]
          %v2373 = vld [vmem:[#allocation4 + $0x90] sm:$0xff]
          %v2374 = vld [vmem:[#allocation4 + $0x98] sm:$0xff]
          %v2375 = vld [vmem:[#allocation4 + $0xa0] sm:$0xff]
          %v2376 = vld [vmem:[#allocation4 + $0xa8] sm:$0xff]
          %v2377 = vld [vmem:[#allocation4 + $0xb0] sm:$0xff]
          %v2378 = vld [vmem:[#allocation4 + $0xb8] sm:$0xff]
          %v2379 = vld [vmem:[#allocation4 + $0xc0] sm:$0xff]
          %v2380 = vld [vmem:[#allocation4 + $0xc8] sm:$0xff]
          %v2381 = vld [vmem:[#allocation4 + $0xd0] sm:$0xff]
          %v2382 = vld [vmem:[#allocation4 + $0xd8] sm:$0xff]
          %v2383 = vld [vmem:[#allocation4 + $0xe0] sm:$0xff]
          %v2384 = vld [vmem:[#allocation4 + $0xe8] sm:$0xff]
          %v2385 = vld [vmem:[#allocation4 + $0xf0] sm:$0xff]
          %v2386 = vld [vmem:[#allocation4 + $0xf8] sm:$0xff]
          %v2387 = vld [vmem:[#allocation3] sm:$0xff]
          %v2388 = vld [vmem:[#allocation3 + $0x8] sm:$0xff]
          %v2389 = vld [vmem:[#allocation3 + $0x10] sm:$0xff]
          %v2390 = vld [vmem:[#allocation3 + $0x18] sm:$0xff]
          %v2391 = vld [vmem:[#allocation3 + $0x20] sm:$0xff]
          %v2392 = vld [vmem:[#allocation3 + $0x28] sm:$0xff]
          %v2393 = vld [vmem:[#allocation3 + $0x30] sm:$0xff]
          %v2394 = vld [vmem:[#allocation3 + $0x38] sm:$0xff]
          %v2395 = vld [vmem:[#allocation3 + $0x40] sm:$0xff]
          %v2396 = vld [vmem:[#allocation3 + $0x48] sm:$0xff]
          %v2397 = vld [vmem:[#allocation3 + $0x50] sm:$0xff]
          %v2398 = vld [vmem:[#allocation3 + $0x58] sm:$0xff]
          %v2399 = vld [vmem:[#allocation3 + $0x60] sm:$0xff]
          %v2400 = vld [vmem:[#allocation3 + $0x68] sm:$0xff]
          %v2401 = vld [vmem:[#allocation3 + $0x70] sm:$0xff]
          %v2402 = vld [vmem:[#allocation3 + $0x78] sm:$0xff]
          %v2403 = vld [vmem:[#allocation3 + $0x80] sm:$0xff]
          %v2404 = vld [vmem:[#allocation3 + $0x88] sm:$0xff]
          %v2405 = vld [vmem:[#allocation3 + $0x90] sm:$0xff]
          %v2406 = vld [vmem:[#allocation3 + $0x98] sm:$0xff]
          %v2407 = vld [vmem:[#allocation3 + $0xa0] sm:$0xff]
          %v2408 = vld [vmem:[#allocation3 + $0xa8] sm:$0xff]
          %v2409 = vld [vmem:[#allocation3 + $0xb0] sm:$0xff]
          %v2410 = vld [vmem:[#allocation3 + $0xb8] sm:$0xff]
          %v2411 = vld [vmem:[#allocation3 + $0xc0] sm:$0xff]
          %v2412 = vld [vmem:[#allocation3 + $0xc8] sm:$0xff]
          %v2413 = vld [vmem:[#allocation3 + $0xd0] sm:$0xff]
          %v2414 = vld [vmem:[#allocation3 + $0xd8] sm:$0xff]
          %v2415 = vld [vmem:[#allocation3 + $0xe0] sm:$0xff]
          %v2416 = vld [vmem:[#allocation3 + $0xe8] sm:$0xff]
          %v2417 = vld [vmem:[#allocation3 + $0xf0] sm:$0xff]
          %v2418 = vld [vmem:[#allocation3 + $0xf8] sm:$0xff]
          %v2419 = vrcp.pop %v2387
          %v2420 = vrcp.pop %v2388
          %v2421 = vrcp.pop %v2389
          %v2422 = vrcp.pop %v2390
          %v2423 = vrcp.pop %v2391
          %v2424 = vrcp.pop %v2392
          %v2425 = vrcp.pop %v2393
          %v2426 = vrcp.pop %v2394
          %v2427 = vrcp.pop %v2395
          %v2428 = vrcp.pop %v2396
          %v2429 = vrcp.pop %v2397
          %v2430 = vrcp.pop %v2398
          %v2431 = vrcp.pop %v2399
          %v2432 = vrcp.pop %v2400
          %v2433 = vrcp.pop %v2401
          %v2434 = vrcp.pop %v2402
          %v2435 = vrcp.pop %v2403
          %v2436 = vrcp.pop %v2404
          %v2437 = vrcp.pop %v2405
          %v2438 = vrcp.pop %v2406
          %v2439 = vrcp.pop %v2407
          %v2440 = vrcp.pop %v2408
          %v2441 = vrcp.pop %v2409
          %v2442 = vrcp.pop %v2410
          %v2443 = vrcp.pop %v2411
          %v2444 = vrcp.pop %v2412
          %v2445 = vrcp.pop %v2413
          %v2446 = vrcp.pop %v2414
          %v2447 = vrcp.pop %v2415
          %v2448 = vrcp.pop %v2416
          %v2449 = vrcp.pop %v2417
          %v2450 = vrcp.pop %v2418
          %2452 = vset.pattern.permute.xlu0 0
          %2453 = vperm.xlu0 %2452, %v2419
          %v2454 = vpop.permute.xlu0 %2453
          %2457 = vset.pattern.permute.xlu0 0
          %2458 = vperm.xlu0 %2457, %v2420
          %v2459 = vpop.permute.xlu0 %2458
          %2462 = vset.pattern.permute.xlu0 0
          %2463 = vperm.xlu0 %2462, %v2421
          %v2464 = vpop.permute.xlu0 %2463
          %2467 = vset.pattern.permute.xlu0 0
          %2468 = vperm.xlu0 %2467, %v2422
          %v2469 = vpop.permute.xlu0 %2468
          %2472 = vset.pattern.permute.xlu0 0
          %2473 = vperm.xlu0 %2472, %v2423
          %v2474 = vpop.permute.xlu0 %2473
          %2477 = vset.pattern.permute.xlu0 0
          %2478 = vperm.xlu0 %2477, %v2424
          %v2479 = vpop.permute.xlu0 %2478
          %2482 = vset.pattern.permute.xlu0 0
          %2483 = vperm.xlu0 %2482, %v2425
          %v2484 = vpop.permute.xlu0 %2483
          %2487 = vset.pattern.permute.xlu0 0
          %2488 = vperm.xlu0 %2487, %v2426
          %v2489 = vpop.permute.xlu0 %2488
          %2492 = vset.pattern.permute.xlu0 0
          %2493 = vperm.xlu0 %2492, %v2427
          %v2494 = vpop.permute.xlu0 %2493
          %2497 = vset.pattern.permute.xlu0 0
          %2498 = vperm.xlu0 %2497, %v2428
          %v2499 = vpop.permute.xlu0 %2498
          %2502 = vset.pattern.permute.xlu0 0
          %2503 = vperm.xlu0 %2502, %v2429
          %v2504 = vpop.permute.xlu0 %2503
          %2507 = vset.pattern.permute.xlu0 0
          %2508 = vperm.xlu0 %2507, %v2430
          %v2509 = vpop.permute.xlu0 %2508
          %2512 = vset.pattern.permute.xlu0 0
          %2513 = vperm.xlu0 %2512, %v2431
          %v2514 = vpop.permute.xlu0 %2513
          %2517 = vset.pattern.permute.xlu0 0
          %2518 = vperm.xlu0 %2517, %v2432
          %v2519 = vpop.permute.xlu0 %2518
          %2522 = vset.pattern.permute.xlu0 0
          %2523 = vperm.xlu0 %2522, %v2433
          %v2524 = vpop.permute.xlu0 %2523
          %2527 = vset.pattern.permute.xlu0 0
          %2528 = vperm.xlu0 %2527, %v2434
          %v2529 = vpop.permute.xlu0 %2528
          %2532 = vset.pattern.permute.xlu0 0
          %2533 = vperm.xlu0 %2532, %v2435
          %v2534 = vpop.permute.xlu0 %2533
          %2537 = vset.pattern.permute.xlu0 0
          %2538 = vperm.xlu0 %2537, %v2436
          %v2539 = vpop.permute.xlu0 %2538
          %2542 = vset.pattern.permute.xlu0 0
          %2543 = vperm.xlu0 %2542, %v2437
          %v2544 = vpop.permute.xlu0 %2543
          %2547 = vset.pattern.permute.xlu0 0
          %2548 = vperm.xlu0 %2547, %v2438
          %v2549 = vpop.permute.xlu0 %2548
          %2552 = vset.pattern.permute.xlu0 0
          %2553 = vperm.xlu0 %2552, %v2439
          %v2554 = vpop.permute.xlu0 %2553
          %2557 = vset.pattern.permute.xlu0 0
          %2558 = vperm.xlu0 %2557, %v2440
          %v2559 = vpop.permute.xlu0 %2558
          %2562 = vset.pattern.permute.xlu0 0
          %2563 = vperm.xlu0 %2562, %v2441
          %v2564 = vpop.permute.xlu0 %2563
          %2567 = vset.pattern.permute.xlu0 0
          %2568 = vperm.xlu0 %2567, %v2442
          %v2569 = vpop.permute.xlu0 %2568
          %2572 = vset.pattern.permute.xlu0 0
          %2573 = vperm.xlu0 %2572, %v2443
          %v2574 = vpop.permute.xlu0 %2573
          %2577 = vset.pattern.permute.xlu0 0
          %2578 = vperm.xlu0 %2577, %v2444
          %v2579 = vpop.permute.xlu0 %2578
          %2582 = vset.pattern.permute.xlu0 0
          %2583 = vperm.xlu0 %2582, %v2445
          %v2584 = vpop.permute.xlu0 %2583
          %2587 = vset.pattern.permute.xlu0 0
          %2588 = vperm.xlu0 %2587, %v2446
          %v2589 = vpop.permute.xlu0 %2588
          %2592 = vset.pattern.permute.xlu0 0
          %2593 = vperm.xlu0 %2592, %v2447
          %v2594 = vpop.permute.xlu0 %2593
          %2597 = vset.pattern.permute.xlu0 0
          %2598 = vperm.xlu0 %2597, %v2448
          %v2599 = vpop.permute.xlu0 %2598
          %2602 = vset.pattern.permute.xlu0 0
          %2603 = vperm.xlu0 %2602, %v2449
          %v2604 = vpop.permute.xlu0 %2603
          %2607 = vset.pattern.permute.xlu0 0
          %2608 = vperm.xlu0 %2607, %v2450
          %v2609 = vpop.permute.xlu0 %2608
          %v2611 = vmul.f32 %v2355, %v2454
          %v2612 = vmul.f32 %v2356, %v2459
          %v2613 = vmul.f32 %v2357, %v2464
          %v2614 = vmul.f32 %v2358, %v2469
          %v2615 = vmul.f32 %v2359, %v2474
          %v2616 = vmul.f32 %v2360, %v2479
          %v2617 = vmul.f32 %v2361, %v2484
          %v2618 = vmul.f32 %v2362, %v2489
          %v2619 = vmul.f32 %v2363, %v2494
          %v2620 = vmul.f32 %v2364, %v2499
          %v2621 = vmul.f32 %v2365, %v2504
          %v2622 = vmul.f32 %v2366, %v2509
          %v2623 = vmul.f32 %v2367, %v2514
          %v2624 = vmul.f32 %v2368, %v2519
          %v2625 = vmul.f32 %v2369, %v2524
          %v2626 = vmul.f32 %v2370, %v2529
          %v2627 = vmul.f32 %v2371, %v2534
          %v2628 = vmul.f32 %v2372, %v2539
          %v2629 = vmul.f32 %v2373, %v2544
          %v2630 = vmul.f32 %v2374, %v2549
          %v2631 = vmul.f32 %v2375, %v2554
          %v2632 = vmul.f32 %v2376, %v2559
          %v2633 = vmul.f32 %v2377, %v2564
          %v2634 = vmul.f32 %v2378, %v2569
          %v2635 = vmul.f32 %v2379, %v2574
          %v2636 = vmul.f32 %v2380, %v2579
          %v2637 = vmul.f32 %v2381, %v2584
          %v2638 = vmul.f32 %v2382, %v2589
          %v2639 = vmul.f32 %v2383, %v2594
          %v2640 = vmul.f32 %v2384, %v2599
          %v2641 = vmul.f32 %v2385, %v2604
          %v2642 = vmul.f32 %v2386, %v2609
          %v2643 = vpack.c.bf16 %v2611, %v2611
          %v2644 = vpack.c.bf16 %v2612, %v2612
          %v2645 = vpack.c.bf16 %v2613, %v2613
          %v2646 = vpack.c.bf16 %v2614, %v2614
          %v2647 = vpack.c.bf16 %v2615, %v2615
          %v2648 = vpack.c.bf16 %v2616, %v2616
          %v2649 = vpack.c.bf16 %v2617, %v2617
          %v2650 = vpack.c.bf16 %v2618, %v2618
          %v2651 = vpack.c.bf16 %v2619, %v2619
          %v2652 = vpack.c.bf16 %v2620, %v2620
          %v2653 = vpack.c.bf16 %v2621, %v2621
          %v2654 = vpack.c.bf16 %v2622, %v2622
          %v2655 = vpack.c.bf16 %v2623, %v2623
          %v2656 = vpack.c.bf16 %v2624, %v2624
          %v2657 = vpack.c.bf16 %v2625, %v2625
          %v2658 = vpack.c.bf16 %v2626, %v2626
          %v2659 = vpack.c.bf16 %v2627, %v2627
          %v2660 = vpack.c.bf16 %v2628, %v2628
          %v2661 = vpack.c.bf16 %v2629, %v2629
          %v2662 = vpack.c.bf16 %v2630, %v2630
          %v2663 = vpack.c.bf16 %v2631, %v2631
          %v2664 = vpack.c.bf16 %v2632, %v2632
          %v2665 = vpack.c.bf16 %v2633, %v2633
          %v2666 = vpack.c.bf16 %v2634, %v2634
          %v2667 = vpack.c.bf16 %v2635, %v2635
          %v2668 = vpack.c.bf16 %v2636, %v2636
          %v2669 = vpack.c.bf16 %v2637, %v2637
          %v2670 = vpack.c.bf16 %v2638, %v2638
          %v2671 = vpack.c.bf16 %v2639, %v2639
          %v2672 = vpack.c.bf16 %v2640, %v2640
          %v2673 = vpack.c.bf16 %v2641, %v2641
          %v2674 = vpack.c.bf16 %v2642, %v2642
          %2675 = vst [vmem:[%s282] sm:$0xf] %v2643
          %2676 = vst [vmem:[%s282 + $0x4] sm:$0xf] %v2644
          %2677 = vst [vmem:[%s282 + $0x8] sm:$0xf] %v2645
          %2678 = vst [vmem:[%s282 + $0xc] sm:$0xf] %v2646
          %2679 = vst [vmem:[%s282 + $0x10] sm:$0xf] %v2647
          %2680 = vst [vmem:[%s282 + $0x14] sm:$0xf] %v2648
          %2681 = vst [vmem:[%s282 + $0x18] sm:$0xf] %v2649
          %2682 = vst [vmem:[%s282 + $0x1c] sm:$0xf] %v2650
          %2683 = vst [vmem:[%s282 + $0x20] sm:$0xf] %v2651
          %2684 = vst [vmem:[%s282 + $0x24] sm:$0xf] %v2652
          %2685 = vst [vmem:[%s282 + $0x28] sm:$0xf] %v2653
          %2686 = vst [vmem:[%s282 + $0x2c] sm:$0xf] %v2654
          %2687 = vst [vmem:[%s282 + $0x30] sm:$0xf] %v2655
          %2688 = vst [vmem:[%s282 + $0x34] sm:$0xf] %v2656
          %2689 = vst [vmem:[%s282 + $0x38] sm:$0xf] %v2657
          %2690 = vst [vmem:[%s282 + $0x3c] sm:$0xf] %v2658
          %2691 = vst [vmem:[%s282 + $0x40] sm:$0xf] %v2659
          %2692 = vst [vmem:[%s282 + $0x44] sm:$0xf] %v2660
          %2693 = vst [vmem:[%s282 + $0x48] sm:$0xf] %v2661
          %2694 = vst [vmem:[%s282 + $0x4c] sm:$0xf] %v2662
          %2695 = vst [vmem:[%s282 + $0x50] sm:$0xf] %v2663
          %2696 = vst [vmem:[%s282 + $0x54] sm:$0xf] %v2664
          %2697 = vst [vmem:[%s282 + $0x58] sm:$0xf] %v2665
          %2698 = vst [vmem:[%s282 + $0x5c] sm:$0xf] %v2666
          %2699 = vst [vmem:[%s282 + $0x60] sm:$0xf] %v2667
          %2700 = vst [vmem:[%s282 + $0x64] sm:$0xf] %v2668
          %2701 = vst [vmem:[%s282 + $0x68] sm:$0xf] %v2669
          %2702 = vst [vmem:[%s282 + $0x6c] sm:$0xf] %v2670
          %2703 = vst [vmem:[%s282 + $0x70] sm:$0xf] %v2671
          %2704 = vst [vmem:[%s282 + $0x74] sm:$0xf] %v2672
          %2705 = vst [vmem:[%s282 + $0x78] sm:$0xf] %v2673
          %2706 = vst [vmem:[%s282 + $0x7c] sm:$0xf] %v2674
        $region40: #{self_attention.4} parent=31 // pred_fallthru
          _
        %s2707 = sand.u32 %s142, 1
        %s2708 = sand.u32 %s142, 1
        %s2709 = smul.addr %s2708, 128
        %s2710 = scalar_lea.vmem [#allocation5], %s2709
        // Predicated region
        $region41: #{self_attention.4} parent=31 // pred_check
          %p2711 = pneg %p152
        $region42: #{self_attention.4} parent=31 // pred_check_branch
          %2713 = sbr.rel (%p2711) target = $region44
        $region43: #{self_attention.4} parent=31 // pred_region
          %s2714 = smul.u32 32, %s22
          %s2715 = smul.addr %s2714, 2
          %s2716 = sadd.s32 %s21, %s2715
          %s2717 = smul.addr %s20, 64
          %s2718 = sadd.s32 %s2716, %s2717
          %s2719 = smul.addr %s2718, 4
          %s2720 = scalar_lea.vmem %s3, %s2719
          // Predicated region
          $region45: #{self_attention.4} parent=43 // pred_check
            _
          $region46: #{self_attention.4} parent=43 // pred_check_branch
            %2722 = sbr.rel (0) target = $region48
          $region47: #{self_attention.4} parent=43 // pred_region
            // Predicated region
            $region49: #{self_attention.4} parent=47 // pred_check
              _
            $region50: #{self_attention.4} parent=47 // pred_check_branch
              %2724 = sbr.rel target = $region52
            $region51: #{self_attention.4} parent=47 // pred_region
              // Predicated region
              $region64: #{self_attention.4} parent=51 // pred_check
                _
              $region65: #{self_attention.4} parent=51 // pred_check_branch
                %2802 = sbr.rel (0) target = $region67
              $region66: #{self_attention.4} parent=51 // pred_region
                loop: start=0, step=1, limit=1
                $region68: #{self_attention.4} parent=66 // loop_pre_header
                  _
                $region69: #{self_attention.4} parent=66 // loop_header
                  %s2804 = sphi 0, %s2808
                  %p2805 = scmp.ge.s32.totalorder %s2804, 1
                  %s2809 = sphi %s2710, %s2710
                  %s2810 = sphi %s2720, %s2720
                $region70: #{self_attention.4} parent=66 // loop_header_branch
                  %2807 = sbr.rel (%p2805) target = $region74
                $region71: #{self_attention.4} parent=66 // loop_body
                  _
                $region72: #{self_attention.4} parent=66 // loop_footer
                  %s2808 = sadd.s32 1, %s2804
                $region73: #{self_attention.4} parent=66 // loop_footer_branch
                  %2803 = sbr.rel target = $region69
                $region74: #{self_attention.4} parent=66 // loop_exit
                  _
                %s2812 = ssub.s32 16, 1
                loop: start=0, step=1, limit=1
                $region75: #{self_attention.4} parent=66 // loop_pre_header
                  _
                $region76: #{self_attention.4} parent=66 // loop_header
                  %s2814 = sphi 0, %s2818
                  %p2815 = scmp.ge.s32.totalorder %s2814, 1
                  %s2819 = sphi %s2710, %s2710
                  %s2820 = sphi %s2720, %s2720
                $region77: #{self_attention.4} parent=66 // loop_header_branch
                  %2817 = sbr.rel (%p2815) target = $region81
                $region78: #{self_attention.4} parent=66 // loop_body
                  %v2821 = vld [vmem:[%s2819] sm:%s2812]
                  %2822 = vst [vmem:[%s2820] sm:%s2812] %v2821
                  %v2823 = vld [vmem:[%s2819 + $0x4] sm:%s2812]
                  %2824 = vst [vmem:[%s2820 + $0x8] sm:%s2812] %v2823
                  %v2825 = vld [vmem:[%s2819 + $0x8] sm:%s2812]
                  %2826 = vst [vmem:[%s2820 + $0x10] sm:%s2812] %v2825
                  %v2827 = vld [vmem:[%s2819 + $0xc] sm:%s2812]
                  %2828 = vst [vmem:[%s2820 + $0x18] sm:%s2812] %v2827
                  %v2829 = vld [vmem:[%s2819 + $0x10] sm:%s2812]
                  %2830 = vst [vmem:[%s2820 + $0x20] sm:%s2812] %v2829
                  %v2831 = vld [vmem:[%s2819 + $0x14] sm:%s2812]
                  %2832 = vst [vmem:[%s2820 + $0x28] sm:%s2812] %v2831
                  %v2833 = vld [vmem:[%s2819 + $0x18] sm:%s2812]
                  %2834 = vst [vmem:[%s2820 + $0x30] sm:%s2812] %v2833
                  %v2835 = vld [vmem:[%s2819 + $0x1c] sm:%s2812]
                  %2836 = vst [vmem:[%s2820 + $0x38] sm:%s2812] %v2835
                  %v2837 = vld [vmem:[%s2819 + $0x20] sm:%s2812]
                  %2838 = vst [vmem:[%s2820 + $0x40] sm:%s2812] %v2837
                  %v2839 = vld [vmem:[%s2819 + $0x24] sm:%s2812]
                  %2840 = vst [vmem:[%s2820 + $0x48] sm:%s2812] %v2839
                  %v2841 = vld [vmem:[%s2819 + $0x28] sm:%s2812]
                  %2842 = vst [vmem:[%s2820 + $0x50] sm:%s2812] %v2841
                  %v2843 = vld [vmem:[%s2819 + $0x2c] sm:%s2812]
                  %2844 = vst [vmem:[%s2820 + $0x58] sm:%s2812] %v2843
                  %v2845 = vld [vmem:[%s2819 + $0x30] sm:%s2812]
                  %2846 = vst [vmem:[%s2820 + $0x60] sm:%s2812] %v2845
                  %v2847 = vld [vmem:[%s2819 + $0x34] sm:%s2812]
                  %2848 = vst [vmem:[%s2820 + $0x68] sm:%s2812] %v2847
                  %v2849 = vld [vmem:[%s2819 + $0x38] sm:%s2812]
                  %2850 = vst [vmem:[%s2820 + $0x70] sm:%s2812] %v2849
                  %v2851 = vld [vmem:[%s2819 + $0x3c] sm:%s2812]
                  %2852 = vst [vmem:[%s2820 + $0x78] sm:%s2812] %v2851
                  %v2853 = vld [vmem:[%s2819 + $0x40] sm:%s2812]
                  %2854 = vst [vmem:[%s2820 + $0x80] sm:%s2812] %v2853
                  %v2855 = vld [vmem:[%s2819 + $0x44] sm:%s2812]
                  %2856 = vst [vmem:[%s2820 + $0x88] sm:%s2812] %v2855
                  %v2857 = vld [vmem:[%s2819 + $0x48] sm:%s2812]
                  %2858 = vst [vmem:[%s2820 + $0x90] sm:%s2812] %v2857
                  %v2859 = vld [vmem:[%s2819 + $0x4c] sm:%s2812]
                  %2860 = vst [vmem:[%s2820 + $0x98] sm:%s2812] %v2859
                  %v2861 = vld [vmem:[%s2819 + $0x50] sm:%s2812]
                  %2862 = vst [vmem:[%s2820 + $0xa0] sm:%s2812] %v2861
                  %v2863 = vld [vmem:[%s2819 + $0x54] sm:%s2812]
                  %2864 = vst [vmem:[%s2820 + $0xa8] sm:%s2812] %v2863
                  %v2865 = vld [vmem:[%s2819 + $0x58] sm:%s2812]
                  %2866 = vst [vmem:[%s2820 + $0xb0] sm:%s2812] %v2865
                  %v2867 = vld [vmem:[%s2819 + $0x5c] sm:%s2812]
                  %2868 = vst [vmem:[%s2820 + $0xb8] sm:%s2812] %v2867
                  %v2869 = vld [vmem:[%s2819 + $0x60] sm:%s2812]
                  %2870 = vst [vmem:[%s2820 + $0xc0] sm:%s2812] %v2869
                  %v2871 = vld [vmem:[%s2819 + $0x64] sm:%s2812]
                  %2872 = vst [vmem:[%s2820 + $0xc8] sm:%s2812] %v2871
                  %v2873 = vld [vmem:[%s2819 + $0x68] sm:%s2812]
                  %2874 = vst [vmem:[%s2820 + $0xd0] sm:%s2812] %v2873
                  %v2875 = vld [vmem:[%s2819 + $0x6c] sm:%s2812]
                  %2876 = vst [vmem:[%s2820 + $0xd8] sm:%s2812] %v2875
                  %v2877 = vld [vmem:[%s2819 + $0x70] sm:%s2812]
                  %2878 = vst [vmem:[%s2820 + $0xe0] sm:%s2812] %v2877
                  %v2879 = vld [vmem:[%s2819 + $0x74] sm:%s2812]
                  %2880 = vst [vmem:[%s2820 + $0xe8] sm:%s2812] %v2879
                  %v2881 = vld [vmem:[%s2819 + $0x78] sm:%s2812]
                  %2882 = vst [vmem:[%s2820 + $0xf0] sm:%s2812] %v2881
                  %v2883 = vld [vmem:[%s2819 + $0x7c] sm:%s2812]
                  %2884 = vst [vmem:[%s2820 + $0xf8] sm:%s2812] %v2883
                $region79: #{self_attention.4} parent=66 // loop_footer
                  %s2818 = sadd.s32 1, %s2814
                $region80: #{self_attention.4} parent=66 // loop_footer_branch
                  %2813 = sbr.rel target = $region76
                $region81: #{self_attention.4} parent=66 // loop_exit
                  _
              $region67: #{self_attention.4} parent=51 // pred_fallthru
                _
            $region52: #{self_attention.4} parent=47 // pred_fallthru
              _
            // Predicated region
            $region53: #{self_attention.4} parent=47 // pred_check
              _
            $region54: #{self_attention.4} parent=47 // pred_check_branch
              %2726 = sbr.rel (0) target = $region56
            $region55: #{self_attention.4} parent=47 // pred_region
              %s2728 = ssub.s32 16, 1
              loop: start=0, step=1, limit=1
              $region57: #{self_attention.4} parent=55 // loop_pre_header
                _
              $region58: #{self_attention.4} parent=55 // loop_header
                %s2730 = sphi 0, %s2734
                %p2731 = scmp.ge.s32.totalorder %s2730, 1
                %s2735 = sphi %s2710, %s2710
                %s2736 = sphi %s2720, %s2720
              $region59: #{self_attention.4} parent=55 // loop_header_branch
                %2733 = sbr.rel (%p2731) target = $region63
              $region60: #{self_attention.4} parent=55 // loop_body
                %v2737 = vld [vmem:[%s2735] sm:%s2728]
                %2738 = vst [vmem:[%s2736] sm:%s2728] %v2737
                %v2739 = vld [vmem:[%s2735 + $0x4] sm:%s2728]
                %2740 = vst [vmem:[%s2736 + $0x8] sm:%s2728] %v2739
                %v2741 = vld [vmem:[%s2735 + $0x8] sm:%s2728]
                %2742 = vst [vmem:[%s2736 + $0x10] sm:%s2728] %v2741
                %v2743 = vld [vmem:[%s2735 + $0xc] sm:%s2728]
                %2744 = vst [vmem:[%s2736 + $0x18] sm:%s2728] %v2743
                %v2745 = vld [vmem:[%s2735 + $0x10] sm:%s2728]
                %2746 = vst [vmem:[%s2736 + $0x20] sm:%s2728] %v2745
                %v2747 = vld [vmem:[%s2735 + $0x14] sm:%s2728]
                %2748 = vst [vmem:[%s2736 + $0x28] sm:%s2728] %v2747
                %v2749 = vld [vmem:[%s2735 + $0x18] sm:%s2728]
                %2750 = vst [vmem:[%s2736 + $0x30] sm:%s2728] %v2749
                %v2751 = vld [vmem:[%s2735 + $0x1c] sm:%s2728]
                %2752 = vst [vmem:[%s2736 + $0x38] sm:%s2728] %v2751
                %v2753 = vld [vmem:[%s2735 + $0x20] sm:%s2728]
                %2754 = vst [vmem:[%s2736 + $0x40] sm:%s2728] %v2753
                %v2755 = vld [vmem:[%s2735 + $0x24] sm:%s2728]
                %2756 = vst [vmem:[%s2736 + $0x48] sm:%s2728] %v2755
                %v2757 = vld [vmem:[%s2735 + $0x28] sm:%s2728]
                %2758 = vst [vmem:[%s2736 + $0x50] sm:%s2728] %v2757
                %v2759 = vld [vmem:[%s2735 + $0x2c] sm:%s2728]
                %2760 = vst [vmem:[%s2736 + $0x58] sm:%s2728] %v2759
                %v2761 = vld [vmem:[%s2735 + $0x30] sm:%s2728]
                %2762 = vst [vmem:[%s2736 + $0x60] sm:%s2728] %v2761
                %v2763 = vld [vmem:[%s2735 + $0x34] sm:%s2728]
                %2764 = vst [vmem:[%s2736 + $0x68] sm:%s2728] %v2763
                %v2765 = vld [vmem:[%s2735 + $0x38] sm:%s2728]
                %2766 = vst [vmem:[%s2736 + $0x70] sm:%s2728] %v2765
                %v2767 = vld [vmem:[%s2735 + $0x3c] sm:%s2728]
                %2768 = vst [vmem:[%s2736 + $0x78] sm:%s2728] %v2767
                %v2769 = vld [vmem:[%s2735 + $0x40] sm:%s2728]
                %2770 = vst [vmem:[%s2736 + $0x80] sm:%s2728] %v2769
                %v2771 = vld [vmem:[%s2735 + $0x44] sm:%s2728]
                %2772 = vst [vmem:[%s2736 + $0x88] sm:%s2728] %v2771
                %v2773 = vld [vmem:[%s2735 + $0x48] sm:%s2728]
                %2774 = vst [vmem:[%s2736 + $0x90] sm:%s2728] %v2773
                %v2775 = vld [vmem:[%s2735 + $0x4c] sm:%s2728]
                %2776 = vst [vmem:[%s2736 + $0x98] sm:%s2728] %v2775
                %v2777 = vld [vmem:[%s2735 + $0x50] sm:%s2728]
                %2778 = vst [vmem:[%s2736 + $0xa0] sm:%s2728] %v2777
                %v2779 = vld [vmem:[%s2735 + $0x54] sm:%s2728]
                %2780 = vst [vmem:[%s2736 + $0xa8] sm:%s2728] %v2779
                %v2781 = vld [vmem:[%s2735 + $0x58] sm:%s2728]
                %2782 = vst [vmem:[%s2736 + $0xb0] sm:%s2728] %v2781
                %v2783 = vld [vmem:[%s2735 + $0x5c] sm:%s2728]
                %2784 = vst [vmem:[%s2736 + $0xb8] sm:%s2728] %v2783
                %v2785 = vld [vmem:[%s2735 + $0x60] sm:%s2728]
                %2786 = vst [vmem:[%s2736 + $0xc0] sm:%s2728] %v2785
                %v2787 = vld [vmem:[%s2735 + $0x64] sm:%s2728]
                %2788 = vst [vmem:[%s2736 + $0xc8] sm:%s2728] %v2787
                %v2789 = vld [vmem:[%s2735 + $0x68] sm:%s2728]
                %2790 = vst [vmem:[%s2736 + $0xd0] sm:%s2728] %v2789
                %v2791 = vld [vmem:[%s2735 + $0x6c] sm:%s2728]
                %2792 = vst [vmem:[%s2736 + $0xd8] sm:%s2728] %v2791
                %v2793 = vld [vmem:[%s2735 + $0x70] sm:%s2728]
                %2794 = vst [vmem:[%s2736 + $0xe0] sm:%s2728] %v2793
                %v2795 = vld [vmem:[%s2735 + $0x74] sm:%s2728]
                %2796 = vst [vmem:[%s2736 + $0xe8] sm:%s2728] %v2795
                %v2797 = vld [vmem:[%s2735 + $0x78] sm:%s2728]
                %2798 = vst [vmem:[%s2736 + $0xf0] sm:%s2728] %v2797
                %v2799 = vld [vmem:[%s2735 + $0x7c] sm:%s2728]
                %2800 = vst [vmem:[%s2736 + $0xf8] sm:%s2728] %v2799
              $region61: #{self_attention.4} parent=55 // loop_footer
                %s2734 = sadd.s32 1, %s2730
              $region62: #{self_attention.4} parent=55 // loop_footer_branch
                %2729 = sbr.rel target = $region58
              $region63: #{self_attention.4} parent=55 // loop_exit
                _
            $region56: #{self_attention.4} parent=47 // pred_fallthru
              _
          $region48: #{self_attention.4} parent=43 // pred_fallthru
            _
          %2885 = vnop
        $region44: #{self_attention.4} parent=31 // pred_fallthru
          _
      $region32: #{self_attention.4} parent=5 // pred_fallthru
        _
      %p2886 = scmp.le.s32.totalorder 2, %s9
      // Predicated region
      $region82: #{self_attention.4} parent=5 // pred_check
        %p2887 = pneg %p2886
      $region83: #{self_attention.4} parent=5 // pred_check_branch
        %2889 = sbr.rel (%p2887) target = $region85
      $region84: #{self_attention.4} parent=5 // pred_region
        %s2890 = ssub.s32 %s9, 2
        // Predicated region
        $region86: #{self_attention.4} parent=84 // pred_check
          %p2891 = pneg %p158
        $region87: #{self_attention.4} parent=84 // pred_check_branch
          %2893 = sbr.rel (%p2891) target = $region89
        $region88: #{self_attention.4} parent=84 // pred_region
          %s2894 = sand.u32 %s143, 1
          %s2895 = sand.u32 %s143, 1
          %s2896 = smul.addr %s2895, 128
          %s2897 = scalar_lea.vmem [#allocation5], %s2896
        $region89: #{self_attention.4} parent=84 // pred_fallthru
          _
      $region85: #{self_attention.4} parent=5 // pred_fallthru
        _
    $region6: #{self_attention.4} parent=1 // loop_footer
      %s13 = sadd.s32 1, %s9
    $region7: #{self_attention.4} parent=1 // loop_footer_branch
      %8 = sbr.rel target = $region3
    $region8: #{self_attention.4} parent=1 // loop_exit
      _

// kernel: self_attention.3
$region0: #{self_attention.3}
  #allocation0 [shape = 'u32[]', space=smem, size = 0x4, offset = 0x4, fixed_abs, tag = 'smem constant byte address 0x4 - core index']
  #allocation1 [shape = 'u32[72,128]{1,0:T(1,128)}', space=vmem, size = 0x9000, scoped, tag = 'internal scratch']
  #allocation2 [shape = 'f32[256,768]{1,0:T(8,128)}', space=vmem, size = 0xc0000, scoped, tag = 'scratch operand']
  %s0 = inlined_call_operand.vmem [shape: bf16[2,256,256], index: 0, kind: input, shape index: {}]
  %s1 = inlined_call_operand.vmem [shape: bf16[256,768], index: 1, kind: input, shape index: {}]
  %s2 = inlined_call_operand.vmem [shape: f32[1,768], index: 2, kind: input, shape index: {}]
  %s3 = inlined_call_operand.vmem [shape: f32[2,256,128], index: 3, kind: input, shape index: {}]
  %s4 = inlined_call_operand.vmem [shape: f32[2,256,128], index: 4, kind: input, shape index: {}]
  %s5 = inlined_call_operand.vmem [shape: f32[2,256,128], index: 5, kind: input, shape index: {}]
  %s6 = inlined_call_operand.vmem [shape: f32[2,256,128], index: 6, kind: input, shape index: {}]
  %s7 = inlined_call_operand.vmem [shape: bf16[2,2,256,128], index: 7, kind: output, shape index: {0}]
  %s8 = inlined_call_operand.vmem [shape: bf16[2,2,256,128], index: 8, kind: output, shape index: {1}]
  %s9 = inlined_call_operand.vmem [shape: bf16[2,2,256,128], index: 9, kind: output, shape index: {2}]
  %10 = xla_tuple %s7, %s8, %s9
  %s11 = sld [smem:[#allocation0]]
  $region84: #{self_attention.3} parent=0
    _
  %s13 = ssub.s32 1, %s11
  %s14 = scalar_select 0, %s13, %s11
  loop: start=0, step=1, limit=4
  $region2: #{self_attention.3} parent=0 // loop_pre_header
    _
  $region3: #{self_attention.3} parent=0 // loop_header
    %s16 = sphi 0, %s20
    %p17 = scmp.ge.s32.totalorder %s16, 4
    %s23 = sphi 0, %s35
    %s24 = sphi 0, %s31
    %s25 = sphi 0, %s23
    %s26 = sphi 0, %s24
    %s27 = sphi 0, %s25
    %s28 = sphi 0, %s26
    %s40 = sphi 0, %s42
    %s43 = sphi 0, %s40
    %s44 = sphi 0, %s43
    %s60 = sphi 0, %s44
    %s64 = sphi 0, %s64
    %s66 = sphi 0, %s64
    %s67 = sphi 0, %s66
    %s81 = sphi 0, %s67
    %s85 = sphi 0, %s85
    %s87 = sphi 0, %s85
    %s88 = sphi 0, %s87
    %s102 = sphi 0, %s88
    %s110 = sphi 0, %s112
    %s113 = sphi 0, %s110
    %s114 = sphi 0, %s113
    %s130 = sphi 0, %s114
    %s138 = sphi 0, %s140
    %s141 = sphi 0, %s138
    %s142 = sphi 0, %s141
    %s158 = sphi 0, %s142
    %s166 = sphi 0, %s168
    %s169 = sphi 0, %s166
    %s170 = sphi 0, %s169
    %s186 = sphi 0, %s170
    %s194 = sphi 0, %s196
    %s197 = sphi 0, %s194
    %s198 = sphi 0, %s197
    %s214 = sphi 0, %s198
    %s222 = sphi 0, %s224
    %s225 = sphi 0, %s222
    %s226 = sphi 0, %s225
    %s242 = sphi 0, %s226
    %s250 = sphi 0, %s252
    %s253 = sphi 0, %s250
    %s254 = sphi 0, %s253
    %s270 = sphi 0, %s254
    %s278 = sphi 0, %s280
    %s281 = sphi 0, %s278
    %s282 = sphi 0, %s281
    %s298 = sphi 0, %s282
  $region4: #{self_attention.3} parent=0 // loop_header_branch
    %19 = sbr.rel (%p17) target = $region8
  $region5: #{self_attention.3} parent=0 // loop_body
    %s21 = ssub.s32 %s16, 1
    %s22 = ssub.s32 %s16, 2
    %s29 = sadd.s32 1, %s24
    %p30 = scmp.ge.s32.totalorder %s29, 1
    %s31 = scalar_select %p30, 0, %s29
    %s32 = sadd.s32 1, %s23
    %s33 = scalar_select %p30, %s32, %s23
    %p34 = scmp.ge.s32.totalorder %s33, 2
    %s35 = scalar_select %p34, 0, %s33
    %s36 = ssub.s32 %s23, %s35
    %s37 = ssub.s32 %s24, %s31
    %s38 = sor.u32 %s36, %s37
    %p39 = scmp.eq.s32.totalorder %s38, 0
    %s41 = sadd.s32 %s40, 1
    %s42 = scalar_select %p39, %s40, %s41
    %p45 = pneg %p39
    %p46 = scmp.eq.s32.totalorder %s16, 1
    %p47 = por %p45, %p46
    %p48 = scmp.ne.s32.totalorder %s40, %s43
    %p49 = scmp.eq.s32.totalorder %s16, 0
    %p50 = por %p48, %p49
    %p51 = scmp.ne.s32.totalorder %s40, %s43
    %p52 = scmp.eq.s32.totalorder %s21, 1
    %p53 = por %p51, %p52
    %p54 = scmp.ne.s32.totalorder %s43, %s44
    %p55 = scmp.eq.s32.totalorder %s21, 0
    %p56 = por %p54, %p55
    %p57 = scmp.ne.s32.totalorder %s43, %s44
    %p58 = scmp.eq.s32.totalorder %s22, 1
    %p59 = por %p57, %p58
    %p61 = scmp.ne.s32.totalorder %s44, %s60
    %p62 = scmp.eq.s32.totalorder %s22, 0
    %p63 = por %p61, %p62
    %s65 = sadd.s32 %s64, 1
    %p68 = scmp.eq.s32.totalorder %s16, 1
    %p69 = scmp.ne.s32.totalorder %s64, %s66
    %p70 = scmp.eq.s32.totalorder %s16, 0
    %p71 = por %p69, %p70
    %p72 = scmp.ne.s32.totalorder %s64, %s66
    %p73 = scmp.eq.s32.totalorder %s21, 1
    %p74 = por %p72, %p73
    %p75 = scmp.ne.s32.totalorder %s66, %s67
    %p76 = scmp.eq.s32.totalorder %s21, 0
    %p77 = por %p75, %p76
    %p78 = scmp.ne.s32.totalorder %s66, %s67
    %p79 = scmp.eq.s32.totalorder %s22, 1
    %p80 = por %p78, %p79
    %p82 = scmp.ne.s32.totalorder %s67, %s81
    %p83 = scmp.eq.s32.totalorder %s22, 0
    %p84 = por %p82, %p83
    %s86 = sadd.s32 %s85, 1
    %p89 = scmp.eq.s32.totalorder %s16, 1
    %p90 = scmp.ne.s32.totalorder %s85, %s87
    %p91 = scmp.eq.s32.totalorder %s16, 0
    %p92 = por %p90, %p91
    %p93 = scmp.ne.s32.totalorder %s85, %s87
    %p94 = scmp.eq.s32.totalorder %s21, 1
    %p95 = por %p93, %p94
    %p96 = scmp.ne.s32.totalorder %s87, %s88
    %p97 = scmp.eq.s32.totalorder %s21, 0
    %p98 = por %p96, %p97
    %p99 = scmp.ne.s32.totalorder %s87, %s88
    %p100 = scmp.eq.s32.totalorder %s22, 1
    %p101 = por %p99, %p100
    %p103 = scmp.ne.s32.totalorder %s88, %s102
    %p104 = scmp.eq.s32.totalorder %s22, 0
    %p105 = por %p103, %p104
    %s106 = ssub.s32 %s23, %s35
    %s107 = ssub.s32 %s24, %s31
    %s108 = sor.u32 %s106, %s107
    %p109 = scmp.eq.s32.totalorder %s108, 0
    %s111 = sadd.s32 %s110, 1
    %s112 = scalar_select %p109, %s110, %s111
    %p115 = pneg %p109
    %p116 = scmp.eq.s32.totalorder %s16, 1
    %p117 = por %p115, %p116
    %p118 = scmp.ne.s32.totalorder %s110, %s113
    %p119 = scmp.eq.s32.totalorder %s16, 0
    %p120 = por %p118, %p119
    %p121 = scmp.ne.s32.totalorder %s110, %s113
    %p122 = scmp.eq.s32.totalorder %s21, 1
    %p123 = por %p121, %p122
    %p124 = scmp.ne.s32.totalorder %s113, %s114
    %p125 = scmp.eq.s32.totalorder %s21, 0
    %p126 = por %p124, %p125
    %p127 = scmp.ne.s32.totalorder %s113, %s114
    %p128 = scmp.eq.s32.totalorder %s22, 1
    %p129 = por %p127, %p128
    %p131 = scmp.ne.s32.totalorder %s114, %s130
    %p132 = scmp.eq.s32.totalorder %s22, 0
    %p133 = por %p131, %p132
    %s134 = ssub.s32 %s23, %s35
    %s135 = ssub.s32 %s24, %s31
    %s136 = sor.u32 %s134, %s135
    %p137 = scmp.eq.s32.totalorder %s136, 0
    %s139 = sadd.s32 %s138, 1
    %s140 = scalar_select %p137, %s138, %s139
    %p143 = pneg %p137
    %p144 = scmp.eq.s32.totalorder %s16, 1
    %p145 = por %p143, %p144
    %p146 = scmp.ne.s32.totalorder %s138, %s141
    %p147 = scmp.eq.s32.totalorder %s16, 0
    %p148 = por %p146, %p147
    %p149 = scmp.ne.s32.totalorder %s138, %s141
    %p150 = scmp.eq.s32.totalorder %s21, 1
    %p151 = por %p149, %p150
    %p152 = scmp.ne.s32.totalorder %s141, %s142
    %p153 = scmp.eq.s32.totalorder %s21, 0
    %p154 = por %p152, %p153
    %p155 = scmp.ne.s32.totalorder %s141, %s142
    %p156 = scmp.eq.s32.totalorder %s22, 1
    %p157 = por %p155, %p156
    %p159 = scmp.ne.s32.totalorder %s142, %s158
    %p160 = scmp.eq.s32.totalorder %s22, 0
    %p161 = por %p159, %p160
    %s162 = ssub.s32 %s23, %s35
    %s163 = ssub.s32 %s24, %s31
    %s164 = sor.u32 %s162, %s163
    %p165 = scmp.eq.s32.totalorder %s164, 0
    %s167 = sadd.s32 %s166, 1
    %s168 = scalar_select %p165, %s166, %s167
    %p171 = pneg %p165
    %p172 = scmp.eq.s32.totalorder %s16, 1
    %p173 = por %p171, %p172
    %p174 = scmp.ne.s32.totalorder %s166, %s169
    %p175 = scmp.eq.s32.totalorder %s16, 0
    %p176 = por %p174, %p175
    %p177 = scmp.ne.s32.totalorder %s166, %s169
    %p178 = scmp.eq.s32.totalorder %s21, 1
    %p179 = por %p177, %p178
    %p180 = scmp.ne.s32.totalorder %s169, %s170
    %p181 = scmp.eq.s32.totalorder %s21, 0
    %p182 = por %p180, %p181
    %p183 = scmp.ne.s32.totalorder %s169, %s170
    %p184 = scmp.eq.s32.totalorder %s22, 1
    %p185 = por %p183, %p184
    %p187 = scmp.ne.s32.totalorder %s170, %s186
    %p188 = scmp.eq.s32.totalorder %s22, 0
    %p189 = por %p187, %p188
    %s190 = ssub.s32 %s23, %s35
    %s191 = ssub.s32 %s24, %s31
    %s192 = sor.u32 %s190, %s191
    %p193 = scmp.eq.s32.totalorder %s192, 0
    %s195 = sadd.s32 %s194, 1
    %s196 = scalar_select %p193, %s194, %s195
    %p199 = pneg %p193
    %p200 = scmp.eq.s32.totalorder %s16, 1
    %p201 = por %p199, %p200
    %p202 = scmp.ne.s32.totalorder %s194, %s197
    %p203 = scmp.eq.s32.totalorder %s16, 0
    %p204 = por %p202, %p203
    %p205 = scmp.ne.s32.totalorder %s194, %s197
    %p206 = scmp.eq.s32.totalorder %s21, 1
    %p207 = por %p205, %p206
    %p208 = scmp.ne.s32.totalorder %s197, %s198
    %p209 = scmp.eq.s32.totalorder %s21, 0
    %p210 = por %p208, %p209
    %p211 = scmp.ne.s32.totalorder %s197, %s198
    %p212 = scmp.eq.s32.totalorder %s22, 1
    %p213 = por %p211, %p212
    %p215 = scmp.ne.s32.totalorder %s198, %s214
    %p216 = scmp.eq.s32.totalorder %s22, 0
    %p217 = por %p215, %p216
    %s218 = ssub.s32 %s23, %s35
    %s219 = ssub.s32 %s24, %s31
    %s220 = sor.u32 %s218, %s219
    %p221 = scmp.eq.s32.totalorder %s220, 0
    %s223 = sadd.s32 %s222, 1
    %s224 = scalar_select %p221, %s222, %s223
    %p227 = pneg %p221
    %p228 = scmp.eq.s32.totalorder %s16, 1
    %p229 = por %p227, %p228
    %p230 = scmp.ne.s32.totalorder %s222, %s225
    %p231 = scmp.eq.s32.totalorder %s16, 0
    %p232 = por %p230, %p231
    %p233 = scmp.ne.s32.totalorder %s222, %s225
    %p234 = scmp.eq.s32.totalorder %s21, 1
    %p235 = por %p233, %p234
    %p236 = scmp.ne.s32.totalorder %s225, %s226
    %p237 = scmp.eq.s32.totalorder %s21, 0
    %p238 = por %p236, %p237
    %p239 = scmp.ne.s32.totalorder %s225, %s226
    %p240 = scmp.eq.s32.totalorder %s22, 1
    %p241 = por %p239, %p240
    %p243 = scmp.ne.s32.totalorder %s226, %s242
    %p244 = scmp.eq.s32.totalorder %s22, 0
    %p245 = por %p243, %p244
    %s246 = ssub.s32 %s23, %s35
    %s247 = ssub.s32 %s24, %s31
    %s248 = sor.u32 %s246, %s247
    %p249 = scmp.eq.s32.totalorder %s248, 0
    %s251 = sadd.s32 %s250, 1
    %s252 = scalar_select %p249, %s250, %s251
    %p255 = pneg %p249
    %p256 = scmp.eq.s32.totalorder %s16, 1
    %p257 = por %p255, %p256
    %p258 = scmp.ne.s32.totalorder %s250, %s253
    %p259 = scmp.eq.s32.totalorder %s16, 0
    %p260 = por %p258, %p259
    %p261 = scmp.ne.s32.totalorder %s250, %s253
    %p262 = scmp.eq.s32.totalorder %s21, 1
    %p263 = por %p261, %p262
    %p264 = scmp.ne.s32.totalorder %s253, %s254
    %p265 = scmp.eq.s32.totalorder %s21, 0
    %p266 = por %p264, %p265
    %p267 = scmp.ne.s32.totalorder %s253, %s254
    %p268 = scmp.eq.s32.totalorder %s22, 1
    %p269 = por %p267, %p268
    %p271 = scmp.ne.s32.totalorder %s254, %s270
    %p272 = scmp.eq.s32.totalorder %s22, 0
    %p273 = por %p271, %p272
    %s274 = ssub.s32 %s23, %s35
    %s275 = ssub.s32 %s24, %s31
    %s276 = sor.u32 %s274, %s275
    %p277 = scmp.eq.s32.totalorder %s276, 0
    %s279 = sadd.s32 %s278, 1
    %s280 = scalar_select %p277, %s278, %s279
    %p283 = pneg %p277
    %p284 = scmp.eq.s32.totalorder %s16, 1
    %p285 = por %p283, %p284
    %p286 = scmp.ne.s32.totalorder %s278, %s281
    %p287 = scmp.eq.s32.totalorder %s16, 0
    %p288 = por %p286, %p287
    %p289 = scmp.ne.s32.totalorder %s278, %s281
    %p290 = scmp.eq.s32.totalorder %s21, 1
    %p291 = por %p289, %p290
    %p292 = scmp.ne.s32.totalorder %s281, %s282
    %p293 = scmp.eq.s32.totalorder %s21, 0
    %p294 = por %p292, %p293
    %p295 = scmp.ne.s32.totalorder %s281, %s282
    %p296 = scmp.eq.s32.totalorder %s22, 1
    %p297 = por %p295, %p296
    %p299 = scmp.ne.s32.totalorder %s282, %s298
    %p300 = scmp.eq.s32.totalorder %s22, 0
    %p301 = por %p299, %p300
    %p302 = scmp.le.s32.totalorder 1, %s16
    %p303 = scmp.lt.s32.totalorder %s16, 3
    %p304 = pnand %p302, %p303
    %p305 = pneg %p304
    // Predicated region
    $region9: #{self_attention.3} parent=5 // pred_check
      _
    $region10: #{self_attention.3} parent=5 // pred_check_branch
      %307 = sbr.rel (%p304) target = $region12
    $region11: #{self_attention.3} parent=5 // pred_region
      %s308 = ssub.s32 %s16, 1
      // Predicated region
      $region13: #{self_attention.3} parent=11 // pred_check
        %p309 = pneg %p77
      $region14: #{self_attention.3} parent=11 // pred_check_branch
        %311 = sbr.rel (%p309) target = $region16
      $region15: #{self_attention.3} parent=11 // pred_region
        _
      $region16: #{self_attention.3} parent=11 // pred_fallthru
        _
      // Predicated region
      $region17: #{self_attention.3} parent=11 // pred_check
        %p312 = pneg %p98
      $region18: #{self_attention.3} parent=11 // pred_check_branch
        %314 = sbr.rel (%p312) target = $region20
      $region19: #{self_attention.3} parent=11 // pred_region
        _
      $region20: #{self_attention.3} parent=11 // pred_fallthru
        _
    $region12: #{self_attention.3} parent=5 // pred_fallthru
      _
    %p315 = scmp.lt.s32.totalorder %s16, 2
    // Predicated region
    $region21: #{self_attention.3} parent=5 // pred_check
      %p316 = pneg %p315
    $region22: #{self_attention.3} parent=5 // pred_check_branch
      %318 = sbr.rel (%p316) target = $region24
    $region23: #{self_attention.3} parent=5 // pred_region
      // Predicated region
      $region25: #{self_attention.3} parent=23 // pred_check
        %p319 = pneg %p50
      $region26: #{self_attention.3} parent=23 // pred_check_branch
        %321 = sbr.rel (%p319) target = $region28
      $region27: #{self_attention.3} parent=23 // pred_region
        %s322 = smul.u32 32, %s24
        %p323 = scmp.lt.s32.totalorder %s23, 1
        %s324 = scalar_select %p323, %s23, 1
        %p325 = scmp.lt.s32.totalorder %s322, 31
        %s326 = scalar_select %p325, %s322, 31
        %s327 = smul.addr %s326, 2
        %s328 = smul.addr %s324, 64
        %s329 = sadd.s32 %s327, %s328
        %s330 = smul.addr %s329, 4
        %s331 = scalar_lea.vmem %s0, %s330
        %s332 = smul.u32 32, %s24
      $region28: #{self_attention.3} parent=23 // pred_fallthru
        _
      // Predicated region
      $region29: #{self_attention.3} parent=23 // pred_check
        %p333 = pneg %p120
      $region30: #{self_attention.3} parent=23 // pred_check_branch
        %335 = sbr.rel (%p333) target = $region32
      $region31: #{self_attention.3} parent=23 // pred_region
        %s336 = smul.u32 32, %s24
        %p337 = scmp.lt.s32.totalorder %s23, 1
        %s338 = scalar_select %p337, %s23, 1
        %p339 = scmp.lt.s32.totalorder %s336, 31
        %s340 = scalar_select %p339, %s336, 31
        %s341 = smul.addr %s338, 32
        %s342 = sadd.s32 %s340, %s341
        %s343 = smul.addr %s342, 8
        %s344 = scalar_lea.vmem %s3, %s343
        %s345 = smul.u32 32, %s24
      $region32: #{self_attention.3} parent=23 // pred_fallthru
        _
      // Predicated region
      $region33: #{self_attention.3} parent=23 // pred_check
        %p346 = pneg %p148
      $region34: #{self_attention.3} parent=23 // pred_check_branch
        %348 = sbr.rel (%p346) target = $region36
      $region35: #{self_attention.3} parent=23 // pred_region
        %s349 = smul.u32 32, %s24
        %p350 = scmp.lt.s32.totalorder %s23, 1
        %s351 = scalar_select %p350, %s23, 1
        %p352 = scmp.lt.s32.totalorder %s349, 31
        %s353 = scalar_select %p352, %s349, 31
        %s354 = smul.addr %s351, 32
        %s355 = sadd.s32 %s353, %s354
        %s356 = smul.addr %s355, 8
        %s357 = scalar_lea.vmem %s4, %s356
        %s358 = smul.u32 32, %s24
      $region36: #{self_attention.3} parent=23 // pred_fallthru
        _
      // Predicated region
      $region37: #{self_attention.3} parent=23 // pred_check
        %p359 = pneg %p176
      $region38: #{self_attention.3} parent=23 // pred_check_branch
        %361 = sbr.rel (%p359) target = $region40
      $region39: #{self_attention.3} parent=23 // pred_region
        %s362 = smul.u32 32, %s24
        %p363 = scmp.lt.s32.totalorder %s23, 1
        %s364 = scalar_select %p363, %s23, 1
        %p365 = scmp.lt.s32.totalorder %s362, 31
        %s366 = scalar_select %p365, %s362, 31
        %s367 = smul.addr %s364, 32
        %s368 = sadd.s32 %s366, %s367
        %s369 = smul.addr %s368, 8
        %s370 = scalar_lea.vmem %s5, %s369
        %s371 = smul.u32 32, %s24
      $region40: #{self_attention.3} parent=23 // pred_fallthru
        _
      // Predicated region
      $region41: #{self_attention.3} parent=23 // pred_check
        %p372 = pneg %p204
      $region42: #{self_attention.3} parent=23 // pred_check_branch
        %374 = sbr.rel (%p372) target = $region44
      $region43: #{self_attention.3} parent=23 // pred_region
        %s375 = smul.u32 32, %s24
        %p376 = scmp.lt.s32.totalorder %s23, 1
        %s377 = scalar_select %p376, %s23, 1
        %p378 = scmp.lt.s32.totalorder %s375, 31
        %s379 = scalar_select %p378, %s375, 31
        %s380 = smul.addr %s377, 32
        %s381 = sadd.s32 %s379, %s380
        %s382 = smul.addr %s381, 8
        %s383 = scalar_lea.vmem %s6, %s382
        %s384 = smul.u32 32, %s24
      $region44: #{self_attention.3} parent=23 // pred_fallthru
        _
    $region24: #{self_attention.3} parent=5 // pred_fallthru
      _
    %p385 = scmp.le.s32.totalorder 1, %s16
    %p386 = scmp.lt.s32.totalorder %s16, 3
    %p387 = pnand %p385, %p386
    %p388 = pneg %p387
    // Predicated region
    $region45: #{self_attention.3} parent=5 // pred_check
      _
    $region46: #{self_attention.3} parent=5 // pred_check_branch
      %390 = sbr.rel (%p387) target = $region48
    $region47: #{self_attention.3} parent=5 // pred_region
      %s391 = ssub.s32 %s16, 1
      %s392 = smul.u32 32, %s26
      %p393 = scmp.lt.s32.totalorder %s25, 1
      %s394 = scalar_select %p393, %s25, 1
      %p395 = scmp.lt.s32.totalorder %s392, 31
      %s396 = scalar_select %p395, %s392, 31
      %s397 = smul.addr %s396, 2
      %s398 = smul.addr %s394, 64
      %s399 = sadd.s32 %s397, %s398
      %s400 = smul.addr %s399, 4
      %s401 = scalar_lea.vmem %s0, %s400
      %p402 = pneg %p56
      %p403 = pneg %p53
      %p404 = pneg %p77
      %p405 = pneg %p74
      %p406 = pneg %p98
      %p407 = pneg %p95
      %s408 = smul.u32 32, %s26
      %p409 = scmp.lt.s32.totalorder %s25, 1
      %s410 = scalar_select %p409, %s25, 1
      %p411 = scmp.lt.s32.totalorder %s408, 31
      %s412 = scalar_select %p411, %s408, 31
      %s413 = smul.addr %s410, 32
      %s414 = sadd.s32 %s412, %s413
      %s415 = smul.addr %s414, 8
      %s416 = scalar_lea.vmem %s3, %s415
      %p417 = pneg %p126
      %p418 = pneg %p123
      %s419 = smul.u32 32, %s26
      %p420 = scmp.lt.s32.totalorder %s25, 1
      %s421 = scalar_select %p420, %s25, 1
      %p422 = scmp.lt.s32.totalorder %s419, 31
      %s423 = scalar_select %p422, %s419, 31
      %s424 = smul.addr %s421, 32
      %s425 = sadd.s32 %s423, %s424
      %s426 = smul.addr %s425, 8
      %s427 = scalar_lea.vmem %s4, %s426
      %p428 = pneg %p154
      %p429 = pneg %p151
      %s430 = smul.u32 32, %s26
      %p431 = scmp.lt.s32.totalorder %s25, 1
      %s432 = scalar_select %p431, %s25, 1
      %p433 = scmp.lt.s32.totalorder %s430, 31
      %s434 = scalar_select %p433, %s430, 31
      %s435 = smul.addr %s432, 32
      %s436 = sadd.s32 %s434, %s435
      %s437 = smul.addr %s436, 8
      %s438 = scalar_lea.vmem %s5, %s437
      %p439 = pneg %p182
      %p440 = pneg %p179
      %s441 = smul.u32 32, %s26
      %p442 = scmp.lt.s32.totalorder %s25, 1
      %s443 = scalar_select %p442, %s25, 1
      %p444 = scmp.lt.s32.totalorder %s441, 31
      %s445 = scalar_select %p444, %s441, 31
      %s446 = smul.addr %s443, 32
      %s447 = sadd.s32 %s445, %s446
      %s448 = smul.addr %s447, 8
      %s449 = scalar_lea.vmem %s6, %s448
      %p450 = pneg %p210
      %p451 = pneg %p207
      %p452 = pneg %p238
      %p453 = pneg %p235
      %s454 = smul.u32 32, %s26
      %p455 = scmp.lt.s32.totalorder %s25, 1
      %s456 = scalar_select %p455, %s25, 1
      %p457 = scmp.lt.s32.totalorder %s454, 31
      %s458 = scalar_select %p457, %s454, 31
      %s459 = smul.addr %s456, 64
      %s460 = sadd.s32 %s458, %s459
      %s461 = smul.addr %s460, 4
      %s462 = scalar_lea.vmem %s7, %s461
      %p463 = pneg %p266
      %p464 = pneg %p263
      %s465 = smul.u32 32, %s26
      %p466 = scmp.lt.s32.totalorder %s25, 1
      %s467 = scalar_select %p466, %s25, 1
      %p468 = scmp.lt.s32.totalorder %s465, 31
      %s469 = scalar_select %p468, %s465, 31
      %s470 = smul.addr %s467, 64
      %s471 = sadd.s32 %s469, %s470
      %s472 = smul.addr %s471, 4
      %s473 = scalar_lea.vmem %s8, %s472
      %p474 = pneg %p294
      %p475 = pneg %p291
      %s476 = smul.u32 32, %s26
      %p477 = scmp.lt.s32.totalorder %s25, 1
      %s478 = scalar_select %p477, %s25, 1
      %p479 = scmp.lt.s32.totalorder %s476, 31
      %s480 = scalar_select %p479, %s476, 31
      %s481 = smul.addr %s478, 64
      %s482 = sadd.s32 %s480, %s481
      %s483 = smul.addr %s482, 4
      %s484 = scalar_lea.vmem %s9, %s483
      %s485 = smul.u32 32, %s26
      %p486 = scmp.lt.s32.totalorder %s25, 1
      %s487 = scalar_select %p486, %s25, 1
      %p488 = scmp.lt.s32.totalorder %s485, 31
      %s489 = scalar_select %p488, %s485, 31
      %s490 = smul.addr %s489, 2
      %s491 = smul.addr %s487, 64
      %s492 = sadd.s32 %s490, %s491
      %s493 = smul.addr %s492, 4
      %s494 = scalar_lea.vmem %s0, %s493
      %s495 = smul.u32 32, %s26
      %s496 = smul.u32 32, %s26
      %p497 = scmp.lt.s32.totalorder %s25, 1
      %s498 = scalar_select %p497, %s25, 1
      %p499 = scmp.lt.s32.totalorder %s496, 31
      %s500 = scalar_select %p499, %s496, 31
      %s501 = smul.addr %s498, 32
      %s502 = sadd.s32 %s500, %s501
      %s503 = smul.addr %s502, 8
      %s504 = scalar_lea.vmem %s3, %s503
      %s505 = smul.u32 32, %s26
      %s506 = smul.u32 32, %s26
      %p507 = scmp.lt.s32.totalorder %s25, 1
      %s508 = scalar_select %p507, %s25, 1
      %p509 = scmp.lt.s32.totalorder %s506, 31
      %s510 = scalar_select %p509, %s506, 31
      %s511 = smul.addr %s508, 32
      %s512 = sadd.s32 %s510, %s511
      %s513 = smul.addr %s512, 8
      %s514 = scalar_lea.vmem %s4, %s513
      %s515 = smul.u32 32, %s26
      %s516 = smul.u32 32, %s26
      %p517 = scmp.lt.s32.totalorder %s25, 1
      %s518 = scalar_select %p517, %s25, 1
      %p519 = scmp.lt.s32.totalorder %s516, 31
      %s520 = scalar_select %p519, %s516, 31
      %s521 = smul.addr %s518, 32
      %s522 = sadd.s32 %s520, %s521
      %s523 = smul.addr %s522, 8
      %s524 = scalar_lea.vmem %s5, %s523
      %s525 = smul.u32 32, %s26
      %s526 = smul.u32 32, %s26
      %p527 = scmp.lt.s32.totalorder %s25, 1
      %s528 = scalar_select %p527, %s25, 1
      %p529 = scmp.lt.s32.totalorder %s526, 31
      %s530 = scalar_select %p529, %s526, 31
      %s531 = smul.addr %s528, 32
      %s532 = sadd.s32 %s530, %s531
      %s533 = smul.addr %s532, 8
      %s534 = scalar_lea.vmem %s6, %s533
      %s535 = smul.u32 32, %s26
      %s536 = smul.u32 32, %s26
      %p537 = scmp.lt.s32.totalorder %s25, 1
      %s538 = scalar_select %p537, %s25, 1
      %p539 = scmp.lt.s32.totalorder %s536, 31
      %s540 = scalar_select %p539, %s536, 31
      %s541 = smul.addr %s538, 64
      %s542 = sadd.s32 %s540, %s541
      %s543 = smul.addr %s542, 4
      %s544 = scalar_lea.vmem %s7, %s543
      %s545 = smul.u32 32, %s26
      %s546 = smul.u32 32, %s26
      %p547 = scmp.lt.s32.totalorder %s25, 1
      %s548 = scalar_select %p547, %s25, 1
      %p549 = scmp.lt.s32.totalorder %s546, 31
      %s550 = scalar_select %p549, %s546, 31
      %s551 = smul.addr %s548, 64
      %s552 = sadd.s32 %s550, %s551
      %s553 = smul.addr %s552, 4
      %s554 = scalar_lea.vmem %s8, %s553
      %s555 = smul.u32 32, %s26
      %s556 = smul.u32 32, %s26
      %p557 = scmp.lt.s32.totalorder %s25, 1
      %s558 = scalar_select %p557, %s25, 1
      %p559 = scmp.lt.s32.totalorder %s556, 31
      %s560 = scalar_select %p559, %s556, 31
      %s561 = smul.addr %s558, 64
      %s562 = sadd.s32 %s560, %s561
      %s563 = smul.addr %s562, 4
      %s564 = scalar_lea.vmem %s9, %s563
      %s565 = smul.u32 32, %s26
      %v566 = vld [vmem:[%s494] sm:$0xff]
      %v567 = vld [vmem:[%s494 + $0x8] sm:$0xff]
      %v568 = vld [vmem:[%s494 + $0x10] sm:$0xff]
      %v569 = vld [vmem:[%s494 + $0x18] sm:$0xff]
      %v570 = vld [vmem:[%s494 + $0x20] sm:$0xff]
      %v571 = vld [vmem:[%s494 + $0x28] sm:$0xff]
      %v572 = vld [vmem:[%s494 + $0x30] sm:$0xff]
      %v573 = vld [vmem:[%s494 + $0x38] sm:$0xff]
      %v574 = vld [vmem:[%s494 + $0x40] sm:$0xff]
      %v575 = vld [vmem:[%s494 + $0x48] sm:$0xff]
      %v576 = vld [vmem:[%s494 + $0x50] sm:$0xff]
      %v577 = vld [vmem:[%s494 + $0x58] sm:$0xff]
      %v578 = vld [vmem:[%s494 + $0x60] sm:$0xff]
      %v579 = vld [vmem:[%s494 + $0x68] sm:$0xff]
      %v580 = vld [vmem:[%s494 + $0x70] sm:$0xff]
      %v581 = vld [vmem:[%s494 + $0x78] sm:$0xff]
      %v582 = vld [vmem:[%s494 + $0x80] sm:$0xff]
      %v583 = vld [vmem:[%s494 + $0x88] sm:$0xff]
      %v584 = vld [vmem:[%s494 + $0x90] sm:$0xff]
      %v585 = vld [vmem:[%s494 + $0x98] sm:$0xff]
      %v586 = vld [vmem:[%s494 + $0xa0] sm:$0xff]
      %v587 = vld [vmem:[%s494 + $0xa8] sm:$0xff]
      %v588 = vld [vmem:[%s494 + $0xb0] sm:$0xff]
      %v589 = vld [vmem:[%s494 + $0xb8] sm:$0xff]
      %v590 = vld [vmem:[%s494 + $0xc0] sm:$0xff]
      %v591 = vld [vmem:[%s494 + $0xc8] sm:$0xff]
      %v592 = vld [vmem:[%s494 + $0xd0] sm:$0xff]
      %v593 = vld [vmem:[%s494 + $0xd8] sm:$0xff]
      %v594 = vld [vmem:[%s494 + $0xe0] sm:$0xff]
      %v595 = vld [vmem:[%s494 + $0xe8] sm:$0xff]
      %v596 = vld [vmem:[%s494 + $0xf0] sm:$0xff]
      %v597 = vld [vmem:[%s494 + $0xf8] sm:$0xff]
      %v598 = vld [vmem:[%s1] sm:$0xff]
      %v599 = vld [vmem:[%s1 + $0x8] sm:$0xff]
      %v600 = vld [vmem:[%s1 + $0x10] sm:$0xff]
      %v601 = vld [vmem:[%s1 + $0x18] sm:$0xff]
      %v602 = vld [vmem:[%s1 + $0x20] sm:$0xff]
      %v603 = vld [vmem:[%s1 + $0x28] sm:$0xff]
      %v604 = vld [vmem:[%s1 + $0x30] sm:$0xff]
      %v605 = vld [vmem:[%s1 + $0x38] sm:$0xff]
      %v606 = vld [vmem:[%s1 + $0x40] sm:$0xff]
      %v607 = vld [vmem:[%s1 + $0x48] sm:$0xff]
      %v608 = vld [vmem:[%s1 + $0x50] sm:$0xff]
      %v609 = vld [vmem:[%s1 + $0x58] sm:$0xff]
      %v610 = vld [vmem:[%s1 + $0x60] sm:$0xff]
      %v611 = vld [vmem:[%s1 + $0x68] sm:$0xff]
      %v612 = vld [vmem:[%s1 + $0x70] sm:$0xff]
      %v613 = vld [vmem:[%s1 + $0x78] sm:$0xff]
      %v614 = vld [vmem:[%s1 + $0x80] sm:$0xff]
      %v615 = vld [vmem:[%s1 + $0x88] sm:$0xff]
      %v616 = vld [vmem:[%s1 + $0x90] sm:$0xff]
      %v617 = vld [vmem:[%s1 + $0x98] sm:$0xff]
      %v618 = vld [vmem:[%s1 + $0xa0] sm:$0xff]
      %v619 = vld [vmem:[%s1 + $0xa8] sm:$0xff]
      %v620 = vld [vmem:[%s1 + $0xb0] sm:$0xff]
      %v621 = vld [vmem:[%s1 + $0xb8] sm:$0xff]
      %v622 = vld [vmem:[%s1 + $0xc0] sm:$0xff]
      %v623 = vld [vmem:[%s1 + $0xc8] sm:$0xff]
      %v624 = vld [vmem:[%s1 + $0xd0] sm:$0xff]
      %v625 = vld [vmem:[%s1 + $0xd8] sm:$0xff]
      %v626 = vld [vmem:[%s1 + $0xe0] sm:$0xff]
      %v627 = vld [vmem:[%s1 + $0xe8] sm:$0xff]
      %v628 = vld [vmem:[%s1 + $0xf0] sm:$0xff]
      %v629 = vld [vmem:[%s1 + $0xf8] sm:$0xff]
      %v630 = vld [vmem:[%s1 + $0x100] sm:$0xff]
      %v631 = vld [vmem:[%s1 + $0x108] sm:$0xff]
      %v632 = vld [vmem:[%s1 + $0x110] sm:$0xff]
      %v633 = vld [vmem:[%s1 + $0x118] sm:$0xff]
      %v634 = vld [vmem:[%s1 + $0x120] sm:$0xff]
      %v635 = vld [vmem:[%s1 + $0x128] sm:$0xff]
      %v636 = vld [vmem:[%s1 + $0x130] sm:$0xff]
      %v637 = vld [vmem:[%s1 + $0x138] sm:$0xff]
      %v638 = vld [vmem:[%s1 + $0x140] sm:$0xff]
      %v639 = vld [vmem:[%s1 + $0x148] sm:$0xff]
      %v640 = vld [vmem:[%s1 + $0x150] sm:$0xff]
      %v641 = vld [vmem:[%s1 + $0x158] sm:$0xff]
      %v642 = vld [vmem:[%s1 + $0x160] sm:$0xff]
      %v643 = vld [vmem:[%s1 + $0x168] sm:$0xff]
      %v644 = vld [vmem:[%s1 + $0x170] sm:$0xff]
      %v645 = vld [vmem:[%s1 + $0x178] sm:$0xff]
      %v646 = vld [vmem:[%s1 + $0x180] sm:$0xff]
      %v647 = vld [vmem:[%s1 + $0x188] sm:$0xff]
      %v648 = vld [vmem:[%s1 + $0x190] sm:$0xff]
      %v649 = vld [vmem:[%s1 + $0x198] sm:$0xff]
      %v650 = vld [vmem:[%s1 + $0x1a0] sm:$0xff]
      %v651 = vld [vmem:[%s1 + $0x1a8] sm:$0xff]
      %v652 = vld [vmem:[%s1 + $0x1b0] sm:$0xff]
      %v653 = vld [vmem:[%s1 + $0x1b8] sm:$0xff]
      %v654 = vld [vmem:[%s1 + $0x1c0] sm:$0xff]
      %v655 = vld [vmem:[%s1 + $0x1c8] sm:$0xff]
      %v656 = vld [vmem:[%s1 + $0x1d0] sm:$0xff]
      %v657 = vld [vmem:[%s1 + $0x1d8] sm:$0xff]
      %v658 = vld [vmem:[%s1 + $0x1e0] sm:$0xff]
      %v659 = vld [vmem:[%s1 + $0x1e8] sm:$0xff]
      %v660 = vld [vmem:[%s1 + $0x1f0] sm:$0xff]
      %v661 = vld [vmem:[%s1 + $0x1f8] sm:$0xff]
      %v662 = vld [vmem:[%s1 + $0x200] sm:$0xff]
      %v663 = vld [vmem:[%s1 + $0x208] sm:$0xff]
      %v664 = vld [vmem:[%s1 + $0x210] sm:$0xff]
      %v665 = vld [vmem:[%s1 + $0x218] sm:$0xff]
      %v666 = vld [vmem:[%s1 + $0x220] sm:$0xff]
      %v667 = vld [vmem:[%s1 + $0x228] sm:$0xff]
      %v668 = vld [vmem:[%s1 + $0x230] sm:$0xff]
      %v669 = vld [vmem:[%s1 + $0x238] sm:$0xff]
      %v670 = vld [vmem:[%s1 + $0x240] sm:$0xff]
      %v671 = vld [vmem:[%s1 + $0x248] sm:$0xff]
      %v672 = vld [vmem:[%s1 + $0x250] sm:$0xff]
      %v673 = vld [vmem:[%s1 + $0x258] sm:$0xff]
      %v674 = vld [vmem:[%s1 + $0x260] sm:$0xff]
      %v675 = vld [vmem:[%s1 + $0x268] sm:$0xff]
      %v676 = vld [vmem:[%s1 + $0x270] sm:$0xff]
      %v677 = vld [vmem:[%s1 + $0x278] sm:$0xff]
      %v678 = vld [vmem:[%s1 + $0x280] sm:$0xff]
      %v679 = vld [vmem:[%s1 + $0x288] sm:$0xff]
      %v680 = vld [vmem:[%s1 + $0x290] sm:$0xff]
      %v681 = vld [vmem:[%s1 + $0x298] sm:$0xff]
      %v682 = vld [vmem:[%s1 + $0x2a0] sm:$0xff]
      %v683 = vld [vmem:[%s1 + $0x2a8] sm:$0xff]
      %v684 = vld [vmem:[%s1 + $0x2b0] sm:$0xff]
      %v685 = vld [vmem:[%s1 + $0x2b8] sm:$0xff]
      %v686 = vld [vmem:[%s1 + $0x2c0] sm:$0xff]
      %v687 = vld [vmem:[%s1 + $0x2c8] sm:$0xff]
      %v688 = vld [vmem:[%s1 + $0x2d0] sm:$0xff]
      %v689 = vld [vmem:[%s1 + $0x2d8] sm:$0xff]
      %v690 = vld [vmem:[%s1 + $0x2e0] sm:$0xff]
      %v691 = vld [vmem:[%s1 + $0x2e8] sm:$0xff]
      %v692 = vld [vmem:[%s1 + $0x2f0] sm:$0xff]
      %v693 = vld [vmem:[%s1 + $0x2f8] sm:$0xff]
      %v694 = vld [vmem:[%s2] sm:$0x3f]
      %v696 = vperm.slane %v694, 0
      %v697 = vperm.slane %v694, 1
      %v698 = vperm.slane %v694, 2
      %v699 = vperm.slane %v694, 3
      %v700 = vperm.slane %v694, 4
      %v701 = vperm.slane %v694, 5
      %v740 = vunpack.c.l.b16 %v566
      %v741 = vunpack.c.h.b16 %v566
      %v742 = vunpack.c.l.b16 %v567
      %v743 = vunpack.c.h.b16 %v567
      %v744 = vunpack.c.l.b16 %v568
      %v745 = vunpack.c.h.b16 %v568
      %v746 = vunpack.c.l.b16 %v569
      %v747 = vunpack.c.h.b16 %v569
      %v748 = vunpack.c.l.b16 %v570
      %v749 = vunpack.c.h.b16 %v570
      %v750 = vunpack.c.l.b16 %v571
      %v751 = vunpack.c.h.b16 %v571
      %v752 = vunpack.c.l.b16 %v572
      %v753 = vunpack.c.h.b16 %v572
      %v754 = vunpack.c.l.b16 %v573
      %v755 = vunpack.c.h.b16 %v573
      %v756 = vunpack.c.l.b16 %v574
      %v757 = vunpack.c.h.b16 %v574
      %v758 = vunpack.c.l.b16 %v575
      %v759 = vunpack.c.h.b16 %v575
      %v760 = vunpack.c.l.b16 %v576
      %v761 = vunpack.c.h.b16 %v576
      %v762 = vunpack.c.l.b16 %v577
      %v763 = vunpack.c.h.b16 %v577
      %v764 = vunpack.c.l.b16 %v578
      %v765 = vunpack.c.h.b16 %v578
      %v766 = vunpack.c.l.b16 %v579
      %v767 = vunpack.c.h.b16 %v579
      %v768 = vunpack.c.l.b16 %v580
      %v769 = vunpack.c.h.b16 %v580
      %v770 = vunpack.c.l.b16 %v581
      %v771 = vunpack.c.h.b16 %v581
      %v772 = vunpack.c.l.b16 %v582
      %v773 = vunpack.c.h.b16 %v582
      %v774 = vunpack.c.l.b16 %v583
      %v775 = vunpack.c.h.b16 %v583
      %v776 = vunpack.c.l.b16 %v584
      %v777 = vunpack.c.h.b16 %v584
      %v778 = vunpack.c.l.b16 %v585
      %v779 = vunpack.c.h.b16 %v585
      %v780 = vunpack.c.l.b16 %v586
      %v781 = vunpack.c.h.b16 %v586
      %v782 = vunpack.c.l.b16 %v587
      %v783 = vunpack.c.h.b16 %v587
      %v784 = vunpack.c.l.b16 %v588
      %v785 = vunpack.c.h.b16 %v588
      %v786 = vunpack.c.l.b16 %v589
      %v787 = vunpack.c.h.b16 %v589
      %v788 = vunpack.c.l.b16 %v590
      %v789 = vunpack.c.h.b16 %v590
      %v790 = vunpack.c.l.b16 %v591
      %v791 = vunpack.c.h.b16 %v591
      %v792 = vunpack.c.l.b16 %v592
      %v793 = vunpack.c.h.b16 %v592
      %v794 = vunpack.c.l.b16 %v593
      %v795 = vunpack.c.h.b16 %v593
      %v796 = vunpack.c.l.b16 %v594
      %v797 = vunpack.c.h.b16 %v594
      %v798 = vunpack.c.l.b16 %v595
      %v799 = vunpack.c.h.b16 %v595
      %v800 = vunpack.c.l.b16 %v596
      %v801 = vunpack.c.h.b16 %v596
      %v802 = vunpack.c.l.b16 %v597
      %v803 = vunpack.c.h.b16 %v597
      %v804 = vpack.c.b16 %v742, %v740
      %v805 = vpack.c.b16 %v743, %v741
      %v806 = vpack.c.b16 %v746, %v744
      %v807 = vpack.c.b16 %v747, %v745
      %v808 = vpack.c.b16 %v750, %v748
      %v809 = vpack.c.b16 %v751, %v749
      %v810 = vpack.c.b16 %v754, %v752
      %v811 = vpack.c.b16 %v755, %v753
      %v812 = vpack.c.b16 %v758, %v756
      %v813 = vpack.c.b16 %v759, %v757
      %v814 = vpack.c.b16 %v762, %v760
      %v815 = vpack.c.b16 %v763, %v761
      %v816 = vpack.c.b16 %v766, %v764
      %v817 = vpack.c.b16 %v767, %v765
      %v818 = vpack.c.b16 %v770, %v768
      %v819 = vpack.c.b16 %v771, %v769
      %v820 = vpack.c.b16 %v774, %v772
      %v821 = vpack.c.b16 %v775, %v773
      %v822 = vpack.c.b16 %v778, %v776
      %v823 = vpack.c.b16 %v779, %v777
      %v824 = vpack.c.b16 %v782, %v780
      %v825 = vpack.c.b16 %v783, %v781
      %v826 = vpack.c.b16 %v786, %v784
      %v827 = vpack.c.b16 %v787, %v785
      %v828 = vpack.c.b16 %v790, %v788
      %v829 = vpack.c.b16 %v791, %v789
      %v830 = vpack.c.b16 %v794, %v792
      %v831 = vpack.c.b16 %v795, %v793
      %v832 = vpack.c.b16 %v798, %v796
      %v833 = vpack.c.b16 %v799, %v797
      %v834 = vpack.c.b16 %v802, %v800
      %v835 = vpack.c.b16 %v803, %v801
      %v964 = vunpack.c.l.b16 %v598
      %v965 = vunpack.c.h.b16 %v598
      %v966 = vunpack.c.l.b16 %v599
      %v967 = vunpack.c.h.b16 %v599
      %v968 = vunpack.c.l.b16 %v600
      %v969 = vunpack.c.h.b16 %v600
      %v970 = vunpack.c.l.b16 %v601
      %v971 = vunpack.c.h.b16 %v601
      %v972 = vunpack.c.l.b16 %v602
      %v973 = vunpack.c.h.b16 %v602
      %v974 = vunpack.c.l.b16 %v603
      %v975 = vunpack.c.h.b16 %v603
      %v976 = vunpack.c.l.b16 %v604
      %v977 = vunpack.c.h.b16 %v604
      %v978 = vunpack.c.l.b16 %v605
      %v979 = vunpack.c.h.b16 %v605
      %v980 = vunpack.c.l.b16 %v606
      %v981 = vunpack.c.h.b16 %v606
      %v982 = vunpack.c.l.b16 %v607
      %v983 = vunpack.c.h.b16 %v607
      %v984 = vunpack.c.l.b16 %v608
      %v985 = vunpack.c.h.b16 %v608
      %v986 = vunpack.c.l.b16 %v609
      %v987 = vunpack.c.h.b16 %v609
      %v988 = vunpack.c.l.b16 %v610
      %v989 = vunpack.c.h.b16 %v610
      %v990 = vunpack.c.l.b16 %v611
      %v991 = vunpack.c.h.b16 %v611
      %v992 = vunpack.c.l.b16 %v612
      %v993 = vunpack.c.h.b16 %v612
      %v994 = vunpack.c.l.b16 %v613
      %v995 = vunpack.c.h.b16 %v613
      %v996 = vunpack.c.l.b16 %v614
      %v997 = vunpack.c.h.b16 %v614
      %v998 = vunpack.c.l.b16 %v615
      %v999 = vunpack.c.h.b16 %v615
      %v1000 = vunpack.c.l.b16 %v616
      %v1001 = vunpack.c.h.b16 %v616
      %v1002 = vunpack.c.l.b16 %v617
      %v1003 = vunpack.c.h.b16 %v617
      %v1004 = vunpack.c.l.b16 %v618
      %v1005 = vunpack.c.h.b16 %v618
      %v1006 = vunpack.c.l.b16 %v619
      %v1007 = vunpack.c.h.b16 %v619
      %v1008 = vunpack.c.l.b16 %v620
      %v1009 = vunpack.c.h.b16 %v620
      %v1010 = vunpack.c.l.b16 %v621
      %v1011 = vunpack.c.h.b16 %v621
      %v1012 = vunpack.c.l.b16 %v622
      %v1013 = vunpack.c.h.b16 %v622
      %v1014 = vunpack.c.l.b16 %v623
      %v1015 = vunpack.c.h.b16 %v623
      %v1016 = vunpack.c.l.b16 %v624
      %v1017 = vunpack.c.h.b16 %v624
      %v1018 = vunpack.c.l.b16 %v625
      %v1019 = vunpack.c.h.b16 %v625
      %v1020 = vunpack.c.l.b16 %v626
      %v1021 = vunpack.c.h.b16 %v626
      %v1022 = vunpack.c.l.b16 %v627
      %v1023 = vunpack.c.h.b16 %v627
      %v1024 = vunpack.c.l.b16 %v628
      %v1025 = vunpack.c.h.b16 %v628
      %v1026 = vunpack.c.l.b16 %v629
      %v1027 = vunpack.c.h.b16 %v629
      %v1028 = vunpack.c.l.b16 %v630
      %v1029 = vunpack.c.h.b16 %v630
      %v1030 = vunpack.c.l.b16 %v631
      %v1031 = vunpack.c.h.b16 %v631
      %v1032 = vunpack.c.l.b16 %v632
      %v1033 = vunpack.c.h.b16 %v632
      %v1034 = vunpack.c.l.b16 %v633
      %v1035 = vunpack.c.h.b16 %v633
      %v1036 = vunpack.c.l.b16 %v634
      %v1037 = vunpack.c.h.b16 %v634
      %v1038 = vunpack.c.l.b16 %v635
      %v1039 = vunpack.c.h.b16 %v635
      %v1040 = vunpack.c.l.b16 %v636
      %v1041 = vunpack.c.h.b16 %v636
      %v1042 = vunpack.c.l.b16 %v637
      %v1043 = vunpack.c.h.b16 %v637
      %v1044 = vunpack.c.l.b16 %v638
      %v1045 = vunpack.c.h.b16 %v638
      %v1046 = vunpack.c.l.b16 %v639
      %v1047 = vunpack.c.h.b16 %v639
      %v1048 = vunpack.c.l.b16 %v640
      %v1049 = vunpack.c.h.b16 %v640
      %v1050 = vunpack.c.l.b16 %v641
      %v1051 = vunpack.c.h.b16 %v641
      %v1052 = vunpack.c.l.b16 %v642
      %v1053 = vunpack.c.h.b16 %v642
      %v1054 = vunpack.c.l.b16 %v643
      %v1055 = vunpack.c.h.b16 %v643
      %v1056 = vunpack.c.l.b16 %v644
      %v1057 = vunpack.c.h.b16 %v644
      %v1058 = vunpack.c.l.b16 %v645
      %v1059 = vunpack.c.h.b16 %v645
      %v1060 = vunpack.c.l.b16 %v646
      %v1061 = vunpack.c.h.b16 %v646
      %v1062 = vunpack.c.l.b16 %v647
      %v1063 = vunpack.c.h.b16 %v647
      %v1064 = vunpack.c.l.b16 %v648
      %v1065 = vunpack.c.h.b16 %v648
      %v1066 = vunpack.c.l.b16 %v649
      %v1067 = vunpack.c.h.b16 %v649
      %v1068 = vunpack.c.l.b16 %v650
      %v1069 = vunpack.c.h.b16 %v650
      %v1070 = vunpack.c.l.b16 %v651
      %v1071 = vunpack.c.h.b16 %v651
      %v1072 = vunpack.c.l.b16 %v652
      %v1073 = vunpack.c.h.b16 %v652
      %v1074 = vunpack.c.l.b16 %v653
      %v1075 = vunpack.c.h.b16 %v653
      %v1076 = vunpack.c.l.b16 %v654
      %v1077 = vunpack.c.h.b16 %v654
      %v1078 = vunpack.c.l.b16 %v655
      %v1079 = vunpack.c.h.b16 %v655
      %v1080 = vunpack.c.l.b16 %v656
      %v1081 = vunpack.c.h.b16 %v656
      %v1082 = vunpack.c.l.b16 %v657
      %v1083 = vunpack.c.h.b16 %v657
      %v1084 = vunpack.c.l.b16 %v658
      %v1085 = vunpack.c.h.b16 %v658
      %v1086 = vunpack.c.l.b16 %v659
      %v1087 = vunpack.c.h.b16 %v659
      %v1088 = vunpack.c.l.b16 %v660
      %v1089 = vunpack.c.h.b16 %v660
      %v1090 = vunpack.c.l.b16 %v661
      %v1091 = vunpack.c.h.b16 %v661
      %v1092 = vunpack.c.l.b16 %v662
      %v1093 = vunpack.c.h.b16 %v662
      %v1094 = vunpack.c.l.b16 %v663
      %v1095 = vunpack.c.h.b16 %v663
      %v1096 = vunpack.c.l.b16 %v664
      %v1097 = vunpack.c.h.b16 %v664
      %v1098 = vunpack.c.l.b16 %v665
      %v1099 = vunpack.c.h.b16 %v665
      %v1100 = vunpack.c.l.b16 %v666
      %v1101 = vunpack.c.h.b16 %v666
      %v1102 = vunpack.c.l.b16 %v667
      %v1103 = vunpack.c.h.b16 %v667
      %v1104 = vunpack.c.l.b16 %v668
      %v1105 = vunpack.c.h.b16 %v668
      %v1106 = vunpack.c.l.b16 %v669
      %v1107 = vunpack.c.h.b16 %v669
      %v1108 = vunpack.c.l.b16 %v670
      %v1109 = vunpack.c.h.b16 %v670
      %v1110 = vunpack.c.l.b16 %v671
      %v1111 = vunpack.c.h.b16 %v671
      %v1112 = vunpack.c.l.b16 %v672
      %v1113 = vunpack.c.h.b16 %v672
      %v1114 = vunpack.c.l.b16 %v673
      %v1115 = vunpack.c.h.b16 %v673
      %v1116 = vunpack.c.l.b16 %v674
      %v1117 = vunpack.c.h.b16 %v674
      %v1118 = vunpack.c.l.b16 %v675
      %v1119 = vunpack.c.h.b16 %v675
      %v1120 = vunpack.c.l.b16 %v676
      %v1121 = vunpack.c.h.b16 %v676
      %v1122 = vunpack.c.l.b16 %v677
      %v1123 = vunpack.c.h.b16 %v677
      %v1124 = vunpack.c.l.b16 %v678
      %v1125 = vunpack.c.h.b16 %v678
      %v1126 = vunpack.c.l.b16 %v679
      %v1127 = vunpack.c.h.b16 %v679
      %v1128 = vunpack.c.l.b16 %v680
      %v1129 = vunpack.c.h.b16 %v680
      %v1130 = vunpack.c.l.b16 %v681
      %v1131 = vunpack.c.h.b16 %v681
      %v1132 = vunpack.c.l.b16 %v682
      %v1133 = vunpack.c.h.b16 %v682
      %v1134 = vunpack.c.l.b16 %v683
      %v1135 = vunpack.c.h.b16 %v683
      %v1136 = vunpack.c.l.b16 %v684
      %v1137 = vunpack.c.h.b16 %v684
      %v1138 = vunpack.c.l.b16 %v685
      %v1139 = vunpack.c.h.b16 %v685
      %v1140 = vunpack.c.l.b16 %v686
      %v1141 = vunpack.c.h.b16 %v686
      %v1142 = vunpack.c.l.b16 %v687
      %v1143 = vunpack.c.h.b16 %v687
      %v1144 = vunpack.c.l.b16 %v688
      %v1145 = vunpack.c.h.b16 %v688
      %v1146 = vunpack.c.l.b16 %v689
      %v1147 = vunpack.c.h.b16 %v689
      %v1148 = vunpack.c.l.b16 %v690
      %v1149 = vunpack.c.h.b16 %v690
      %v1150 = vunpack.c.l.b16 %v691
      %v1151 = vunpack.c.h.b16 %v691
      %v1152 = vunpack.c.l.b16 %v692
      %v1153 = vunpack.c.h.b16 %v692
      %v1154 = vunpack.c.l.b16 %v693
      %v1155 = vunpack.c.h.b16 %v693
      %v1156 = vpack.c.b16 %v970, %v964
      %v1157 = vpack.c.b16 %v971, %v965
      %v1158 = vpack.c.b16 %v972, %v966
      %v1159 = vpack.c.b16 %v973, %v967
      %v1160 = vpack.c.b16 %v974, %v968
      %v1161 = vpack.c.b16 %v975, %v969
      %v1162 = vpack.c.b16 %v982, %v976
      %v1163 = vpack.c.b16 %v983, %v977
      %v1164 = vpack.c.b16 %v984, %v978
      %v1165 = vpack.c.b16 %v985, %v979
      %v1166 = vpack.c.b16 %v986, %v980
      %v1167 = vpack.c.b16 %v987, %v981
      %v1168 = vpack.c.b16 %v994, %v988
      %v1169 = vpack.c.b16 %v995, %v989
      %v1170 = vpack.c.b16 %v996, %v990
      %v1171 = vpack.c.b16 %v997, %v991
      %v1172 = vpack.c.b16 %v998, %v992
      %v1173 = vpack.c.b16 %v999, %v993
      %v1174 = vpack.c.b16 %v1006, %v1000
      %v1175 = vpack.c.b16 %v1007, %v1001
      %v1176 = vpack.c.b16 %v1008, %v1002
      %v1177 = vpack.c.b16 %v1009, %v1003
      %v1178 = vpack.c.b16 %v1010, %v1004
      %v1179 = vpack.c.b16 %v1011, %v1005
      %v1180 = vpack.c.b16 %v1018, %v1012
      %v1181 = vpack.c.b16 %v1019, %v1013
      %v1182 = vpack.c.b16 %v1020, %v1014
      %v1183 = vpack.c.b16 %v1021, %v1015
      %v1184 = vpack.c.b16 %v1022, %v1016
      %v1185 = vpack.c.b16 %v1023, %v1017
      %v1186 = vpack.c.b16 %v1030, %v1024
      %v1187 = vpack.c.b16 %v1031, %v1025
      %v1188 = vpack.c.b16 %v1032, %v1026
      %v1189 = vpack.c.b16 %v1033, %v1027
      %v1190 = vpack.c.b16 %v1034, %v1028
      %v1191 = vpack.c.b16 %v1035, %v1029
      %v1192 = vpack.c.b16 %v1042, %v1036
      %v1193 = vpack.c.b16 %v1043, %v1037
      %v1194 = vpack.c.b16 %v1044, %v1038
      %v1195 = vpack.c.b16 %v1045, %v1039
      %v1196 = vpack.c.b16 %v1046, %v1040
      %v1197 = vpack.c.b16 %v1047, %v1041
      %v1198 = vpack.c.b16 %v1054, %v1048
      %v1199 = vpack.c.b16 %v1055, %v1049
      %v1200 = vpack.c.b16 %v1056, %v1050
      %v1201 = vpack.c.b16 %v1057, %v1051
      %v1202 = vpack.c.b16 %v1058, %v1052
      %v1203 = vpack.c.b16 %v1059, %v1053
      %v1204 = vpack.c.b16 %v1066, %v1060
      %v1205 = vpack.c.b16 %v1067, %v1061
      %v1206 = vpack.c.b16 %v1068, %v1062
      %v1207 = vpack.c.b16 %v1069, %v1063
      %v1208 = vpack.c.b16 %v1070, %v1064
      %v1209 = vpack.c.b16 %v1071, %v1065
      %v1210 = vpack.c.b16 %v1078, %v1072
      %v1211 = vpack.c.b16 %v1079, %v1073
      %v1212 = vpack.c.b16 %v1080, %v1074
      %v1213 = vpack.c.b16 %v1081, %v1075
      %v1214 = vpack.c.b16 %v1082, %v1076
      %v1215 = vpack.c.b16 %v1083, %v1077
      %v1216 = vpack.c.b16 %v1090, %v1084
      %v1217 = vpack.c.b16 %v1091, %v1085
      %v1218 = vpack.c.b16 %v1092, %v1086
      %v1219 = vpack.c.b16 %v1093, %v1087
      %v1220 = vpack.c.b16 %v1094, %v1088
      %v1221 = vpack.c.b16 %v1095, %v1089
      %v1222 = vpack.c.b16 %v1102, %v1096
      %v1223 = vpack.c.b16 %v1103, %v1097
      %v1224 = vpack.c.b16 %v1104, %v1098
      %v1225 = vpack.c.b16 %v1105, %v1099
      %v1226 = vpack.c.b16 %v1106, %v1100
      %v1227 = vpack.c.b16 %v1107, %v1101
      %v1228 = vpack.c.b16 %v1114, %v1108
      %v1229 = vpack.c.b16 %v1115, %v1109
      %v1230 = vpack.c.b16 %v1116, %v1110
      %v1231 = vpack.c.b16 %v1117, %v1111
      %v1232 = vpack.c.b16 %v1118, %v1112
      %v1233 = vpack.c.b16 %v1119, %v1113
      %v1234 = vpack.c.b16 %v1126, %v1120
      %v1235 = vpack.c.b16 %v1127, %v1121
      %v1236 = vpack.c.b16 %v1128, %v1122
      %v1237 = vpack.c.b16 %v1129, %v1123
      %v1238 = vpack.c.b16 %v1130, %v1124
      %v1239 = vpack.c.b16 %v1131, %v1125
      %v1240 = vpack.c.b16 %v1138, %v1132
      %v1241 = vpack.c.b16 %v1139, %v1133
      %v1242 = vpack.c.b16 %v1140, %v1134
      %v1243 = vpack.c.b16 %v1141, %v1135
      %v1244 = vpack.c.b16 %v1142, %v1136
      %v1245 = vpack.c.b16 %v1143, %v1137
      %v1246 = vpack.c.b16 %v1150, %v1144
      %v1247 = vpack.c.b16 %v1151, %v1145
      %v1248 = vpack.c.b16 %v1152, %v1146
      %v1249 = vpack.c.b16 %v1153, %v1147
      %v1250 = vpack.c.b16 %v1154, %v1148
      %v1251 = vpack.c.b16 %v1155, %v1149
      %1348 = vmatpush.bf16.msra.mxu0 %v1198
      %1349 = vmatpush.bf16.msra.mxu0 %v1192
      %1350 = vmatpush.bf16.msra.mxu0 %v1186
      %1351 = vmatpush.bf16.msra.mxu0 %v1180
      %1352 = vmatpush.bf16.msra.mxu0 %v1174
      %1353 = vmatpush.bf16.msra.mxu0 %v1168
      %1354 = vmatpush.bf16.msra.mxu0 %v1162
      %1355 = vmatpush.bf16.msra.mxu0 %v1156
      %1356 = vmatmul.bf16.gmra.mxu0 %v804
      %v1357 = vpop.f32.mrf.mxu0
      %v1358 = vadd.f32 %v696, %v1357
      %v1359 = vpop.f32.mrf.mxu0
      %v1360 = vadd.f32 %v696, %v1359
      %1361 = vmatmul.bf16.gmra.mxu0 %v806
      %v1362 = vpop.f32.mrf.mxu0
      %v1363 = vadd.f32 %v696, %v1362
      %v1364 = vpop.f32.mrf.mxu0
      %v1365 = vadd.f32 %v696, %v1364
      %1366 = vmatmul.bf16.gmra.mxu0 %v808
      %v1367 = vpop.f32.mrf.mxu0
      %v1368 = vadd.f32 %v696, %v1367
      %v1369 = vpop.f32.mrf.mxu0
      %v1370 = vadd.f32 %v696, %v1369
      %1371 = vmatmul.bf16.gmra.mxu0 %v810
      %v1372 = vpop.f32.mrf.mxu0
      %v1373 = vadd.f32 %v696, %v1372
      %v1374 = vpop.f32.mrf.mxu0
      %v1375 = vadd.f32 %v696, %v1374
      %1376 = vmatmul.bf16.gmra.mxu0 %v812
      %v1377 = vpop.f32.mrf.mxu0
      %v1378 = vadd.f32 %v696, %v1377
      %v1379 = vpop.f32.mrf.mxu0
      %v1380 = vadd.f32 %v696, %v1379
      %1381 = vmatmul.bf16.gmra.mxu0 %v814
      %v1382 = vpop.f32.mrf.mxu0
      %v1383 = vadd.f32 %v696, %v1382
      %v1384 = vpop.f32.mrf.mxu0
      %v1385 = vadd.f32 %v696, %v1384
      %1386 = vmatmul.bf16.gmra.mxu0 %v816
      %v1387 = vpop.f32.mrf.mxu0
      %v1388 = vadd.f32 %v696, %v1387
      %v1389 = vpop.f32.mrf.mxu0
      %v1390 = vadd.f32 %v696, %v1389
      %1391 = vmatmul.bf16.gmra.mxu0 %v818
      %v1392 = vpop.f32.mrf.mxu0
      %v1393 = vadd.f32 %v696, %v1392
      %v1394 = vpop.f32.mrf.mxu0
      %v1395 = vadd.f32 %v696, %v1394
      %1396 = vmatmul.bf16.gmra.mxu0 %v820
      %v1397 = vpop.f32.mrf.mxu0
      %v1398 = vadd.f32 %v696, %v1397
      %v1399 = vpop.f32.mrf.mxu0
      %v1400 = vadd.f32 %v696, %v1399
      %1401 = vmatmul.bf16.gmra.mxu0 %v822
      %v1402 = vpop.f32.mrf.mxu0
      %v1403 = vadd.f32 %v696, %v1402
      %v1404 = vpop.f32.mrf.mxu0
      %v1405 = vadd.f32 %v696, %v1404
      %1406 = vmatmul.bf16.gmra.mxu0 %v824
      %v1407 = vpop.f32.mrf.mxu0
      %v1408 = vadd.f32 %v696, %v1407
      %v1409 = vpop.f32.mrf.mxu0
      %v1410 = vadd.f32 %v696, %v1409
      %1411 = vmatmul.bf16.gmra.mxu0 %v826
      %v1412 = vpop.f32.mrf.mxu0
      %v1413 = vadd.f32 %v696, %v1412
      %v1414 = vpop.f32.mrf.mxu0
      %v1415 = vadd.f32 %v696, %v1414
      %1416 = vmatmul.bf16.gmra.mxu0 %v828
      %v1417 = vpop.f32.mrf.mxu0
      %v1418 = vadd.f32 %v696, %v1417
      %v1419 = vpop.f32.mrf.mxu0
      %v1420 = vadd.f32 %v696, %v1419
      %1421 = vmatmul.bf16.gmra.mxu0 %v830
      %v1422 = vpop.f32.mrf.mxu0
      %v1423 = vadd.f32 %v696, %v1422
      %v1424 = vpop.f32.mrf.mxu0
      %v1425 = vadd.f32 %v696, %v1424
      %1426 = vmatmul.bf16.gmra.mxu0 %v832
      %v1427 = vpop.f32.mrf.mxu0
      %v1428 = vadd.f32 %v696, %v1427
      %v1429 = vpop.f32.mrf.mxu0
      %v1430 = vadd.f32 %v696, %v1429
      %1431 = vmatmul.bf16.gmra.mxu0 %v834
      %v1432 = vpop.f32.mrf.mxu0
      %v1433 = vadd.f32 %v696, %v1432
      %v1434 = vpop.f32.mrf.mxu0
      %v1435 = vadd.f32 %v696, %v1434
      %1436 = vdwg.mxu0
      %1437 = vmatpush.bf16.msra.mxu0 %v1246
      %1438 = vmatpush.bf16.msra.mxu0 %v1240
      %1439 = vmatpush.bf16.msra.mxu0 %v1234
      %1440 = vmatpush.bf16.msra.mxu0 %v1228
      %1441 = vmatpush.bf16.msra.mxu0 %v1222
      %1442 = vmatpush.bf16.msra.mxu0 %v1216
      %1443 = vmatpush.bf16.msra.mxu0 %v1210
      %1444 = vmatpush.bf16.msra.mxu0 %v1204
      %1445 = vmatmul.bf16.gmra.mxu0 %v805
      %v1446 = vpop.f32.mrf.mxu0
      %v1447 = vadd.f32 %v1358, %v1446
      %v1448 = vpop.f32.mrf.mxu0
      %v1449 = vadd.f32 %v1360, %v1448
      %1450 = vmatmul.bf16.gmra.mxu0 %v807
      %v1451 = vpop.f32.mrf.mxu0
      %v1452 = vadd.f32 %v1363, %v1451
      %v1453 = vpop.f32.mrf.mxu0
      %v1454 = vadd.f32 %v1365, %v1453
      %1455 = vmatmul.bf16.gmra.mxu0 %v809
      %v1456 = vpop.f32.mrf.mxu0
      %v1457 = vadd.f32 %v1368, %v1456
      %v1458 = vpop.f32.mrf.mxu0
      %v1459 = vadd.f32 %v1370, %v1458
      %1460 = vmatmul.bf16.gmra.mxu0 %v811
      %v1461 = vpop.f32.mrf.mxu0
      %v1462 = vadd.f32 %v1373, %v1461
      %v1463 = vpop.f32.mrf.mxu0
      %v1464 = vadd.f32 %v1375, %v1463
      %1465 = vmatmul.bf16.gmra.mxu0 %v813
      %v1466 = vpop.f32.mrf.mxu0
      %v1467 = vadd.f32 %v1378, %v1466
      %v1468 = vpop.f32.mrf.mxu0
      %v1469 = vadd.f32 %v1380, %v1468
      %1470 = vmatmul.bf16.gmra.mxu0 %v815
      %v1471 = vpop.f32.mrf.mxu0
      %v1472 = vadd.f32 %v1383, %v1471
      %v1473 = vpop.f32.mrf.mxu0
      %v1474 = vadd.f32 %v1385, %v1473
      %1475 = vmatmul.bf16.gmra.mxu0 %v817
      %v1476 = vpop.f32.mrf.mxu0
      %v1477 = vadd.f32 %v1388, %v1476
      %v1478 = vpop.f32.mrf.mxu0
      %v1479 = vadd.f32 %v1390, %v1478
      %1480 = vmatmul.bf16.gmra.mxu0 %v819
      %v1481 = vpop.f32.mrf.mxu0
      %v1482 = vadd.f32 %v1393, %v1481
      %v1483 = vpop.f32.mrf.mxu0
      %v1484 = vadd.f32 %v1395, %v1483
      %1485 = vmatmul.bf16.gmra.mxu0 %v821
      %v1486 = vpop.f32.mrf.mxu0
      %v1487 = vadd.f32 %v1398, %v1486
      %v1488 = vpop.f32.mrf.mxu0
      %v1489 = vadd.f32 %v1400, %v1488
      %1490 = vmatmul.bf16.gmra.mxu0 %v823
      %v1491 = vpop.f32.mrf.mxu0
      %v1492 = vadd.f32 %v1403, %v1491
      %v1493 = vpop.f32.mrf.mxu0
      %v1494 = vadd.f32 %v1405, %v1493
      %1495 = vmatmul.bf16.gmra.mxu0 %v825
      %v1496 = vpop.f32.mrf.mxu0
      %v1497 = vadd.f32 %v1408, %v1496
      %v1498 = vpop.f32.mrf.mxu0
      %v1499 = vadd.f32 %v1410, %v1498
      %1500 = vmatmul.bf16.gmra.mxu0 %v827
      %v1501 = vpop.f32.mrf.mxu0
      %v1502 = vadd.f32 %v1413, %v1501
      %v1503 = vpop.f32.mrf.mxu0
      %v1504 = vadd.f32 %v1415, %v1503
      %1505 = vmatmul.bf16.gmra.mxu0 %v829
      %v1506 = vpop.f32.mrf.mxu0
      %v1507 = vadd.f32 %v1418, %v1506
      %v1508 = vpop.f32.mrf.mxu0
      %v1509 = vadd.f32 %v1420, %v1508
      %1510 = vmatmul.bf16.gmra.mxu0 %v831
      %v1511 = vpop.f32.mrf.mxu0
      %v1512 = vadd.f32 %v1423, %v1511
      %v1513 = vpop.f32.mrf.mxu0
      %v1514 = vadd.f32 %v1425, %v1513
      %1515 = vmatmul.bf16.gmra.mxu0 %v833
      %v1516 = vpop.f32.mrf.mxu0
      %v1517 = vadd.f32 %v1428, %v1516
      %v1518 = vpop.f32.mrf.mxu0
      %v1519 = vadd.f32 %v1430, %v1518
      %1520 = vmatmul.bf16.gmra.mxu0 %v835
      %v1521 = vpop.f32.mrf.mxu0
      %v1522 = vadd.f32 %v1433, %v1521
      %v1523 = vpop.f32.mrf.mxu0
      %v1524 = vadd.f32 %v1435, %v1523
      %1525 = vdwg.mxu0
      %1526 = vmatpush.bf16.msra.mxu0 %v1199
      %1527 = vmatpush.bf16.msra.mxu0 %v1193
      %1528 = vmatpush.bf16.msra.mxu0 %v1187
      %1529 = vmatpush.bf16.msra.mxu0 %v1181
      %1530 = vmatpush.bf16.msra.mxu0 %v1175
      %1531 = vmatpush.bf16.msra.mxu0 %v1169
      %1532 = vmatpush.bf16.msra.mxu0 %v1163
      %1533 = vmatpush.bf16.msra.mxu0 %v1157
      %1534 = vmatmul.bf16.gmra.mxu0 %v804
      %v1535 = vpop.f32.mrf.mxu0
      %v1536 = vadd.f32 %v697, %v1535
      %v1537 = vpop.f32.mrf.mxu0
      %v1538 = vadd.f32 %v697, %v1537
      %1539 = vmatmul.bf16.gmra.mxu0 %v806
      %v1540 = vpop.f32.mrf.mxu0
      %v1541 = vadd.f32 %v697, %v1540
      %v1542 = vpop.f32.mrf.mxu0
      %v1543 = vadd.f32 %v697, %v1542
      %1544 = vmatmul.bf16.gmra.mxu0 %v808
      %v1545 = vpop.f32.mrf.mxu0
      %v1546 = vadd.f32 %v697, %v1545
      %v1547 = vpop.f32.mrf.mxu0
      %v1548 = vadd.f32 %v697, %v1547
      %1549 = vmatmul.bf16.gmra.mxu0 %v810
      %v1550 = vpop.f32.mrf.mxu0
      %v1551 = vadd.f32 %v697, %v1550
      %v1552 = vpop.f32.mrf.mxu0
      %v1553 = vadd.f32 %v697, %v1552
      %1554 = vmatmul.bf16.gmra.mxu0 %v812
      %v1555 = vpop.f32.mrf.mxu0
      %v1556 = vadd.f32 %v697, %v1555
      %v1557 = vpop.f32.mrf.mxu0
      %v1558 = vadd.f32 %v697, %v1557
      %1559 = vmatmul.bf16.gmra.mxu0 %v814
      %v1560 = vpop.f32.mrf.mxu0
      %v1561 = vadd.f32 %v697, %v1560
      %v1562 = vpop.f32.mrf.mxu0
      %v1563 = vadd.f32 %v697, %v1562
      %1564 = vmatmul.bf16.gmra.mxu0 %v816
      %v1565 = vpop.f32.mrf.mxu0
      %v1566 = vadd.f32 %v697, %v1565
      %v1567 = vpop.f32.mrf.mxu0
      %v1568 = vadd.f32 %v697, %v1567
      %1569 = vmatmul.bf16.gmra.mxu0 %v818
      %v1570 = vpop.f32.mrf.mxu0
      %v1571 = vadd.f32 %v697, %v1570
      %v1572 = vpop.f32.mrf.mxu0
      %v1573 = vadd.f32 %v697, %v1572
      %1574 = vmatmul.bf16.gmra.mxu0 %v820
      %v1575 = vpop.f32.mrf.mxu0
      %v1576 = vadd.f32 %v697, %v1575
      %v1577 = vpop.f32.mrf.mxu0
      %v1578 = vadd.f32 %v697, %v1577
      %1579 = vmatmul.bf16.gmra.mxu0 %v822
      %v1580 = vpop.f32.mrf.mxu0
      %v1581 = vadd.f32 %v697, %v1580
      %v1582 = vpop.f32.mrf.mxu0
      %v1583 = vadd.f32 %v697, %v1582
      %1584 = vmatmul.bf16.gmra.mxu0 %v824
      %v1585 = vpop.f32.mrf.mxu0
      %v1586 = vadd.f32 %v697, %v1585
      %v1587 = vpop.f32.mrf.mxu0
      %v1588 = vadd.f32 %v697, %v1587
      %1589 = vmatmul.bf16.gmra.mxu0 %v826
      %v1590 = vpop.f32.mrf.mxu0
      %v1591 = vadd.f32 %v697, %v1590
      %v1592 = vpop.f32.mrf.mxu0
      %v1593 = vadd.f32 %v697, %v1592
      %1594 = vmatmul.bf16.gmra.mxu0 %v828
      %v1595 = vpop.f32.mrf.mxu0
      %v1596 = vadd.f32 %v697, %v1595
      %v1597 = vpop.f32.mrf.mxu0
      %v1598 = vadd.f32 %v697, %v1597
      %1599 = vmatmul.bf16.gmra.mxu0 %v830
      %v1600 = vpop.f32.mrf.mxu0
      %v1601 = vadd.f32 %v697, %v1600
      %v1602 = vpop.f32.mrf.mxu0
      %v1603 = vadd.f32 %v697, %v1602
      %1604 = vmatmul.bf16.gmra.mxu0 %v832
      %v1605 = vpop.f32.mrf.mxu0
      %v1606 = vadd.f32 %v697, %v1605
      %v1607 = vpop.f32.mrf.mxu0
      %v1608 = vadd.f32 %v697, %v1607
      %1609 = vmatmul.bf16.gmra.mxu0 %v834
      %v1610 = vpop.f32.mrf.mxu0
      %v1611 = vadd.f32 %v697, %v1610
      %v1612 = vpop.f32.mrf.mxu0
      %v1613 = vadd.f32 %v697, %v1612
      %1614 = vdwg.mxu0
      %1615 = vmatpush.bf16.msra.mxu0 %v1247
      %1616 = vmatpush.bf16.msra.mxu0 %v1241
      %1617 = vmatpush.bf16.msra.mxu0 %v1235
      %1618 = vmatpush.bf16.msra.mxu0 %v1229
      %1619 = vmatpush.bf16.msra.mxu0 %v1223
      %1620 = vmatpush.bf16.msra.mxu0 %v1217
      %1621 = vmatpush.bf16.msra.mxu0 %v1211
      %1622 = vmatpush.bf16.msra.mxu0 %v1205
      %1623 = vmatmul.bf16.gmra.mxu0 %v805
      %v1624 = vpop.f32.mrf.mxu0
      %v1625 = vadd.f32 %v1536, %v1624
      %v1626 = vpop.f32.mrf.mxu0
      %v1627 = vadd.f32 %v1538, %v1626
      %1628 = vmatmul.bf16.gmra.mxu0 %v807
      %v1629 = vpop.f32.mrf.mxu0
      %v1630 = vadd.f32 %v1541, %v1629
      %v1631 = vpop.f32.mrf.mxu0
      %v1632 = vadd.f32 %v1543, %v1631
      %1633 = vmatmul.bf16.gmra.mxu0 %v809
      %v1634 = vpop.f32.mrf.mxu0
      %v1635 = vadd.f32 %v1546, %v1634
      %v1636 = vpop.f32.mrf.mxu0
      %v1637 = vadd.f32 %v1548, %v1636
      %1638 = vmatmul.bf16.gmra.mxu0 %v811
      %v1639 = vpop.f32.mrf.mxu0
      %v1640 = vadd.f32 %v1551, %v1639
      %v1641 = vpop.f32.mrf.mxu0
      %v1642 = vadd.f32 %v1553, %v1641
      %1643 = vmatmul.bf16.gmra.mxu0 %v813
      %v1644 = vpop.f32.mrf.mxu0
      %v1645 = vadd.f32 %v1556, %v1644
      %v1646 = vpop.f32.mrf.mxu0
      %v1647 = vadd.f32 %v1558, %v1646
      %1648 = vmatmul.bf16.gmra.mxu0 %v815
      %v1649 = vpop.f32.mrf.mxu0
      %v1650 = vadd.f32 %v1561, %v1649
      %v1651 = vpop.f32.mrf.mxu0
      %v1652 = vadd.f32 %v1563, %v1651
      %1653 = vmatmul.bf16.gmra.mxu0 %v817
      %v1654 = vpop.f32.mrf.mxu0
      %v1655 = vadd.f32 %v1566, %v1654
      %v1656 = vpop.f32.mrf.mxu0
      %v1657 = vadd.f32 %v1568, %v1656
      %1658 = vmatmul.bf16.gmra.mxu0 %v819
      %v1659 = vpop.f32.mrf.mxu0
      %v1660 = vadd.f32 %v1571, %v1659
      %v1661 = vpop.f32.mrf.mxu0
      %v1662 = vadd.f32 %v1573, %v1661
      %1663 = vmatmul.bf16.gmra.mxu0 %v821
      %v1664 = vpop.f32.mrf.mxu0
      %v1665 = vadd.f32 %v1576, %v1664
      %v1666 = vpop.f32.mrf.mxu0
      %v1667 = vadd.f32 %v1578, %v1666
      %1668 = vmatmul.bf16.gmra.mxu0 %v823
      %v1669 = vpop.f32.mrf.mxu0
      %v1670 = vadd.f32 %v1581, %v1669
      %v1671 = vpop.f32.mrf.mxu0
      %v1672 = vadd.f32 %v1583, %v1671
      %1673 = vmatmul.bf16.gmra.mxu0 %v825
      %v1674 = vpop.f32.mrf.mxu0
      %v1675 = vadd.f32 %v1586, %v1674
      %v1676 = vpop.f32.mrf.mxu0
      %v1677 = vadd.f32 %v1588, %v1676
      %1678 = vmatmul.bf16.gmra.mxu0 %v827
      %v1679 = vpop.f32.mrf.mxu0
      %v1680 = vadd.f32 %v1591, %v1679
      %v1681 = vpop.f32.mrf.mxu0
      %v1682 = vadd.f32 %v1593, %v1681
      %1683 = vmatmul.bf16.gmra.mxu0 %v829
      %v1684 = vpop.f32.mrf.mxu0
      %v1685 = vadd.f32 %v1596, %v1684
      %v1686 = vpop.f32.mrf.mxu0
      %v1687 = vadd.f32 %v1598, %v1686
      %1688 = vmatmul.bf16.gmra.mxu0 %v831
      %v1689 = vpop.f32.mrf.mxu0
      %v1690 = vadd.f32 %v1601, %v1689
      %v1691 = vpop.f32.mrf.mxu0
      %v1692 = vadd.f32 %v1603, %v1691
      %1693 = vmatmul.bf16.gmra.mxu0 %v833
      %v1694 = vpop.f32.mrf.mxu0
      %v1695 = vadd.f32 %v1606, %v1694
      %v1696 = vpop.f32.mrf.mxu0
      %v1697 = vadd.f32 %v1608, %v1696
      %1698 = vmatmul.bf16.gmra.mxu0 %v835
      %v1699 = vpop.f32.mrf.mxu0
      %v1700 = vadd.f32 %v1611, %v1699
      %v1701 = vpop.f32.mrf.mxu0
      %v1702 = vadd.f32 %v1613, %v1701
      %1703 = vdwg.mxu0
      %1704 = vmatpush.bf16.msra.mxu0 %v1200
      %1705 = vmatpush.bf16.msra.mxu0 %v1194
      %1706 = vmatpush.bf16.msra.mxu0 %v1188
      %1707 = vmatpush.bf16.msra.mxu0 %v1182
      %1708 = vmatpush.bf16.msra.mxu0 %v1176
      %1709 = vmatpush.bf16.msra.mxu0 %v1170
      %1710 = vmatpush.bf16.msra.mxu0 %v1164
      %1711 = vmatpush.bf16.msra.mxu0 %v1158
      %1712 = vmatmul.bf16.gmra.mxu0 %v804
      %v1713 = vpop.f32.mrf.mxu0
      %v1714 = vadd.f32 %v698, %v1713
      %v1715 = vpop.f32.mrf.mxu0
      %v1716 = vadd.f32 %v698, %v1715
      %1717 = vmatmul.bf16.gmra.mxu0 %v806
      %v1718 = vpop.f32.mrf.mxu0
      %v1719 = vadd.f32 %v698, %v1718
      %v1720 = vpop.f32.mrf.mxu0
      %v1721 = vadd.f32 %v698, %v1720
      %1722 = vmatmul.bf16.gmra.mxu0 %v808
      %v1723 = vpop.f32.mrf.mxu0
      %v1724 = vadd.f32 %v698, %v1723
      %v1725 = vpop.f32.mrf.mxu0
      %v1726 = vadd.f32 %v698, %v1725
      %1727 = vmatmul.bf16.gmra.mxu0 %v810
      %v1728 = vpop.f32.mrf.mxu0
      %v1729 = vadd.f32 %v698, %v1728
      %v1730 = vpop.f32.mrf.mxu0
      %v1731 = vadd.f32 %v698, %v1730
      %1732 = vmatmul.bf16.gmra.mxu0 %v812
      %v1733 = vpop.f32.mrf.mxu0
      %v1734 = vadd.f32 %v698, %v1733
      %v1735 = vpop.f32.mrf.mxu0
      %v1736 = vadd.f32 %v698, %v1735
      %1737 = vmatmul.bf16.gmra.mxu0 %v814
      %v1738 = vpop.f32.mrf.mxu0
      %v1739 = vadd.f32 %v698, %v1738
      %v1740 = vpop.f32.mrf.mxu0
      %v1741 = vadd.f32 %v698, %v1740
      %1742 = vmatmul.bf16.gmra.mxu0 %v816
      %v1743 = vpop.f32.mrf.mxu0
      %v1744 = vadd.f32 %v698, %v1743
      %v1745 = vpop.f32.mrf.mxu0
      %v1746 = vadd.f32 %v698, %v1745
      %1747 = vmatmul.bf16.gmra.mxu0 %v818
      %v1748 = vpop.f32.mrf.mxu0
      %v1749 = vadd.f32 %v698, %v1748
      %v1750 = vpop.f32.mrf.mxu0
      %v1751 = vadd.f32 %v698, %v1750
      %1752 = vmatmul.bf16.gmra.mxu0 %v820
      %v1753 = vpop.f32.mrf.mxu0
      %v1754 = vadd.f32 %v698, %v1753
      %v1755 = vpop.f32.mrf.mxu0
      %v1756 = vadd.f32 %v698, %v1755
      %1757 = vmatmul.bf16.gmra.mxu0 %v822
      %v1758 = vpop.f32.mrf.mxu0
      %v1759 = vadd.f32 %v698, %v1758
      %v1760 = vpop.f32.mrf.mxu0
      %v1761 = vadd.f32 %v698, %v1760
      %1762 = vmatmul.bf16.gmra.mxu0 %v824
      %v1763 = vpop.f32.mrf.mxu0
      %v1764 = vadd.f32 %v698, %v1763
      %v1765 = vpop.f32.mrf.mxu0
      %v1766 = vadd.f32 %v698, %v1765
      %1767 = vmatmul.bf16.gmra.mxu0 %v826
      %v1768 = vpop.f32.mrf.mxu0
      %v1769 = vadd.f32 %v698, %v1768
      %v1770 = vpop.f32.mrf.mxu0
      %v1771 = vadd.f32 %v698, %v1770
      %1772 = vmatmul.bf16.gmra.mxu0 %v828
      %v1773 = vpop.f32.mrf.mxu0
      %v1774 = vadd.f32 %v698, %v1773
      %v1775 = vpop.f32.mrf.mxu0
      %v1776 = vadd.f32 %v698, %v1775
      %1777 = vmatmul.bf16.gmra.mxu0 %v830
      %v1778 = vpop.f32.mrf.mxu0
      %v1779 = vadd.f32 %v698, %v1778
      %v1780 = vpop.f32.mrf.mxu0
      %v1781 = vadd.f32 %v698, %v1780
      %1782 = vmatmul.bf16.gmra.mxu0 %v832
      %v1783 = vpop.f32.mrf.mxu0
      %v1784 = vadd.f32 %v698, %v1783
      %v1785 = vpop.f32.mrf.mxu0
      %v1786 = vadd.f32 %v698, %v1785
      %1787 = vmatmul.bf16.gmra.mxu0 %v834
      %v1788 = vpop.f32.mrf.mxu0
      %v1789 = vadd.f32 %v698, %v1788
      %v1790 = vpop.f32.mrf.mxu0
      %v1791 = vadd.f32 %v698, %v1790
      %1792 = vdwg.mxu0
      %1793 = vmatpush.bf16.msra.mxu0 %v1248
      %1794 = vmatpush.bf16.msra.mxu0 %v1242
      %1795 = vmatpush.bf16.msra.mxu0 %v1236
      %1796 = vmatpush.bf16.msra.mxu0 %v1230
      %1797 = vmatpush.bf16.msra.mxu0 %v1224
      %1798 = vmatpush.bf16.msra.mxu0 %v1218
      %1799 = vmatpush.bf16.msra.mxu0 %v1212
      %1800 = vmatpush.bf16.msra.mxu0 %v1206
      %1801 = vmatmul.bf16.gmra.mxu0 %v805
      %v1802 = vpop.f32.mrf.mxu0
      %v1803 = vadd.f32 %v1714, %v1802
      %v1804 = vpop.f32.mrf.mxu0
      %v1805 = vadd.f32 %v1716, %v1804
      %1806 = vmatmul.bf16.gmra.mxu0 %v807
      %v1807 = vpop.f32.mrf.mxu0
      %v1808 = vadd.f32 %v1719, %v1807
      %v1809 = vpop.f32.mrf.mxu0
      %v1810 = vadd.f32 %v1721, %v1809
      %1811 = vmatmul.bf16.gmra.mxu0 %v809
      %v1812 = vpop.f32.mrf.mxu0
      %v1813 = vadd.f32 %v1724, %v1812
      %v1814 = vpop.f32.mrf.mxu0
      %v1815 = vadd.f32 %v1726, %v1814
      %1816 = vmatmul.bf16.gmra.mxu0 %v811
      %v1817 = vpop.f32.mrf.mxu0
      %v1818 = vadd.f32 %v1729, %v1817
      %v1819 = vpop.f32.mrf.mxu0
      %v1820 = vadd.f32 %v1731, %v1819
      %1821 = vmatmul.bf16.gmra.mxu0 %v813
      %v1822 = vpop.f32.mrf.mxu0
      %v1823 = vadd.f32 %v1734, %v1822
      %v1824 = vpop.f32.mrf.mxu0
      %v1825 = vadd.f32 %v1736, %v1824
      %1826 = vmatmul.bf16.gmra.mxu0 %v815
      %v1827 = vpop.f32.mrf.mxu0
      %v1828 = vadd.f32 %v1739, %v1827
      %v1829 = vpop.f32.mrf.mxu0
      %v1830 = vadd.f32 %v1741, %v1829
      %1831 = vmatmul.bf16.gmra.mxu0 %v817
      %v1832 = vpop.f32.mrf.mxu0
      %v1833 = vadd.f32 %v1744, %v1832
      %v1834 = vpop.f32.mrf.mxu0
      %v1835 = vadd.f32 %v1746, %v1834
      %1836 = vmatmul.bf16.gmra.mxu0 %v819
      %v1837 = vpop.f32.mrf.mxu0
      %v1838 = vadd.f32 %v1749, %v1837
      %v1839 = vpop.f32.mrf.mxu0
      %v1840 = vadd.f32 %v1751, %v1839
      %1841 = vmatmul.bf16.gmra.mxu0 %v821
      %v1842 = vpop.f32.mrf.mxu0
      %v1843 = vadd.f32 %v1754, %v1842
      %v1844 = vpop.f32.mrf.mxu0
      %v1845 = vadd.f32 %v1756, %v1844
      %1846 = vmatmul.bf16.gmra.mxu0 %v823
      %v1847 = vpop.f32.mrf.mxu0
      %v1848 = vadd.f32 %v1759, %v1847
      %v1849 = vpop.f32.mrf.mxu0
      %v1850 = vadd.f32 %v1761, %v1849
      %1851 = vmatmul.bf16.gmra.mxu0 %v825
      %v1852 = vpop.f32.mrf.mxu0
      %v1853 = vadd.f32 %v1764, %v1852
      %v1854 = vpop.f32.mrf.mxu0
      %v1855 = vadd.f32 %v1766, %v1854
      %1856 = vmatmul.bf16.gmra.mxu0 %v827
      %v1857 = vpop.f32.mrf.mxu0
      %v1858 = vadd.f32 %v1769, %v1857
      %v1859 = vpop.f32.mrf.mxu0
      %v1860 = vadd.f32 %v1771, %v1859
      %1861 = vmatmul.bf16.gmra.mxu0 %v829
      %v1862 = vpop.f32.mrf.mxu0
      %v1863 = vadd.f32 %v1774, %v1862
      %v1864 = vpop.f32.mrf.mxu0
      %v1865 = vadd.f32 %v1776, %v1864
      %1866 = vmatmul.bf16.gmra.mxu0 %v831
      %v1867 = vpop.f32.mrf.mxu0
      %v1868 = vadd.f32 %v1779, %v1867
      %v1869 = vpop.f32.mrf.mxu0
      %v1870 = vadd.f32 %v1781, %v1869
      %1871 = vmatmul.bf16.gmra.mxu0 %v833
      %v1872 = vpop.f32.mrf.mxu0
      %v1873 = vadd.f32 %v1784, %v1872
      %v1874 = vpop.f32.mrf.mxu0
      %v1875 = vadd.f32 %v1786, %v1874
      %1876 = vmatmul.bf16.gmra.mxu0 %v835
      %v1877 = vpop.f32.mrf.mxu0
      %v1878 = vadd.f32 %v1789, %v1877
      %v1879 = vpop.f32.mrf.mxu0
      %v1880 = vadd.f32 %v1791, %v1879
      %1881 = vdwg.mxu0
      %1882 = vmatpush.bf16.msra.mxu0 %v1201
      %1883 = vmatpush.bf16.msra.mxu0 %v1195
      %1884 = vmatpush.bf16.msra.mxu0 %v1189
      %1885 = vmatpush.bf16.msra.mxu0 %v1183
      %1886 = vmatpush.bf16.msra.mxu0 %v1177
      %1887 = vmatpush.bf16.msra.mxu0 %v1171
      %1888 = vmatpush.bf16.msra.mxu0 %v1165
      %1889 = vmatpush.bf16.msra.mxu0 %v1159
      %1890 = vmatmul.bf16.gmra.mxu0 %v804
      %v1891 = vpop.f32.mrf.mxu0
      %v1892 = vadd.f32 %v699, %v1891
      %v1893 = vpop.f32.mrf.mxu0
      %v1894 = vadd.f32 %v699, %v1893
      %1895 = vmatmul.bf16.gmra.mxu0 %v806
      %v1896 = vpop.f32.mrf.mxu0
      %v1897 = vadd.f32 %v699, %v1896
      %v1898 = vpop.f32.mrf.mxu0
      %v1899 = vadd.f32 %v699, %v1898
      %1900 = vmatmul.bf16.gmra.mxu0 %v808
      %v1901 = vpop.f32.mrf.mxu0
      %v1902 = vadd.f32 %v699, %v1901
      %v1903 = vpop.f32.mrf.mxu0
      %v1904 = vadd.f32 %v699, %v1903
      %1905 = vmatmul.bf16.gmra.mxu0 %v810
      %v1906 = vpop.f32.mrf.mxu0
      %v1907 = vadd.f32 %v699, %v1906
      %v1908 = vpop.f32.mrf.mxu0
      %v1909 = vadd.f32 %v699, %v1908
      %1910 = vmatmul.bf16.gmra.mxu0 %v812
      %v1911 = vpop.f32.mrf.mxu0
      %v1912 = vadd.f32 %v699, %v1911
      %v1913 = vpop.f32.mrf.mxu0
      %v1914 = vadd.f32 %v699, %v1913
      %1915 = vmatmul.bf16.gmra.mxu0 %v814
      %v1916 = vpop.f32.mrf.mxu0
      %v1917 = vadd.f32 %v699, %v1916
      %v1918 = vpop.f32.mrf.mxu0
      %v1919 = vadd.f32 %v699, %v1918
      %1920 = vmatmul.bf16.gmra.mxu0 %v816
      %v1921 = vpop.f32.mrf.mxu0
      %v1922 = vadd.f32 %v699, %v1921
      %v1923 = vpop.f32.mrf.mxu0
      %v1924 = vadd.f32 %v699, %v1923
      %1925 = vmatmul.bf16.gmra.mxu0 %v818
      %v1926 = vpop.f32.mrf.mxu0
      %v1927 = vadd.f32 %v699, %v1926
      %v1928 = vpop.f32.mrf.mxu0
      %v1929 = vadd.f32 %v699, %v1928
      %1930 = vmatmul.bf16.gmra.mxu0 %v820
      %v1931 = vpop.f32.mrf.mxu0
      %v1932 = vadd.f32 %v699, %v1931
      %v1933 = vpop.f32.mrf.mxu0
      %v1934 = vadd.f32 %v699, %v1933
      %1935 = vmatmul.bf16.gmra.mxu0 %v822
      %v1936 = vpop.f32.mrf.mxu0
      %v1937 = vadd.f32 %v699, %v1936
      %v1938 = vpop.f32.mrf.mxu0
      %v1939 = vadd.f32 %v699, %v1938
      %1940 = vmatmul.bf16.gmra.mxu0 %v824
      %v1941 = vpop.f32.mrf.mxu0
      %v1942 = vadd.f32 %v699, %v1941
      %v1943 = vpop.f32.mrf.mxu0
      %v1944 = vadd.f32 %v699, %v1943
      %1945 = vmatmul.bf16.gmra.mxu0 %v826
      %v1946 = vpop.f32.mrf.mxu0
      %v1947 = vadd.f32 %v699, %v1946
      %v1948 = vpop.f32.mrf.mxu0
      %v1949 = vadd.f32 %v699, %v1948
      %1950 = vmatmul.bf16.gmra.mxu0 %v828
      %v1951 = vpop.f32.mrf.mxu0
      %v1952 = vadd.f32 %v699, %v1951
      %v1953 = vpop.f32.mrf.mxu0
      %v1954 = vadd.f32 %v699, %v1953
      %1955 = vmatmul.bf16.gmra.mxu0 %v830
      %v1956 = vpop.f32.mrf.mxu0
      %v1957 = vadd.f32 %v699, %v1956
      %v1958 = vpop.f32.mrf.mxu0
      %v1959 = vadd.f32 %v699, %v1958
      %1960 = vmatmul.bf16.gmra.mxu0 %v832
      %v1961 = vpop.f32.mrf.mxu0
      %v1962 = vadd.f32 %v699, %v1961
      %v1963 = vpop.f32.mrf.mxu0
      %v1964 = vadd.f32 %v699, %v1963
      %1965 = vmatmul.bf16.gmra.mxu0 %v834
      %v1966 = vpop.f32.mrf.mxu0
      %v1967 = vadd.f32 %v699, %v1966
      %v1968 = vpop.f32.mrf.mxu0
      %v1969 = vadd.f32 %v699, %v1968
      %1970 = vdwg.mxu0
      %1971 = vmatpush.bf16.msra.mxu0 %v1249
      %1972 = vmatpush.bf16.msra.mxu0 %v1243
      %1973 = vmatpush.bf16.msra.mxu0 %v1237
      %1974 = vmatpush.bf16.msra.mxu0 %v1231
      %1975 = vmatpush.bf16.msra.mxu0 %v1225
      %1976 = vmatpush.bf16.msra.mxu0 %v1219
      %1977 = vmatpush.bf16.msra.mxu0 %v1213
      %1978 = vmatpush.bf16.msra.mxu0 %v1207
      %1979 = vmatmul.bf16.gmra.mxu0 %v805
      %v1980 = vpop.f32.mrf.mxu0
      %v1981 = vadd.f32 %v1892, %v1980
      %v1982 = vpop.f32.mrf.mxu0
      %v1983 = vadd.f32 %v1894, %v1982
      %1984 = vmatmul.bf16.gmra.mxu0 %v807
      %v1985 = vpop.f32.mrf.mxu0
      %v1986 = vadd.f32 %v1897, %v1985
      %v1987 = vpop.f32.mrf.mxu0
      %v1988 = vadd.f32 %v1899, %v1987
      %1989 = vmatmul.bf16.gmra.mxu0 %v809
      %v1990 = vpop.f32.mrf.mxu0
      %v1991 = vadd.f32 %v1902, %v1990
      %v1992 = vpop.f32.mrf.mxu0
      %v1993 = vadd.f32 %v1904, %v1992
      %1994 = vmatmul.bf16.gmra.mxu0 %v811
      %v1995 = vpop.f32.mrf.mxu0
      %v1996 = vadd.f32 %v1907, %v1995
      %v1997 = vpop.f32.mrf.mxu0
      %v1998 = vadd.f32 %v1909, %v1997
      %1999 = vmatmul.bf16.gmra.mxu0 %v813
      %v2000 = vpop.f32.mrf.mxu0
      %v2001 = vadd.f32 %v1912, %v2000
      %v2002 = vpop.f32.mrf.mxu0
      %v2003 = vadd.f32 %v1914, %v2002
      %2004 = vmatmul.bf16.gmra.mxu0 %v815
      %v2005 = vpop.f32.mrf.mxu0
      %v2006 = vadd.f32 %v1917, %v2005
      %v2007 = vpop.f32.mrf.mxu0
      %v2008 = vadd.f32 %v1919, %v2007
      %2009 = vmatmul.bf16.gmra.mxu0 %v817
      %v2010 = vpop.f32.mrf.mxu0
      %v2011 = vadd.f32 %v1922, %v2010
      %v2012 = vpop.f32.mrf.mxu0
      %v2013 = vadd.f32 %v1924, %v2012
      %2014 = vmatmul.bf16.gmra.mxu0 %v819
      %v2015 = vpop.f32.mrf.mxu0
      %v2016 = vadd.f32 %v1927, %v2015
      %v2017 = vpop.f32.mrf.mxu0
      %v2018 = vadd.f32 %v1929, %v2017
      %2019 = vmatmul.bf16.gmra.mxu0 %v821
      %v2020 = vpop.f32.mrf.mxu0
      %v2021 = vadd.f32 %v1932, %v2020
      %v2022 = vpop.f32.mrf.mxu0
      %v2023 = vadd.f32 %v1934, %v2022
      %2024 = vmatmul.bf16.gmra.mxu0 %v823
      %v2025 = vpop.f32.mrf.mxu0
      %v2026 = vadd.f32 %v1937, %v2025
      %v2027 = vpop.f32.mrf.mxu0
      %v2028 = vadd.f32 %v1939, %v2027
      %2029 = vmatmul.bf16.gmra.mxu0 %v825
      %v2030 = vpop.f32.mrf.mxu0
      %v2031 = vadd.f32 %v1942, %v2030
      %v2032 = vpop.f32.mrf.mxu0
      %v2033 = vadd.f32 %v1944, %v2032
      %2034 = vmatmul.bf16.gmra.mxu0 %v827
      %v2035 = vpop.f32.mrf.mxu0
      %v2036 = vadd.f32 %v1947, %v2035
      %v2037 = vpop.f32.mrf.mxu0
      %v2038 = vadd.f32 %v1949, %v2037
      %2039 = vmatmul.bf16.gmra.mxu0 %v829
      %v2040 = vpop.f32.mrf.mxu0
      %v2041 = vadd.f32 %v1952, %v2040
      %v2042 = vpop.f32.mrf.mxu0
      %v2043 = vadd.f32 %v1954, %v2042
      %2044 = vmatmul.bf16.gmra.mxu0 %v831
      %v2045 = vpop.f32.mrf.mxu0
      %v2046 = vadd.f32 %v1957, %v2045
      %v2047 = vpop.f32.mrf.mxu0
      %v2048 = vadd.f32 %v1959, %v2047
      %2049 = vmatmul.bf16.gmra.mxu0 %v833
      %v2050 = vpop.f32.mrf.mxu0
      %v2051 = vadd.f32 %v1962, %v2050
      %v2052 = vpop.f32.mrf.mxu0
      %v2053 = vadd.f32 %v1964, %v2052
      %2054 = vmatmul.bf16.gmra.mxu0 %v835
      %v2055 = vpop.f32.mrf.mxu0
      %v2056 = vadd.f32 %v1967, %v2055
      %v2057 = vpop.f32.mrf.mxu0
      %v2058 = vadd.f32 %v1969, %v2057
      %2059 = vdwg.mxu0
      %2060 = vmatpush.bf16.msra.mxu0 %v1202
      %2061 = vmatpush.bf16.msra.mxu0 %v1196
      %2062 = vmatpush.bf16.msra.mxu0 %v1190
      %2063 = vmatpush.bf16.msra.mxu0 %v1184
      %2064 = vmatpush.bf16.msra.mxu0 %v1178
      %2065 = vmatpush.bf16.msra.mxu0 %v1172
      %2066 = vmatpush.bf16.msra.mxu0 %v1166
      %2067 = vmatpush.bf16.msra.mxu0 %v1160
      %2068 = vmatmul.bf16.gmra.mxu0 %v804
      %v2069 = vpop.f32.mrf.mxu0
      %v2070 = vadd.f32 %v700, %v2069
      %v2071 = vpop.f32.mrf.mxu0
      %v2072 = vadd.f32 %v700, %v2071
      %2073 = vmatmul.bf16.gmra.mxu0 %v806
      %v2074 = vpop.f32.mrf.mxu0
      %v2075 = vadd.f32 %v700, %v2074
      %v2076 = vpop.f32.mrf.mxu0
      %v2077 = vadd.f32 %v700, %v2076
      %2078 = vmatmul.bf16.gmra.mxu0 %v808
      %v2079 = vpop.f32.mrf.mxu0
      %v2080 = vadd.f32 %v700, %v2079
      %v2081 = vpop.f32.mrf.mxu0
      %v2082 = vadd.f32 %v700, %v2081
      %2083 = vmatmul.bf16.gmra.mxu0 %v810
      %v2084 = vpop.f32.mrf.mxu0
      %v2085 = vadd.f32 %v700, %v2084
      %v2086 = vpop.f32.mrf.mxu0
      %v2087 = vadd.f32 %v700, %v2086
      %2088 = vmatmul.bf16.gmra.mxu0 %v812
      %v2089 = vpop.f32.mrf.mxu0
      %v2090 = vadd.f32 %v700, %v2089
      %v2091 = vpop.f32.mrf.mxu0
      %v2092 = vadd.f32 %v700, %v2091
      %2093 = vmatmul.bf16.gmra.mxu0 %v814
      %v2094 = vpop.f32.mrf.mxu0
      %v2095 = vadd.f32 %v700, %v2094
      %v2096 = vpop.f32.mrf.mxu0
      %v2097 = vadd.f32 %v700, %v2096
      %2098 = vmatmul.bf16.gmra.mxu0 %v816
      %v2099 = vpop.f32.mrf.mxu0
      %v2100 = vadd.f32 %v700, %v2099
      %v2101 = vpop.f32.mrf.mxu0
      %v2102 = vadd.f32 %v700, %v2101
      %2103 = vmatmul.bf16.gmra.mxu0 %v818
      %v2104 = vpop.f32.mrf.mxu0
      %v2105 = vadd.f32 %v700, %v2104
      %v2106 = vpop.f32.mrf.mxu0
      %v2107 = vadd.f32 %v700, %v2106
      %2108 = vmatmul.bf16.gmra.mxu0 %v820
      %v2109 = vpop.f32.mrf.mxu0
      %v2110 = vadd.f32 %v700, %v2109
      %v2111 = vpop.f32.mrf.mxu0
      %v2112 = vadd.f32 %v700, %v2111
      %2113 = vmatmul.bf16.gmra.mxu0 %v822
      %v2114 = vpop.f32.mrf.mxu0
      %v2115 = vadd.f32 %v700, %v2114
      %v2116 = vpop.f32.mrf.mxu0
      %v2117 = vadd.f32 %v700, %v2116
      %2118 = vmatmul.bf16.gmra.mxu0 %v824
      %v2119 = vpop.f32.mrf.mxu0
      %v2120 = vadd.f32 %v700, %v2119
      %v2121 = vpop.f32.mrf.mxu0
      %v2122 = vadd.f32 %v700, %v2121
      %2123 = vmatmul.bf16.gmra.mxu0 %v826
      %v2124 = vpop.f32.mrf.mxu0
      %v2125 = vadd.f32 %v700, %v2124
      %v2126 = vpop.f32.mrf.mxu0
      %v2127 = vadd.f32 %v700, %v2126
      %2128 = vmatmul.bf16.gmra.mxu0 %v828
      %v2129 = vpop.f32.mrf.mxu0
      %v2130 = vadd.f32 %v700, %v2129
      %v2131 = vpop.f32.mrf.mxu0
      %v2132 = vadd.f32 %v700, %v2131
      %2133 = vmatmul.bf16.gmra.mxu0 %v830
      %v2134 = vpop.f32.mrf.mxu0
      %v2135 = vadd.f32 %v700, %v2134
      %v2136 = vpop.f32.mrf.mxu0
      %v2137 = vadd.f32 %v700, %v2136
      %2138 = vmatmul.bf16.gmra.mxu0 %v832
      %v2139 = vpop.f32.mrf.mxu0
      %v2140 = vadd.f32 %v700, %v2139
      %v2141 = vpop.f32.mrf.mxu0
      %v2142 = vadd.f32 %v700, %v2141
      %2143 = vmatmul.bf16.gmra.mxu0 %v834
      %v2144 = vpop.f32.mrf.mxu0
      %v2145 = vadd.f32 %v700, %v2144
      %v2146 = vpop.f32.mrf.mxu0
      %v2147 = vadd.f32 %v700, %v2146
      %2148 = vdwg.mxu0
      %2149 = vmatpush.bf16.msra.mxu0 %v1250
      %2150 = vmatpush.bf16.msra.mxu0 %v1244
      %2151 = vmatpush.bf16.msra.mxu0 %v1238
      %2152 = vmatpush.bf16.msra.mxu0 %v1232
      %2153 = vmatpush.bf16.msra.mxu0 %v1226
      %2154 = vmatpush.bf16.msra.mxu0 %v1220
      %2155 = vmatpush.bf16.msra.mxu0 %v1214
      %2156 = vmatpush.bf16.msra.mxu0 %v1208
      %2157 = vmatmul.bf16.gmra.mxu0 %v805
      %v2158 = vpop.f32.mrf.mxu0
      %v2159 = vadd.f32 %v2070, %v2158
      %v2160 = vpop.f32.mrf.mxu0
      %v2161 = vadd.f32 %v2072, %v2160
      %2162 = vmatmul.bf16.gmra.mxu0 %v807
      %v2163 = vpop.f32.mrf.mxu0
      %v2164 = vadd.f32 %v2075, %v2163
      %v2165 = vpop.f32.mrf.mxu0
      %v2166 = vadd.f32 %v2077, %v2165
      %2167 = vmatmul.bf16.gmra.mxu0 %v809
      %v2168 = vpop.f32.mrf.mxu0
      %v2169 = vadd.f32 %v2080, %v2168
      %v2170 = vpop.f32.mrf.mxu0
      %v2171 = vadd.f32 %v2082, %v2170
      %2172 = vmatmul.bf16.gmra.mxu0 %v811
      %v2173 = vpop.f32.mrf.mxu0
      %v2174 = vadd.f32 %v2085, %v2173
      %v2175 = vpop.f32.mrf.mxu0
      %v2176 = vadd.f32 %v2087, %v2175
      %2177 = vmatmul.bf16.gmra.mxu0 %v813
      %v2178 = vpop.f32.mrf.mxu0
      %v2179 = vadd.f32 %v2090, %v2178
      %v2180 = vpop.f32.mrf.mxu0
      %v2181 = vadd.f32 %v2092, %v2180
      %2182 = vmatmul.bf16.gmra.mxu0 %v815
      %v2183 = vpop.f32.mrf.mxu0
      %v2184 = vadd.f32 %v2095, %v2183
      %v2185 = vpop.f32.mrf.mxu0
      %v2186 = vadd.f32 %v2097, %v2185
      %2187 = vmatmul.bf16.gmra.mxu0 %v817
      %v2188 = vpop.f32.mrf.mxu0
      %v2189 = vadd.f32 %v2100, %v2188
      %v2190 = vpop.f32.mrf.mxu0
      %v2191 = vadd.f32 %v2102, %v2190
      %2192 = vmatmul.bf16.gmra.mxu0 %v819
      %v2193 = vpop.f32.mrf.mxu0
      %v2194 = vadd.f32 %v2105, %v2193
      %v2195 = vpop.f32.mrf.mxu0
      %v2196 = vadd.f32 %v2107, %v2195
      %2197 = vmatmul.bf16.gmra.mxu0 %v821
      %v2198 = vpop.f32.mrf.mxu0
      %v2199 = vadd.f32 %v2110, %v2198
      %v2200 = vpop.f32.mrf.mxu0
      %v2201 = vadd.f32 %v2112, %v2200
      %2202 = vmatmul.bf16.gmra.mxu0 %v823
      %v2203 = vpop.f32.mrf.mxu0
      %v2204 = vadd.f32 %v2115, %v2203
      %v2205 = vpop.f32.mrf.mxu0
      %v2206 = vadd.f32 %v2117, %v2205
      %2207 = vmatmul.bf16.gmra.mxu0 %v825
      %v2208 = vpop.f32.mrf.mxu0
      %v2209 = vadd.f32 %v2120, %v2208
      %v2210 = vpop.f32.mrf.mxu0
      %v2211 = vadd.f32 %v2122, %v2210
      %2212 = vmatmul.bf16.gmra.mxu0 %v827
      %v2213 = vpop.f32.mrf.mxu0
      %v2214 = vadd.f32 %v2125, %v2213
      %v2215 = vpop.f32.mrf.mxu0
      %v2216 = vadd.f32 %v2127, %v2215
      %2217 = vmatmul.bf16.gmra.mxu0 %v829
      %v2218 = vpop.f32.mrf.mxu0
      %v2219 = vadd.f32 %v2130, %v2218
      %v2220 = vpop.f32.mrf.mxu0
      %v2221 = vadd.f32 %v2132, %v2220
      %2222 = vmatmul.bf16.gmra.mxu0 %v831
      %v2223 = vpop.f32.mrf.mxu0
      %v2224 = vadd.f32 %v2135, %v2223
      %v2225 = vpop.f32.mrf.mxu0
      %v2226 = vadd.f32 %v2137, %v2225
      %2227 = vmatmul.bf16.gmra.mxu0 %v833
      %v2228 = vpop.f32.mrf.mxu0
      %v2229 = vadd.f32 %v2140, %v2228
      %v2230 = vpop.f32.mrf.mxu0
      %v2231 = vadd.f32 %v2142, %v2230
      %2232 = vmatmul.bf16.gmra.mxu0 %v835
      %v2233 = vpop.f32.mrf.mxu0
      %v2234 = vadd.f32 %v2145, %v2233
      %v2235 = vpop.f32.mrf.mxu0
      %v2236 = vadd.f32 %v2147, %v2235
      %2237 = vdwg.mxu0
      %2238 = vmatpush.bf16.msra.mxu0 %v1203
      %2239 = vmatpush.bf16.msra.mxu0 %v1197
      %2240 = vmatpush.bf16.msra.mxu0 %v1191
      %2241 = vmatpush.bf16.msra.mxu0 %v1185
      %2242 = vmatpush.bf16.msra.mxu0 %v1179
      %2243 = vmatpush.bf16.msra.mxu0 %v1173
      %2244 = vmatpush.bf16.msra.mxu0 %v1167
      %2245 = vmatpush.bf16.msra.mxu0 %v1161
      %2246 = vmatmul.bf16.gmra.mxu0 %v804
      %v2247 = vpop.f32.mrf.mxu0
      %v2248 = vadd.f32 %v701, %v2247
      %v2249 = vpop.f32.mrf.mxu0
      %v2250 = vadd.f32 %v701, %v2249
      %2251 = vmatmul.bf16.gmra.mxu0 %v806
      %v2252 = vpop.f32.mrf.mxu0
      %v2253 = vadd.f32 %v701, %v2252
      %v2254 = vpop.f32.mrf.mxu0
      %v2255 = vadd.f32 %v701, %v2254
      %2256 = vmatmul.bf16.gmra.mxu0 %v808
      %v2257 = vpop.f32.mrf.mxu0
      %v2258 = vadd.f32 %v701, %v2257
      %v2259 = vpop.f32.mrf.mxu0
      %v2260 = vadd.f32 %v701, %v2259
      %2261 = vmatmul.bf16.gmra.mxu0 %v810
      %v2262 = vpop.f32.mrf.mxu0
      %v2263 = vadd.f32 %v701, %v2262
      %v2264 = vpop.f32.mrf.mxu0
      %v2265 = vadd.f32 %v701, %v2264
      %2266 = vmatmul.bf16.gmra.mxu0 %v812
      %v2267 = vpop.f32.mrf.mxu0
      %v2268 = vadd.f32 %v701, %v2267
      %v2269 = vpop.f32.mrf.mxu0
      %v2270 = vadd.f32 %v701, %v2269
      %2271 = vmatmul.bf16.gmra.mxu0 %v814
      %v2272 = vpop.f32.mrf.mxu0
      %v2273 = vadd.f32 %v701, %v2272
      %v2274 = vpop.f32.mrf.mxu0
      %v2275 = vadd.f32 %v701, %v2274
      %2276 = vmatmul.bf16.gmra.mxu0 %v816
      %v2277 = vpop.f32.mrf.mxu0
      %v2278 = vadd.f32 %v701, %v2277
      %v2279 = vpop.f32.mrf.mxu0
      %v2280 = vadd.f32 %v701, %v2279
      %2281 = vmatmul.bf16.gmra.mxu0 %v818
      %v2282 = vpop.f32.mrf.mxu0
      %v2283 = vadd.f32 %v701, %v2282
      %v2284 = vpop.f32.mrf.mxu0
      %v2285 = vadd.f32 %v701, %v2284
      %2286 = vmatmul.bf16.gmra.mxu0 %v820
      %v2287 = vpop.f32.mrf.mxu0
      %v2288 = vadd.f32 %v701, %v2287
      %v2289 = vpop.f32.mrf.mxu0
      %v2290 = vadd.f32 %v701, %v2289
      %2291 = vmatmul.bf16.gmra.mxu0 %v822
      %v2292 = vpop.f32.mrf.mxu0
      %v2293 = vadd.f32 %v701, %v2292
      %v2294 = vpop.f32.mrf.mxu0
      %v2295 = vadd.f32 %v701, %v2294
      %2296 = vmatmul.bf16.gmra.mxu0 %v824
      %v2297 = vpop.f32.mrf.mxu0
      %v2298 = vadd.f32 %v701, %v2297
      %v2299 = vpop.f32.mrf.mxu0
      %v2300 = vadd.f32 %v701, %v2299
      %2301 = vmatmul.bf16.gmra.mxu0 %v826
      %v2302 = vpop.f32.mrf.mxu0
      %v2303 = vadd.f32 %v701, %v2302
      %v2304 = vpop.f32.mrf.mxu0
      %v2305 = vadd.f32 %v701, %v2304
      %2306 = vmatmul.bf16.gmra.mxu0 %v828
      %v2307 = vpop.f32.mrf.mxu0
      %v2308 = vadd.f32 %v701, %v2307
      %v2309 = vpop.f32.mrf.mxu0
      %v2310 = vadd.f32 %v701, %v2309
      %2311 = vmatmul.bf16.gmra.mxu0 %v830
      %v2312 = vpop.f32.mrf.mxu0
      %v2313 = vadd.f32 %v701, %v2312
      %v2314 = vpop.f32.mrf.mxu0
      %v2315 = vadd.f32 %v701, %v2314
      %2316 = vmatmul.bf16.gmra.mxu0 %v832
      %v2317 = vpop.f32.mrf.mxu0
      %v2318 = vadd.f32 %v701, %v2317
      %v2319 = vpop.f32.mrf.mxu0
      %v2320 = vadd.f32 %v701, %v2319
      %2321 = vmatmul.bf16.gmra.mxu0 %v834
      %v2322 = vpop.f32.mrf.mxu0
      %v2323 = vadd.f32 %v701, %v2322
      %v2324 = vpop.f32.mrf.mxu0
      %v2325 = vadd.f32 %v701, %v2324
      %2326 = vdwg.mxu0
      %2327 = vmatpush.bf16.msra.mxu0 %v1251
      %2328 = vmatpush.bf16.msra.mxu0 %v1245
      %2329 = vmatpush.bf16.msra.mxu0 %v1239
      %2330 = vmatpush.bf16.msra.mxu0 %v1233
      %2331 = vmatpush.bf16.msra.mxu0 %v1227
      %2332 = vmatpush.bf16.msra.mxu0 %v1221
      %2333 = vmatpush.bf16.msra.mxu0 %v1215
      %2334 = vmatpush.bf16.msra.mxu0 %v1209
      %2335 = vmatmul.bf16.gmra.mxu0 %v805
      %v2336 = vpop.f32.mrf.mxu0
      %v2337 = vadd.f32 %v2248, %v2336
      %v2338 = vpop.f32.mrf.mxu0
      %v2339 = vadd.f32 %v2250, %v2338
      %2340 = vmatmul.bf16.gmra.mxu0 %v807
      %v2341 = vpop.f32.mrf.mxu0
      %v2342 = vadd.f32 %v2253, %v2341
      %v2343 = vpop.f32.mrf.mxu0
      %v2344 = vadd.f32 %v2255, %v2343
      %2345 = vmatmul.bf16.gmra.mxu0 %v809
      %v2346 = vpop.f32.mrf.mxu0
      %v2347 = vadd.f32 %v2258, %v2346
      %v2348 = vpop.f32.mrf.mxu0
      %v2349 = vadd.f32 %v2260, %v2348
      %2350 = vmatmul.bf16.gmra.mxu0 %v811
      %v2351 = vpop.f32.mrf.mxu0
      %v2352 = vadd.f32 %v2263, %v2351
      %v2353 = vpop.f32.mrf.mxu0
      %v2354 = vadd.f32 %v2265, %v2353
      %2355 = vmatmul.bf16.gmra.mxu0 %v813
      %v2356 = vpop.f32.mrf.mxu0
      %v2357 = vadd.f32 %v2268, %v2356
      %v2358 = vpop.f32.mrf.mxu0
      %v2359 = vadd.f32 %v2270, %v2358
      %2360 = vmatmul.bf16.gmra.mxu0 %v815
      %v2361 = vpop.f32.mrf.mxu0
      %v2362 = vadd.f32 %v2273, %v2361
      %v2363 = vpop.f32.mrf.mxu0
      %v2364 = vadd.f32 %v2275, %v2363
      %2365 = vmatmul.bf16.gmra.mxu0 %v817
      %v2366 = vpop.f32.mrf.mxu0
      %v2367 = vadd.f32 %v2278, %v2366
      %v2368 = vpop.f32.mrf.mxu0
      %v2369 = vadd.f32 %v2280, %v2368
      %2370 = vmatmul.bf16.gmra.mxu0 %v819
      %v2371 = vpop.f32.mrf.mxu0
      %v2372 = vadd.f32 %v2283, %v2371
      %v2373 = vpop.f32.mrf.mxu0
      %v2374 = vadd.f32 %v2285, %v2373
      %2375 = vmatmul.bf16.gmra.mxu0 %v821
      %v2376 = vpop.f32.mrf.mxu0
      %v2377 = vadd.f32 %v2288, %v2376
      %v2378 = vpop.f32.mrf.mxu0
      %v2379 = vadd.f32 %v2290, %v2378
      %2380 = vmatmul.bf16.gmra.mxu0 %v823
      %v2381 = vpop.f32.mrf.mxu0
      %v2382 = vadd.f32 %v2293, %v2381
      %v2383 = vpop.f32.mrf.mxu0
      %v2384 = vadd.f32 %v2295, %v2383
      %2385 = vmatmul.bf16.gmra.mxu0 %v825
      %v2386 = vpop.f32.mrf.mxu0
      %v2387 = vadd.f32 %v2298, %v2386
      %v2388 = vpop.f32.mrf.mxu0
      %v2389 = vadd.f32 %v2300, %v2388
      %2390 = vmatmul.bf16.gmra.mxu0 %v827
      %v2391 = vpop.f32.mrf.mxu0
      %v2392 = vadd.f32 %v2303, %v2391
      %v2393 = vpop.f32.mrf.mxu0
      %v2394 = vadd.f32 %v2305, %v2393
      %2395 = vmatmul.bf16.gmra.mxu0 %v829
      %v2396 = vpop.f32.mrf.mxu0
      %v2397 = vadd.f32 %v2308, %v2396
      %v2398 = vpop.f32.mrf.mxu0
      %v2399 = vadd.f32 %v2310, %v2398
      %2400 = vmatmul.bf16.gmra.mxu0 %v831
      %v2401 = vpop.f32.mrf.mxu0
      %v2402 = vadd.f32 %v2313, %v2401
      %v2403 = vpop.f32.mrf.mxu0
      %v2404 = vadd.f32 %v2315, %v2403
      %2405 = vmatmul.bf16.gmra.mxu0 %v833
      %v2406 = vpop.f32.mrf.mxu0
      %v2407 = vadd.f32 %v2318, %v2406
      %v2408 = vpop.f32.mrf.mxu0
      %v2409 = vadd.f32 %v2320, %v2408
      %2410 = vmatmul.bf16.gmra.mxu0 %v835
      %v2411 = vpop.f32.mrf.mxu0
      %v2412 = vadd.f32 %v2323, %v2411
      %v2413 = vpop.f32.mrf.mxu0
      %v2414 = vadd.f32 %v2325, %v2413
      %2415 = vdwg.mxu0
      %2416 = vst [vmem:[#allocation2] sm:$0xff] %v1447
      %2417 = vst [vmem:[#allocation2 + $0x8] sm:$0xff] %v1625
      %2418 = vst [vmem:[#allocation2 + $0x10] sm:$0xff] %v1803
      %2419 = vst [vmem:[#allocation2 + $0x18] sm:$0xff] %v1981
      %2420 = vst [vmem:[#allocation2 + $0x20] sm:$0xff] %v2159
      %2421 = vst [vmem:[#allocation2 + $0x28] sm:$0xff] %v2337
      %2422 = vst [vmem:[#allocation2 + $0x30] sm:$0xff] %v1449
      %2423 = vst [vmem:[#allocation2 + $0x38] sm:$0xff] %v1627
      %2424 = vst [vmem:[#allocation2 + $0x40] sm:$0xff] %v1805
      %2425 = vst [vmem:[#allocation2 + $0x48] sm:$0xff] %v1983
      %2426 = vst [vmem:[#allocation2 + $0x50] sm:$0xff] %v2161
      %2427 = vst [vmem:[#allocation2 + $0x58] sm:$0xff] %v2339
      %2428 = vst [vmem:[#allocation2 + $0x60] sm:$0xff] %v1452
      %2429 = vst [vmem:[#allocation2 + $0x68] sm:$0xff] %v1630
      %2430 = vst [vmem:[#allocation2 + $0x70] sm:$0xff] %v1808
      %2431 = vst [vmem:[#allocation2 + $0x78] sm:$0xff] %v1986
      %2432 = vst [vmem:[#allocation2 + $0x80] sm:$0xff] %v2164
      %2433 = vst [vmem:[#allocation2 + $0x88] sm:$0xff] %v2342
      %2434 = vst [vmem:[#allocation2 + $0x90] sm:$0xff] %v1454
      %2435 = vst [vmem:[#allocation2 + $0x98] sm:$0xff] %v1632
      %2436 = vst [vmem:[#allocation2 + $0xa0] sm:$0xff] %v1810
      %2437 = vst [vmem:[#allocation2 + $0xa8] sm:$0xff] %v1988
      %2438 = vst [vmem:[#allocation2 + $0xb0] sm:$0xff] %v2166
      %2439 = vst [vmem:[#allocation2 + $0xb8] sm:$0xff] %v2344
      %2440 = vst [vmem:[#allocation2 + $0xc0] sm:$0xff] %v1457
      %2441 = vst [vmem:[#allocation2 + $0xc8] sm:$0xff] %v1635
      %2442 = vst [vmem:[#allocation2 + $0xd0] sm:$0xff] %v1813
      %2443 = vst [vmem:[#allocation2 + $0xd8] sm:$0xff] %v1991
      %2444 = vst [vmem:[#allocation2 + $0xe0] sm:$0xff] %v2169
      %2445 = vst [vmem:[#allocation2 + $0xe8] sm:$0xff] %v2347
      %2446 = vst [vmem:[#allocation2 + $0xf0] sm:$0xff] %v1459
      %2447 = vst [vmem:[#allocation2 + $0xf8] sm:$0xff] %v1637
      %2448 = vst [vmem:[#allocation2 + $0x100] sm:$0xff] %v1815
      %2449 = vst [vmem:[#allocation2 + $0x108] sm:$0xff] %v1993
      %2450 = vst [vmem:[#allocation2 + $0x110] sm:$0xff] %v2171
      %2451 = vst [vmem:[#allocation2 + $0x118] sm:$0xff] %v2349
      %2452 = vst [vmem:[#allocation2 + $0x120] sm:$0xff] %v1462
      %2453 = vst [vmem:[#allocation2 + $0x128] sm:$0xff] %v1640
      %2454 = vst [vmem:[#allocation2 + $0x130] sm:$0xff] %v1818
      %2455 = vst [vmem:[#allocation2 + $0x138] sm:$0xff] %v1996
      %2456 = vst [vmem:[#allocation2 + $0x140] sm:$0xff] %v2174
      %2457 = vst [vmem:[#allocation2 + $0x148] sm:$0xff] %v2352
      %2458 = vst [vmem:[#allocation2 + $0x150] sm:$0xff] %v1464
      %2459 = vst [vmem:[#allocation2 + $0x158] sm:$0xff] %v1642
      %2460 = vst [vmem:[#allocation2 + $0x160] sm:$0xff] %v1820
      %2461 = vst [vmem:[#allocation2 + $0x168] sm:$0xff] %v1998
      %2462 = vst [vmem:[#allocation2 + $0x170] sm:$0xff] %v2176
      %2463 = vst [vmem:[#allocation2 + $0x178] sm:$0xff] %v2354
      %2464 = vst [vmem:[#allocation2 + $0x180] sm:$0xff] %v1467
      %2465 = vst [vmem:[#allocation2 + $0x188] sm:$0xff] %v1645
      %2466 = vst [vmem:[#allocation2 + $0x190] sm:$0xff] %v1823
      %2467 = vst [vmem:[#allocation2 + $0x198] sm:$0xff] %v2001
      %2468 = vst [vmem:[#allocation2 + $0x1a0] sm:$0xff] %v2179
      %2469 = vst [vmem:[#allocation2 + $0x1a8] sm:$0xff] %v2357
      %2470 = vst [vmem:[#allocation2 + $0x1b0] sm:$0xff] %v1469
      %2471 = vst [vmem:[#allocation2 + $0x1b8] sm:$0xff] %v1647
      %2472 = vst [vmem:[#allocation2 + $0x1c0] sm:$0xff] %v1825
      %2473 = vst [vmem:[#allocation2 + $0x1c8] sm:$0xff] %v2003
      %2474 = vst [vmem:[#allocation2 + $0x1d0] sm:$0xff] %v2181
      %2475 = vst [vmem:[#allocation2 + $0x1d8] sm:$0xff] %v2359
      %2476 = vst [vmem:[#allocation2 + $0x1e0] sm:$0xff] %v1472
      %2477 = vst [vmem:[#allocation2 + $0x1e8] sm:$0xff] %v1650
      %2478 = vst [vmem:[#allocation2 + $0x1f0] sm:$0xff] %v1828
      %2479 = vst [vmem:[#allocation2 + $0x1f8] sm:$0xff] %v2006
      %2480 = vst [vmem:[#allocation2 + $0x200] sm:$0xff] %v2184
      %2481 = vst [vmem:[#allocation2 + $0x208] sm:$0xff] %v2362
      %2482 = vst [vmem:[#allocation2 + $0x210] sm:$0xff] %v1474
      %2483 = vst [vmem:[#allocation2 + $0x218] sm:$0xff] %v1652
      %2484 = vst [vmem:[#allocation2 + $0x220] sm:$0xff] %v1830
      %2485 = vst [vmem:[#allocation2 + $0x228] sm:$0xff] %v2008
      %2486 = vst [vmem:[#allocation2 + $0x230] sm:$0xff] %v2186
      %2487 = vst [vmem:[#allocation2 + $0x238] sm:$0xff] %v2364
      %2488 = vst [vmem:[#allocation2 + $0x240] sm:$0xff] %v1477
      %2489 = vst [vmem:[#allocation2 + $0x248] sm:$0xff] %v1655
      %2490 = vst [vmem:[#allocation2 + $0x250] sm:$0xff] %v1833
      %2491 = vst [vmem:[#allocation2 + $0x258] sm:$0xff] %v2011
      %2492 = vst [vmem:[#allocation2 + $0x260] sm:$0xff] %v2189
      %2493 = vst [vmem:[#allocation2 + $0x268] sm:$0xff] %v2367
      %2494 = vst [vmem:[#allocation2 + $0x270] sm:$0xff] %v1479
      %2495 = vst [vmem:[#allocation2 + $0x278] sm:$0xff] %v1657
      %2496 = vst [vmem:[#allocation2 + $0x280] sm:$0xff] %v1835
      %2497 = vst [vmem:[#allocation2 + $0x288] sm:$0xff] %v2013
      %2498 = vst [vmem:[#allocation2 + $0x290] sm:$0xff] %v2191
      %2499 = vst [vmem:[#allocation2 + $0x298] sm:$0xff] %v2369
      %2500 = vst [vmem:[#allocation2 + $0x2a0] sm:$0xff] %v1482
      %2501 = vst [vmem:[#allocation2 + $0x2a8] sm:$0xff] %v1660
      %2502 = vst [vmem:[#allocation2 + $0x2b0] sm:$0xff] %v1838
      %2503 = vst [vmem:[#allocation2 + $0x2b8] sm:$0xff] %v2016
      %2504 = vst [vmem:[#allocation2 + $0x2c0] sm:$0xff] %v2194
      %2505 = vst [vmem:[#allocation2 + $0x2c8] sm:$0xff] %v2372
      %2506 = vst [vmem:[#allocation2 + $0x2d0] sm:$0xff] %v1484
      %2507 = vst [vmem:[#allocation2 + $0x2d8] sm:$0xff] %v1662
      %2508 = vst [vmem:[#allocation2 + $0x2e0] sm:$0xff] %v1840
      %2509 = vst [vmem:[#allocation2 + $0x2e8] sm:$0xff] %v2018
      %2510 = vst [vmem:[#allocation2 + $0x2f0] sm:$0xff] %v2196
      %2511 = vst [vmem:[#allocation2 + $0x2f8] sm:$0xff] %v2374
      %2512 = vst [vmem:[#allocation2 + $0x300] sm:$0xff] %v1487
      %2513 = vst [vmem:[#allocation2 + $0x308] sm:$0xff] %v1665
      %2514 = vst [vmem:[#allocation2 + $0x310] sm:$0xff] %v1843
      %2515 = vst [vmem:[#allocation2 + $0x318] sm:$0xff] %v2021
      %2516 = vst [vmem:[#allocation2 + $0x320] sm:$0xff] %v2199
      %2517 = vst [vmem:[#allocation2 + $0x328] sm:$0xff] %v2377
      %2518 = vst [vmem:[#allocation2 + $0x330] sm:$0xff] %v1489
      %2519 = vst [vmem:[#allocation2 + $0x338] sm:$0xff] %v1667
      %2520 = vst [vmem:[#allocation2 + $0x340] sm:$0xff] %v1845
      %2521 = vst [vmem:[#allocation2 + $0x348] sm:$0xff] %v2023
      %2522 = vst [vmem:[#allocation2 + $0x350] sm:$0xff] %v2201
      %2523 = vst [vmem:[#allocation2 + $0x358] sm:$0xff] %v2379
      %2524 = vst [vmem:[#allocation2 + $0x360] sm:$0xff] %v1492
      %2525 = vst [vmem:[#allocation2 + $0x368] sm:$0xff] %v1670
      %2526 = vst [vmem:[#allocation2 + $0x370] sm:$0xff] %v1848
      %2527 = vst [vmem:[#allocation2 + $0x378] sm:$0xff] %v2026
      %2528 = vst [vmem:[#allocation2 + $0x380] sm:$0xff] %v2204
      %2529 = vst [vmem:[#allocation2 + $0x388] sm:$0xff] %v2382
      %2530 = vst [vmem:[#allocation2 + $0x390] sm:$0xff] %v1494
      %2531 = vst [vmem:[#allocation2 + $0x398] sm:$0xff] %v1672
      %2532 = vst [vmem:[#allocation2 + $0x3a0] sm:$0xff] %v1850
      %2533 = vst [vmem:[#allocation2 + $0x3a8] sm:$0xff] %v2028
      %2534 = vst [vmem:[#allocation2 + $0x3b0] sm:$0xff] %v2206
      %2535 = vst [vmem:[#allocation2 + $0x3b8] sm:$0xff] %v2384
      %2536 = vst [vmem:[#allocation2 + $0x3c0] sm:$0xff] %v1497
      %2537 = vst [vmem:[#allocation2 + $0x3c8] sm:$0xff] %v1675
      %2538 = vst [vmem:[#allocation2 + $0x3d0] sm:$0xff] %v1853
      %2539 = vst [vmem:[#allocation2 + $0x3d8] sm:$0xff] %v2031
      %2540 = vst [vmem:[#allocation2 + $0x3e0] sm:$0xff] %v2209
      %2541 = vst [vmem:[#allocation2 + $0x3e8] sm:$0xff] %v2387
      %2542 = vst [vmem:[#allocation2 + $0x3f0] sm:$0xff] %v1499
      %2543 = vst [vmem:[#allocation2 + $0x3f8] sm:$0xff] %v1677
      %2544 = vst [vmem:[#allocation2 + $0x400] sm:$0xff] %v1855
      %2545 = vst [vmem:[#allocation2 + $0x408] sm:$0xff] %v2033
      %2546 = vst [vmem:[#allocation2 + $0x410] sm:$0xff] %v2211
      %2547 = vst [vmem:[#allocation2 + $0x418] sm:$0xff] %v2389
      %2548 = vst [vmem:[#allocation2 + $0x420] sm:$0xff] %v1502
      %2549 = vst [vmem:[#allocation2 + $0x428] sm:$0xff] %v1680
      %2550 = vst [vmem:[#allocation2 + $0x430] sm:$0xff] %v1858
      %2551 = vst [vmem:[#allocation2 + $0x438] sm:$0xff] %v2036
      %2552 = vst [vmem:[#allocation2 + $0x440] sm:$0xff] %v2214
      %2553 = vst [vmem:[#allocation2 + $0x448] sm:$0xff] %v2392
      %2554 = vst [vmem:[#allocation2 + $0x450] sm:$0xff] %v1504
      %2555 = vst [vmem:[#allocation2 + $0x458] sm:$0xff] %v1682
      %2556 = vst [vmem:[#allocation2 + $0x460] sm:$0xff] %v1860
      %2557 = vst [vmem:[#allocation2 + $0x468] sm:$0xff] %v2038
      %2558 = vst [vmem:[#allocation2 + $0x470] sm:$0xff] %v2216
      %2559 = vst [vmem:[#allocation2 + $0x478] sm:$0xff] %v2394
      %2560 = vst [vmem:[#allocation2 + $0x480] sm:$0xff] %v1507
      %2561 = vst [vmem:[#allocation2 + $0x488] sm:$0xff] %v1685
      %2562 = vst [vmem:[#allocation2 + $0x490] sm:$0xff] %v1863
      %2563 = vst [vmem:[#allocation2 + $0x498] sm:$0xff] %v2041
      %2564 = vst [vmem:[#allocation2 + $0x4a0] sm:$0xff] %v2219
      %2565 = vst [vmem:[#allocation2 + $0x4a8] sm:$0xff] %v2397
      %2566 = vst [vmem:[#allocation2 + $0x4b0] sm:$0xff] %v1509
      %2567 = vst [vmem:[#allocation2 + $0x4b8] sm:$0xff] %v1687
      %2568 = vst [vmem:[#allocation2 + $0x4c0] sm:$0xff] %v1865
      %2569 = vst [vmem:[#allocation2 + $0x4c8] sm:$0xff] %v2043
      %2570 = vst [vmem:[#allocation2 + $0x4d0] sm:$0xff] %v2221
      %2571 = vst [vmem:[#allocation2 + $0x4d8] sm:$0xff] %v2399
      %2572 = vst [vmem:[#allocation2 + $0x4e0] sm:$0xff] %v1512
      %2573 = vst [vmem:[#allocation2 + $0x4e8] sm:$0xff] %v1690
      %2574 = vst [vmem:[#allocation2 + $0x4f0] sm:$0xff] %v1868
      %2575 = vst [vmem:[#allocation2 + $0x4f8] sm:$0xff] %v2046
      %2576 = vst [vmem:[#allocation2 + $0x500] sm:$0xff] %v2224
      %2577 = vst [vmem:[#allocation2 + $0x508] sm:$0xff] %v2402
      %2578 = vst [vmem:[#allocation2 + $0x510] sm:$0xff] %v1514
      %2579 = vst [vmem:[#allocation2 + $0x518] sm:$0xff] %v1692
      %2580 = vst [vmem:[#allocation2 + $0x520] sm:$0xff] %v1870
      %2581 = vst [vmem:[#allocation2 + $0x528] sm:$0xff] %v2048
      %2582 = vst [vmem:[#allocation2 + $0x530] sm:$0xff] %v2226
      %2583 = vst [vmem:[#allocation2 + $0x538] sm:$0xff] %v2404
      %2584 = vst [vmem:[#allocation2 + $0x540] sm:$0xff] %v1517
      %2585 = vst [vmem:[#allocation2 + $0x548] sm:$0xff] %v1695
      %2586 = vst [vmem:[#allocation2 + $0x550] sm:$0xff] %v1873
      %2587 = vst [vmem:[#allocation2 + $0x558] sm:$0xff] %v2051
      %2588 = vst [vmem:[#allocation2 + $0x560] sm:$0xff] %v2229
      %2589 = vst [vmem:[#allocation2 + $0x568] sm:$0xff] %v2407
      %2590 = vst [vmem:[#allocation2 + $0x570] sm:$0xff] %v1519
      %2591 = vst [vmem:[#allocation2 + $0x578] sm:$0xff] %v1697
      %2592 = vst [vmem:[#allocation2 + $0x580] sm:$0xff] %v1875
      %2593 = vst [vmem:[#allocation2 + $0x588] sm:$0xff] %v2053
      %2594 = vst [vmem:[#allocation2 + $0x590] sm:$0xff] %v2231
      %2595 = vst [vmem:[#allocation2 + $0x598] sm:$0xff] %v2409
      %2596 = vst [vmem:[#allocation2 + $0x5a0] sm:$0xff] %v1522
      %2597 = vst [vmem:[#allocation2 + $0x5a8] sm:$0xff] %v1700
      %2598 = vst [vmem:[#allocation2 + $0x5b0] sm:$0xff] %v1878
      %2599 = vst [vmem:[#allocation2 + $0x5b8] sm:$0xff] %v2056
      %2600 = vst [vmem:[#allocation2 + $0x5c0] sm:$0xff] %v2234
      %2601 = vst [vmem:[#allocation2 + $0x5c8] sm:$0xff] %v2412
      %2602 = vst [vmem:[#allocation2 + $0x5d0] sm:$0xff] %v1524
      %2603 = vst [vmem:[#allocation2 + $0x5d8] sm:$0xff] %v1702
      %2604 = vst [vmem:[#allocation2 + $0x5e0] sm:$0xff] %v1880
      %2605 = vst [vmem:[#allocation2 + $0x5e8] sm:$0xff] %v2058
      %2606 = vst [vmem:[#allocation2 + $0x5f0] sm:$0xff] %v2236
      %2607 = vst [vmem:[#allocation2 + $0x5f8] sm:$0xff] %v2414
      %v2608 = vld [vmem:[%s504] sm:$0xff]
      %v2609 = vld [vmem:[%s504 + $0x8] sm:$0xff]
      %v2610 = vld [vmem:[%s504 + $0x10] sm:$0xff]
      %v2611 = vld [vmem:[%s504 + $0x18] sm:$0xff]
      %v2612 = vld [vmem:[%s504 + $0x20] sm:$0xff]
      %v2613 = vld [vmem:[%s504 + $0x28] sm:$0xff]
      %v2614 = vld [vmem:[%s504 + $0x30] sm:$0xff]
      %v2615 = vld [vmem:[%s504 + $0x38] sm:$0xff]
      %v2616 = vld [vmem:[%s504 + $0x40] sm:$0xff]
      %v2617 = vld [vmem:[%s504 + $0x48] sm:$0xff]
      %v2618 = vld [vmem:[%s504 + $0x50] sm:$0xff]
      %v2619 = vld [vmem:[%s504 + $0x58] sm:$0xff]
      %v2620 = vld [vmem:[%s504 + $0x60] sm:$0xff]
      %v2621 = vld [vmem:[%s504 + $0x68] sm:$0xff]
      %v2622 = vld [vmem:[%s504 + $0x70] sm:$0xff]
      %v2623 = vld [vmem:[%s504 + $0x78] sm:$0xff]
      %v2624 = vld [vmem:[%s504 + $0x80] sm:$0xff]
      %v2625 = vld [vmem:[%s504 + $0x88] sm:$0xff]
      %v2626 = vld [vmem:[%s504 + $0x90] sm:$0xff]
      %v2627 = vld [vmem:[%s504 + $0x98] sm:$0xff]
      %v2628 = vld [vmem:[%s504 + $0xa0] sm:$0xff]
      %v2629 = vld [vmem:[%s504 + $0xa8] sm:$0xff]
      %v2630 = vld [vmem:[%s504 + $0xb0] sm:$0xff]
      %v2631 = vld [vmem:[%s504 + $0xb8] sm:$0xff]
      %v2632 = vld [vmem:[%s504 + $0xc0] sm:$0xff]
      %v2633 = vld [vmem:[%s504 + $0xc8] sm:$0xff]
      %v2634 = vld [vmem:[%s504 + $0xd0] sm:$0xff]
      %v2635 = vld [vmem:[%s504 + $0xd8] sm:$0xff]
      %v2636 = vld [vmem:[%s504 + $0xe0] sm:$0xff]
      %v2637 = vld [vmem:[%s504 + $0xe8] sm:$0xff]
      %v2638 = vld [vmem:[%s504 + $0xf0] sm:$0xff]
      %v2639 = vld [vmem:[%s504 + $0xf8] sm:$0xff]
      %v2640 = vld [vmem:[%s514] sm:$0xff]
      %v2641 = vld [vmem:[%s514 + $0x8] sm:$0xff]
      %v2642 = vld [vmem:[%s514 + $0x10] sm:$0xff]
      %v2643 = vld [vmem:[%s514 + $0x18] sm:$0xff]
      %v2644 = vld [vmem:[%s514 + $0x20] sm:$0xff]
      %v2645 = vld [vmem:[%s514 + $0x28] sm:$0xff]
      %v2646 = vld [vmem:[%s514 + $0x30] sm:$0xff]
      %v2647 = vld [vmem:[%s514 + $0x38] sm:$0xff]
      %v2648 = vld [vmem:[%s514 + $0x40] sm:$0xff]
      %v2649 = vld [vmem:[%s514 + $0x48] sm:$0xff]
      %v2650 = vld [vmem:[%s514 + $0x50] sm:$0xff]
      %v2651 = vld [vmem:[%s514 + $0x58] sm:$0xff]
      %v2652 = vld [vmem:[%s514 + $0x60] sm:$0xff]
      %v2653 = vld [vmem:[%s514 + $0x68] sm:$0xff]
      %v2654 = vld [vmem:[%s514 + $0x70] sm:$0xff]
      %v2655 = vld [vmem:[%s514 + $0x78] sm:$0xff]
      %v2656 = vld [vmem:[%s514 + $0x80] sm:$0xff]
      %v2657 = vld [vmem:[%s514 + $0x88] sm:$0xff]
      %v2658 = vld [vmem:[%s514 + $0x90] sm:$0xff]
      %v2659 = vld [vmem:[%s514 + $0x98] sm:$0xff]
      %v2660 = vld [vmem:[%s514 + $0xa0] sm:$0xff]
      %v2661 = vld [vmem:[%s514 + $0xa8] sm:$0xff]
      %v2662 = vld [vmem:[%s514 + $0xb0] sm:$0xff]
      %v2663 = vld [vmem:[%s514 + $0xb8] sm:$0xff]
      %v2664 = vld [vmem:[%s514 + $0xc0] sm:$0xff]
      %v2665 = vld [vmem:[%s514 + $0xc8] sm:$0xff]
      %v2666 = vld [vmem:[%s514 + $0xd0] sm:$0xff]
      %v2667 = vld [vmem:[%s514 + $0xd8] sm:$0xff]
      %v2668 = vld [vmem:[%s514 + $0xe0] sm:$0xff]
      %v2669 = vld [vmem:[%s514 + $0xe8] sm:$0xff]
      %v2670 = vld [vmem:[%s514 + $0xf0] sm:$0xff]
      %v2671 = vld [vmem:[%s514 + $0xf8] sm:$0xff]
      %v2672 = vld [vmem:[%s524] sm:$0xff]
      %v2673 = vld [vmem:[%s524 + $0x8] sm:$0xff]
      %v2674 = vld [vmem:[%s524 + $0x10] sm:$0xff]
      %v2675 = vld [vmem:[%s524 + $0x18] sm:$0xff]
      %v2676 = vld [vmem:[%s524 + $0x20] sm:$0xff]
      %v2677 = vld [vmem:[%s524 + $0x28] sm:$0xff]
      %v2678 = vld [vmem:[%s524 + $0x30] sm:$0xff]
      %v2679 = vld [vmem:[%s524 + $0x38] sm:$0xff]
      %v2680 = vld [vmem:[%s524 + $0x40] sm:$0xff]
      %v2681 = vld [vmem:[%s524 + $0x48] sm:$0xff]
      %v2682 = vld [vmem:[%s524 + $0x50] sm:$0xff]
      %v2683 = vld [vmem:[%s524 + $0x58] sm:$0xff]
      %v2684 = vld [vmem:[%s524 + $0x60] sm:$0xff]
      %v2685 = vld [vmem:[%s524 + $0x68] sm:$0xff]
      %v2686 = vld [vmem:[%s524 + $0x70] sm:$0xff]
      %v2687 = vld [vmem:[%s524 + $0x78] sm:$0xff]
      %v2688 = vld [vmem:[%s524 + $0x80] sm:$0xff]
      %v2689 = vld [vmem:[%s524 + $0x88] sm:$0xff]
      %v2690 = vld [vmem:[%s524 + $0x90] sm:$0xff]
      %v2691 = vld [vmem:[%s524 + $0x98] sm:$0xff]
      %v2692 = vld [vmem:[%s524 + $0xa0] sm:$0xff]
      %v2693 = vld [vmem:[%s524 + $0xa8] sm:$0xff]
      %v2694 = vld [vmem:[%s524 + $0xb0] sm:$0xff]
      %v2695 = vld [vmem:[%s524 + $0xb8] sm:$0xff]
      %v2696 = vld [vmem:[%s524 + $0xc0] sm:$0xff]
      %v2697 = vld [vmem:[%s524 + $0xc8] sm:$0xff]
      %v2698 = vld [vmem:[%s524 + $0xd0] sm:$0xff]
      %v2699 = vld [vmem:[%s524 + $0xd8] sm:$0xff]
      %v2700 = vld [vmem:[%s524 + $0xe0] sm:$0xff]
      %v2701 = vld [vmem:[%s524 + $0xe8] sm:$0xff]
      %v2702 = vld [vmem:[%s524 + $0xf0] sm:$0xff]
      %v2703 = vld [vmem:[%s524 + $0xf8] sm:$0xff]
      %v2704 = vld [vmem:[%s534] sm:$0xff]
      %v2705 = vld [vmem:[%s534 + $0x8] sm:$0xff]
      %v2706 = vld [vmem:[%s534 + $0x10] sm:$0xff]
      %v2707 = vld [vmem:[%s534 + $0x18] sm:$0xff]
      %v2708 = vld [vmem:[%s534 + $0x20] sm:$0xff]
      %v2709 = vld [vmem:[%s534 + $0x28] sm:$0xff]
      %v2710 = vld [vmem:[%s534 + $0x30] sm:$0xff]
      %v2711 = vld [vmem:[%s534 + $0x38] sm:$0xff]
      %v2712 = vld [vmem:[%s534 + $0x40] sm:$0xff]
      %v2713 = vld [vmem:[%s534 + $0x48] sm:$0xff]
      %v2714 = vld [vmem:[%s534 + $0x50] sm:$0xff]
      %v2715 = vld [vmem:[%s534 + $0x58] sm:$0xff]
      %v2716 = vld [vmem:[%s534 + $0x60] sm:$0xff]
      %v2717 = vld [vmem:[%s534 + $0x68] sm:$0xff]
      %v2718 = vld [vmem:[%s534 + $0x70] sm:$0xff]
      %v2719 = vld [vmem:[%s534 + $0x78] sm:$0xff]
      %v2720 = vld [vmem:[%s534 + $0x80] sm:$0xff]
      %v2721 = vld [vmem:[%s534 + $0x88] sm:$0xff]
      %v2722 = vld [vmem:[%s534 + $0x90] sm:$0xff]
      %v2723 = vld [vmem:[%s534 + $0x98] sm:$0xff]
      %v2724 = vld [vmem:[%s534 + $0xa0] sm:$0xff]
      %v2725 = vld [vmem:[%s534 + $0xa8] sm:$0xff]
      %v2726 = vld [vmem:[%s534 + $0xb0] sm:$0xff]
      %v2727 = vld [vmem:[%s534 + $0xb8] sm:$0xff]
      %v2728 = vld [vmem:[%s534 + $0xc0] sm:$0xff]
      %v2729 = vld [vmem:[%s534 + $0xc8] sm:$0xff]
      %v2730 = vld [vmem:[%s534 + $0xd0] sm:$0xff]
      %v2731 = vld [vmem:[%s534 + $0xd8] sm:$0xff]
      %v2732 = vld [vmem:[%s534 + $0xe0] sm:$0xff]
      %v2733 = vld [vmem:[%s534 + $0xe8] sm:$0xff]
      %v2734 = vld [vmem:[%s534 + $0xf0] sm:$0xff]
      %v2735 = vld [vmem:[%s534 + $0xf8] sm:$0xff]
      loop: start=0, step=1, limit=2
      $region49: #{self_attention.3} parent=47 // loop_pre_header
        _
      $region50: #{self_attention.3} parent=47 // loop_header
        %s2737 = sphi 0, %s2741
        %p2738 = scmp.ge.s32.totalorder %s2737, 2
      $region51: #{self_attention.3} parent=47 // loop_header_branch
        %2740 = sbr.rel (%p2738) target = $region55
      $region52: #{self_attention.3} parent=47 // loop_body
        %s2742 = smul.u32 %s2737, 128
        %s2743 = sadd.s32 %s2742, 256
        %s2744 = sadd.s32 %s2742, 512
        %s2745 = sshra.s32 %s2742, 7
        %s2746 = sand.u32 %s2742, 127
        %s2747 = smul.addr %s2745, 8
        %s2748 = scalar_lea.vmem [#allocation2], %s2747
        %v2749 = vld [vmem:[%s2748] sm:$0xff]
        %v2750 = vld [vmem:[%s2748 + $0x30] sm:$0xff]
        %v2751 = vld [vmem:[%s2748 + $0x60] sm:$0xff]
        %v2752 = vld [vmem:[%s2748 + $0x90] sm:$0xff]
        %v2753 = vld [vmem:[%s2748 + $0xc0] sm:$0xff]
        %v2754 = vld [vmem:[%s2748 + $0xf0] sm:$0xff]
        %v2755 = vld [vmem:[%s2748 + $0x120] sm:$0xff]
        %v2756 = vld [vmem:[%s2748 + $0x150] sm:$0xff]
        %v2757 = vld [vmem:[%s2748 + $0x180] sm:$0xff]
        %v2758 = vld [vmem:[%s2748 + $0x1b0] sm:$0xff]
        %v2759 = vld [vmem:[%s2748 + $0x1e0] sm:$0xff]
        %v2760 = vld [vmem:[%s2748 + $0x210] sm:$0xff]
        %v2761 = vld [vmem:[%s2748 + $0x240] sm:$0xff]
        %v2762 = vld [vmem:[%s2748 + $0x270] sm:$0xff]
        %v2763 = vld [vmem:[%s2748 + $0x2a0] sm:$0xff]
        %v2764 = vld [vmem:[%s2748 + $0x2d0] sm:$0xff]
        %v2765 = vld [vmem:[%s2748 + $0x300] sm:$0xff]
        %v2766 = vld [vmem:[%s2748 + $0x330] sm:$0xff]
        %v2767 = vld [vmem:[%s2748 + $0x360] sm:$0xff]
        %v2768 = vld [vmem:[%s2748 + $0x390] sm:$0xff]
        %v2769 = vld [vmem:[%s2748 + $0x3c0] sm:$0xff]
        %v2770 = vld [vmem:[%s2748 + $0x3f0] sm:$0xff]
        %v2771 = vld [vmem:[%s2748 + $0x420] sm:$0xff]
        %v2772 = vld [vmem:[%s2748 + $0x450] sm:$0xff]
        %v2773 = vld [vmem:[%s2748 + $0x480] sm:$0xff]
        %v2774 = vld [vmem:[%s2748 + $0x4b0] sm:$0xff]
        %v2775 = vld [vmem:[%s2748 + $0x4e0] sm:$0xff]
        %v2776 = vld [vmem:[%s2748 + $0x510] sm:$0xff]
        %v2777 = vld [vmem:[%s2748 + $0x540] sm:$0xff]
        %v2778 = vld [vmem:[%s2748 + $0x570] sm:$0xff]
        %v2779 = vld [vmem:[%s2748 + $0x5a0] sm:$0xff]
        %v2780 = vld [vmem:[%s2748 + $0x5d0] sm:$0xff]
        %s2781 = sshra.s32 %s2743, 7
        %s2782 = sand.u32 %s2743, 127
        %s2783 = smul.addr %s2781, 8
        %s2784 = scalar_lea.vmem [#allocation2], %s2783
        %v2785 = vld [vmem:[%s2784] sm:$0xff]
        %v2786 = vld [vmem:[%s2784 + $0x30] sm:$0xff]
        %v2787 = vld [vmem:[%s2784 + $0x60] sm:$0xff]
        %v2788 = vld [vmem:[%s2784 + $0x90] sm:$0xff]
        %v2789 = vld [vmem:[%s2784 + $0xc0] sm:$0xff]
        %v2790 = vld [vmem:[%s2784 + $0xf0] sm:$0xff]
        %v2791 = vld [vmem:[%s2784 + $0x120] sm:$0xff]
        %v2792 = vld [vmem:[%s2784 + $0x150] sm:$0xff]
        %v2793 = vld [vmem:[%s2784 + $0x180] sm:$0xff]
        %v2794 = vld [vmem:[%s2784 + $0x1b0] sm:$0xff]
        %v2795 = vld [vmem:[%s2784 + $0x1e0] sm:$0xff]
        %v2796 = vld [vmem:[%s2784 + $0x210] sm:$0xff]
        %v2797 = vld [vmem:[%s2784 + $0x240] sm:$0xff]
        %v2798 = vld [vmem:[%s2784 + $0x270] sm:$0xff]
        %v2799 = vld [vmem:[%s2784 + $0x2a0] sm:$0xff]
        %v2800 = vld [vmem:[%s2784 + $0x2d0] sm:$0xff]
        %v2801 = vld [vmem:[%s2784 + $0x300] sm:$0xff]
        %v2802 = vld [vmem:[%s2784 + $0x330] sm:$0xff]
        %v2803 = vld [vmem:[%s2784 + $0x360] sm:$0xff]
        %v2804 = vld [vmem:[%s2784 + $0x390] sm:$0xff]
        %v2805 = vld [vmem:[%s2784 + $0x3c0] sm:$0xff]
        %v2806 = vld [vmem:[%s2784 + $0x3f0] sm:$0xff]
        %v2807 = vld [vmem:[%s2784 + $0x420] sm:$0xff]
        %v2808 = vld [vmem:[%s2784 + $0x450] sm:$0xff]
        %v2809 = vld [vmem:[%s2784 + $0x480] sm:$0xff]
        %v2810 = vld [vmem:[%s2784 + $0x4b0] sm:$0xff]
        %v2811 = vld [vmem:[%s2784 + $0x4e0] sm:$0xff]
        %v2812 = vld [vmem:[%s2784 + $0x510] sm:$0xff]
        %v2813 = vld [vmem:[%s2784 + $0x540] sm:$0xff]
        %v2814 = vld [vmem:[%s2784 + $0x570] sm:$0xff]
        %v2815 = vld [vmem:[%s2784 + $0x5a0] sm:$0xff]
        %v2816 = vld [vmem:[%s2784 + $0x5d0] sm:$0xff]
        %s2817 = sshra.s32 %s2744, 7
        %s2818 = sand.u32 %s2744, 127
        %s2819 = smul.addr %s2817, 8
        %s2820 = scalar_lea.vmem [#allocation2], %s2819
        %v2821 = vld [vmem:[%s2820] sm:$0xff]
        %v2822 = vld [vmem:[%s2820 + $0x30] sm:$0xff]
        %v2823 = vld [vmem:[%s2820 + $0x60] sm:$0xff]
        %v2824 = vld [vmem:[%s2820 + $0x90] sm:$0xff]
        %v2825 = vld [vmem:[%s2820 + $0xc0] sm:$0xff]
        %v2826 = vld [vmem:[%s2820 + $0xf0] sm:$0xff]
        %v2827 = vld [vmem:[%s2820 + $0x120] sm:$0xff]
        %v2828 = vld [vmem:[%s2820 + $0x150] sm:$0xff]
        %v2829 = vld [vmem:[%s2820 + $0x180] sm:$0xff]
        %v2830 = vld [vmem:[%s2820 + $0x1b0] sm:$0xff]
        %v2831 = vld [vmem:[%s2820 + $0x1e0] sm:$0xff]
        %v2832 = vld [vmem:[%s2820 + $0x210] sm:$0xff]
        %v2833 = vld [vmem:[%s2820 + $0x240] sm:$0xff]
        %v2834 = vld [vmem:[%s2820 + $0x270] sm:$0xff]
        %v2835 = vld [vmem:[%s2820 + $0x2a0] sm:$0xff]
        %v2836 = vld [vmem:[%s2820 + $0x2d0] sm:$0xff]
        %v2837 = vld [vmem:[%s2820 + $0x300] sm:$0xff]
        %v2838 = vld [vmem:[%s2820 + $0x330] sm:$0xff]
        %v2839 = vld [vmem:[%s2820 + $0x360] sm:$0xff]
        %v2840 = vld [vmem:[%s2820 + $0x390] sm:$0xff]
        %v2841 = vld [vmem:[%s2820 + $0x3c0] sm:$0xff]
        %v2842 = vld [vmem:[%s2820 + $0x3f0] sm:$0xff]
        %v2843 = vld [vmem:[%s2820 + $0x420] sm:$0xff]
        %v2844 = vld [vmem:[%s2820 + $0x450] sm:$0xff]
        %v2845 = vld [vmem:[%s2820 + $0x480] sm:$0xff]
        %v2846 = vld [vmem:[%s2820 + $0x4b0] sm:$0xff]
        %v2847 = vld [vmem:[%s2820 + $0x4e0] sm:$0xff]
        %v2848 = vld [vmem:[%s2820 + $0x510] sm:$0xff]
        %v2849 = vld [vmem:[%s2820 + $0x540] sm:$0xff]
        %v2850 = vld [vmem:[%s2820 + $0x570] sm:$0xff]
        %v2851 = vld [vmem:[%s2820 + $0x5a0] sm:$0xff]
        %v2852 = vld [vmem:[%s2820 + $0x5d0] sm:$0xff]
        %v2853 = vmul.f32 %v2749, %v2749
        %v2854 = vmul.f32 %v2750, %v2750
        %v2855 = vmul.f32 %v2751, %v2751
        %v2856 = vmul.f32 %v2752, %v2752
        %v2857 = vmul.f32 %v2753, %v2753
        %v2858 = vmul.f32 %v2754, %v2754
        %v2859 = vmul.f32 %v2755, %v2755
        %v2860 = vmul.f32 %v2756, %v2756
        %v2861 = vmul.f32 %v2757, %v2757
        %v2862 = vmul.f32 %v2758, %v2758
        %v2863 = vmul.f32 %v2759, %v2759
        %v2864 = vmul.f32 %v2760, %v2760
        %v2865 = vmul.f32 %v2761, %v2761
        %v2866 = vmul.f32 %v2762, %v2762
        %v2867 = vmul.f32 %v2763, %v2763
        %v2868 = vmul.f32 %v2764, %v2764
        %v2869 = vmul.f32 %v2765, %v2765
        %v2870 = vmul.f32 %v2766, %v2766
        %v2871 = vmul.f32 %v2767, %v2767
        %v2872 = vmul.f32 %v2768, %v2768
        %v2873 = vmul.f32 %v2769, %v2769
        %v2874 = vmul.f32 %v2770, %v2770
        %v2875 = vmul.f32 %v2771, %v2771
        %v2876 = vmul.f32 %v2772, %v2772
        %v2877 = vmul.f32 %v2773, %v2773
        %v2878 = vmul.f32 %v2774, %v2774
        %v2879 = vmul.f32 %v2775, %v2775
        %v2880 = vmul.f32 %v2776, %v2776
        %v2881 = vmul.f32 %v2777, %v2777
        %v2882 = vmul.f32 %v2778, %v2778
        %v2883 = vmul.f32 %v2779, %v2779
        %v2884 = vmul.f32 %v2780, %v2780
        %2885 = vadd.xlane.f32.xlu0 %v2853
        %v2886 = vpop.xlane.xlu0 %2885
        %2887 = vadd.xlane.f32.xlu0 %v2854
        %v2888 = vpop.xlane.xlu0 %2887
        %2889 = vadd.xlane.f32.xlu0 %v2855
        %v2890 = vpop.xlane.xlu0 %2889
        %2891 = vadd.xlane.f32.xlu0 %v2856
        %v2892 = vpop.xlane.xlu0 %2891
        %2893 = vadd.xlane.f32.xlu0 %v2857
        %v2894 = vpop.xlane.xlu0 %2893
        %2895 = vadd.xlane.f32.xlu0 %v2858
        %v2896 = vpop.xlane.xlu0 %2895
        %2897 = vadd.xlane.f32.xlu0 %v2859
        %v2898 = vpop.xlane.xlu0 %2897
        %2899 = vadd.xlane.f32.xlu0 %v2860
        %v2900 = vpop.xlane.xlu0 %2899
        %2901 = vadd.xlane.f32.xlu0 %v2861
        %v2902 = vpop.xlane.xlu0 %2901
        %2903 = vadd.xlane.f32.xlu0 %v2862
        %v2904 = vpop.xlane.xlu0 %2903
        %2905 = vadd.xlane.f32.xlu0 %v2863
        %v2906 = vpop.xlane.xlu0 %2905
        %2907 = vadd.xlane.f32.xlu0 %v2864
        %v2908 = vpop.xlane.xlu0 %2907
        %2909 = vadd.xlane.f32.xlu0 %v2865
        %v2910 = vpop.xlane.xlu0 %2909
        %2911 = vadd.xlane.f32.xlu0 %v2866
        %v2912 = vpop.xlane.xlu0 %2911
        %2913 = vadd.xlane.f32.xlu0 %v2867
        %v2914 = vpop.xlane.xlu0 %2913
        %2915 = vadd.xlane.f32.xlu0 %v2868
        %v2916 = vpop.xlane.xlu0 %2915
        %2917 = vadd.xlane.f32.xlu0 %v2869
        %v2918 = vpop.xlane.xlu0 %2917
        %2919 = vadd.xlane.f32.xlu0 %v2870
        %v2920 = vpop.xlane.xlu0 %2919
        %2921 = vadd.xlane.f32.xlu0 %v2871
        %v2922 = vpop.xlane.xlu0 %2921
        %2923 = vadd.xlane.f32.xlu0 %v2872
        %v2924 = vpop.xlane.xlu0 %2923
        %2925 = vadd.xlane.f32.xlu0 %v2873
        %v2926 = vpop.xlane.xlu0 %2925
        %2927 = vadd.xlane.f32.xlu0 %v2874
        %v2928 = vpop.xlane.xlu0 %2927
        %2929 = vadd.xlane.f32.xlu0 %v2875
        %v2930 = vpop.xlane.xlu0 %2929
        %2931 = vadd.xlane.f32.xlu0 %v2876
        %v2932 = vpop.xlane.xlu0 %2931
        %2933 = vadd.xlane.f32.xlu0 %v2877
        %v2934 = vpop.xlane.xlu0 %2933
        %2935 = vadd.xlane.f32.xlu0 %v2878
        %v2936 = vpop.xlane.xlu0 %2935
        %2937 = vadd.xlane.f32.xlu0 %v2879
        %v2938 = vpop.xlane.xlu0 %2937
        %2939 = vadd.xlane.f32.xlu0 %v2880
        %v2940 = vpop.xlane.xlu0 %2939
        %2941 = vadd.xlane.f32.xlu0 %v2881
        %v2942 = vpop.xlane.xlu0 %2941
        %2943 = vadd.xlane.f32.xlu0 %v2882
        %v2944 = vpop.xlane.xlu0 %2943
        %2945 = vadd.xlane.f32.xlu0 %v2883
        %v2946 = vpop.xlane.xlu0 %2945
        %2947 = vadd.xlane.f32.xlu0 %v2884
        %v2948 = vpop.xlane.xlu0 %2947
        %v2949 = vrcp.pop 128.0
        %v2950 = vmul.f32 128.0, %v2949
        %v2951 = vsub.f32 1.0, %v2950
        %v2952 = vmul.f32 %v2949, %v2951
        %v2953 = vadd.f32 %v2949, %v2952
        %vm2954 = vweird.f32 %v2949
        %v2955 = vsel %vm2954, %v2949, %v2953
        %v2956 = vmul.f32 %v2886, %v2955
        %v2957 = vmul.f32 %v2888, %v2955
        %v2958 = vmul.f32 %v2890, %v2955
        %v2959 = vmul.f32 %v2892, %v2955
        %v2960 = vmul.f32 %v2894, %v2955
        %v2961 = vmul.f32 %v2896, %v2955
        %v2962 = vmul.f32 %v2898, %v2955
        %v2963 = vmul.f32 %v2900, %v2955
        %v2964 = vmul.f32 %v2902, %v2955
        %v2965 = vmul.f32 %v2904, %v2955
        %v2966 = vmul.f32 %v2906, %v2955
        %v2967 = vmul.f32 %v2908, %v2955
        %v2968 = vmul.f32 %v2910, %v2955
        %v2969 = vmul.f32 %v2912, %v2955
        %v2970 = vmul.f32 %v2914, %v2955
        %v2971 = vmul.f32 %v2916, %v2955
        %v2972 = vmul.f32 %v2918, %v2955
        %v2973 = vmul.f32 %v2920, %v2955
        %v2974 = vmul.f32 %v2922, %v2955
        %v2975 = vmul.f32 %v2924, %v2955
        %v2976 = vmul.f32 %v2926, %v2955
        %v2977 = vmul.f32 %v2928, %v2955
        %v2978 = vmul.f32 %v2930, %v2955
        %v2979 = vmul.f32 %v2932, %v2955
        %v2980 = vmul.f32 %v2934, %v2955
        %v2981 = vmul.f32 %v2936, %v2955
        %v2982 = vmul.f32 %v2938, %v2955
        %v2983 = vmul.f32 %v2940, %v2955
        %v2984 = vmul.f32 %v2942, %v2955
        %v2985 = vmul.f32 %v2944, %v2955
        %v2986 = vmul.f32 %v2946, %v2955
        %v2987 = vmul.f32 %v2948, %v2955
        %v2988 = vadd.f32 %v2956, 1e-06
        %v2989 = vadd.f32 %v2957, 1e-06
        %v2990 = vadd.f32 %v2958, 1e-06
        %v2991 = vadd.f32 %v2959, 1e-06
        %v2992 = vadd.f32 %v2960, 1e-06
        %v2993 = vadd.f32 %v2961, 1e-06
        %v2994 = vadd.f32 %v2962, 1e-06
        %v2995 = vadd.f32 %v2963, 1e-06
        %v2996 = vadd.f32 %v2964, 1e-06
        %v2997 = vadd.f32 %v2965, 1e-06
        %v2998 = vadd.f32 %v2966, 1e-06
        %v2999 = vadd.f32 %v2967, 1e-06
        %v3000 = vadd.f32 %v2968, 1e-06
        %v3001 = vadd.f32 %v2969, 1e-06
        %v3002 = vadd.f32 %v2970, 1e-06
        %v3003 = vadd.f32 %v2971, 1e-06
        %v3004 = vadd.f32 %v2972, 1e-06
        %v3005 = vadd.f32 %v2973, 1e-06
        %v3006 = vadd.f32 %v2974, 1e-06
        %v3007 = vadd.f32 %v2975, 1e-06
        %v3008 = vadd.f32 %v2976, 1e-06
        %v3009 = vadd.f32 %v2977, 1e-06
        %v3010 = vadd.f32 %v2978, 1e-06
        %v3011 = vadd.f32 %v2979, 1e-06
        %v3012 = vadd.f32 %v2980, 1e-06
        %v3013 = vadd.f32 %v2981, 1e-06
        %v3014 = vadd.f32 %v2982, 1e-06
        %v3015 = vadd.f32 %v2983, 1e-06
        %v3016 = vadd.f32 %v2984, 1e-06
        %v3017 = vadd.f32 %v2985, 1e-06
        %v3018 = vadd.f32 %v2986, 1e-06
        %v3019 = vadd.f32 %v2987, 1e-06
        %v3020 = vrsqrt.pop %v2988
        %v3021 = vmul.f32 %v3020, %v2988
        %v3022 = vmul.f32 %v3021, %v3020
        %v3023 = vmul.f32 0.5, %v3022
        %v3024 = vsub.f32 1.5, %v3023
        %v3025 = vmul.f32 %v3020, %v3024
        %vm3026 = vweird.f32 %v2988
        %vm3027 = vweird.f32 %v3020
        %vm3028 = vmor %vm3026, %vm3027
        %v3029 = vsel %vm3028, %v3020, %v3025
        %v3030 = vrsqrt.pop %v2989
        %v3031 = vmul.f32 %v3030, %v2989
        %v3032 = vmul.f32 %v3031, %v3030
        %v3033 = vmul.f32 0.5, %v3032
        %v3034 = vsub.f32 1.5, %v3033
        %v3035 = vmul.f32 %v3030, %v3034
        %vm3036 = vweird.f32 %v2989
        %vm3037 = vweird.f32 %v3030
        %vm3038 = vmor %vm3036, %vm3037
        %v3039 = vsel %vm3038, %v3030, %v3035
        %v3040 = vrsqrt.pop %v2990
        %v3041 = vmul.f32 %v3040, %v2990
        %v3042 = vmul.f32 %v3041, %v3040
        %v3043 = vmul.f32 0.5, %v3042
        %v3044 = vsub.f32 1.5, %v3043
        %v3045 = vmul.f32 %v3040, %v3044
        %vm3046 = vweird.f32 %v2990
        %vm3047 = vweird.f32 %v3040
        %vm3048 = vmor %vm3046, %vm3047
        %v3049 = vsel %vm3048, %v3040, %v3045
        %v3050 = vrsqrt.pop %v2991
        %v3051 = vmul.f32 %v3050, %v2991
        %v3052 = vmul.f32 %v3051, %v3050
        %v3053 = vmul.f32 0.5, %v3052
        %v3054 = vsub.f32 1.5, %v3053
        %v3055 = vmul.f32 %v3050, %v3054
        %vm3056 = vweird.f32 %v2991
        %vm3057 = vweird.f32 %v3050
        %vm3058 = vmor %vm3056, %vm3057
        %v3059 = vsel %vm3058, %v3050, %v3055
        %v3060 = vrsqrt.pop %v2992
        %v3061 = vmul.f32 %v3060, %v2992
        %v3062 = vmul.f32 %v3061, %v3060
        %v3063 = vmul.f32 0.5, %v3062
        %v3064 = vsub.f32 1.5, %v3063
        %v3065 = vmul.f32 %v3060, %v3064
        %vm3066 = vweird.f32 %v2992
        %vm3067 = vweird.f32 %v3060
        %vm3068 = vmor %vm3066, %vm3067
        %v3069 = vsel %vm3068, %v3060, %v3065
        %v3070 = vrsqrt.pop %v2993
        %v3071 = vmul.f32 %v3070, %v2993
        %v3072 = vmul.f32 %v3071, %v3070
        %v3073 = vmul.f32 0.5, %v3072
        %v3074 = vsub.f32 1.5, %v3073
        %v3075 = vmul.f32 %v3070, %v3074
        %vm3076 = vweird.f32 %v2993
        %vm3077 = vweird.f32 %v3070
        %vm3078 = vmor %vm3076, %vm3077
        %v3079 = vsel %vm3078, %v3070, %v3075
        %v3080 = vrsqrt.pop %v2994
        %v3081 = vmul.f32 %v3080, %v2994
        %v3082 = vmul.f32 %v3081, %v3080
        %v3083 = vmul.f32 0.5, %v3082
        %v3084 = vsub.f32 1.5, %v3083
        %v3085 = vmul.f32 %v3080, %v3084
        %vm3086 = vweird.f32 %v2994
        %vm3087 = vweird.f32 %v3080
        %vm3088 = vmor %vm3086, %vm3087
        %v3089 = vsel %vm3088, %v3080, %v3085
        %v3090 = vrsqrt.pop %v2995
        %v3091 = vmul.f32 %v3090, %v2995
        %v3092 = vmul.f32 %v3091, %v3090
        %v3093 = vmul.f32 0.5, %v3092
        %v3094 = vsub.f32 1.5, %v3093
        %v3095 = vmul.f32 %v3090, %v3094
        %vm3096 = vweird.f32 %v2995
        %vm3097 = vweird.f32 %v3090
        %vm3098 = vmor %vm3096, %vm3097
        %v3099 = vsel %vm3098, %v3090, %v3095
        %v3100 = vrsqrt.pop %v2996
        %v3101 = vmul.f32 %v3100, %v2996
        %v3102 = vmul.f32 %v3101, %v3100
        %v3103 = vmul.f32 0.5, %v3102
        %v3104 = vsub.f32 1.5, %v3103
        %v3105 = vmul.f32 %v3100, %v3104
        %vm3106 = vweird.f32 %v2996
        %vm3107 = vweird.f32 %v3100
        %vm3108 = vmor %vm3106, %vm3107
        %v3109 = vsel %vm3108, %v3100, %v3105
        %v3110 = vrsqrt.pop %v2997
        %v3111 = vmul.f32 %v3110, %v2997
        %v3112 = vmul.f32 %v3111, %v3110
        %v3113 = vmul.f32 0.5, %v3112
        %v3114 = vsub.f32 1.5, %v3113
        %v3115 = vmul.f32 %v3110, %v3114
        %vm3116 = vweird.f32 %v2997
        %vm3117 = vweird.f32 %v3110
        %vm3118 = vmor %vm3116, %vm3117
        %v3119 = vsel %vm3118, %v3110, %v3115
        %v3120 = vrsqrt.pop %v2998
        %v3121 = vmul.f32 %v3120, %v2998
        %v3122 = vmul.f32 %v3121, %v3120
        %v3123 = vmul.f32 0.5, %v3122
        %v3124 = vsub.f32 1.5, %v3123
        %v3125 = vmul.f32 %v3120, %v3124
        %vm3126 = vweird.f32 %v2998
        %vm3127 = vweird.f32 %v3120
        %vm3128 = vmor %vm3126, %vm3127
        %v3129 = vsel %vm3128, %v3120, %v3125
        %v3130 = vrsqrt.pop %v2999
        %v3131 = vmul.f32 %v3130, %v2999
        %v3132 = vmul.f32 %v3131, %v3130
        %v3133 = vmul.f32 0.5, %v3132
        %v3134 = vsub.f32 1.5, %v3133
        %v3135 = vmul.f32 %v3130, %v3134
        %vm3136 = vweird.f32 %v2999
        %vm3137 = vweird.f32 %v3130
        %vm3138 = vmor %vm3136, %vm3137
        %v3139 = vsel %vm3138, %v3130, %v3135
        %v3140 = vrsqrt.pop %v3000
        %v3141 = vmul.f32 %v3140, %v3000
        %v3142 = vmul.f32 %v3141, %v3140
        %v3143 = vmul.f32 0.5, %v3142
        %v3144 = vsub.f32 1.5, %v3143
        %v3145 = vmul.f32 %v3140, %v3144
        %vm3146 = vweird.f32 %v3000
        %vm3147 = vweird.f32 %v3140
        %vm3148 = vmor %vm3146, %vm3147
        %v3149 = vsel %vm3148, %v3140, %v3145
        %v3150 = vrsqrt.pop %v3001
        %v3151 = vmul.f32 %v3150, %v3001
        %v3152 = vmul.f32 %v3151, %v3150
        %v3153 = vmul.f32 0.5, %v3152
        %v3154 = vsub.f32 1.5, %v3153
        %v3155 = vmul.f32 %v3150, %v3154
        %vm3156 = vweird.f32 %v3001
        %vm3157 = vweird.f32 %v3150
        %vm3158 = vmor %vm3156, %vm3157
        %v3159 = vsel %vm3158, %v3150, %v3155
        %v3160 = vrsqrt.pop %v3002
        %v3161 = vmul.f32 %v3160, %v3002
        %v3162 = vmul.f32 %v3161, %v3160
        %v3163 = vmul.f32 0.5, %v3162
        %v3164 = vsub.f32 1.5, %v3163
        %v3165 = vmul.f32 %v3160, %v3164
        %vm3166 = vweird.f32 %v3002
        %vm3167 = vweird.f32 %v3160
        %vm3168 = vmor %vm3166, %vm3167
        %v3169 = vsel %vm3168, %v3160, %v3165
        %v3170 = vrsqrt.pop %v3003
        %v3171 = vmul.f32 %v3170, %v3003
        %v3172 = vmul.f32 %v3171, %v3170
        %v3173 = vmul.f32 0.5, %v3172
        %v3174 = vsub.f32 1.5, %v3173
        %v3175 = vmul.f32 %v3170, %v3174
        %vm3176 = vweird.f32 %v3003
        %vm3177 = vweird.f32 %v3170
        %vm3178 = vmor %vm3176, %vm3177
        %v3179 = vsel %vm3178, %v3170, %v3175
        %v3180 = vrsqrt.pop %v3004
        %v3181 = vmul.f32 %v3180, %v3004
        %v3182 = vmul.f32 %v3181, %v3180
        %v3183 = vmul.f32 0.5, %v3182
        %v3184 = vsub.f32 1.5, %v3183
        %v3185 = vmul.f32 %v3180, %v3184
        %vm3186 = vweird.f32 %v3004
        %vm3187 = vweird.f32 %v3180
        %vm3188 = vmor %vm3186, %vm3187
        %v3189 = vsel %vm3188, %v3180, %v3185
        %v3190 = vrsqrt.pop %v3005
        %v3191 = vmul.f32 %v3190, %v3005
        %v3192 = vmul.f32 %v3191, %v3190
        %v3193 = vmul.f32 0.5, %v3192
        %v3194 = vsub.f32 1.5, %v3193
        %v3195 = vmul.f32 %v3190, %v3194
        %vm3196 = vweird.f32 %v3005
        %vm3197 = vweird.f32 %v3190
        %vm3198 = vmor %vm3196, %vm3197
        %v3199 = vsel %vm3198, %v3190, %v3195
        %v3200 = vrsqrt.pop %v3006
        %v3201 = vmul.f32 %v3200, %v3006
        %v3202 = vmul.f32 %v3201, %v3200
        %v3203 = vmul.f32 0.5, %v3202
        %v3204 = vsub.f32 1.5, %v3203
        %v3205 = vmul.f32 %v3200, %v3204
        %vm3206 = vweird.f32 %v3006
        %vm3207 = vweird.f32 %v3200
        %vm3208 = vmor %vm3206, %vm3207
        %v3209 = vsel %vm3208, %v3200, %v3205
        %v3210 = vrsqrt.pop %v3007
        %v3211 = vmul.f32 %v3210, %v3007
        %v3212 = vmul.f32 %v3211, %v3210
        %v3213 = vmul.f32 0.5, %v3212
        %v3214 = vsub.f32 1.5, %v3213
        %v3215 = vmul.f32 %v3210, %v3214
        %vm3216 = vweird.f32 %v3007
        %vm3217 = vweird.f32 %v3210
        %vm3218 = vmor %vm3216, %vm3217
        %v3219 = vsel %vm3218, %v3210, %v3215
        %v3220 = vrsqrt.pop %v3008
        %v3221 = vmul.f32 %v3220, %v3008
        %v3222 = vmul.f32 %v3221, %v3220
        %v3223 = vmul.f32 0.5, %v3222
        %v3224 = vsub.f32 1.5, %v3223
        %v3225 = vmul.f32 %v3220, %v3224
        %vm3226 = vweird.f32 %v3008
        %vm3227 = vweird.f32 %v3220
        %vm3228 = vmor %vm3226, %vm3227
        %v3229 = vsel %vm3228, %v3220, %v3225
        %v3230 = vrsqrt.pop %v3009
        %v3231 = vmul.f32 %v3230, %v3009
        %v3232 = vmul.f32 %v3231, %v3230
        %v3233 = vmul.f32 0.5, %v3232
        %v3234 = vsub.f32 1.5, %v3233
        %v3235 = vmul.f32 %v3230, %v3234
        %vm3236 = vweird.f32 %v3009
        %vm3237 = vweird.f32 %v3230
        %vm3238 = vmor %vm3236, %vm3237
        %v3239 = vsel %vm3238, %v3230, %v3235
        %v3240 = vrsqrt.pop %v3010
        %v3241 = vmul.f32 %v3240, %v3010
        %v3242 = vmul.f32 %v3241, %v3240
        %v3243 = vmul.f32 0.5, %v3242
        %v3244 = vsub.f32 1.5, %v3243
        %v3245 = vmul.f32 %v3240, %v3244
        %vm3246 = vweird.f32 %v3010
        %vm3247 = vweird.f32 %v3240
        %vm3248 = vmor %vm3246, %vm3247
        %v3249 = vsel %vm3248, %v3240, %v3245
        %v3250 = vrsqrt.pop %v3011
        %v3251 = vmul.f32 %v3250, %v3011
        %v3252 = vmul.f32 %v3251, %v3250
        %v3253 = vmul.f32 0.5, %v3252
        %v3254 = vsub.f32 1.5, %v3253
        %v3255 = vmul.f32 %v3250, %v3254
        %vm3256 = vweird.f32 %v3011
        %vm3257 = vweird.f32 %v3250
        %vm3258 = vmor %vm3256, %vm3257
        %v3259 = vsel %vm3258, %v3250, %v3255
        %v3260 = vrsqrt.pop %v3012
        %v3261 = vmul.f32 %v3260, %v3012
        %v3262 = vmul.f32 %v3261, %v3260
        %v3263 = vmul.f32 0.5, %v3262
        %v3264 = vsub.f32 1.5, %v3263
        %v3265 = vmul.f32 %v3260, %v3264
        %vm3266 = vweird.f32 %v3012
        %vm3267 = vweird.f32 %v3260
        %vm3268 = vmor %vm3266, %vm3267
        %v3269 = vsel %vm3268, %v3260, %v3265
        %v3270 = vrsqrt.pop %v3013
        %v3271 = vmul.f32 %v3270, %v3013
        %v3272 = vmul.f32 %v3271, %v3270
        %v3273 = vmul.f32 0.5, %v3272
        %v3274 = vsub.f32 1.5, %v3273
        %v3275 = vmul.f32 %v3270, %v3274
        %vm3276 = vweird.f32 %v3013
        %vm3277 = vweird.f32 %v3270
        %vm3278 = vmor %vm3276, %vm3277
        %v3279 = vsel %vm3278, %v3270, %v3275
        %v3280 = vrsqrt.pop %v3014
        %v3281 = vmul.f32 %v3280, %v3014
        %v3282 = vmul.f32 %v3281, %v3280
        %v3283 = vmul.f32 0.5, %v3282
        %v3284 = vsub.f32 1.5, %v3283
        %v3285 = vmul.f32 %v3280, %v3284
        %vm3286 = vweird.f32 %v3014
        %vm3287 = vweird.f32 %v3280
        %vm3288 = vmor %vm3286, %vm3287
        %v3289 = vsel %vm3288, %v3280, %v3285
        %v3290 = vrsqrt.pop %v3015
        %v3291 = vmul.f32 %v3290, %v3015
        %v3292 = vmul.f32 %v3291, %v3290
        %v3293 = vmul.f32 0.5, %v3292
        %v3294 = vsub.f32 1.5, %v3293
        %v3295 = vmul.f32 %v3290, %v3294
        %vm3296 = vweird.f32 %v3015
        %vm3297 = vweird.f32 %v3290
        %vm3298 = vmor %vm3296, %vm3297
        %v3299 = vsel %vm3298, %v3290, %v3295
        %v3300 = vrsqrt.pop %v3016
        %v3301 = vmul.f32 %v3300, %v3016
        %v3302 = vmul.f32 %v3301, %v3300
        %v3303 = vmul.f32 0.5, %v3302
        %v3304 = vsub.f32 1.5, %v3303
        %v3305 = vmul.f32 %v3300, %v3304
        %vm3306 = vweird.f32 %v3016
        %vm3307 = vweird.f32 %v3300
        %vm3308 = vmor %vm3306, %vm3307
        %v3309 = vsel %vm3308, %v3300, %v3305
        %v3310 = vrsqrt.pop %v3017
        %v3311 = vmul.f32 %v3310, %v3017
        %v3312 = vmul.f32 %v3311, %v3310
        %v3313 = vmul.f32 0.5, %v3312
        %v3314 = vsub.f32 1.5, %v3313
        %v3315 = vmul.f32 %v3310, %v3314
        %vm3316 = vweird.f32 %v3017
        %vm3317 = vweird.f32 %v3310
        %vm3318 = vmor %vm3316, %vm3317
        %v3319 = vsel %vm3318, %v3310, %v3315
        %v3320 = vrsqrt.pop %v3018
        %v3321 = vmul.f32 %v3320, %v3018
        %v3322 = vmul.f32 %v3321, %v3320
        %v3323 = vmul.f32 0.5, %v3322
        %v3324 = vsub.f32 1.5, %v3323
        %v3325 = vmul.f32 %v3320, %v3324
        %vm3326 = vweird.f32 %v3018
        %vm3327 = vweird.f32 %v3320
        %vm3328 = vmor %vm3326, %vm3327
        %v3329 = vsel %vm3328, %v3320, %v3325
        %v3330 = vrsqrt.pop %v3019
        %v3331 = vmul.f32 %v3330, %v3019
        %v3332 = vmul.f32 %v3331, %v3330
        %v3333 = vmul.f32 0.5, %v3332
        %v3334 = vsub.f32 1.5, %v3333
        %v3335 = vmul.f32 %v3330, %v3334
        %vm3336 = vweird.f32 %v3019
        %vm3337 = vweird.f32 %v3330
        %vm3338 = vmor %vm3336, %vm3337
        %v3339 = vsel %vm3338, %v3330, %v3335
        %v3340 = vmul.f32 %v2749, %v3029
        %v3341 = vmul.f32 %v2750, %v3039
        %v3342 = vmul.f32 %v2751, %v3049
        %v3343 = vmul.f32 %v2752, %v3059
        %v3344 = vmul.f32 %v2753, %v3069
        %v3345 = vmul.f32 %v2754, %v3079
        %v3346 = vmul.f32 %v2755, %v3089
        %v3347 = vmul.f32 %v2756, %v3099
        %v3348 = vmul.f32 %v2757, %v3109
        %v3349 = vmul.f32 %v2758, %v3119
        %v3350 = vmul.f32 %v2759, %v3129
        %v3351 = vmul.f32 %v2760, %v3139
        %v3352 = vmul.f32 %v2761, %v3149
        %v3353 = vmul.f32 %v2762, %v3159
        %v3354 = vmul.f32 %v2763, %v3169
        %v3355 = vmul.f32 %v2764, %v3179
        %v3356 = vmul.f32 %v2765, %v3189
        %v3357 = vmul.f32 %v2766, %v3199
        %v3358 = vmul.f32 %v2767, %v3209
        %v3359 = vmul.f32 %v2768, %v3219
        %v3360 = vmul.f32 %v2769, %v3229
        %v3361 = vmul.f32 %v2770, %v3239
        %v3362 = vmul.f32 %v2771, %v3249
        %v3363 = vmul.f32 %v2772, %v3259
        %v3364 = vmul.f32 %v2773, %v3269
        %v3365 = vmul.f32 %v2774, %v3279
        %v3366 = vmul.f32 %v2775, %v3289
        %v3367 = vmul.f32 %v2776, %v3299
        %v3368 = vmul.f32 %v2777, %v3309
        %v3369 = vmul.f32 %v2778, %v3319
        %v3370 = vmul.f32 %v2779, %v3329
        %v3371 = vmul.f32 %v2780, %v3339
        %v3372 = vmul.f32 %v2785, %v2785
        %v3373 = vmul.f32 %v2786, %v2786
        %v3374 = vmul.f32 %v2787, %v2787
        %v3375 = vmul.f32 %v2788, %v2788
        %v3376 = vmul.f32 %v2789, %v2789
        %v3377 = vmul.f32 %v2790, %v2790
        %v3378 = vmul.f32 %v2791, %v2791
        %v3379 = vmul.f32 %v2792, %v2792
        %v3380 = vmul.f32 %v2793, %v2793
        %v3381 = vmul.f32 %v2794, %v2794
        %v3382 = vmul.f32 %v2795, %v2795
        %v3383 = vmul.f32 %v2796, %v2796
        %v3384 = vmul.f32 %v2797, %v2797
        %v3385 = vmul.f32 %v2798, %v2798
        %v3386 = vmul.f32 %v2799, %v2799
        %v3387 = vmul.f32 %v2800, %v2800
        %v3388 = vmul.f32 %v2801, %v2801
        %v3389 = vmul.f32 %v2802, %v2802
        %v3390 = vmul.f32 %v2803, %v2803
        %v3391 = vmul.f32 %v2804, %v2804
        %v3392 = vmul.f32 %v2805, %v2805
        %v3393 = vmul.f32 %v2806, %v2806
        %v3394 = vmul.f32 %v2807, %v2807
        %v3395 = vmul.f32 %v2808, %v2808
        %v3396 = vmul.f32 %v2809, %v2809
        %v3397 = vmul.f32 %v2810, %v2810
        %v3398 = vmul.f32 %v2811, %v2811
        %v3399 = vmul.f32 %v2812, %v2812
        %v3400 = vmul.f32 %v2813, %v2813
        %v3401 = vmul.f32 %v2814, %v2814
        %v3402 = vmul.f32 %v2815, %v2815
        %v3403 = vmul.f32 %v2816, %v2816
        %3404 = vadd.xlane.f32.xlu0 %v3372
        %v3405 = vpop.xlane.xlu0 %3404
        %3406 = vadd.xlane.f32.xlu0 %v3373
        %v3407 = vpop.xlane.xlu0 %3406
        %3408 = vadd.xlane.f32.xlu0 %v3374
        %v3409 = vpop.xlane.xlu0 %3408
        %3410 = vadd.xlane.f32.xlu0 %v3375
        %v3411 = vpop.xlane.xlu0 %3410
        %3412 = vadd.xlane.f32.xlu0 %v3376
        %v3413 = vpop.xlane.xlu0 %3412
        %3414 = vadd.xlane.f32.xlu0 %v3377
        %v3415 = vpop.xlane.xlu0 %3414
        %3416 = vadd.xlane.f32.xlu0 %v3378
        %v3417 = vpop.xlane.xlu0 %3416
        %3418 = vadd.xlane.f32.xlu0 %v3379
        %v3419 = vpop.xlane.xlu0 %3418
        %3420 = vadd.xlane.f32.xlu0 %v3380
        %v3421 = vpop.xlane.xlu0 %3420
        %3422 = vadd.xlane.f32.xlu0 %v3381
        %v3423 = vpop.xlane.xlu0 %3422
        %3424 = vadd.xlane.f32.xlu0 %v3382
        %v3425 = vpop.xlane.xlu0 %3424
        %3426 = vadd.xlane.f32.xlu0 %v3383
        %v3427 = vpop.xlane.xlu0 %3426
        %3428 = vadd.xlane.f32.xlu0 %v3384
        %v3429 = vpop.xlane.xlu0 %3428
        %3430 = vadd.xlane.f32.xlu0 %v3385
        %v3431 = vpop.xlane.xlu0 %3430
        %3432 = vadd.xlane.f32.xlu0 %v3386
        %v3433 = vpop.xlane.xlu0 %3432
        %3434 = vadd.xlane.f32.xlu0 %v3387
        %v3435 = vpop.xlane.xlu0 %3434
        %3436 = vadd.xlane.f32.xlu0 %v3388
        %v3437 = vpop.xlane.xlu0 %3436
        %3438 = vadd.xlane.f32.xlu0 %v3389
        %v3439 = vpop.xlane.xlu0 %3438
        %3440 = vadd.xlane.f32.xlu0 %v3390
        %v3441 = vpop.xlane.xlu0 %3440
        %3442 = vadd.xlane.f32.xlu0 %v3391
        %v3443 = vpop.xlane.xlu0 %3442
        %3444 = vadd.xlane.f32.xlu0 %v3392
        %v3445 = vpop.xlane.xlu0 %3444
        %3446 = vadd.xlane.f32.xlu0 %v3393
        %v3447 = vpop.xlane.xlu0 %3446
        %3448 = vadd.xlane.f32.xlu0 %v3394
        %v3449 = vpop.xlane.xlu0 %3448
        %3450 = vadd.xlane.f32.xlu0 %v3395
        %v3451 = vpop.xlane.xlu0 %3450
        %3452 = vadd.xlane.f32.xlu0 %v3396
        %v3453 = vpop.xlane.xlu0 %3452
        %3454 = vadd.xlane.f32.xlu0 %v3397
        %v3455 = vpop.xlane.xlu0 %3454
        %3456 = vadd.xlane.f32.xlu0 %v3398
        %v3457 = vpop.xlane.xlu0 %3456
        %3458 = vadd.xlane.f32.xlu0 %v3399
        %v3459 = vpop.xlane.xlu0 %3458
        %3460 = vadd.xlane.f32.xlu0 %v3400
        %v3461 = vpop.xlane.xlu0 %3460
        %3462 = vadd.xlane.f32.xlu0 %v3401
        %v3463 = vpop.xlane.xlu0 %3462
        %3464 = vadd.xlane.f32.xlu0 %v3402
        %v3465 = vpop.xlane.xlu0 %3464
        %3466 = vadd.xlane.f32.xlu0 %v3403
        %v3467 = vpop.xlane.xlu0 %3466
        %v3468 = vmul.f32 %v3405, %v2955
        %v3469 = vmul.f32 %v3407, %v2955
        %v3470 = vmul.f32 %v3409, %v2955
        %v3471 = vmul.f32 %v3411, %v2955
        %v3472 = vmul.f32 %v3413, %v2955
        %v3473 = vmul.f32 %v3415, %v2955
        %v3474 = vmul.f32 %v3417, %v2955
        %v3475 = vmul.f32 %v3419, %v2955
        %v3476 = vmul.f32 %v3421, %v2955
        %v3477 = vmul.f32 %v3423, %v2955
        %v3478 = vmul.f32 %v3425, %v2955
        %v3479 = vmul.f32 %v3427, %v2955
        %v3480 = vmul.f32 %v3429, %v2955
        %v3481 = vmul.f32 %v3431, %v2955
        %v3482 = vmul.f32 %v3433, %v2955
        %v3483 = vmul.f32 %v3435, %v2955
        %v3484 = vmul.f32 %v3437, %v2955
        %v3485 = vmul.f32 %v3439, %v2955
        %v3486 = vmul.f32 %v3441, %v2955
        %v3487 = vmul.f32 %v3443, %v2955
        %v3488 = vmul.f32 %v3445, %v2955
        %v3489 = vmul.f32 %v3447, %v2955
        %v3490 = vmul.f32 %v3449, %v2955
        %v3491 = vmul.f32 %v3451, %v2955
        %v3492 = vmul.f32 %v3453, %v2955
        %v3493 = vmul.f32 %v3455, %v2955
        %v3494 = vmul.f32 %v3457, %v2955
        %v3495 = vmul.f32 %v3459, %v2955
        %v3496 = vmul.f32 %v3461, %v2955
        %v3497 = vmul.f32 %v3463, %v2955
        %v3498 = vmul.f32 %v3465, %v2955
        %v3499 = vmul.f32 %v3467, %v2955
        %v3500 = vadd.f32 %v3468, 1e-06
        %v3501 = vadd.f32 %v3469, 1e-06
        %v3502 = vadd.f32 %v3470, 1e-06
        %v3503 = vadd.f32 %v3471, 1e-06
        %v3504 = vadd.f32 %v3472, 1e-06
        %v3505 = vadd.f32 %v3473, 1e-06
        %v3506 = vadd.f32 %v3474, 1e-06
        %v3507 = vadd.f32 %v3475, 1e-06
        %v3508 = vadd.f32 %v3476, 1e-06
        %v3509 = vadd.f32 %v3477, 1e-06
        %v3510 = vadd.f32 %v3478, 1e-06
        %v3511 = vadd.f32 %v3479, 1e-06
        %v3512 = vadd.f32 %v3480, 1e-06
        %v3513 = vadd.f32 %v3481, 1e-06
        %v3514 = vadd.f32 %v3482, 1e-06
        %v3515 = vadd.f32 %v3483, 1e-06
        %v3516 = vadd.f32 %v3484, 1e-06
        %v3517 = vadd.f32 %v3485, 1e-06
        %v3518 = vadd.f32 %v3486, 1e-06
        %v3519 = vadd.f32 %v3487, 1e-06
        %v3520 = vadd.f32 %v3488, 1e-06
        %v3521 = vadd.f32 %v3489, 1e-06
        %v3522 = vadd.f32 %v3490, 1e-06
        %v3523 = vadd.f32 %v3491, 1e-06
        %v3524 = vadd.f32 %v3492, 1e-06
        %v3525 = vadd.f32 %v3493, 1e-06
        %v3526 = vadd.f32 %v3494, 1e-06
        %v3527 = vadd.f32 %v3495, 1e-06
        %v3528 = vadd.f32 %v3496, 1e-06
        %v3529 = vadd.f32 %v3497, 1e-06
        %v3530 = vadd.f32 %v3498, 1e-06
        %v3531 = vadd.f32 %v3499, 1e-06
        %v3532 = vrsqrt.pop %v3500
        %v3533 = vmul.f32 %v3532, %v3500
        %v3534 = vmul.f32 %v3533, %v3532
        %v3535 = vmul.f32 0.5, %v3534
        %v3536 = vsub.f32 1.5, %v3535
        %v3537 = vmul.f32 %v3532, %v3536
        %vm3538 = vweird.f32 %v3500
        %vm3539 = vweird.f32 %v3532
        %vm3540 = vmor %vm3538, %vm3539
        %v3541 = vsel %vm3540, %v3532, %v3537
        %v3542 = vrsqrt.pop %v3501
        %v3543 = vmul.f32 %v3542, %v3501
        %v3544 = vmul.f32 %v3543, %v3542
        %v3545 = vmul.f32 0.5, %v3544
        %v3546 = vsub.f32 1.5, %v3545
        %v3547 = vmul.f32 %v3542, %v3546
        %vm3548 = vweird.f32 %v3501
        %vm3549 = vweird.f32 %v3542
        %vm3550 = vmor %vm3548, %vm3549
        %v3551 = vsel %vm3550, %v3542, %v3547
        %v3552 = vrsqrt.pop %v3502
        %v3553 = vmul.f32 %v3552, %v3502
        %v3554 = vmul.f32 %v3553, %v3552
        %v3555 = vmul.f32 0.5, %v3554
        %v3556 = vsub.f32 1.5, %v3555
        %v3557 = vmul.f32 %v3552, %v3556
        %vm3558 = vweird.f32 %v3502
        %vm3559 = vweird.f32 %v3552
        %vm3560 = vmor %vm3558, %vm3559
        %v3561 = vsel %vm3560, %v3552, %v3557
        %v3562 = vrsqrt.pop %v3503
        %v3563 = vmul.f32 %v3562, %v3503
        %v3564 = vmul.f32 %v3563, %v3562
        %v3565 = vmul.f32 0.5, %v3564
        %v3566 = vsub.f32 1.5, %v3565
        %v3567 = vmul.f32 %v3562, %v3566
        %vm3568 = vweird.f32 %v3503
        %vm3569 = vweird.f32 %v3562
        %vm3570 = vmor %vm3568, %vm3569
        %v3571 = vsel %vm3570, %v3562, %v3567
        %v3572 = vrsqrt.pop %v3504
        %v3573 = vmul.f32 %v3572, %v3504
        %v3574 = vmul.f32 %v3573, %v3572
        %v3575 = vmul.f32 0.5, %v3574
        %v3576 = vsub.f32 1.5, %v3575
        %v3577 = vmul.f32 %v3572, %v3576
        %vm3578 = vweird.f32 %v3504
        %vm3579 = vweird.f32 %v3572
        %vm3580 = vmor %vm3578, %vm3579
        %v3581 = vsel %vm3580, %v3572, %v3577
        %v3582 = vrsqrt.pop %v3505
        %v3583 = vmul.f32 %v3582, %v3505
        %v3584 = vmul.f32 %v3583, %v3582
        %v3585 = vmul.f32 0.5, %v3584
        %v3586 = vsub.f32 1.5, %v3585
        %v3587 = vmul.f32 %v3582, %v3586
        %vm3588 = vweird.f32 %v3505
        %vm3589 = vweird.f32 %v3582
        %vm3590 = vmor %vm3588, %vm3589
        %v3591 = vsel %vm3590, %v3582, %v3587
        %v3592 = vrsqrt.pop %v3506
        %v3593 = vmul.f32 %v3592, %v3506
        %v3594 = vmul.f32 %v3593, %v3592
        %v3595 = vmul.f32 0.5, %v3594
        %v3596 = vsub.f32 1.5, %v3595
        %v3597 = vmul.f32 %v3592, %v3596
        %vm3598 = vweird.f32 %v3506
        %vm3599 = vweird.f32 %v3592
        %vm3600 = vmor %vm3598, %vm3599
        %v3601 = vsel %vm3600, %v3592, %v3597
        %v3602 = vrsqrt.pop %v3507
        %v3603 = vmul.f32 %v3602, %v3507
        %v3604 = vmul.f32 %v3603, %v3602
        %v3605 = vmul.f32 0.5, %v3604
        %v3606 = vsub.f32 1.5, %v3605
        %v3607 = vmul.f32 %v3602, %v3606
        %vm3608 = vweird.f32 %v3507
        %vm3609 = vweird.f32 %v3602
        %vm3610 = vmor %vm3608, %vm3609
        %v3611 = vsel %vm3610, %v3602, %v3607
        %v3612 = vrsqrt.pop %v3508
        %v3613 = vmul.f32 %v3612, %v3508
        %v3614 = vmul.f32 %v3613, %v3612
        %v3615 = vmul.f32 0.5, %v3614
        %v3616 = vsub.f32 1.5, %v3615
        %v3617 = vmul.f32 %v3612, %v3616
        %vm3618 = vweird.f32 %v3508
        %vm3619 = vweird.f32 %v3612
        %vm3620 = vmor %vm3618, %vm3619
        %v3621 = vsel %vm3620, %v3612, %v3617
        %v3622 = vrsqrt.pop %v3509
        %v3623 = vmul.f32 %v3622, %v3509
        %v3624 = vmul.f32 %v3623, %v3622
        %v3625 = vmul.f32 0.5, %v3624
        %v3626 = vsub.f32 1.5, %v3625
        %v3627 = vmul.f32 %v3622, %v3626
        %vm3628 = vweird.f32 %v3509
        %vm3629 = vweird.f32 %v3622
        %vm3630 = vmor %vm3628, %vm3629
        %v3631 = vsel %vm3630, %v3622, %v3627
        %v3632 = vrsqrt.pop %v3510
        %v3633 = vmul.f32 %v3632, %v3510
        %v3634 = vmul.f32 %v3633, %v3632
        %v3635 = vmul.f32 0.5, %v3634
        %v3636 = vsub.f32 1.5, %v3635
        %v3637 = vmul.f32 %v3632, %v3636
        %vm3638 = vweird.f32 %v3510
        %vm3639 = vweird.f32 %v3632
        %vm3640 = vmor %vm3638, %vm3639
        %v3641 = vsel %vm3640, %v3632, %v3637
        %v3642 = vrsqrt.pop %v3511
        %v3643 = vmul.f32 %v3642, %v3511
        %v3644 = vmul.f32 %v3643, %v3642
        %v3645 = vmul.f32 0.5, %v3644
        %v3646 = vsub.f32 1.5, %v3645
        %v3647 = vmul.f32 %v3642, %v3646
        %vm3648 = vweird.f32 %v3511
        %vm3649 = vweird.f32 %v3642
        %vm3650 = vmor %vm3648, %vm3649
        %v3651 = vsel %vm3650, %v3642, %v3647
        %v3652 = vrsqrt.pop %v3512
        %v3653 = vmul.f32 %v3652, %v3512
        %v3654 = vmul.f32 %v3653, %v3652
        %v3655 = vmul.f32 0.5, %v3654
        %v3656 = vsub.f32 1.5, %v3655
        %v3657 = vmul.f32 %v3652, %v3656
        %vm3658 = vweird.f32 %v3512
        %vm3659 = vweird.f32 %v3652
        %vm3660 = vmor %vm3658, %vm3659
        %v3661 = vsel %vm3660, %v3652, %v3657
        %v3662 = vrsqrt.pop %v3513
        %v3663 = vmul.f32 %v3662, %v3513
        %v3664 = vmul.f32 %v3663, %v3662
        %v3665 = vmul.f32 0.5, %v3664
        %v3666 = vsub.f32 1.5, %v3665
        %v3667 = vmul.f32 %v3662, %v3666
        %vm3668 = vweird.f32 %v3513
        %vm3669 = vweird.f32 %v3662
        %vm3670 = vmor %vm3668, %vm3669
        %v3671 = vsel %vm3670, %v3662, %v3667
        %v3672 = vrsqrt.pop %v3514
        %v3673 = vmul.f32 %v3672, %v3514
        %v3674 = vmul.f32 %v3673, %v3672
        %v3675 = vmul.f32 0.5, %v3674
        %v3676 = vsub.f32 1.5, %v3675
        %v3677 = vmul.f32 %v3672, %v3676
        %vm3678 = vweird.f32 %v3514
        %vm3679 = vweird.f32 %v3672
        %vm3680 = vmor %vm3678, %vm3679
        %v3681 = vsel %vm3680, %v3672, %v3677
        %v3682 = vrsqrt.pop %v3515
        %v3683 = vmul.f32 %v3682, %v3515
        %v3684 = vmul.f32 %v3683, %v3682
        %v3685 = vmul.f32 0.5, %v3684
        %v3686 = vsub.f32 1.5, %v3685
        %v3687 = vmul.f32 %v3682, %v3686
        %vm3688 = vweird.f32 %v3515
        %vm3689 = vweird.f32 %v3682
        %vm3690 = vmor %vm3688, %vm3689
        %v3691 = vsel %vm3690, %v3682, %v3687
        %v3692 = vrsqrt.pop %v3516
        %v3693 = vmul.f32 %v3692, %v3516
        %v3694 = vmul.f32 %v3693, %v3692
        %v3695 = vmul.f32 0.5, %v3694
        %v3696 = vsub.f32 1.5, %v3695
        %v3697 = vmul.f32 %v3692, %v3696
        %vm3698 = vweird.f32 %v3516
        %vm3699 = vweird.f32 %v3692
        %vm3700 = vmor %vm3698, %vm3699
        %v3701 = vsel %vm3700, %v3692, %v3697
        %v3702 = vrsqrt.pop %v3517
        %v3703 = vmul.f32 %v3702, %v3517
        %v3704 = vmul.f32 %v3703, %v3702
        %v3705 = vmul.f32 0.5, %v3704
        %v3706 = vsub.f32 1.5, %v3705
        %v3707 = vmul.f32 %v3702, %v3706
        %vm3708 = vweird.f32 %v3517
        %vm3709 = vweird.f32 %v3702
        %vm3710 = vmor %vm3708, %vm3709
        %v3711 = vsel %vm3710, %v3702, %v3707
        %v3712 = vrsqrt.pop %v3518
        %v3713 = vmul.f32 %v3712, %v3518
        %v3714 = vmul.f32 %v3713, %v3712
        %v3715 = vmul.f32 0.5, %v3714
        %v3716 = vsub.f32 1.5, %v3715
        %v3717 = vmul.f32 %v3712, %v3716
        %vm3718 = vweird.f32 %v3518
        %vm3719 = vweird.f32 %v3712
        %vm3720 = vmor %vm3718, %vm3719
        %v3721 = vsel %vm3720, %v3712, %v3717
        %v3722 = vrsqrt.pop %v3519
        %v3723 = vmul.f32 %v3722, %v3519
        %v3724 = vmul.f32 %v3723, %v3722
        %v3725 = vmul.f32 0.5, %v3724
        %v3726 = vsub.f32 1.5, %v3725
        %v3727 = vmul.f32 %v3722, %v3726
        %vm3728 = vweird.f32 %v3519
        %vm3729 = vweird.f32 %v3722
        %vm3730 = vmor %vm3728, %vm3729
        %v3731 = vsel %vm3730, %v3722, %v3727
        %v3732 = vrsqrt.pop %v3520
        %v3733 = vmul.f32 %v3732, %v3520
        %v3734 = vmul.f32 %v3733, %v3732
        %v3735 = vmul.f32 0.5, %v3734
        %v3736 = vsub.f32 1.5, %v3735
        %v3737 = vmul.f32 %v3732, %v3736
        %vm3738 = vweird.f32 %v3520
        %vm3739 = vweird.f32 %v3732
        %vm3740 = vmor %vm3738, %vm3739
        %v3741 = vsel %vm3740, %v3732, %v3737
        %v3742 = vrsqrt.pop %v3521
        %v3743 = vmul.f32 %v3742, %v3521
        %v3744 = vmul.f32 %v3743, %v3742
        %v3745 = vmul.f32 0.5, %v3744
        %v3746 = vsub.f32 1.5, %v3745
        %v3747 = vmul.f32 %v3742, %v3746
        %vm3748 = vweird.f32 %v3521
        %vm3749 = vweird.f32 %v3742
        %vm3750 = vmor %vm3748, %vm3749
        %v3751 = vsel %vm3750, %v3742, %v3747
        %v3752 = vrsqrt.pop %v3522
        %v3753 = vmul.f32 %v3752, %v3522
        %v3754 = vmul.f32 %v3753, %v3752
        %v3755 = vmul.f32 0.5, %v3754
        %v3756 = vsub.f32 1.5, %v3755
        %v3757 = vmul.f32 %v3752, %v3756
        %vm3758 = vweird.f32 %v3522
        %vm3759 = vweird.f32 %v3752
        %vm3760 = vmor %vm3758, %vm3759
        %v3761 = vsel %vm3760, %v3752, %v3757
        %v3762 = vrsqrt.pop %v3523
        %v3763 = vmul.f32 %v3762, %v3523
        %v3764 = vmul.f32 %v3763, %v3762
        %v3765 = vmul.f32 0.5, %v3764
        %v3766 = vsub.f32 1.5, %v3765
        %v3767 = vmul.f32 %v3762, %v3766
        %vm3768 = vweird.f32 %v3523
        %vm3769 = vweird.f32 %v3762
        %vm3770 = vmor %vm3768, %vm3769
        %v3771 = vsel %vm3770, %v3762, %v3767
        %v3772 = vrsqrt.pop %v3524
        %v3773 = vmul.f32 %v3772, %v3524
        %v3774 = vmul.f32 %v3773, %v3772
        %v3775 = vmul.f32 0.5, %v3774
        %v3776 = vsub.f32 1.5, %v3775
        %v3777 = vmul.f32 %v3772, %v3776
        %vm3778 = vweird.f32 %v3524
        %vm3779 = vweird.f32 %v3772
        %vm3780 = vmor %vm3778, %vm3779
        %v3781 = vsel %vm3780, %v3772, %v3777
        %v3782 = vrsqrt.pop %v3525
        %v3783 = vmul.f32 %v3782, %v3525
        %v3784 = vmul.f32 %v3783, %v3782
        %v3785 = vmul.f32 0.5, %v3784
        %v3786 = vsub.f32 1.5, %v3785
        %v3787 = vmul.f32 %v3782, %v3786
        %vm3788 = vweird.f32 %v3525
        %vm3789 = vweird.f32 %v3782
        %vm3790 = vmor %vm3788, %vm3789
        %v3791 = vsel %vm3790, %v3782, %v3787
        %v3792 = vrsqrt.pop %v3526
        %v3793 = vmul.f32 %v3792, %v3526
        %v3794 = vmul.f32 %v3793, %v3792
        %v3795 = vmul.f32 0.5, %v3794
        %v3796 = vsub.f32 1.5, %v3795
        %v3797 = vmul.f32 %v3792, %v3796
        %vm3798 = vweird.f32 %v3526
        %vm3799 = vweird.f32 %v3792
        %vm3800 = vmor %vm3798, %vm3799
        %v3801 = vsel %vm3800, %v3792, %v3797
        %v3802 = vrsqrt.pop %v3527
        %v3803 = vmul.f32 %v3802, %v3527
        %v3804 = vmul.f32 %v3803, %v3802
        %v3805 = vmul.f32 0.5, %v3804
        %v3806 = vsub.f32 1.5, %v3805
        %v3807 = vmul.f32 %v3802, %v3806
        %vm3808 = vweird.f32 %v3527
        %vm3809 = vweird.f32 %v3802
        %vm3810 = vmor %vm3808, %vm3809
        %v3811 = vsel %vm3810, %v3802, %v3807
        %v3812 = vrsqrt.pop %v3528
        %v3813 = vmul.f32 %v3812, %v3528
        %v3814 = vmul.f32 %v3813, %v3812
        %v3815 = vmul.f32 0.5, %v3814
        %v3816 = vsub.f32 1.5, %v3815
        %v3817 = vmul.f32 %v3812, %v3816
        %vm3818 = vweird.f32 %v3528
        %vm3819 = vweird.f32 %v3812
        %vm3820 = vmor %vm3818, %vm3819
        %v3821 = vsel %vm3820, %v3812, %v3817
        %v3822 = vrsqrt.pop %v3529
        %v3823 = vmul.f32 %v3822, %v3529
        %v3824 = vmul.f32 %v3823, %v3822
        %v3825 = vmul.f32 0.5, %v3824
        %v3826 = vsub.f32 1.5, %v3825
        %v3827 = vmul.f32 %v3822, %v3826
        %vm3828 = vweird.f32 %v3529
        %vm3829 = vweird.f32 %v3822
        %vm3830 = vmor %vm3828, %vm3829
        %v3831 = vsel %vm3830, %v3822, %v3827
        %v3832 = vrsqrt.pop %v3530
        %v3833 = vmul.f32 %v3832, %v3530
        %v3834 = vmul.f32 %v3833, %v3832
        %v3835 = vmul.f32 0.5, %v3834
        %v3836 = vsub.f32 1.5, %v3835
        %v3837 = vmul.f32 %v3832, %v3836
        %vm3838 = vweird.f32 %v3530
        %vm3839 = vweird.f32 %v3832
        %vm3840 = vmor %vm3838, %vm3839
        %v3841 = vsel %vm3840, %v3832, %v3837
        %v3842 = vrsqrt.pop %v3531
        %v3843 = vmul.f32 %v3842, %v3531
        %v3844 = vmul.f32 %v3843, %v3842
        %v3845 = vmul.f32 0.5, %v3844
        %v3846 = vsub.f32 1.5, %v3845
        %v3847 = vmul.f32 %v3842, %v3846
        %vm3848 = vweird.f32 %v3531
        %vm3849 = vweird.f32 %v3842
        %vm3850 = vmor %vm3848, %vm3849
        %v3851 = vsel %vm3850, %v3842, %v3847
        %v3852 = vmul.f32 %v2785, %v3541
        %v3853 = vmul.f32 %v2786, %v3551
        %v3854 = vmul.f32 %v2787, %v3561
        %v3855 = vmul.f32 %v2788, %v3571
        %v3856 = vmul.f32 %v2789, %v3581
        %v3857 = vmul.f32 %v2790, %v3591
        %v3858 = vmul.f32 %v2791, %v3601
        %v3859 = vmul.f32 %v2792, %v3611
        %v3860 = vmul.f32 %v2793, %v3621
        %v3861 = vmul.f32 %v2794, %v3631
        %v3862 = vmul.f32 %v2795, %v3641
        %v3863 = vmul.f32 %v2796, %v3651
        %v3864 = vmul.f32 %v2797, %v3661
        %v3865 = vmul.f32 %v2798, %v3671
        %v3866 = vmul.f32 %v2799, %v3681
        %v3867 = vmul.f32 %v2800, %v3691
        %v3868 = vmul.f32 %v2801, %v3701
        %v3869 = vmul.f32 %v2802, %v3711
        %v3870 = vmul.f32 %v2803, %v3721
        %v3871 = vmul.f32 %v2804, %v3731
        %v3872 = vmul.f32 %v2805, %v3741
        %v3873 = vmul.f32 %v2806, %v3751
        %v3874 = vmul.f32 %v2807, %v3761
        %v3875 = vmul.f32 %v2808, %v3771
        %v3876 = vmul.f32 %v2809, %v3781
        %v3877 = vmul.f32 %v2810, %v3791
        %v3878 = vmul.f32 %v2811, %v3801
        %v3879 = vmul.f32 %v2812, %v3811
        %v3880 = vmul.f32 %v2813, %v3821
        %v3881 = vmul.f32 %v2814, %v3831
        %v3882 = vmul.f32 %v2815, %v3841
        %v3883 = vmul.f32 %v2816, %v3851
        %v3884 = vmul.f32 %v2608, %v3340
        %v3885 = vmul.f32 %v2609, %v3341
        %v3886 = vmul.f32 %v2610, %v3342
        %v3887 = vmul.f32 %v2611, %v3343
        %v3888 = vmul.f32 %v2612, %v3344
        %v3889 = vmul.f32 %v2613, %v3345
        %v3890 = vmul.f32 %v2614, %v3346
        %v3891 = vmul.f32 %v2615, %v3347
        %v3892 = vmul.f32 %v2616, %v3348
        %v3893 = vmul.f32 %v2617, %v3349
        %v3894 = vmul.f32 %v2618, %v3350
        %v3895 = vmul.f32 %v2619, %v3351
        %v3896 = vmul.f32 %v2620, %v3352
        %v3897 = vmul.f32 %v2621, %v3353
        %v3898 = vmul.f32 %v2622, %v3354
        %v3899 = vmul.f32 %v2623, %v3355
        %v3900 = vmul.f32 %v2624, %v3356
        %v3901 = vmul.f32 %v2625, %v3357
        %v3902 = vmul.f32 %v2626, %v3358
        %v3903 = vmul.f32 %v2627, %v3359
        %v3904 = vmul.f32 %v2628, %v3360
        %v3905 = vmul.f32 %v2629, %v3361
        %v3906 = vmul.f32 %v2630, %v3362
        %v3907 = vmul.f32 %v2631, %v3363
        %v3908 = vmul.f32 %v2632, %v3364
        %v3909 = vmul.f32 %v2633, %v3365
        %v3910 = vmul.f32 %v2634, %v3366
        %v3911 = vmul.f32 %v2635, %v3367
        %v3912 = vmul.f32 %v2636, %v3368
        %v3913 = vmul.f32 %v2637, %v3369
        %v3914 = vmul.f32 %v2638, %v3370
        %v3915 = vmul.f32 %v2639, %v3371
        %3916 = vrot.lane.b32.xlu0 %v3340, 64
        %v3917 = vpop.permute.xlu0 %3916
        %3918 = vrot.lane.b32.xlu0 %v3341, 64
        %v3919 = vpop.permute.xlu0 %3918
        %3920 = vrot.lane.b32.xlu0 %v3342, 64
        %v3921 = vpop.permute.xlu0 %3920
        %3922 = vrot.lane.b32.xlu0 %v3343, 64
        %v3923 = vpop.permute.xlu0 %3922
        %3924 = vrot.lane.b32.xlu0 %v3344, 64
        %v3925 = vpop.permute.xlu0 %3924
        %3926 = vrot.lane.b32.xlu0 %v3345, 64
        %v3927 = vpop.permute.xlu0 %3926
        %3928 = vrot.lane.b32.xlu0 %v3346, 64
        %v3929 = vpop.permute.xlu0 %3928
        %3930 = vrot.lane.b32.xlu0 %v3347, 64
        %v3931 = vpop.permute.xlu0 %3930
        %3932 = vrot.lane.b32.xlu0 %v3348, 64
        %v3933 = vpop.permute.xlu0 %3932
        %3934 = vrot.lane.b32.xlu0 %v3349, 64
        %v3935 = vpop.permute.xlu0 %3934
        %3936 = vrot.lane.b32.xlu0 %v3350, 64
        %v3937 = vpop.permute.xlu0 %3936
        %3938 = vrot.lane.b32.xlu0 %v3351, 64
        %v3939 = vpop.permute.xlu0 %3938
        %3940 = vrot.lane.b32.xlu0 %v3352, 64
        %v3941 = vpop.permute.xlu0 %3940
        %3942 = vrot.lane.b32.xlu0 %v3353, 64
        %v3943 = vpop.permute.xlu0 %3942
        %3944 = vrot.lane.b32.xlu0 %v3354, 64
        %v3945 = vpop.permute.xlu0 %3944
        %3946 = vrot.lane.b32.xlu0 %v3355, 64
        %v3947 = vpop.permute.xlu0 %3946
        %3948 = vrot.lane.b32.xlu0 %v3356, 64
        %v3949 = vpop.permute.xlu0 %3948
        %3950 = vrot.lane.b32.xlu0 %v3357, 64
        %v3951 = vpop.permute.xlu0 %3950
        %3952 = vrot.lane.b32.xlu0 %v3358, 64
        %v3953 = vpop.permute.xlu0 %3952
        %3954 = vrot.lane.b32.xlu0 %v3359, 64
        %v3955 = vpop.permute.xlu0 %3954
        %3956 = vrot.lane.b32.xlu0 %v3360, 64
        %v3957 = vpop.permute.xlu0 %3956
        %3958 = vrot.lane.b32.xlu0 %v3361, 64
        %v3959 = vpop.permute.xlu0 %3958
        %3960 = vrot.lane.b32.xlu0 %v3362, 64
        %v3961 = vpop.permute.xlu0 %3960
        %3962 = vrot.lane.b32.xlu0 %v3363, 64
        %v3963 = vpop.permute.xlu0 %3962
        %3964 = vrot.lane.b32.xlu0 %v3364, 64
        %v3965 = vpop.permute.xlu0 %3964
        %3966 = vrot.lane.b32.xlu0 %v3365, 64
        %v3967 = vpop.permute.xlu0 %3966
        %3968 = vrot.lane.b32.xlu0 %v3366, 64
        %v3969 = vpop.permute.xlu0 %3968
        %3970 = vrot.lane.b32.xlu0 %v3367, 64
        %v3971 = vpop.permute.xlu0 %3970
        %3972 = vrot.lane.b32.xlu0 %v3368, 64
        %v3973 = vpop.permute.xlu0 %3972
        %3974 = vrot.lane.b32.xlu0 %v3369, 64
        %v3975 = vpop.permute.xlu0 %3974
        %3976 = vrot.lane.b32.xlu0 %v3370, 64
        %v3977 = vpop.permute.xlu0 %3976
        %3978 = vrot.lane.b32.xlu0 %v3371, 64
        %v3979 = vpop.permute.xlu0 %3978
        %v3980 = vmul.f32 %v2640, %v3917
        %v3981 = vmul.f32 %v2641, %v3919
        %v3982 = vmul.f32 %v2642, %v3921
        %v3983 = vmul.f32 %v2643, %v3923
        %v3984 = vmul.f32 %v2644, %v3925
        %v3985 = vmul.f32 %v2645, %v3927
        %v3986 = vmul.f32 %v2646, %v3929
        %v3987 = vmul.f32 %v2647, %v3931
        %v3988 = vmul.f32 %v2648, %v3933
        %v3989 = vmul.f32 %v2649, %v3935
        %v3990 = vmul.f32 %v2650, %v3937
        %v3991 = vmul.f32 %v2651, %v3939
        %v3992 = vmul.f32 %v2652, %v3941
        %v3993 = vmul.f32 %v2653, %v3943
        %v3994 = vmul.f32 %v2654, %v3945
        %v3995 = vmul.f32 %v2655, %v3947
        %v3996 = vmul.f32 %v2656, %v3949
        %v3997 = vmul.f32 %v2657, %v3951
        %v3998 = vmul.f32 %v2658, %v3953
        %v3999 = vmul.f32 %v2659, %v3955
        %v4000 = vmul.f32 %v2660, %v3957
        %v4001 = vmul.f32 %v2661, %v3959
        %v4002 = vmul.f32 %v2662, %v3961
        %v4003 = vmul.f32 %v2663, %v3963
        %v4004 = vmul.f32 %v2664, %v3965
        %v4005 = vmul.f32 %v2665, %v3967
        %v4006 = vmul.f32 %v2666, %v3969
        %v4007 = vmul.f32 %v2667, %v3971
        %v4008 = vmul.f32 %v2668, %v3973
        %v4009 = vmul.f32 %v2669, %v3975
        %v4010 = vmul.f32 %v2670, %v3977
        %v4011 = vmul.f32 %v2671, %v3979
        %v4012 = vadd.f32 %v3884, %v3980
        %v4013 = vadd.f32 %v3885, %v3981
        %v4014 = vadd.f32 %v3886, %v3982
        %v4015 = vadd.f32 %v3887, %v3983
        %v4016 = vadd.f32 %v3888, %v3984
        %v4017 = vadd.f32 %v3889, %v3985
        %v4018 = vadd.f32 %v3890, %v3986
        %v4019 = vadd.f32 %v3891, %v3987
        %v4020 = vadd.f32 %v3892, %v3988
        %v4021 = vadd.f32 %v3893, %v3989
        %v4022 = vadd.f32 %v3894, %v3990
        %v4023 = vadd.f32 %v3895, %v3991
        %v4024 = vadd.f32 %v3896, %v3992
        %v4025 = vadd.f32 %v3897, %v3993
        %v4026 = vadd.f32 %v3898, %v3994
        %v4027 = vadd.f32 %v3899, %v3995
        %v4028 = vadd.f32 %v3900, %v3996
        %v4029 = vadd.f32 %v3901, %v3997
        %v4030 = vadd.f32 %v3902, %v3998
        %v4031 = vadd.f32 %v3903, %v3999
        %v4032 = vadd.f32 %v3904, %v4000
        %v4033 = vadd.f32 %v3905, %v4001
        %v4034 = vadd.f32 %v3906, %v4002
        %v4035 = vadd.f32 %v3907, %v4003
        %v4036 = vadd.f32 %v3908, %v4004
        %v4037 = vadd.f32 %v3909, %v4005
        %v4038 = vadd.f32 %v3910, %v4006
        %v4039 = vadd.f32 %v3911, %v4007
        %v4040 = vadd.f32 %v3912, %v4008
        %v4041 = vadd.f32 %v3913, %v4009
        %v4042 = vadd.f32 %v3914, %v4010
        %v4043 = vadd.f32 %v3915, %v4011
        %v4044 = vmul.f32 %v2672, %v3852
        %v4045 = vmul.f32 %v2673, %v3853
        %v4046 = vmul.f32 %v2674, %v3854
        %v4047 = vmul.f32 %v2675, %v3855
        %v4048 = vmul.f32 %v2676, %v3856
        %v4049 = vmul.f32 %v2677, %v3857
        %v4050 = vmul.f32 %v2678, %v3858
        %v4051 = vmul.f32 %v2679, %v3859
        %v4052 = vmul.f32 %v2680, %v3860
        %v4053 = vmul.f32 %v2681, %v3861
        %v4054 = vmul.f32 %v2682, %v3862
        %v4055 = vmul.f32 %v2683, %v3863
        %v4056 = vmul.f32 %v2684, %v3864
        %v4057 = vmul.f32 %v2685, %v3865
        %v4058 = vmul.f32 %v2686, %v3866
        %v4059 = vmul.f32 %v2687, %v3867
        %v4060 = vmul.f32 %v2688, %v3868
        %v4061 = vmul.f32 %v2689, %v3869
        %v4062 = vmul.f32 %v2690, %v3870
        %v4063 = vmul.f32 %v2691, %v3871
        %v4064 = vmul.f32 %v2692, %v3872
        %v4065 = vmul.f32 %v2693, %v3873
        %v4066 = vmul.f32 %v2694, %v3874
        %v4067 = vmul.f32 %v2695, %v3875
        %v4068 = vmul.f32 %v2696, %v3876
        %v4069 = vmul.f32 %v2697, %v3877
        %v4070 = vmul.f32 %v2698, %v3878
        %v4071 = vmul.f32 %v2699, %v3879
        %v4072 = vmul.f32 %v2700, %v3880
        %v4073 = vmul.f32 %v2701, %v3881
        %v4074 = vmul.f32 %v2702, %v3882
        %v4075 = vmul.f32 %v2703, %v3883
        %4076 = vrot.lane.b32.xlu0 %v3852, 64
        %v4077 = vpop.permute.xlu0 %4076
        %4078 = vrot.lane.b32.xlu0 %v3853, 64
        %v4079 = vpop.permute.xlu0 %4078
        %4080 = vrot.lane.b32.xlu0 %v3854, 64
        %v4081 = vpop.permute.xlu0 %4080
        %4082 = vrot.lane.b32.xlu0 %v3855, 64
        %v4083 = vpop.permute.xlu0 %4082
        %4084 = vrot.lane.b32.xlu0 %v3856, 64
        %v4085 = vpop.permute.xlu0 %4084
        %4086 = vrot.lane.b32.xlu0 %v3857, 64
        %v4087 = vpop.permute.xlu0 %4086
        %4088 = vrot.lane.b32.xlu0 %v3858, 64
        %v4089 = vpop.permute.xlu0 %4088
        %4090 = vrot.lane.b32.xlu0 %v3859, 64
        %v4091 = vpop.permute.xlu0 %4090
        %4092 = vrot.lane.b32.xlu0 %v3860, 64
        %v4093 = vpop.permute.xlu0 %4092
        %4094 = vrot.lane.b32.xlu0 %v3861, 64
        %v4095 = vpop.permute.xlu0 %4094
        %4096 = vrot.lane.b32.xlu0 %v3862, 64
        %v4097 = vpop.permute.xlu0 %4096
        %4098 = vrot.lane.b32.xlu0 %v3863, 64
        %v4099 = vpop.permute.xlu0 %4098
        %4100 = vrot.lane.b32.xlu0 %v3864, 64
        %v4101 = vpop.permute.xlu0 %4100
        %4102 = vrot.lane.b32.xlu0 %v3865, 64
        %v4103 = vpop.permute.xlu0 %4102
        %4104 = vrot.lane.b32.xlu0 %v3866, 64
        %v4105 = vpop.permute.xlu0 %4104
        %4106 = vrot.lane.b32.xlu0 %v3867, 64
        %v4107 = vpop.permute.xlu0 %4106
        %4108 = vrot.lane.b32.xlu0 %v3868, 64
        %v4109 = vpop.permute.xlu0 %4108
        %4110 = vrot.lane.b32.xlu0 %v3869, 64
        %v4111 = vpop.permute.xlu0 %4110
        %4112 = vrot.lane.b32.xlu0 %v3870, 64
        %v4113 = vpop.permute.xlu0 %4112
        %4114 = vrot.lane.b32.xlu0 %v3871, 64
        %v4115 = vpop.permute.xlu0 %4114
        %4116 = vrot.lane.b32.xlu0 %v3872, 64
        %v4117 = vpop.permute.xlu0 %4116
        %4118 = vrot.lane.b32.xlu0 %v3873, 64
        %v4119 = vpop.permute.xlu0 %4118
        %4120 = vrot.lane.b32.xlu0 %v3874, 64
        %v4121 = vpop.permute.xlu0 %4120
        %4122 = vrot.lane.b32.xlu0 %v3875, 64
        %v4123 = vpop.permute.xlu0 %4122
        %4124 = vrot.lane.b32.xlu0 %v3876, 64
        %v4125 = vpop.permute.xlu0 %4124
        %4126 = vrot.lane.b32.xlu0 %v3877, 64
        %v4127 = vpop.permute.xlu0 %4126
        %4128 = vrot.lane.b32.xlu0 %v3878, 64
        %v4129 = vpop.permute.xlu0 %4128
        %4130 = vrot.lane.b32.xlu0 %v3879, 64
        %v4131 = vpop.permute.xlu0 %4130
        %4132 = vrot.lane.b32.xlu0 %v3880, 64
        %v4133 = vpop.permute.xlu0 %4132
        %4134 = vrot.lane.b32.xlu0 %v3881, 64
        %v4135 = vpop.permute.xlu0 %4134
        %4136 = vrot.lane.b32.xlu0 %v3882, 64
        %v4137 = vpop.permute.xlu0 %4136
        %4138 = vrot.lane.b32.xlu0 %v3883, 64
        %v4139 = vpop.permute.xlu0 %4138
        %v4140 = vmul.f32 %v2704, %v4077
        %v4141 = vmul.f32 %v2705, %v4079
        %v4142 = vmul.f32 %v2706, %v4081
        %v4143 = vmul.f32 %v2707, %v4083
        %v4144 = vmul.f32 %v2708, %v4085
        %v4145 = vmul.f32 %v2709, %v4087
        %v4146 = vmul.f32 %v2710, %v4089
        %v4147 = vmul.f32 %v2711, %v4091
        %v4148 = vmul.f32 %v2712, %v4093
        %v4149 = vmul.f32 %v2713, %v4095
        %v4150 = vmul.f32 %v2714, %v4097
        %v4151 = vmul.f32 %v2715, %v4099
        %v4152 = vmul.f32 %v2716, %v4101
        %v4153 = vmul.f32 %v2717, %v4103
        %v4154 = vmul.f32 %v2718, %v4105
        %v4155 = vmul.f32 %v2719, %v4107
        %v4156 = vmul.f32 %v2720, %v4109
        %v4157 = vmul.f32 %v2721, %v4111
        %v4158 = vmul.f32 %v2722, %v4113
        %v4159 = vmul.f32 %v2723, %v4115
        %v4160 = vmul.f32 %v2724, %v4117
        %v4161 = vmul.f32 %v2725, %v4119
        %v4162 = vmul.f32 %v2726, %v4121
        %v4163 = vmul.f32 %v2727, %v4123
        %v4164 = vmul.f32 %v2728, %v4125
        %v4165 = vmul.f32 %v2729, %v4127
        %v4166 = vmul.f32 %v2730, %v4129
        %v4167 = vmul.f32 %v2731, %v4131
        %v4168 = vmul.f32 %v2732, %v4133
        %v4169 = vmul.f32 %v2733, %v4135
        %v4170 = vmul.f32 %v2734, %v4137
        %v4171 = vmul.f32 %v2735, %v4139
        %v4172 = vadd.f32 %v4044, %v4140
        %v4173 = vadd.f32 %v4045, %v4141
        %v4174 = vadd.f32 %v4046, %v4142
        %v4175 = vadd.f32 %v4047, %v4143
        %v4176 = vadd.f32 %v4048, %v4144
        %v4177 = vadd.f32 %v4049, %v4145
        %v4178 = vadd.f32 %v4050, %v4146
        %v4179 = vadd.f32 %v4051, %v4147
        %v4180 = vadd.f32 %v4052, %v4148
        %v4181 = vadd.f32 %v4053, %v4149
        %v4182 = vadd.f32 %v4054, %v4150
        %v4183 = vadd.f32 %v4055, %v4151
        %v4184 = vadd.f32 %v4056, %v4152
        %v4185 = vadd.f32 %v4057, %v4153
        %v4186 = vadd.f32 %v4058, %v4154
        %v4187 = vadd.f32 %v4059, %v4155
        %v4188 = vadd.f32 %v4060, %v4156
        %v4189 = vadd.f32 %v4061, %v4157
        %v4190 = vadd.f32 %v4062, %v4158
        %v4191 = vadd.f32 %v4063, %v4159
        %v4192 = vadd.f32 %v4064, %v4160
        %v4193 = vadd.f32 %v4065, %v4161
        %v4194 = vadd.f32 %v4066, %v4162
        %v4195 = vadd.f32 %v4067, %v4163
        %v4196 = vadd.f32 %v4068, %v4164
        %v4197 = vadd.f32 %v4069, %v4165
        %v4198 = vadd.f32 %v4070, %v4166
        %v4199 = vadd.f32 %v4071, %v4167
        %v4200 = vadd.f32 %v4072, %v4168
        %v4201 = vadd.f32 %v4073, %v4169
        %v4202 = vadd.f32 %v4074, %v4170
        %v4203 = vadd.f32 %v4075, %v4171
        %v4204 = vpack.c.bf16 %v4012, %v4012
        %v4205 = vpack.c.bf16 %v4013, %v4013
        %v4206 = vpack.c.bf16 %v4014, %v4014
        %v4207 = vpack.c.bf16 %v4015, %v4015
        %v4208 = vpack.c.bf16 %v4016, %v4016
        %v4209 = vpack.c.bf16 %v4017, %v4017
        %v4210 = vpack.c.bf16 %v4018, %v4018
        %v4211 = vpack.c.bf16 %v4019, %v4019
        %v4212 = vpack.c.bf16 %v4020, %v4020
        %v4213 = vpack.c.bf16 %v4021, %v4021
        %v4214 = vpack.c.bf16 %v4022, %v4022
        %v4215 = vpack.c.bf16 %v4023, %v4023
        %v4216 = vpack.c.bf16 %v4024, %v4024
        %v4217 = vpack.c.bf16 %v4025, %v4025
        %v4218 = vpack.c.bf16 %v4026, %v4026
        %v4219 = vpack.c.bf16 %v4027, %v4027
        %v4220 = vpack.c.bf16 %v4028, %v4028
        %v4221 = vpack.c.bf16 %v4029, %v4029
        %v4222 = vpack.c.bf16 %v4030, %v4030
        %v4223 = vpack.c.bf16 %v4031, %v4031
        %v4224 = vpack.c.bf16 %v4032, %v4032
        %v4225 = vpack.c.bf16 %v4033, %v4033
        %v4226 = vpack.c.bf16 %v4034, %v4034
        %v4227 = vpack.c.bf16 %v4035, %v4035
        %v4228 = vpack.c.bf16 %v4036, %v4036
        %v4229 = vpack.c.bf16 %v4037, %v4037
        %v4230 = vpack.c.bf16 %v4038, %v4038
        %v4231 = vpack.c.bf16 %v4039, %v4039
        %v4232 = vpack.c.bf16 %v4040, %v4040
        %v4233 = vpack.c.bf16 %v4041, %v4041
        %v4234 = vpack.c.bf16 %v4042, %v4042
        %v4235 = vpack.c.bf16 %v4043, %v4043
        %s4236 = smul.u32 %s2737, 32
        %s4237 = smul.addr %s4236, 4
        %s4238 = scalar_lea.vmem %s544, %s4237
        %4239 = vst [vmem:[%s4238] sm:$0xf] %v4204
        %4240 = vst [vmem:[%s4238 + $0x4] sm:$0xf] %v4205
        %4241 = vst [vmem:[%s4238 + $0x8] sm:$0xf] %v4206
        %4242 = vst [vmem:[%s4238 + $0xc] sm:$0xf] %v4207
        %4243 = vst [vmem:[%s4238 + $0x10] sm:$0xf] %v4208
        %4244 = vst [vmem:[%s4238 + $0x14] sm:$0xf] %v4209
        %4245 = vst [vmem:[%s4238 + $0x18] sm:$0xf] %v4210
        %4246 = vst [vmem:[%s4238 + $0x1c] sm:$0xf] %v4211
        %4247 = vst [vmem:[%s4238 + $0x20] sm:$0xf] %v4212
        %4248 = vst [vmem:[%s4238 + $0x24] sm:$0xf] %v4213
        %4249 = vst [vmem:[%s4238 + $0x28] sm:$0xf] %v4214
        %4250 = vst [vmem:[%s4238 + $0x2c] sm:$0xf] %v4215
        %4251 = vst [vmem:[%s4238 + $0x30] sm:$0xf] %v4216
        %4252 = vst [vmem:[%s4238 + $0x34] sm:$0xf] %v4217
        %4253 = vst [vmem:[%s4238 + $0x38] sm:$0xf] %v4218
        %4254 = vst [vmem:[%s4238 + $0x3c] sm:$0xf] %v4219
        %4255 = vst [vmem:[%s4238 + $0x40] sm:$0xf] %v4220
        %4256 = vst [vmem:[%s4238 + $0x44] sm:$0xf] %v4221
        %4257 = vst [vmem:[%s4238 + $0x48] sm:$0xf] %v4222
        %4258 = vst [vmem:[%s4238 + $0x4c] sm:$0xf] %v4223
        %4259 = vst [vmem:[%s4238 + $0x50] sm:$0xf] %v4224
        %4260 = vst [vmem:[%s4238 + $0x54] sm:$0xf] %v4225
        %4261 = vst [vmem:[%s4238 + $0x58] sm:$0xf] %v4226
        %4262 = vst [vmem:[%s4238 + $0x5c] sm:$0xf] %v4227
        %4263 = vst [vmem:[%s4238 + $0x60] sm:$0xf] %v4228
        %4264 = vst [vmem:[%s4238 + $0x64] sm:$0xf] %v4229
        %4265 = vst [vmem:[%s4238 + $0x68] sm:$0xf] %v4230
        %4266 = vst [vmem:[%s4238 + $0x6c] sm:$0xf] %v4231
        %4267 = vst [vmem:[%s4238 + $0x70] sm:$0xf] %v4232
        %4268 = vst [vmem:[%s4238 + $0x74] sm:$0xf] %v4233
        %4269 = vst [vmem:[%s4238 + $0x78] sm:$0xf] %v4234
        %4270 = vst [vmem:[%s4238 + $0x7c] sm:$0xf] %v4235
        %v4271 = vpack.c.bf16 %v4172, %v4172
        %v4272 = vpack.c.bf16 %v4173, %v4173
        %v4273 = vpack.c.bf16 %v4174, %v4174
        %v4274 = vpack.c.bf16 %v4175, %v4175
        %v4275 = vpack.c.bf16 %v4176, %v4176
        %v4276 = vpack.c.bf16 %v4177, %v4177
        %v4277 = vpack.c.bf16 %v4178, %v4178
        %v4278 = vpack.c.bf16 %v4179, %v4179
        %v4279 = vpack.c.bf16 %v4180, %v4180
        %v4280 = vpack.c.bf16 %v4181, %v4181
        %v4281 = vpack.c.bf16 %v4182, %v4182
        %v4282 = vpack.c.bf16 %v4183, %v4183
        %v4283 = vpack.c.bf16 %v4184, %v4184
        %v4284 = vpack.c.bf16 %v4185, %v4185
        %v4285 = vpack.c.bf16 %v4186, %v4186
        %v4286 = vpack.c.bf16 %v4187, %v4187
        %v4287 = vpack.c.bf16 %v4188, %v4188
        %v4288 = vpack.c.bf16 %v4189, %v4189
        %v4289 = vpack.c.bf16 %v4190, %v4190
        %v4290 = vpack.c.bf16 %v4191, %v4191
        %v4291 = vpack.c.bf16 %v4192, %v4192
        %v4292 = vpack.c.bf16 %v4193, %v4193
        %v4293 = vpack.c.bf16 %v4194, %v4194
        %v4294 = vpack.c.bf16 %v4195, %v4195
        %v4295 = vpack.c.bf16 %v4196, %v4196
        %v4296 = vpack.c.bf16 %v4197, %v4197
        %v4297 = vpack.c.bf16 %v4198, %v4198
        %v4298 = vpack.c.bf16 %v4199, %v4199
        %v4299 = vpack.c.bf16 %v4200, %v4200
        %v4300 = vpack.c.bf16 %v4201, %v4201
        %v4301 = vpack.c.bf16 %v4202, %v4202
        %v4302 = vpack.c.bf16 %v4203, %v4203
        %s4303 = smul.addr %s4236, 4
        %s4304 = scalar_lea.vmem %s554, %s4303
        %4305 = vst [vmem:[%s4304] sm:$0xf] %v4271
        %4306 = vst [vmem:[%s4304 + $0x4] sm:$0xf] %v4272
        %4307 = vst [vmem:[%s4304 + $0x8] sm:$0xf] %v4273
        %4308 = vst [vmem:[%s4304 + $0xc] sm:$0xf] %v4274
        %4309 = vst [vmem:[%s4304 + $0x10] sm:$0xf] %v4275
        %4310 = vst [vmem:[%s4304 + $0x14] sm:$0xf] %v4276
        %4311 = vst [vmem:[%s4304 + $0x18] sm:$0xf] %v4277
        %4312 = vst [vmem:[%s4304 + $0x1c] sm:$0xf] %v4278
        %4313 = vst [vmem:[%s4304 + $0x20] sm:$0xf] %v4279
        %4314 = vst [vmem:[%s4304 + $0x24] sm:$0xf] %v4280
        %4315 = vst [vmem:[%s4304 + $0x28] sm:$0xf] %v4281
        %4316 = vst [vmem:[%s4304 + $0x2c] sm:$0xf] %v4282
        %4317 = vst [vmem:[%s4304 + $0x30] sm:$0xf] %v4283
        %4318 = vst [vmem:[%s4304 + $0x34] sm:$0xf] %v4284
        %4319 = vst [vmem:[%s4304 + $0x38] sm:$0xf] %v4285
        %4320 = vst [vmem:[%s4304 + $0x3c] sm:$0xf] %v4286
        %4321 = vst [vmem:[%s4304 + $0x40] sm:$0xf] %v4287
        %4322 = vst [vmem:[%s4304 + $0x44] sm:$0xf] %v4288
        %4323 = vst [vmem:[%s4304 + $0x48] sm:$0xf] %v4289
        %4324 = vst [vmem:[%s4304 + $0x4c] sm:$0xf] %v4290
        %4325 = vst [vmem:[%s4304 + $0x50] sm:$0xf] %v4291
        %4326 = vst [vmem:[%s4304 + $0x54] sm:$0xf] %v4292
        %4327 = vst [vmem:[%s4304 + $0x58] sm:$0xf] %v4293
        %4328 = vst [vmem:[%s4304 + $0x5c] sm:$0xf] %v4294
        %4329 = vst [vmem:[%s4304 + $0x60] sm:$0xf] %v4295
        %4330 = vst [vmem:[%s4304 + $0x64] sm:$0xf] %v4296
        %4331 = vst [vmem:[%s4304 + $0x68] sm:$0xf] %v4297
        %4332 = vst [vmem:[%s4304 + $0x6c] sm:$0xf] %v4298
        %4333 = vst [vmem:[%s4304 + $0x70] sm:$0xf] %v4299
        %4334 = vst [vmem:[%s4304 + $0x74] sm:$0xf] %v4300
        %4335 = vst [vmem:[%s4304 + $0x78] sm:$0xf] %v4301
        %4336 = vst [vmem:[%s4304 + $0x7c] sm:$0xf] %v4302
        %v4337 = vpack.c.bf16 %v2821, %v2821
        %v4338 = vpack.c.bf16 %v2822, %v2822
        %v4339 = vpack.c.bf16 %v2823, %v2823
        %v4340 = vpack.c.bf16 %v2824, %v2824
        %v4341 = vpack.c.bf16 %v2825, %v2825
        %v4342 = vpack.c.bf16 %v2826, %v2826
        %v4343 = vpack.c.bf16 %v2827, %v2827
        %v4344 = vpack.c.bf16 %v2828, %v2828
        %v4345 = vpack.c.bf16 %v2829, %v2829
        %v4346 = vpack.c.bf16 %v2830, %v2830
        %v4347 = vpack.c.bf16 %v2831, %v2831
        %v4348 = vpack.c.bf16 %v2832, %v2832
        %v4349 = vpack.c.bf16 %v2833, %v2833
        %v4350 = vpack.c.bf16 %v2834, %v2834
        %v4351 = vpack.c.bf16 %v2835, %v2835
        %v4352 = vpack.c.bf16 %v2836, %v2836
        %v4353 = vpack.c.bf16 %v2837, %v2837
        %v4354 = vpack.c.bf16 %v2838, %v2838
        %v4355 = vpack.c.bf16 %v2839, %v2839
        %v4356 = vpack.c.bf16 %v2840, %v2840
        %v4357 = vpack.c.bf16 %v2841, %v2841
        %v4358 = vpack.c.bf16 %v2842, %v2842
        %v4359 = vpack.c.bf16 %v2843, %v2843
        %v4360 = vpack.c.bf16 %v2844, %v2844
        %v4361 = vpack.c.bf16 %v2845, %v2845
        %v4362 = vpack.c.bf16 %v2846, %v2846
        %v4363 = vpack.c.bf16 %v2847, %v2847
        %v4364 = vpack.c.bf16 %v2848, %v2848
        %v4365 = vpack.c.bf16 %v2849, %v2849
        %v4366 = vpack.c.bf16 %v2850, %v2850
        %v4367 = vpack.c.bf16 %v2851, %v2851
        %v4368 = vpack.c.bf16 %v2852, %v2852
        %s4369 = smul.addr %s4236, 4
        %s4370 = scalar_lea.vmem %s564, %s4369
        %4371 = vst [vmem:[%s4370] sm:$0xf] %v4337
        %4372 = vst [vmem:[%s4370 + $0x4] sm:$0xf] %v4338
        %4373 = vst [vmem:[%s4370 + $0x8] sm:$0xf] %v4339
        %4374 = vst [vmem:[%s4370 + $0xc] sm:$0xf] %v4340
        %4375 = vst [vmem:[%s4370 + $0x10] sm:$0xf] %v4341
        %4376 = vst [vmem:[%s4370 + $0x14] sm:$0xf] %v4342
        %4377 = vst [vmem:[%s4370 + $0x18] sm:$0xf] %v4343
        %4378 = vst [vmem:[%s4370 + $0x1c] sm:$0xf] %v4344
        %4379 = vst [vmem:[%s4370 + $0x20] sm:$0xf] %v4345
        %4380 = vst [vmem:[%s4370 + $0x24] sm:$0xf] %v4346
        %4381 = vst [vmem:[%s4370 + $0x28] sm:$0xf] %v4347
        %4382 = vst [vmem:[%s4370 + $0x2c] sm:$0xf] %v4348
        %4383 = vst [vmem:[%s4370 + $0x30] sm:$0xf] %v4349
        %4384 = vst [vmem:[%s4370 + $0x34] sm:$0xf] %v4350
        %4385 = vst [vmem:[%s4370 + $0x38] sm:$0xf] %v4351
        %4386 = vst [vmem:[%s4370 + $0x3c] sm:$0xf] %v4352
        %4387 = vst [vmem:[%s4370 + $0x40] sm:$0xf] %v4353
        %4388 = vst [vmem:[%s4370 + $0x44] sm:$0xf] %v4354
        %4389 = vst [vmem:[%s4370 + $0x48] sm:$0xf] %v4355
        %4390 = vst [vmem:[%s4370 + $0x4c] sm:$0xf] %v4356
        %4391 = vst [vmem:[%s4370 + $0x50] sm:$0xf] %v4357
        %4392 = vst [vmem:[%s4370 + $0x54] sm:$0xf] %v4358
        %4393 = vst [vmem:[%s4370 + $0x58] sm:$0xf] %v4359
        %4394 = vst [vmem:[%s4370 + $0x5c] sm:$0xf] %v4360
        %4395 = vst [vmem:[%s4370 + $0x60] sm:$0xf] %v4361
        %4396 = vst [vmem:[%s4370 + $0x64] sm:$0xf] %v4362
        %4397 = vst [vmem:[%s4370 + $0x68] sm:$0xf] %v4363
        %4398 = vst [vmem:[%s4370 + $0x6c] sm:$0xf] %v4364
        %4399 = vst [vmem:[%s4370 + $0x70] sm:$0xf] %v4365
        %4400 = vst [vmem:[%s4370 + $0x74] sm:$0xf] %v4366
        %4401 = vst [vmem:[%s4370 + $0x78] sm:$0xf] %v4367
        %4402 = vst [vmem:[%s4370 + $0x7c] sm:$0xf] %v4368
      $region53: #{self_attention.3} parent=47 // loop_footer
        %s2741 = sadd.s32 1, %s2737
      $region54: #{self_attention.3} parent=47 // loop_footer_branch
        %2736 = sbr.rel target = $region50
      $region55: #{self_attention.3} parent=47 // loop_exit
        _
      %s4403 = smul.u32 32, %s26
      %p4404 = scmp.lt.s32.totalorder %s25, 1
      %s4405 = scalar_select %p4404, %s25, 1
      %p4406 = scmp.lt.s32.totalorder %s4403, 31
      %s4407 = scalar_select %p4406, %s4403, 31
      %s4408 = smul.addr %s4405, 64
      %s4409 = sadd.s32 %s4407, %s4408
      %s4410 = smul.addr %s4409, 4
      %s4411 = scalar_lea.vmem %s7, %s4410
      %s4412 = smul.u32 32, %s26
      %p4413 = scmp.lt.s32.totalorder %s25, 1
      %s4414 = scalar_select %p4413, %s25, 1
      %p4415 = scmp.lt.s32.totalorder %s4412, 31
      %s4416 = scalar_select %p4415, %s4412, 31
      %s4417 = smul.addr %s4414, 64
      %s4418 = sadd.s32 %s4416, %s4417
      %s4419 = smul.addr %s4418, 4
      %s4420 = scalar_lea.vmem %s8, %s4419
      %s4421 = smul.u32 32, %s26
      %p4422 = scmp.lt.s32.totalorder %s25, 1
      %s4423 = scalar_select %p4422, %s25, 1
      %p4424 = scmp.lt.s32.totalorder %s4421, 31
      %s4425 = scalar_select %p4424, %s4421, 31
      %s4426 = smul.addr %s4423, 64
      %s4427 = sadd.s32 %s4425, %s4426
      %s4428 = smul.addr %s4427, 4
      %s4429 = scalar_lea.vmem %s9, %s4428
      // Predicated region
      $region56: #{self_attention.3} parent=47 // pred_check
        %p4430 = pneg %p235
      $region57: #{self_attention.3} parent=47 // pred_check_branch
        %4432 = sbr.rel (%p4430) target = $region59
      $region58: #{self_attention.3} parent=47 // pred_region
        %s4433 = smul.u32 32, %s26
      $region59: #{self_attention.3} parent=47 // pred_fallthru
        _
      // Predicated region
      $region60: #{self_attention.3} parent=47 // pred_check
        %p4434 = pneg %p263
      $region61: #{self_attention.3} parent=47 // pred_check_branch
        %4436 = sbr.rel (%p4434) target = $region63
      $region62: #{self_attention.3} parent=47 // pred_region
        %s4437 = smul.u32 32, %s26
      $region63: #{self_attention.3} parent=47 // pred_fallthru
        _
      // Predicated region
      $region64: #{self_attention.3} parent=47 // pred_check
        %p4438 = pneg %p291
      $region65: #{self_attention.3} parent=47 // pred_check_branch
        %4440 = sbr.rel (%p4438) target = $region67
      $region66: #{self_attention.3} parent=47 // pred_region
        %s4441 = smul.u32 32, %s26
      $region67: #{self_attention.3} parent=47 // pred_fallthru
        _
    $region48: #{self_attention.3} parent=5 // pred_fallthru
      _
    %p4442 = scmp.le.s32.totalorder 2, %s16
    // Predicated region
    $region68: #{self_attention.3} parent=5 // pred_check
      %p4443 = pneg %p4442
    $region69: #{self_attention.3} parent=5 // pred_check_branch
      %4445 = sbr.rel (%p4443) target = $region71
    $region70: #{self_attention.3} parent=5 // pred_region
      %s4446 = ssub.s32 %s16, 2
      // Predicated region
      $region72: #{self_attention.3} parent=70 // pred_check
        %p4447 = pneg %p241
      $region73: #{self_attention.3} parent=70 // pred_check_branch
        %4449 = sbr.rel (%p4447) target = $region75
      $region74: #{self_attention.3} parent=70 // pred_region
        %s4450 = smul.u32 32, %s28
        %p4451 = scmp.lt.s32.totalorder %s27, 1
        %s4452 = scalar_select %p4451, %s27, 1
        %p4453 = scmp.lt.s32.totalorder %s4450, 31
        %s4454 = scalar_select %p4453, %s4450, 31
        %s4455 = smul.addr %s4452, 64
        %s4456 = sadd.s32 %s4454, %s4455
        %s4457 = smul.addr %s4456, 4
        %s4458 = scalar_lea.vmem %s7, %s4457
      $region75: #{self_attention.3} parent=70 // pred_fallthru
        _
      // Predicated region
      $region76: #{self_attention.3} parent=70 // pred_check
        %p4459 = pneg %p269
      $region77: #{self_attention.3} parent=70 // pred_check_branch
        %4461 = sbr.rel (%p4459) target = $region79
      $region78: #{self_attention.3} parent=70 // pred_region
        %s4462 = smul.u32 32, %s28
        %p4463 = scmp.lt.s32.totalorder %s27, 1
        %s4464 = scalar_select %p4463, %s27, 1
        %p4465 = scmp.lt.s32.totalorder %s4462, 31
        %s4466 = scalar_select %p4465, %s4462, 31
        %s4467 = smul.addr %s4464, 64
        %s4468 = sadd.s32 %s4466, %s4467
        %s4469 = smul.addr %s4468, 4
        %s4470 = scalar_lea.vmem %s8, %s4469
      $region79: #{self_attention.3} parent=70 // pred_fallthru
        _
      // Predicated region
      $region80: #{self_attention.3} parent=70 // pred_check
        %p4471 = pneg %p297
      $region81: #{self_attention.3} parent=70 // pred_check_branch
        %4473 = sbr.rel (%p4471) target = $region83
      $region82: #{self_attention.3} parent=70 // pred_region
        %s4474 = smul.u32 32, %s28
        %p4475 = scmp.lt.s32.totalorder %s27, 1
        %s4476 = scalar_select %p4475, %s27, 1
        %p4477 = scmp.lt.s32.totalorder %s4474, 31
        %s4478 = scalar_select %p4477, %s4474, 31
        %s4479 = smul.addr %s4476, 64
        %s4480 = sadd.s32 %s4478, %s4479
        %s4481 = smul.addr %s4480, 4
        %s4482 = scalar_lea.vmem %s9, %s4481
      $region83: #{self_attention.3} parent=70 // pred_fallthru
        _
    $region71: #{self_attention.3} parent=5 // pred_fallthru
      _
  $region6: #{self_attention.3} parent=0 // loop_footer
    %s20 = sadd.s32 1, %s16
  $region7: #{self_attention.3} parent=0 // loop_footer_branch
    %15 = sbr.rel target = $region3
  $region8: #{self_attention.3} parent=0 // loop_exit
    _

</llo_original>
